<compile_context>
chip_gen: v5e
topology: v5e:2x2
jax: 0.10.0
libtpu: 0.0.40
codegen_flags: <defaults>
</compile_context>

<pallas_src>
import jax
import jax.numpy as jnp
import numpy as np
from jax import lax
from jax.experimental import pallas as pl
from jax.experimental.pallas import tpu as pltpu

PAD, BOS, EOS = 0, 1, 2
BF16 = jnp.bfloat16


def _gate_act(gates, c, H):
    """PyTorch LSTM gate order (i, f, g, o); all math in f32."""
    i = jax.nn.sigmoid(gates[:, 0 * H:1 * H])
    f = jax.nn.sigmoid(gates[:, 1 * H:2 * H])
    g = jnp.tanh(gates[:, 2 * H:3 * H])
    o = jax.nn.sigmoid(gates[:, 3 * H:4 * H])
    c_new = f * c + i * g
    h_new = o * jnp.tanh(c_new)
    return h_new, c_new


# ----------------------------------------------------------------------------
# Encoder kernel: bidirectional LSTM with length masking, fwd/rev chains fused
# into one per-step matmul, hoisted input projections, decoder_init_cell and
# the fused key/value projection computed in-kernel (outputs already in the
# layout the decoder consumes).
# ----------------------------------------------------------------------------
def encoder_kernel(x_ref, mask_ref,
                   wih_f_ref, wih_r_ref, b_f_ref, b_r_ref,
                   w_blk_ref,
                   kv_wf_ref, kv_wr_ref, kv_b_ref,
                   init_wf_ref, init_wr_ref, init_b_ref,
                   key_ref, val_ref, h0_ref, c0_ref,
                   gx_f, gx_r, out_f, out_r, h_both, cf, cr):
    L, B, E = x_ref.shape
    H = h0_ref.shape[-1]

    # Hoisted input projections: one bf16 (L*B, E) @ (E, 4H) matmul per dir.
    x2 = x_ref[...].reshape(L * B, E).astype(BF16)
    gx_f[...] = (jnp.dot(x2, wih_f_ref[...], preferred_element_type=jnp.float32)
                 + b_f_ref[...]).reshape(L, B, 4 * H)
    gx_r[...] = (jnp.dot(x2, wih_r_ref[...], preferred_element_type=jnp.float32)
                 + b_r_ref[...]).reshape(L, B, 4 * H)

    h_both[...] = jnp.zeros_like(h_both)
    cf[...] = jnp.zeros_like(cf)
    cr[...] = jnp.zeros_like(cr)

    def body(i, carry):
        # One fused recurrent matmul for BOTH directions:
        # [hf | hr] (B,2H) @ block-diag([whh_f, whh_r]) (2H,8H).
        rec = jnp.dot(h_both[...].astype(BF16), w_blk_ref[...],
                      preferred_element_type=jnp.float32)          # (B, 8H)
        t = i
        tr = L - 1 - i
        m = mask_ref[t]                                            # (B, 1)
        mr = mask_ref[tr]

        gates_f = gx_f[t] + rec[:, :4 * H]
        gates_r = gx_r[tr] + rec[:, 4 * H:]
        hfn, cfn = _gate_act(gates_f, cf[...], H)
        hrn, crn = _gate_act(gates_r, cr[...], H)

        # pack_padded_sequence semantics: padded steps keep state, output 0.
        hf_new = jnp.where(m > 0, hfn, h_both[:, :H])
        hr_new = jnp.where(mr > 0, hrn, h_both[:, H:])
        cf[...] = jnp.where(m > 0, cfn, cf[...])
        cr[...] = jnp.where(mr > 0, crn, cr[...])
        h_both[:, :H] = hf_new
        h_both[:, H:] = hr_new
        out_f[t] = hf_new * m
        out_r[tr] = hr_new * mr
        return carry

    unroll = L if L <= 16 else 8          # full unroll only for short seqs
    lax.fori_loop(0, L, body, 0, unroll=unroll)

    # decoder_init_cell(cat([last_cell_fwd, last_cell_rev], 1)) via split weights.
    dcell = (jnp.dot(cf[...].astype(BF16), init_wf_ref[...],
                     preferred_element_type=jnp.float32)
             + jnp.dot(cr[...].astype(BF16), init_wr_ref[...],
                       preferred_element_type=jnp.float32)
             + init_b_ref[...])
    c0_ref[...] = dcell
    h0_ref[...] = jnp.tanh(dcell)

    # Fused key/value projection, hoisted here so the raw encoder outputs never
    # leave VMEM (no HBM round trip / transpose between encoder and decoder).
    f2 = out_f[...].reshape(L * B, H).astype(BF16)
    r2 = out_r[...].reshape(L * B, H).astype(BF16)
    kv = (jnp.dot(f2, kv_wf_ref[...], preferred_element_type=jnp.float32)
          + jnp.dot(r2, kv_wr_ref[...], preferred_element_type=jnp.float32)
          + kv_b_ref[...])                                          # (L*B, 2H)
    key_ref[...] = kv[:, :H].reshape(L, B, H)
    val_ref[...] = kv[:, H:].reshape(L, B, H)


# ----------------------------------------------------------------------------
# Decoder kernel: precomputed x-part of the LSTMCell gates, then a sequential
# loop of (one fused recurrent matmul) -> VPU/XLU dot-product attention ->
# tanh(att_drp_linear on the packed [h | ctx]).  The vocab projection is done
# outside in a separate gridded kernel.  Last step's score is dropped
# (scores.pop()), so this runs Lt-1 steps.
# ----------------------------------------------------------------------------
def decoder_kernel(tgt_ref, key_ref, val_ref, mask_ref,
                   wih_x_ref, w_ha_ref, b_ref, att_w_ref,
                   h0_ref, c0_ref,
                   att_out_ref,
                   gx_s, ah, c_s):
    n_steps, B, E = tgt_ref.shape
    L, _, H = key_ref.shape

    # x-part of the LSTMCell gates for all steps (+ combined bias), hoisted.
    t2 = tgt_ref[...].reshape(n_steps * B, E).astype(BF16)
    gx_s[...] = (jnp.dot(t2, wih_x_ref[...], preferred_element_type=jnp.float32)
                 + b_ref[...]).reshape(n_steps, B, 4 * H)

    ah[:, :H] = h0_ref[...]                      # [h | attn]; attn starts at 0
    ah[:, H:] = jnp.zeros_like(h0_ref[...])
    c_s[...] = c0_ref[...]

    mask = mask_ref[...]                         # (L, B)

    def body(t, carry):
        # Single fused recurrent matmul:
        # [h | attn] (B,2H) @ [whh; wih_attn] (2H,4H).
        gates = gx_s[t] + jnp.dot(ah[...].astype(BF16), w_ha_ref[...],
                                  preferred_element_type=jnp.float32)
        h_new, c_new = _gate_act(gates, c_s[...], H)

        # Dot-product attention (q-len 1) on the VPU/XLU -- keeps the MXU slot
        # free for the gate matmul.  Matches the PyTorch code exactly:
        # softmax(score * mask) (padded scores are zeroed, not -inf).
        s = jnp.sum(h_new[None, :, :] * key_ref[...], axis=-1)      # (L, B)
        w = jax.nn.softmax(s * mask, axis=0)
        ctx = jnp.sum(w[:, :, None] * val_ref[...], axis=0)         # (B, H)

        # ah now holds [h_t | ctx_t]: input of att_drp_linear AND the next
        # step's [h | attn] LSTM input.
        ah[:, :H] = h_new
        ah[:, H:] = ctx
        att = jnp.tanh(jnp.dot(ah[...].astype(BF16), att_w_ref[...],
                               preferred_element_type=jnp.float32))
        att_out_ref[t] = att
        c_s[...] = c_new
        return carry

    unroll = n_steps if n_steps <= 16 else 8
    lax.fori_loop(0, n_steps, body, 0, unroll=unroll)


# ----------------------------------------------------------------------------
# Vocab projection kernel: ((Lt-1)*B, H) @ (H, TN) per lane-dense Vt tile.
# ----------------------------------------------------------------------------
def output_proj_kernel(att_ref, w_ref, b_ref, out_ref):
    out_ref[...] = (jnp.dot(att_ref[...].astype(BF16), w_ref[...],
                            preferred_element_type=jnp.float32)
                    + b_ref[...])


# ----------------------------------------------------------------------------
# Parameters: pre-transposed (in, out) layout; matmul weights in bf16 (f32
# accumulation in the kernels); biases and embeddings in f32.  Weights that
# the PyTorch model applies to concatenated features are stored split.
# ----------------------------------------------------------------------------
def init_params(key, V_src, V_tgt, E, H):
    ks = jax.random.split(key, 22)

    def rnd(k, shape, scale=0.1, dtype=jnp.float32):
        return (jax.random.normal(k, shape, jnp.float32) * scale).astype(dtype)

    p = {}
    p['enc_embed'] = rnd(ks[0], (V_src, E)).at[PAD].set(0.0)   # padding_idx row
    p['dec_embed'] = rnd(ks[1], (V_tgt, E)).at[PAD].set(0.0)
    # encoder bidirectional LSTM (b = b_ih + b_hh combined)
    p['enc_wih_f'] = rnd(ks[2], (E, 4 * H), dtype=BF16)
    p['enc_whh_f'] = rnd(ks[3], (H, 4 * H), dtype=BF16)
    p['enc_b_f'] = rnd(ks[4], (1, 4 * H))
    p['enc_wih_r'] = rnd(ks[5], (E, 4 * H), dtype=BF16)
    p['enc_whh_r'] = rnd(ks[6], (H, 4 * H), dtype=BF16)
    p['enc_b_r'] = rnd(ks[7], (1, 4 * H))
    # decoder LSTMCell over [embed | attention]; input weight split x / attn
    p['dec_wih_x'] = rnd(ks[8], (E, 4 * H), dtype=BF16)
    p['dec_wih_a'] = rnd(ks[9], (H, 4 * H), dtype=BF16)
    p['dec_whh'] = rnd(ks[10], (H, 4 * H), dtype=BF16)
    p['dec_b'] = rnd(ks[11], (1, 4 * H))
    # decoder_init_cell Linear(2H -> H), split by encoder direction
    p['init_wf'] = rnd(ks[12], (H, H), dtype=BF16)
    p['init_wr'] = rnd(ks[13], (H, H), dtype=BF16)
    p['init_b'] = rnd(ks[14], (1, H))
    # att_drp_linear Linear(2H -> H, no bias), split into h / ctx parts
    p['att_wh'] = rnd(ks[15], (H, H), dtype=BF16)
    p['att_wc'] = rnd(ks[16], (H, H), dtype=BF16)
    # key/value linears fused (cols [:H] -> key, [H:] -> value), split by dir
    p['kv_wf'] = rnd(ks[17], (H, 2 * H), dtype=BF16)
    p['kv_wr'] = rnd(ks[18], (H, 2 * H), dtype=BF16)
    p['kv_b'] = rnd(ks[19], (1, 2 * H))
    # output_linear Linear(H -> Vt)
    p['out_w'] = rnd(ks[20], (H, V_tgt), dtype=BF16)
    p['out_b'] = rnd(ks[21], (1, V_tgt))
    return p


# ----------------------------------------------------------------------------
# VMEM limit sized from actual in/out/scratch usage (review item).
# ----------------------------------------------------------------------------
def _nbytes(shape, dtype):
    n = 1
    for s in shape:
        n *= int(s)
    return n * np.dtype(dtype).itemsize


def _vmem_limit_bytes(arrays, out_shapes, scratch_sd):
    total = sum(int(a.size) * a.dtype.itemsize for a in arrays)
    total += sum(_nbytes(o.shape, o.dtype) for o in out_shapes)
    total += sum(_nbytes(s, d) for s, d in scratch_sd)
    # 2x headroom for compiler temporaries, 8 MiB floor, capped below the
    # smallest per-core physical VMEM (v7x: 64 MiB).
    return int(min(max(2 * total + (4 << 20), 8 << 20), 60 << 20))


# ----------------------------------------------------------------------------
# Wrapper: NMT.forward (token-index inputs replace the List[List[str]] glue)
# ----------------------------------------------------------------------------
def nmt_forward(params, src_tokens, tgt_tokens, src_lens):
    L, B = src_tokens.shape
    Lt = tgt_tokens.shape[0]
    H = params['init_b'].shape[1]
    Vt = params['out_w'].shape[1]
    n_steps = Lt - 1
    f32 = jnp.float32

    x = jnp.take(params['enc_embed'], src_tokens, axis=0)                # (L,B,E)
    tgt_x = jnp.take(params['dec_embed'], tgt_tokens[:n_steps], axis=0)  # (n,B,E)

    pos = jnp.arange(L)
    step_mask = (pos[:, None] < src_lens[None, :]).astype(f32)           # (L,B)
    step_mask3 = step_mask[:, :, None]                                   # (L,B,1)

    # Trace-time weight packing for the fused per-step recurrent matmuls.
    w_blk = jnp.zeros((2 * H, 8 * H), BF16)
    w_blk = (w_blk.at[:H, :4 * H].set(params['enc_whh_f'])
                  .at[H:, 4 * H:].set(params['enc_whh_r']))
    w_ha = jnp.concatenate([params['dec_whh'], params['dec_wih_a']], axis=0)  # (2H,4H)
    att_w = jnp.concatenate([params['att_wh'], params['att_wc']], axis=0)     # (2H,H)

    vmem = pl.BlockSpec(memory_space=pltpu.MemorySpace.VMEM)

    # ---------------- encoder ----------------
    enc_in = (x, step_mask3,
              params['enc_wih_f'], params['enc_wih_r'],
              params['enc_b_f'], params['enc_b_r'],
              w_blk,
              params['kv_wf'], params['kv_wr'], params['kv_b'],
              params['init_wf'], params['init_wr'], params['init_b'])
    enc_scratch_sd = [
        ((L, B, 4 * H), f32),   # gx_f
        ((L, B, 4 * H), f32),   # gx_r
        ((L, B, H), f32),       # out_f
        ((L, B, H), f32),       # out_r
        ((B, 2 * H), f32),      # h_both = [hf | hr]
        ((B, H), f32),          # cf
        ((B, H), f32),          # cr
    ]
    enc_out_shape = (jax.ShapeDtypeStruct((L, B, H), f32),   # key
                     jax.ShapeDtypeStruct((L, B, H), f32),   # value
                     jax.ShapeDtypeStruct((B, H), f32),      # h0
                     jax.ShapeDtypeStruct((B, H), f32))      # c0
    key, val, h0, c0 = pl.pallas_call(
        encoder_kernel,
        out_shape=enc_out_shape,
        in_specs=[vmem] * len(enc_in),
        out_specs=(vmem,) * 4,
        scratch_shapes=[pltpu.VMEM(s, d) for s, d in enc_scratch_sd],
        compiler_params=pltpu.CompilerParams(
            vmem_limit_bytes=_vmem_limit_bytes(enc_in, enc_out_shape,
                                               enc_scratch_sd)),
    )(*enc_in)

    # ---------------- decoder ----------------
    dec_in = (tgt_x, key, val, step_mask,
              params['dec_wih_x'], w_ha, params['dec_b'], att_w,
              h0, c0)
    dec_scratch_sd = [
        ((n_steps, B, 4 * H), f32),   # gx_s
        ((B, 2 * H), f32),            # ah = [h | attn]
        ((B, H), f32),                # c
    ]
    dec_out_shape = jax.ShapeDtypeStruct((n_steps, B, H), f32)
    att_seq = pl.pallas_call(
        decoder_kernel,
        out_shape=dec_out_shape,
        in_specs=[vmem] * len(dec_in),
        out_specs=vmem,
        scratch_shapes=[pltpu.VMEM(s, d) for s, d in dec_scratch_sd],
        compiler_params=pltpu.CompilerParams(
            vmem_limit_bytes=_vmem_limit_bytes(dec_in, [dec_out_shape],
                                               dec_scratch_sd)),
    )(*dec_in)

    # ---------------- vocab projection ----------------
    M = n_steps * B
    att_flat = att_seq.reshape(M, H)
    # lane-dense Vt tiles; larger tiles at realistic vocab sizes cut per-step
    # pipeline overhead.
    TN = next((c for c in (1024, 512, 256, 128) if Vt % c == 0), Vt)
    scores2d = pl.pallas_call(
        output_proj_kernel,
        out_shape=jax.ShapeDtypeStruct((M, Vt), f32),
        grid=(Vt // TN,),
        in_specs=[
            pl.BlockSpec((M, H), lambda j: (0, 0)),
            pl.BlockSpec((H, TN), lambda j: (0, j)),
            pl.BlockSpec((1, TN), lambda j: (0, j)),
        ],
        out_specs=pl.BlockSpec((M, TN), lambda j: (0, j)),
        compiler_params=pltpu.CompilerParams(dimension_semantics=("parallel",)),
    )(att_flat, params['out_w'], params['out_b'])

    scores = scores2d.reshape(n_steps, B, Vt)
    return scores, tgt_tokens


# ----------------------------------------------------------------------------
# Pure-JAX f32 reference (mirrors the PyTorch math) for a correctness check.
# bf16 kernel weights are upcast so both paths use the same weight values.
# ----------------------------------------------------------------------------
def reference_forward(params, src_tokens, tgt_tokens, src_lens):
    P = {k: (v.astype(jnp.float32) if v.dtype == BF16 else v)
         for k, v in params.items()}
    L, B = src_tokens.shape
    Lt = tgt_tokens.shape[0]
    H = P['init_b'].shape[1]
    x = P['enc_embed'][src_tokens]
    tgt_x = P['dec_embed'][tgt_tokens]
    pos = jnp.arange(L)
    m = (pos[:, None] < src_lens[None, :]).astype(jnp.float32)    # (L, B)

    def lstm_step(x_t, h, c, wih, whh, b):
        gates = x_t @ wih + h @ whh + b
        i, f, g, o = jnp.split(gates, 4, axis=1)
        c_new = jax.nn.sigmoid(f) * c + jax.nn.sigmoid(i) * jnp.tanh(g)
        h_new = jax.nn.sigmoid(o) * jnp.tanh(c_new)
        return h_new, c_new

    hf = jnp.zeros((B, H)); cf = jnp.zeros((B, H)); out_f = []
    for t in range(L):
        hn, cn = lstm_step(x[t], hf, cf, P['enc_wih_f'], P['enc_whh_f'],
                           P['enc_b_f'][0])
        mt = m[t][:, None]
        hf = mt * hn + (1 - mt) * hf
        cf = mt * cn + (1 - mt) * cf
        out_f.append(hf * mt)
    hr = jnp.zeros((B, H)); cr = jnp.zeros((B, H)); out_r = [None] * L
    for t in range(L - 1, -1, -1):
        hn, cn = lstm_step(x[t], hr, cr, P['enc_wih_r'], P['enc_whh_r'],
                           P['enc_b_r'][0])
        mt = m[t][:, None]
        hr = mt * hn + (1 - mt) * hr
        cr = mt * cn + (1 - mt) * cr
        out_r[t] = hr * mt

    enc = jnp.concatenate([jnp.stack(out_f), jnp.stack(out_r)], axis=-1)  # (L,B,2H)
    init_w = jnp.concatenate([P['init_wf'], P['init_wr']], axis=0)
    dcell = jnp.concatenate([cf, cr], axis=1) @ init_w + P['init_b'][0]
    h, c = jnp.tanh(dcell), dcell

    enc_p = enc.transpose(1, 0, 2)                                        # (B,L,2H)
    kv_w = jnp.concatenate([P['kv_wf'], P['kv_wr']], axis=0)              # (2H,2H)
    key = enc_p @ kv_w[:, :H] + P['kv_b'][0, :H]
    val = enc_p @ kv_w[:, H:] + P['kv_b'][0, H:]

    dec_wih = jnp.concatenate([P['dec_wih_x'], P['dec_wih_a']], axis=0)
    att_w = jnp.concatenate([P['att_wh'], P['att_wc']], axis=0)           # (2H,H)

    attn = jnp.zeros((B, H))
    att_mask = m.T
    scores = []
    for t in range(Lt - 1):
        inp = jnp.concatenate([tgt_x[t], attn], axis=1)
        hn, cn = lstm_step(inp, h, c, dec_wih, P['dec_whh'], P['dec_b'][0])
        s = jnp.einsum('bh,blh->bl', hn, key)
        w = jax.nn.softmax(s * att_mask, axis=-1)
        ctx = jnp.einsum('bl,blh->bh', w, val)
        att = jnp.tanh(jnp.concatenate([hn, ctx], axis=1) @ att_w)
        out = att @ P['out_w'] + P['out_b'][0]
        scores.append(out)
        attn, h, c = ctx, hn, cn
    return jnp.stack(scores)


if __name__ == "__main__":
    # small but sublane/lane-aligned shapes: B multiple of 8; E, H, Vt
    # multiples of 128 (E padded to a lane multiple per the perf review).
    B, L, Lt = 8, 8, 8
    E, H = 128, 128
    V_src, V_tgt = 48, 256

    key = jax.random.PRNGKey(0)
    k_p, k_src, k_tgt = jax.random.split(key, 3)
    params = init_params(k_p, V_src, V_tgt, E, H)

    # source: variable lengths (descending, as pack_padded_sequence expects),
    # padded with <pad>=0; target wrapped by <s>=1 ... </s>=2.
    src_lens = jnp.array([8, 8, 7, 7, 6, 5, 4, 3], dtype=jnp.int32)
    src_tokens = jax.random.randint(k_src, (L, B), 3, V_src).astype(jnp.int32)
    pos = jnp.arange(L)[:, None]
    src_tokens = jnp.where(pos < src_lens[None, :], src_tokens, PAD)
    tgt_tokens = jax.random.randint(k_tgt, (Lt, B), 3, V_tgt).astype(jnp.int32)
    tgt_tokens = tgt_tokens.at[0].set(BOS).at[Lt - 1].set(EOS)

    scores, padded_tgt = nmt_forward(params, src_tokens, tgt_tokens, src_lens)
    scores = jax.block_until_ready(scores)

    ref = reference_forward(params, src_tokens, tgt_tokens, src_lens)
    # kernels use bf16 weights / bf16 matmul inputs (f32 accumulation) vs an
    # all-f32 reference -> tolerances loosened accordingly.
    np.testing.assert_allclose(np.asarray(scores), np.asarray(ref),
                               rtol=5e-2, atol=5e-2)
    assert scores.shape == (Lt - 1, B, V_tgt)
    assert padded_tgt.shape == (Lt, B)
    print("KERNEL_OK")
</pallas_src>

<mosaic_0001>
module attributes {stable_mosaic.version = 11 : i64} {
  func.func @encoder_kernel(%arg0: memref<8x8x128xf32, #tpu.memory_space<vmem>>, %arg1: memref<8x8x1xf32, #tpu.memory_space<vmem>>, %arg2: memref<128x512xbf16, #tpu.memory_space<vmem>>, %arg3: memref<128x512xbf16, #tpu.memory_space<vmem>>, %arg4: memref<1x512xf32, #tpu.memory_space<vmem>>, %arg5: memref<1x512xf32, #tpu.memory_space<vmem>>, %arg6: memref<256x1024xbf16, #tpu.memory_space<vmem>>, %arg7: memref<128x256xbf16, #tpu.memory_space<vmem>>, %arg8: memref<128x256xbf16, #tpu.memory_space<vmem>>, %arg9: memref<1x256xf32, #tpu.memory_space<vmem>>, %arg10: memref<128x128xbf16, #tpu.memory_space<vmem>>, %arg11: memref<128x128xbf16, #tpu.memory_space<vmem>>, %arg12: memref<1x128xf32, #tpu.memory_space<vmem>>, %arg13: memref<8x8x128xf32, #tpu.memory_space<vmem>>, %arg14: memref<8x8x128xf32, #tpu.memory_space<vmem>>, %arg15: memref<8x128xf32, #tpu.memory_space<vmem>>, %arg16: memref<8x128xf32, #tpu.memory_space<vmem>>, %arg17: memref<8x8x512xf32, #tpu.memory_space<vmem>>, %arg18: memref<8x8x512xf32, #tpu.memory_space<vmem>>, %arg19: memref<8x8x128xf32, #tpu.memory_space<vmem>>, %arg20: memref<8x8x128xf32, #tpu.memory_space<vmem>>, %arg21: memref<8x256xf32, #tpu.memory_space<vmem>>, %arg22: memref<8x128xf32, #tpu.memory_space<vmem>>, %arg23: memref<8x128xf32, #tpu.memory_space<vmem>>) attributes {dimension_semantics = [], scalar_prefetch = 0 : i64, scratch_operands = 7 : i64, tpu.core_type = #tpu.core_type<tc>} {
    %c0 = arith.constant 0 : index
    %c0_0 = arith.constant 0 : index
    %c0_1 = arith.constant 0 : index
    %0 = vector.load %arg0[%c0, %c0_0, %c0_1] : memref<8x8x128xf32, #tpu.memory_space<vmem>>, vector<8x8x128xf32>
    %1 = vector.shape_cast %0 : vector<8x8x128xf32> to vector<64x128xf32>
    %2 = arith.truncf %1 : vector<64x128xf32> to vector<64x128xbf16>
    %c0_2 = arith.constant 0 : index
    %c0_3 = arith.constant 0 : index
    %3 = vector.load %arg2[%c0_2, %c0_3] : memref<128x512xbf16, #tpu.memory_space<vmem>>, vector<128x512xbf16>
    %cst = arith.constant dense<0.000000e+00> : vector<64x512xf32>
    %4 = tpu.matmul %2, %3, %cst {dimension_numbers = #tpu.dot_dimension_numbers<[1], [0], [0], [1], [0, 0, 1, 1], [], []>} : vector<64x128xbf16>, vector<128x512xbf16>, vector<64x512xf32> -> vector<64x512xf32>
    %c0_4 = arith.constant 0 : index
    %c0_5 = arith.constant 0 : index
    %5 = vector.load %arg4[%c0_4, %c0_5] : memref<1x512xf32, #tpu.memory_space<vmem>>, vector<1x512xf32>
    %6 = vector.broadcast %5 : vector<1x512xf32> to vector<64x512xf32>
    %7 = arith.addf %4, %6 : vector<64x512xf32>
    %8 = vector.shape_cast %7 : vector<64x512xf32> to vector<8x8x512xf32>
    %c0_6 = arith.constant 0 : index
    %c0_7 = arith.constant 0 : index
    %c0_8 = arith.constant 0 : index
    %9 = vector.load %arg17[%c0_6, %c0_7, %c0_8] : memref<8x8x512xf32, #tpu.memory_space<vmem>>, vector<8x8x512xf32>
    tpu.vector_store %arg17[%c0_6, %c0_7, %c0_8], %8 {strides = array<i32>} : memref<8x8x512xf32, #tpu.memory_space<vmem>>, vector<8x8x512xf32>,
    %c0_9 = arith.constant 0 : index
    %c0_10 = arith.constant 0 : index
    %10 = vector.load %arg3[%c0_9, %c0_10] : memref<128x512xbf16, #tpu.memory_space<vmem>>, vector<128x512xbf16>
    %cst_11 = arith.constant dense<0.000000e+00> : vector<64x512xf32>
    %11 = tpu.matmul %2, %10, %cst_11 {dimension_numbers = #tpu.dot_dimension_numbers<[1], [0], [0], [1], [0, 0, 1, 1], [], []>} : vector<64x128xbf16>, vector<128x512xbf16>, vector<64x512xf32> -> vector<64x512xf32>
    %c0_12 = arith.constant 0 : index
    %c0_13 = arith.constant 0 : index
    %12 = vector.load %arg5[%c0_12, %c0_13] : memref<1x512xf32, #tpu.memory_space<vmem>>, vector<1x512xf32>
    %13 = vector.broadcast %12 : vector<1x512xf32> to vector<64x512xf32>
    %14 = arith.addf %11, %13 : vector<64x512xf32>
    %15 = vector.shape_cast %14 : vector<64x512xf32> to vector<8x8x512xf32>
    %c0_14 = arith.constant 0 : index
    %c0_15 = arith.constant 0 : index
    %c0_16 = arith.constant 0 : index
    %16 = vector.load %arg18[%c0_14, %c0_15, %c0_16] : memref<8x8x512xf32, #tpu.memory_space<vmem>>, vector<8x8x512xf32>
    tpu.vector_store %arg18[%c0_14, %c0_15, %c0_16], %15 {strides = array<i32>} : memref<8x8x512xf32, #tpu.memory_space<vmem>>, vector<8x8x512xf32>,
    %cst_17 = arith.constant 0.000000e+00 : f32
    %17 = vector.broadcast %cst_17 : f32 to vector<8x256xf32>
    %c0_18 = arith.constant 0 : index
    %c0_19 = arith.constant 0 : index
    %18 = vector.load %arg21[%c0_18, %c0_19] : memref<8x256xf32, #tpu.memory_space<vmem>>, vector<8x256xf32>
    tpu.vector_store %arg21[%c0_18, %c0_19], %17 {strides = array<i32>} : memref<8x256xf32, #tpu.memory_space<vmem>>, vector<8x256xf32>,
    %cst_20 = arith.constant 0.000000e+00 : f32
    %19 = vector.broadcast %cst_20 : f32 to vector<8x128xf32>
    %c0_21 = arith.constant 0 : index
    %c0_22 = arith.constant 0 : index
    %20 = vector.load %arg22[%c0_21, %c0_22] : memref<8x128xf32, #tpu.memory_space<vmem>>, vector<8x128xf32>
    tpu.vector_store %arg22[%c0_21, %c0_22], %19 {strides = array<i32>} : memref<8x128xf32, #tpu.memory_space<vmem>>, vector<8x128xf32>,
    %cst_23 = arith.constant 0.000000e+00 : f32
    %21 = vector.broadcast %cst_23 : f32 to vector<8x128xf32>
    %c0_24 = arith.constant 0 : index
    %c0_25 = arith.constant 0 : index
    %22 = vector.load %arg23[%c0_24, %c0_25] : memref<8x128xf32, #tpu.memory_space<vmem>>, vector<8x128xf32>
    tpu.vector_store %arg23[%c0_24, %c0_25], %21 {strides = array<i32>} : memref<8x128xf32, #tpu.memory_space<vmem>>, vector<8x128xf32>,
    %c0_i32 = arith.constant 0 : i32
    %c0_26 = arith.constant 0 : index
    %c0_27 = arith.constant 0 : index
    %23 = vector.load %arg21[%c0_26, %c0_27] : memref<8x256xf32, #tpu.memory_space<vmem>>, vector<8x256xf32>
    %24 = arith.truncf %23 : vector<8x256xf32> to vector<8x256xbf16>
    %c0_28 = arith.constant 0 : index
    %c0_29 = arith.constant 0 : index
    %25 = vector.load %arg6[%c0_28, %c0_29] : memref<256x1024xbf16, #tpu.memory_space<vmem>>, vector<256x1024xbf16>
    %cst_30 = arith.constant dense<0.000000e+00> : vector<8x1024xf32>
    %26 = tpu.matmul %24, %25, %cst_30 {dimension_numbers = #tpu.dot_dimension_numbers<[1], [0], [0], [1], [0, 0, 1, 1], [], []>} : vector<8x256xbf16>, vector<256x1024xbf16>, vector<8x1024xf32> -> vector<8x1024xf32>
    %c7_i32 = arith.constant 7 : i32
    %27 = arith.subi %c7_i32, %c0_i32 : i32
    %28 = arith.index_cast %c0_i32 : i32 to index
    %c0_31 = arith.constant 0 : index
    %c0_32 = arith.constant 0 : index
    %29 = vector.load %arg1[%28, %c0_31, %c0_32] : memref<8x8x1xf32, #tpu.memory_space<vmem>>, vector<1x8x1xf32>
    %30 = vector.shape_cast %29 : vector<1x8x1xf32> to vector<8x1xf32>
    %31 = arith.index_cast %27 : i32 to index
    %c0_33 = arith.constant 0 : index
    %c0_34 = arith.constant 0 : index
    %32 = vector.load %arg1[%31, %c0_33, %c0_34] : memref<8x8x1xf32, #tpu.memory_space<vmem>>, vector<1x8x1xf32>
    %33 = vector.shape_cast %32 : vector<1x8x1xf32> to vector<8x1xf32>
    %34 = arith.index_cast %c0_i32 : i32 to index
    %c0_35 = arith.constant 0 : index
    %c0_36 = arith.constant 0 : index
    %35 = vector.load %arg17[%34, %c0_35, %c0_36] : memref<8x8x512xf32, #tpu.memory_space<vmem>>, vector<1x8x512xf32>
    %36 = vector.shape_cast %35 : vector<1x8x512xf32> to vector<8x512xf32>
    %37 = vector.extract_strided_slice %26 {offsets = [0, 0], sizes = [8, 512], strides = [1, 1]} : vector<8x1024xf32> to vector<8x512xf32>
    %38 = arith.addf %36, %37 : vector<8x512xf32>
    %39 = arith.index_cast %27 : i32 to index
    %c0_37 = arith.constant 0 : index
    %c0_38 = arith.constant 0 : index
    %40 = vector.load %arg18[%39, %c0_37, %c0_38] : memref<8x8x512xf32, #tpu.memory_space<vmem>>, vector<1x8x512xf32>
    %41 = vector.shape_cast %40 : vector<1x8x512xf32> to vector<8x512xf32>
    %42 = vector.extract_strided_slice %26 {offsets = [0, 512], sizes = [8, 512], strides = [1, 1]} : vector<8x1024xf32> to vector<8x512xf32>
    %43 = arith.addf %41, %42 : vector<8x512xf32>
    %c0_39 = arith.constant 0 : index
    %c0_40 = arith.constant 0 : index
    %44 = vector.load %arg22[%c0_39, %c0_40] : memref<8x128xf32, #tpu.memory_space<vmem>>, vector<8x128xf32>
    %45 = vector.extract_strided_slice %38 {offsets = [0, 0], sizes = [8, 128], strides = [1, 1]} : vector<8x512xf32> to vector<8x128xf32>
    %46 = arith.negf %45 : vector<8x128xf32>
    %47 = math.exp %46 : vector<8x128xf32>
    %cst_41 = arith.constant 1.000000e+00 : f32
    %48 = vector.broadcast %cst_41 : f32 to vector<8x128xf32>
    %49 = arith.addf %48, %47 : vector<8x128xf32>
    %50 = arith.divf %48, %49 : vector<8x128xf32>
    %51 = vector.extract_strided_slice %38 {offsets = [0, 128], sizes = [8, 128], strides = [1, 1]} : vector<8x512xf32> to vector<8x128xf32>
    %52 = arith.negf %51 : vector<8x128xf32>
    %53 = math.exp %52 : vector<8x128xf32>
    %cst_42 = arith.constant 1.000000e+00 : f32
    %54 = vector.broadcast %cst_42 : f32 to vector<8x128xf32>
    %55 = arith.addf %54, %53 : vector<8x128xf32>
    %56 = arith.divf %54, %55 : vector<8x128xf32>
    %57 = vector.extract_strided_slice %38 {offsets = [0, 256], sizes = [8, 128], strides = [1, 1]} : vector<8x512xf32> to vector<8x128xf32>
    %58 = math.tanh %57 : vector<8x128xf32>
    %59 = vector.extract_strided_slice %38 {offsets = [0, 384], sizes = [8, 128], strides = [1, 1]} : vector<8x512xf32> to vector<8x128xf32>
    %60 = arith.negf %59 : vector<8x128xf32>
    %61 = math.exp %60 : vector<8x128xf32>
    %cst_43 = arith.constant 1.000000e+00 : f32
    %62 = vector.broadcast %cst_43 : f32 to vector<8x128xf32>
    %63 = arith.addf %62, %61 : vector<8x128xf32>
    %64 = arith.divf %62, %63 : vector<8x128xf32>
    %65 = arith.mulf %56, %44 : vector<8x128xf32>
    %66 = arith.mulf %50, %58 : vector<8x128xf32>
    %67 = arith.addf %65, %66 : vector<8x128xf32>
    %68 = math.tanh %67 : vector<8x128xf32>
    %69 = arith.mulf %64, %68 : vector<8x128xf32>
    %c0_44 = arith.constant 0 : index
    %c0_45 = arith.constant 0 : index
    %70 = vector.load %arg23[%c0_44, %c0_45] : memref<8x128xf32, #tpu.memory_space<vmem>>, vector<8x128xf32>
    %71 = vector.extract_strided_slice %43 {offsets = [0, 0], sizes = [8, 128], strides = [1, 1]} : vector<8x512xf32> to vector<8x128xf32>
    %72 = arith.negf %71 : vector<8x128xf32>
    %73 = math.exp %72 : vector<8x128xf32>
    %cst_46 = arith.constant 1.000000e+00 : f32
    %74 = vector.broadcast %cst_46 : f32 to vector<8x128xf32>
    %75 = arith.addf %74, %73 : vector<8x128xf32>
    %76 = arith.divf %74, %75 : vector<8x128xf32>
    %77 = vector.extract_strided_slice %43 {offsets = [0, 128], sizes = [8, 128], strides = [1, 1]} : vector<8x512xf32> to vector<8x128xf32>
    %78 = arith.negf %77 : vector<8x128xf32>
    %79 = math.exp %78 : vector<8x128xf32>
    %cst_47 = arith.constant 1.000000e+00 : f32
    %80 = vector.broadcast %cst_47 : f32 to vector<8x128xf32>
    %81 = arith.addf %80, %79 : vector<8x128xf32>
    %82 = arith.divf %80, %81 : vector<8x128xf32>
    %83 = vector.extract_strided_slice %43 {offsets = [0, 256], sizes = [8, 128], strides = [1, 1]} : vector<8x512xf32> to vector<8x128xf32>
    %84 = math.tanh %83 : vector<8x128xf32>
    %85 = vector.extract_strided_slice %43 {offsets = [0, 384], sizes = [8, 128], strides = [1, 1]} : vector<8x512xf32> to vector<8x128xf32>
    %86 = arith.negf %85 : vector<8x128xf32>
    %87 = math.exp %86 : vector<8x128xf32>
    %cst_48 = arith.constant 1.000000e+00 : f32
    %88 = vector.broadcast %cst_48 : f32 to vector<8x128xf32>
    %89 = arith.addf %88, %87 : vector<8x128xf32>
    %90 = arith.divf %88, %89 : vector<8x128xf32>
    %91 = arith.mulf %82, %70 : vector<8x128xf32>
    %92 = arith.mulf %76, %84 : vector<8x128xf32>
    %93 = arith.addf %91, %92 : vector<8x128xf32>
    %94 = math.tanh %93 : vector<8x128xf32>
    %95 = arith.mulf %90, %94 : vector<8x128xf32>
    %cst_49 = arith.constant 0.000000e+00 : f32
    %96 = vector.broadcast %cst_49 : f32 to vector<8x1xf32>
    %97 = arith.cmpf ogt, %30, %96 : vector<8x1xf32>
    %c0_50 = arith.constant 0 : index
    %c0_51 = arith.constant 0 : index
    %98 = vector.load %arg21[%c0_50, %c0_51] : memref<8x256xf32, #tpu.memory_space<vmem>>, vector<8x128xf32>
    %99 = vector.shape_cast %97 : vector<8x1xi1> to vector<8x1xi1>
    %100 = vector.broadcast %99 : vector<8x1xi1> to vector<8x128xi1>
    %101 = arith.select %100, %69, %98 : vector<8x128xi1>, vector<8x128xf32>
    %cst_52 = arith.constant 0.000000e+00 : f32
    %102 = vector.broadcast %cst_52 : f32 to vector<8x1xf32>
    %103 = arith.cmpf ogt, %33, %102 : vector<8x1xf32>
    %c0_53 = arith.constant 0 : index
    %c128 = arith.constant 128 : index
    %104 = vector.load %arg21[%c0_53, %c128] : memref<8x256xf32, #tpu.memory_space<vmem>>, vector<8x128xf32>
    %105 = vector.shape_cast %103 : vector<8x1xi1> to vector<8x1xi1>
    %106 = vector.broadcast %105 : vector<8x1xi1> to vector<8x128xi1>
    %107 = arith.select %106, %95, %104 : vector<8x128xi1>, vector<8x128xf32>
    %cst_54 = arith.constant 0.000000e+00 : f32
    %108 = vector.broadcast %cst_54 : f32 to vector<8x1xf32>
    %109 = arith.cmpf ogt, %30, %108 : vector<8x1xf32>
    %c0_55 = arith.constant 0 : index
    %c0_56 = arith.constant 0 : index
    %110 = vector.load %arg22[%c0_55, %c0_56] : memref<8x128xf32, #tpu.memory_space<vmem>>, vector<8x128xf32>
    %111 = vector.shape_cast %109 : vector<8x1xi1> to vector<8x1xi1>
    %112 = vector.broadcast %111 : vector<8x1xi1> to vector<8x128xi1>
    %113 = arith.select %112, %67, %110 : vector<8x128xi1>, vector<8x128xf32>
    %c0_57 = arith.constant 0 : index
    %c0_58 = arith.constant 0 : index
    %114 = vector.load %arg22[%c0_57, %c0_58] : memref<8x128xf32, #tpu.memory_space<vmem>>, vector<8x128xf32>
    tpu.vector_store %arg22[%c0_57, %c0_58], %113 {strides = array<i32>} : memref<8x128xf32, #tpu.memory_space<vmem>>, vector<8x128xf32>,
    %cst_59 = arith.constant 0.000000e+00 : f32
    %115 = vector.broadcast %cst_59 : f32 to vector<8x1xf32>
    %116 = arith.cmpf ogt, %33, %115 : vector<8x1xf32>
    %c0_60 = arith.constant 0 : index
    %c0_61 = arith.constant 0 : index
    %117 = vector.load %arg23[%c0_60, %c0_61] : memref<8x128xf32, #tpu.memory_space<vmem>>, vector<8x128xf32>
    %118 = vector.shape_cast %116 : vector<8x1xi1> to vector<8x1xi1>
    %119 = vector.broadcast %118 : vector<8x1xi1> to vector<8x128xi1>
    %120 = arith.select %119, %93, %117 : vector<8x128xi1>, vector<8x128xf32>
    %c0_62 = arith.constant 0 : index
    %c0_63 = arith.constant 0 : index
    %121 = vector.load %arg23[%c0_62, %c0_63] : memref<8x128xf32, #tpu.memory_space<vmem>>, vector<8x128xf32>
    tpu.vector_store %arg23[%c0_62, %c0_63], %120 {strides = array<i32>} : memref<8x128xf32, #tpu.memory_space<vmem>>, vector<8x128xf32>,
    %c0_64 = arith.constant 0 : index
    %c0_65 = arith.constant 0 : index
    %122 = vector.load %arg21[%c0_64, %c0_65] : memref<8x256xf32, #tpu.memory_space<vmem>>, vector<8x128xf32>
    tpu.vector_store %arg21[%c0_64, %c0_65], %101 {strides = array<i32>} : memref<8x256xf32, #tpu.memory_space<vmem>>, vector<8x128xf32>,
    %c0_66 = arith.constant 0 : index
    %c128_67 = arith.constant 128 : index
    %123 = vector.load %arg21[%c0_66, %c128_67] : memref<8x256xf32, #tpu.memory_space<vmem>>, vector<8x128xf32>
    tpu.vector_store %arg21[%c0_66, %c128_67], %107 {strides = array<i32>} : memref<8x256xf32, #tpu.memory_space<vmem>>, vector<8x128xf32>,
    %124 = vector.broadcast %30 : vector<8x1xf32> to vector<8x128xf32>
    %125 = arith.mulf %101, %124 : vector<8x128xf32>
    %126 = arith.index_cast %c0_i32 : i32 to index
    %c0_68 = arith.constant 0 : index
    %c0_69 = arith.constant 0 : index
    %127 = vector.load %arg19[%126, %c0_68, %c0_69] : memref<8x8x128xf32, #tpu.memory_space<vmem>>, vector<1x8x128xf32>
    %128 = vector.shape_cast %127 : vector<1x8x128xf32> to vector<8x128xf32>
    %129 = vector.shape_cast %125 : vector<8x128xf32> to vector<1x8x128xf32>
    tpu.vector_store %arg19[%126, %c0_68, %c0_69], %129 {strides = array<i32>} : memref<8x8x128xf32, #tpu.memory_space<vmem>>, vector<1x8x128xf32>,
    %130 = vector.broadcast %33 : vector<8x1xf32> to vector<8x128xf32>
    %131 = arith.mulf %107, %130 : vector<8x128xf32>
    %132 = arith.index_cast %27 : i32 to index
    %c0_70 = arith.constant 0 : index
    %c0_71 = arith.constant 0 : index
    %133 = vector.load %arg20[%132, %c0_70, %c0_71] : memref<8x8x128xf32, #tpu.memory_space<vmem>>, vector<1x8x128xf32>
    %134 = vector.shape_cast %133 : vector<1x8x128xf32> to vector<8x128xf32>
    %135 = vector.shape_cast %131 : vector<8x128xf32> to vector<1x8x128xf32>
    tpu.vector_store %arg20[%132, %c0_70, %c0_71], %135 {strides = array<i32>} : memref<8x8x128xf32, #tpu.memory_space<vmem>>, vector<1x8x128xf32>,
    %c1_i32 = arith.constant 1 : i32
    %c0_72 = arith.constant 0 : index
    %c0_73 = arith.constant 0 : index
    %136 = vector.load %arg21[%c0_72, %c0_73] : memref<8x256xf32, #tpu.memory_space<vmem>>, vector<8x256xf32>
    %137 = arith.truncf %136 : vector<8x256xf32> to vector<8x256xbf16>
    %c0_74 = arith.constant 0 : index
    %c0_75 = arith.constant 0 : index
    %138 = vector.load %arg6[%c0_74, %c0_75] : memref<256x1024xbf16, #tpu.memory_space<vmem>>, vector<256x1024xbf16>
    %cst_76 = arith.constant dense<0.000000e+00> : vector<8x1024xf32>
    %139 = tpu.matmul %137, %138, %cst_76 {dimension_numbers = #tpu.dot_dimension_numbers<[1], [0], [0], [1], [0, 0, 1, 1], [], []>} : vector<8x256xbf16>, vector<256x1024xbf16>, vector<8x1024xf32> -> vector<8x1024xf32>
    %c7_i32_77 = arith.constant 7 : i32
    %140 = arith.subi %c7_i32_77, %c1_i32 : i32
    %141 = arith.index_cast %c1_i32 : i32 to index
    %c0_78 = arith.constant 0 : index
    %c0_79 = arith.constant 0 : index
    %142 = vector.load %arg1[%141, %c0_78, %c0_79] : memref<8x8x1xf32, #tpu.memory_space<vmem>>, vector<1x8x1xf32>
    %143 = vector.shape_cast %142 : vector<1x8x1xf32> to vector<8x1xf32>
    %144 = arith.index_cast %140 : i32 to index
    %c0_80 = arith.constant 0 : index
    %c0_81 = arith.constant 0 : index
    %145 = vector.load %arg1[%144, %c0_80, %c0_81] : memref<8x8x1xf32, #tpu.memory_space<vmem>>, vector<1x8x1xf32>
    %146 = vector.shape_cast %145 : vector<1x8x1xf32> to vector<8x1xf32>
    %147 = arith.index_cast %c1_i32 : i32 to index
    %c0_82 = arith.constant 0 : index
    %c0_83 = arith.constant 0 : index
    %148 = vector.load %arg17[%147, %c0_82, %c0_83] : memref<8x8x512xf32, #tpu.memory_space<vmem>>, vector<1x8x512xf32>
    %149 = vector.shape_cast %148 : vector<1x8x512xf32> to vector<8x512xf32>
    %150 = vector.extract_strided_slice %139 {offsets = [0, 0], sizes = [8, 512], strides = [1, 1]} : vector<8x1024xf32> to vector<8x512xf32>
    %151 = arith.addf %149, %150 : vector<8x512xf32>
    %152 = arith.index_cast %140 : i32 to index
    %c0_84 = arith.constant 0 : index
    %c0_85 = arith.constant 0 : index
    %153 = vector.load %arg18[%152, %c0_84, %c0_85] : memref<8x8x512xf32, #tpu.memory_space<vmem>>, vector<1x8x512xf32>
    %154 = vector.shape_cast %153 : vector<1x8x512xf32> to vector<8x512xf32>
    %155 = vector.extract_strided_slice %139 {offsets = [0, 512], sizes = [8, 512], strides = [1, 1]} : vector<8x1024xf32> to vector<8x512xf32>
    %156 = arith.addf %154, %155 : vector<8x512xf32>
    %c0_86 = arith.constant 0 : index
    %c0_87 = arith.constant 0 : index
    %157 = vector.load %arg22[%c0_86, %c0_87] : memref<8x128xf32, #tpu.memory_space<vmem>>, vector<8x128xf32>
    %158 = vector.extract_strided_slice %151 {offsets = [0, 0], sizes = [8, 128], strides = [1, 1]} : vector<8x512xf32> to vector<8x128xf32>
    %159 = arith.negf %158 : vector<8x128xf32>
    %160 = math.exp %159 : vector<8x128xf32>
    %cst_88 = arith.constant 1.000000e+00 : f32
    %161 = vector.broadcast %cst_88 : f32 to vector<8x128xf32>
    %162 = arith.addf %161, %160 : vector<8x128xf32>
    %163 = arith.divf %161, %162 : vector<8x128xf32>
    %164 = vector.extract_strided_slice %151 {offsets = [0, 128], sizes = [8, 128], strides = [1, 1]} : vector<8x512xf32> to vector<8x128xf32>
    %165 = arith.negf %164 : vector<8x128xf32>
    %166 = math.exp %165 : vector<8x128xf32>
    %cst_89 = arith.constant 1.000000e+00 : f32
    %167 = vector.broadcast %cst_89 : f32 to vector<8x128xf32>
    %168 = arith.addf %167, %166 : vector<8x128xf32>
    %169 = arith.divf %167, %168 : vector<8x128xf32>
    %170 = vector.extract_strided_slice %151 {offsets = [0, 256], sizes = [8, 128], strides = [1, 1]} : vector<8x512xf32> to vector<8x128xf32>
    %171 = math.tanh %170 : vector<8x128xf32>
    %172 = vector.extract_strided_slice %151 {offsets = [0, 384], sizes = [8, 128], strides = [1, 1]} : vector<8x512xf32> to vector<8x128xf32>
    %173 = arith.negf %172 : vector<8x128xf32>
    %174 = math.exp %173 : vector<8x128xf32>
    %cst_90 = arith.constant 1.000000e+00 : f32
    %175 = vector.broadcast %cst_90 : f32 to vector<8x128xf32>
    %176 = arith.addf %175, %174 : vector<8x128xf32>
    %177 = arith.divf %175, %176 : vector<8x128xf32>
    %178 = arith.mulf %169, %157 : vector<8x128xf32>
    %179 = arith.mulf %163, %171 : vector<8x128xf32>
    %180 = arith.addf %178, %179 : vector<8x128xf32>
    %181 = math.tanh %180 : vector<8x128xf32>
    %182 = arith.mulf %177, %181 : vector<8x128xf32>
    %c0_91 = arith.constant 0 : index
    %c0_92 = arith.constant 0 : index
    %183 = vector.load %arg23[%c0_91, %c0_92] : memref<8x128xf32, #tpu.memory_space<vmem>>, vector<8x128xf32>
    %184 = vector.extract_strided_slice %156 {offsets = [0, 0], sizes = [8, 128], strides = [1, 1]} : vector<8x512xf32> to vector<8x128xf32>
    %185 = arith.negf %184 : vector<8x128xf32>
    %186 = math.exp %185 : vector<8x128xf32>
    %cst_93 = arith.constant 1.000000e+00 : f32
    %187 = vector.broadcast %cst_93 : f32 to vector<8x128xf32>
    %188 = arith.addf %187, %186 : vector<8x128xf32>
    %189 = arith.divf %187, %188 : vector<8x128xf32>
    %190 = vector.extract_strided_slice %156 {offsets = [0, 128], sizes = [8, 128], strides = [1, 1]} : vector<8x512xf32> to vector<8x128xf32>
    %191 = arith.negf %190 : vector<8x128xf32>
    %192 = math.exp %191 : vector<8x128xf32>
    %cst_94 = arith.constant 1.000000e+00 : f32
    %193 = vector.broadcast %cst_94 : f32 to vector<8x128xf32>
    %194 = arith.addf %193, %192 : vector<8x128xf32>
    %195 = arith.divf %193, %194 : vector<8x128xf32>
    %196 = vector.extract_strided_slice %156 {offsets = [0, 256], sizes = [8, 128], strides = [1, 1]} : vector<8x512xf32> to vector<8x128xf32>
    %197 = math.tanh %196 : vector<8x128xf32>
    %198 = vector.extract_strided_slice %156 {offsets = [0, 384], sizes = [8, 128], strides = [1, 1]} : vector<8x512xf32> to vector<8x128xf32>
    %199 = arith.negf %198 : vector<8x128xf32>
    %200 = math.exp %199 : vector<8x128xf32>
    %cst_95 = arith.constant 1.000000e+00 : f32
    %201 = vector.broadcast %cst_95 : f32 to vector<8x128xf32>
    %202 = arith.addf %201, %200 : vector<8x128xf32>
    %203 = arith.divf %201, %202 : vector<8x128xf32>
    %204 = arith.mulf %195, %183 : vector<8x128xf32>
    %205 = arith.mulf %189, %197 : vector<8x128xf32>
    %206 = arith.addf %204, %205 : vector<8x128xf32>
    %207 = math.tanh %206 : vector<8x128xf32>
    %208 = arith.mulf %203, %207 : vector<8x128xf32>
    %cst_96 = arith.constant 0.000000e+00 : f32
    %209 = vector.broadcast %cst_96 : f32 to vector<8x1xf32>
    %210 = arith.cmpf ogt, %143, %209 : vector<8x1xf32>
    %c0_97 = arith.constant 0 : index
    %c0_98 = arith.constant 0 : index
    %211 = vector.load %arg21[%c0_97, %c0_98] : memref<8x256xf32, #tpu.memory_space<vmem>>, vector<8x128xf32>
    %212 = vector.shape_cast %210 : vector<8x1xi1> to vector<8x1xi1>
    %213 = vector.broadcast %212 : vector<8x1xi1> to vector<8x128xi1>
    %214 = arith.select %213, %182, %211 : vector<8x128xi1>, vector<8x128xf32>
    %cst_99 = arith.constant 0.000000e+00 : f32
    %215 = vector.broadcast %cst_99 : f32 to vector<8x1xf32>
    %216 = arith.cmpf ogt, %146, %215 : vector<8x1xf32>
    %c0_100 = arith.constant 0 : index
    %c128_101 = arith.constant 128 : index
    %217 = vector.load %arg21[%c0_100, %c128_101] : memref<8x256xf32, #tpu.memory_space<vmem>>, vector<8x128xf32>
    %218 = vector.shape_cast %216 : vector<8x1xi1> to vector<8x1xi1>
    %219 = vector.broadcast %218 : vector<8x1xi1> to vector<8x128xi1>
    %220 = arith.select %219, %208, %217 : vector<8x128xi1>, vector<8x128xf32>
    %cst_102 = arith.constant 0.000000e+00 : f32
    %221 = vector.broadcast %cst_102 : f32 to vector<8x1xf32>
    %222 = arith.cmpf ogt, %143, %221 : vector<8x1xf32>
    %c0_103 = arith.constant 0 : index
    %c0_104 = arith.constant 0 : index
    %223 = vector.load %arg22[%c0_103, %c0_104] : memref<8x128xf32, #tpu.memory_space<vmem>>, vector<8x128xf32>
    %224 = vector.shape_cast %222 : vector<8x1xi1> to vector<8x1xi1>
    %225 = vector.broadcast %224 : vector<8x1xi1> to vector<8x128xi1>
    %226 = arith.select %225, %180, %223 : vector<8x128xi1>, vector<8x128xf32>
    %c0_105 = arith.constant 0 : index
    %c0_106 = arith.constant 0 : index
    %227 = vector.load %arg22[%c0_105, %c0_106] : memref<8x128xf32, #tpu.memory_space<vmem>>, vector<8x128xf32>
    tpu.vector_store %arg22[%c0_105, %c0_106], %226 {strides = array<i32>} : memref<8x128xf32, #tpu.memory_space<vmem>>, vector<8x128xf32>,
    %cst_107 = arith.constant 0.000000e+00 : f32
    %228 = vector.broadcast %cst_107 : f32 to vector<8x1xf32>
    %229 = arith.cmpf ogt, %146, %228 : vector<8x1xf32>
    %c0_108 = arith.constant 0 : index
    %c0_109 = arith.constant 0 : index
    %230 = vector.load %arg23[%c0_108, %c0_109] : memref<8x128xf32, #tpu.memory_space<vmem>>, vector<8x128xf32>
    %231 = vector.shape_cast %229 : vector<8x1xi1> to vector<8x1xi1>
    %232 = vector.broadcast %231 : vector<8x1xi1> to vector<8x128xi1>
    %233 = arith.select %232, %206, %230 : vector<8x128xi1>, vector<8x128xf32>
    %c0_110 = arith.constant 0 : index
    %c0_111 = arith.constant 0 : index
    %234 = vector.load %arg23[%c0_110, %c0_111] : memref<8x128xf32, #tpu.memory_space<vmem>>, vector<8x128xf32>
    tpu.vector_store %arg23[%c0_110, %c0_111], %233 {strides = array<i32>} : memref<8x128xf32, #tpu.memory_space<vmem>>, vector<8x128xf32>,
    %c0_112 = arith.constant 0 : index
    %c0_113 = arith.constant 0 : index
    %235 = vector.load %arg21[%c0_112, %c0_113] : memref<8x256xf32, #tpu.memory_space<vmem>>, vector<8x128xf32>
    tpu.vector_store %arg21[%c0_112, %c0_113], %214 {strides = array<i32>} : memref<8x256xf32, #tpu.memory_space<vmem>>, vector<8x128xf32>,
    %c0_114 = arith.constant 0 : index
    %c128_115 = arith.constant 128 : index
    %236 = vector.load %arg21[%c0_114, %c128_115] : memref<8x256xf32, #tpu.memory_space<vmem>>, vector<8x128xf32>
    tpu.vector_store %arg21[%c0_114, %c128_115], %220 {strides = array<i32>} : memref<8x256xf32, #tpu.memory_space<vmem>>, vector<8x128xf32>,
    %237 = vector.broadcast %143 : vector<8x1xf32> to vector<8x128xf32>
    %238 = arith.mulf %214, %237 : vector<8x128xf32>
    %239 = arith.index_cast %c1_i32 : i32 to index
    %c0_116 = arith.constant 0 : index
    %c0_117 = arith.constant 0 : index
    %240 = vector.load %arg19[%239, %c0_116, %c0_117] : memref<8x8x128xf32, #tpu.memory_space<vmem>>, vector<1x8x128xf32>
    %241 = vector.shape_cast %240 : vector<1x8x128xf32> to vector<8x128xf32>
    %242 = vector.shape_cast %238 : vector<8x128xf32> to vector<1x8x128xf32>
    tpu.vector_store %arg19[%239, %c0_116, %c0_117], %242 {strides = array<i32>} : memref<8x8x128xf32, #tpu.memory_space<vmem>>, vector<1x8x128xf32>,
    %243 = vector.broadcast %146 : vector<8x1xf32> to vector<8x128xf32>
    %244 = arith.mulf %220, %243 : vector<8x128xf32>
    %245 = arith.index_cast %140 : i32 to index
    %c0_118 = arith.constant 0 : index
    %c0_119 = arith.constant 0 : index
    %246 = vector.load %arg20[%245, %c0_118, %c0_119] : memref<8x8x128xf32, #tpu.memory_space<vmem>>, vector<1x8x128xf32>
    %247 = vector.shape_cast %246 : vector<1x8x128xf32> to vector<8x128xf32>
    %248 = vector.shape_cast %244 : vector<8x128xf32> to vector<1x8x128xf32>
    tpu.vector_store %arg20[%245, %c0_118, %c0_119], %248 {strides = array<i32>} : memref<8x8x128xf32, #tpu.memory_space<vmem>>, vector<1x8x128xf32>,
    %c2_i32 = arith.constant 2 : i32
    %c0_120 = arith.constant 0 : index
    %c0_121 = arith.constant 0 : index
    %249 = vector.load %arg21[%c0_120, %c0_121] : memref<8x256xf32, #tpu.memory_space<vmem>>, vector<8x256xf32>
    %250 = arith.truncf %249 : vector<8x256xf32> to vector<8x256xbf16>
    %c0_122 = arith.constant 0 : index
    %c0_123 = arith.constant 0 : index
    %251 = vector.load %arg6[%c0_122, %c0_123] : memref<256x1024xbf16, #tpu.memory_space<vmem>>, vector<256x1024xbf16>
    %cst_124 = arith.constant dense<0.000000e+00> : vector<8x1024xf32>
    %252 = tpu.matmul %250, %251, %cst_124 {dimension_numbers = #tpu.dot_dimension_numbers<[1], [0], [0], [1], [0, 0, 1, 1], [], []>} : vector<8x256xbf16>, vector<256x1024xbf16>, vector<8x1024xf32> -> vector<8x1024xf32>
    %c7_i32_125 = arith.constant 7 : i32
    %253 = arith.subi %c7_i32_125, %c2_i32 : i32
    %254 = arith.index_cast %c2_i32 : i32 to index
    %c0_126 = arith.constant 0 : index
    %c0_127 = arith.constant 0 : index
    %255 = vector.load %arg1[%254, %c0_126, %c0_127] : memref<8x8x1xf32, #tpu.memory_space<vmem>>, vector<1x8x1xf32>
    %256 = vector.shape_cast %255 : vector<1x8x1xf32> to vector<8x1xf32>
    %257 = arith.index_cast %253 : i32 to index
    %c0_128 = arith.constant 0 : index
    %c0_129 = arith.constant 0 : index
    %258 = vector.load %arg1[%257, %c0_128, %c0_129] : memref<8x8x1xf32, #tpu.memory_space<vmem>>, vector<1x8x1xf32>
    %259 = vector.shape_cast %258 : vector<1x8x1xf32> to vector<8x1xf32>
    %260 = arith.index_cast %c2_i32 : i32 to index
    %c0_130 = arith.constant 0 : index
    %c0_131 = arith.constant 0 : index
    %261 = vector.load %arg17[%260, %c0_130, %c0_131] : memref<8x8x512xf32, #tpu.memory_space<vmem>>, vector<1x8x512xf32>
    %262 = vector.shape_cast %261 : vector<1x8x512xf32> to vector<8x512xf32>
    %263 = vector.extract_strided_slice %252 {offsets = [0, 0], sizes = [8, 512], strides = [1, 1]} : vector<8x1024xf32> to vector<8x512xf32>
    %264 = arith.addf %262, %263 : vector<8x512xf32>
    %265 = arith.index_cast %253 : i32 to index
    %c0_132 = arith.constant 0 : index
    %c0_133 = arith.constant 0 : index
    %266 = vector.load %arg18[%265, %c0_132, %c0_133] : memref<8x8x512xf32, #tpu.memory_space<vmem>>, vector<1x8x512xf32>
    %267 = vector.shape_cast %266 : vector<1x8x512xf32> to vector<8x512xf32>
    %268 = vector.extract_strided_slice %252 {offsets = [0, 512], sizes = [8, 512], strides = [1, 1]} : vector<8x1024xf32> to vector<8x512xf32>
    %269 = arith.addf %267, %268 : vector<8x512xf32>
    %c0_134 = arith.constant 0 : index
    %c0_135 = arith.constant 0 : index
    %270 = vector.load %arg22[%c0_134, %c0_135] : memref<8x128xf32, #tpu.memory_space<vmem>>, vector<8x128xf32>
    %271 = vector.extract_strided_slice %264 {offsets = [0, 0], sizes = [8, 128], strides = [1, 1]} : vector<8x512xf32> to vector<8x128xf32>
    %272 = arith.negf %271 : vector<8x128xf32>
    %273 = math.exp %272 : vector<8x128xf32>
    %cst_136 = arith.constant 1.000000e+00 : f32
    %274 = vector.broadcast %cst_136 : f32 to vector<8x128xf32>
    %275 = arith.addf %274, %273 : vector<8x128xf32>
    %276 = arith.divf %274, %275 : vector<8x128xf32>
    %277 = vector.extract_strided_slice %264 {offsets = [0, 128], sizes = [8, 128], strides = [1, 1]} : vector<8x512xf32> to vector<8x128xf32>
    %278 = arith.negf %277 : vector<8x128xf32>
    %279 = math.exp %278 : vector<8x128xf32>
    %cst_137 = arith.constant 1.000000e+00 : f32
    %280 = vector.broadcast %cst_137 : f32 to vector<8x128xf32>
    %281 = arith.addf %280, %279 : vector<8x128xf32>
    %282 = arith.divf %280, %281 : vector<8x128xf32>
    %283 = vector.extract_strided_slice %264 {offsets = [0, 256], sizes = [8, 128], strides = [1, 1]} : vector<8x512xf32> to vector<8x128xf32>
    %284 = math.tanh %283 : vector<8x128xf32>
    %285 = vector.extract_strided_slice %264 {offsets = [0, 384], sizes = [8, 128], strides = [1, 1]} : vector<8x512xf32> to vector<8x128xf32>
    %286 = arith.negf %285 : vector<8x128xf32>
    %287 = math.exp %286 : vector<8x128xf32>
    %cst_138 = arith.constant 1.000000e+00 : f32
    %288 = vector.broadcast %cst_138 : f32 to vector<8x128xf32>
    %289 = arith.addf %288, %287 : vector<8x128xf32>
    %290 = arith.divf %288, %289 : vector<8x128xf32>
    %291 = arith.mulf %282, %270 : vector<8x128xf32>
    %292 = arith.mulf %276, %284 : vector<8x128xf32>
    %293 = arith.addf %291, %292 : vector<8x128xf32>
    %294 = math.tanh %293 : vector<8x128xf32>
    %295 = arith.mulf %290, %294 : vector<8x128xf32>
    %c0_139 = arith.constant 0 : index
    %c0_140 = arith.constant 0 : index
    %296 = vector.load %arg23[%c0_139, %c0_140] : memref<8x128xf32, #tpu.memory_space<vmem>>, vector<8x128xf32>
    %297 = vector.extract_strided_slice %269 {offsets = [0, 0], sizes = [8, 128], strides = [1, 1]} : vector<8x512xf32> to vector<8x128xf32>
    %298 = arith.negf %297 : vector<8x128xf32>
    %299 = math.exp %298 : vector<8x128xf32>
    %cst_141 = arith.constant 1.000000e+00 : f32
    %300 = vector.broadcast %cst_141 : f32 to vector<8x128xf32>
    %301 = arith.addf %300, %299 : vector<8x128xf32>
    %302 = arith.divf %300, %301 : vector<8x128xf32>
    %303 = vector.extract_strided_slice %269 {offsets = [0, 128], sizes = [8, 128], strides = [1, 1]} : vector<8x512xf32> to vector<8x128xf32>
    %304 = arith.negf %303 : vector<8x128xf32>
    %305 = math.exp %304 : vector<8x128xf32>
    %cst_142 = arith.constant 1.000000e+00 : f32
    %306 = vector.broadcast %cst_142 : f32 to vector<8x128xf32>
    %307 = arith.addf %306, %305 : vector<8x128xf32>
    %308 = arith.divf %306, %307 : vector<8x128xf32>
    %309 = vector.extract_strided_slice %269 {offsets = [0, 256], sizes = [8, 128], strides = [1, 1]} : vector<8x512xf32> to vector<8x128xf32>
    %310 = math.tanh %309 : vector<8x128xf32>
    %311 = vector.extract_strided_slice %269 {offsets = [0, 384], sizes = [8, 128], strides = [1, 1]} : vector<8x512xf32> to vector<8x128xf32>
    %312 = arith.negf %311 : vector<8x128xf32>
    %313 = math.exp %312 : vector<8x128xf32>
    %cst_143 = arith.constant 1.000000e+00 : f32
    %314 = vector.broadcast %cst_143 : f32 to vector<8x128xf32>
    %315 = arith.addf %314, %313 : vector<8x128xf32>
    %316 = arith.divf %314, %315 : vector<8x128xf32>
    %317 = arith.mulf %308, %296 : vector<8x128xf32>
    %318 = arith.mulf %302, %310 : vector<8x128xf32>
    %319 = arith.addf %317, %318 : vector<8x128xf32>
    %320 = math.tanh %319 : vector<8x128xf32>
    %321 = arith.mulf %316, %320 : vector<8x128xf32>
    %cst_144 = arith.constant 0.000000e+00 : f32
    %322 = vector.broadcast %cst_144 : f32 to vector<8x1xf32>
    %323 = arith.cmpf ogt, %256, %322 : vector<8x1xf32>
    %c0_145 = arith.constant 0 : index
    %c0_146 = arith.constant 0 : index
    %324 = vector.load %arg21[%c0_145, %c0_146] : memref<8x256xf32, #tpu.memory_space<vmem>>, vector<8x128xf32>
    %325 = vector.shape_cast %323 : vector<8x1xi1> to vector<8x1xi1>
    %326 = vector.broadcast %325 : vector<8x1xi1> to vector<8x128xi1>
    %327 = arith.select %326, %295, %324 : vector<8x128xi1>, vector<8x128xf32>
    %cst_147 = arith.constant 0.000000e+00 : f32
    %328 = vector.broadcast %cst_147 : f32 to vector<8x1xf32>
    %329 = arith.cmpf ogt, %259, %328 : vector<8x1xf32>
    %c0_148 = arith.constant 0 : index
    %c128_149 = arith.constant 128 : index
    %330 = vector.load %arg21[%c0_148, %c128_149] : memref<8x256xf32, #tpu.memory_space<vmem>>, vector<8x128xf32>
    %331 = vector.shape_cast %329 : vector<8x1xi1> to vector<8x1xi1>
    %332 = vector.broadcast %331 : vector<8x1xi1> to vector<8x128xi1>
    %333 = arith.select %332, %321, %330 : vector<8x128xi1>, vector<8x128xf32>
    %cst_150 = arith.constant 0.000000e+00 : f32
    %334 = vector.broadcast %cst_150 : f32 to vector<8x1xf32>
    %335 = arith.cmpf ogt, %256, %334 : vector<8x1xf32>
    %c0_151 = arith.constant 0 : index
    %c0_152 = arith.constant 0 : index
    %336 = vector.load %arg22[%c0_151, %c0_152] : memref<8x128xf32, #tpu.memory_space<vmem>>, vector<8x128xf32>
    %337 = vector.shape_cast %335 : vector<8x1xi1> to vector<8x1xi1>
    %338 = vector.broadcast %337 : vector<8x1xi1> to vector<8x128xi1>
    %339 = arith.select %338, %293, %336 : vector<8x128xi1>, vector<8x128xf32>
    %c0_153 = arith.constant 0 : index
    %c0_154 = arith.constant 0 : index
    %340 = vector.load %arg22[%c0_153, %c0_154] : memref<8x128xf32, #tpu.memory_space<vmem>>, vector<8x128xf32>
    tpu.vector_store %arg22[%c0_153, %c0_154], %339 {strides = array<i32>} : memref<8x128xf32, #tpu.memory_space<vmem>>, vector<8x128xf32>,
    %cst_155 = arith.constant 0.000000e+00 : f32
    %341 = vector.broadcast %cst_155 : f32 to vector<8x1xf32>
    %342 = arith.cmpf ogt, %259, %341 : vector<8x1xf32>
    %c0_156 = arith.constant 0 : index
    %c0_157 = arith.constant 0 : index
    %343 = vector.load %arg23[%c0_156, %c0_157] : memref<8x128xf32, #tpu.memory_space<vmem>>, vector<8x128xf32>
    %344 = vector.shape_cast %342 : vector<8x1xi1> to vector<8x1xi1>
    %345 = vector.broadcast %344 : vector<8x1xi1> to vector<8x128xi1>
    %346 = arith.select %345, %319, %343 : vector<8x128xi1>, vector<8x128xf32>
    %c0_158 = arith.constant 0 : index
    %c0_159 = arith.constant 0 : index
    %347 = vector.load %arg23[%c0_158, %c0_159] : memref<8x128xf32, #tpu.memory_space<vmem>>, vector<8x128xf32>
    tpu.vector_store %arg23[%c0_158, %c0_159], %346 {strides = array<i32>} : memref<8x128xf32, #tpu.memory_space<vmem>>, vector<8x128xf32>,
    %c0_160 = arith.constant 0 : index
    %c0_161 = arith.constant 0 : index
    %348 = vector.load %arg21[%c0_160, %c0_161] : memref<8x256xf32, #tpu.memory_space<vmem>>, vector<8x128xf32>
    tpu.vector_store %arg21[%c0_160, %c0_161], %327 {strides = array<i32>} : memref<8x256xf32, #tpu.memory_space<vmem>>, vector<8x128xf32>,
    %c0_162 = arith.constant 0 : index
    %c128_163 = arith.constant 128 : index
    %349 = vector.load %arg21[%c0_162, %c128_163] : memref<8x256xf32, #tpu.memory_space<vmem>>, vector<8x128xf32>
    tpu.vector_store %arg21[%c0_162, %c128_163], %333 {strides = array<i32>} : memref<8x256xf32, #tpu.memory_space<vmem>>, vector<8x128xf32>,
    %350 = vector.broadcast %256 : vector<8x1xf32> to vector<8x128xf32>
    %351 = arith.mulf %327, %350 : vector<8x128xf32>
    %352 = arith.index_cast %c2_i32 : i32 to index
    %c0_164 = arith.constant 0 : index
    %c0_165 = arith.constant 0 : index
    %353 = vector.load %arg19[%352, %c0_164, %c0_165] : memref<8x8x128xf32, #tpu.memory_space<vmem>>, vector<1x8x128xf32>
    %354 = vector.shape_cast %353 : vector<1x8x128xf32> to vector<8x128xf32>
    %355 = vector.shape_cast %351 : vector<8x128xf32> to vector<1x8x128xf32>
    tpu.vector_store %arg19[%352, %c0_164, %c0_165], %355 {strides = array<i32>} : memref<8x8x128xf32, #tpu.memory_space<vmem>>, vector<1x8x128xf32>,
    %356 = vector.broadcast %259 : vector<8x1xf32> to vector<8x128xf32>
    %357 = arith.mulf %333, %356 : vector<8x128xf32>
    %358 = arith.index_cast %253 : i32 to index
    %c0_166 = arith.constant 0 : index
    %c0_167 = arith.constant 0 : index
    %359 = vector.load %arg20[%358, %c0_166, %c0_167] : memref<8x8x128xf32, #tpu.memory_space<vmem>>, vector<1x8x128xf32>
    %360 = vector.shape_cast %359 : vector<1x8x128xf32> to vector<8x128xf32>
    %361 = vector.shape_cast %357 : vector<8x128xf32> to vector<1x8x128xf32>
    tpu.vector_store %arg20[%358, %c0_166, %c0_167], %361 {strides = array<i32>} : memref<8x8x128xf32, #tpu.memory_space<vmem>>, vector<1x8x128xf32>,
    %c3_i32 = arith.constant 3 : i32
    %c0_168 = arith.constant 0 : index
    %c0_169 = arith.constant 0 : index
    %362 = vector.load %arg21[%c0_168, %c0_169] : memref<8x256xf32, #tpu.memory_space<vmem>>, vector<8x256xf32>
    %363 = arith.truncf %362 : vector<8x256xf32> to vector<8x256xbf16>
    %c0_170 = arith.constant 0 : index
    %c0_171 = arith.constant 0 : index
    %364 = vector.load %arg6[%c0_170, %c0_171] : memref<256x1024xbf16, #tpu.memory_space<vmem>>, vector<256x1024xbf16>
    %cst_172 = arith.constant dense<0.000000e+00> : vector<8x1024xf32>
    %365 = tpu.matmul %363, %364, %cst_172 {dimension_numbers = #tpu.dot_dimension_numbers<[1], [0], [0], [1], [0, 0, 1, 1], [], []>} : vector<8x256xbf16>, vector<256x1024xbf16>, vector<8x1024xf32> -> vector<8x1024xf32>
    %c7_i32_173 = arith.constant 7 : i32
    %366 = arith.subi %c7_i32_173, %c3_i32 : i32
    %367 = arith.index_cast %c3_i32 : i32 to index
    %c0_174 = arith.constant 0 : index
    %c0_175 = arith.constant 0 : index
    %368 = vector.load %arg1[%367, %c0_174, %c0_175] : memref<8x8x1xf32, #tpu.memory_space<vmem>>, vector<1x8x1xf32>
    %369 = vector.shape_cast %368 : vector<1x8x1xf32> to vector<8x1xf32>
    %370 = arith.index_cast %366 : i32 to index
    %c0_176 = arith.constant 0 : index
    %c0_177 = arith.constant 0 : index
    %371 = vector.load %arg1[%370, %c0_176, %c0_177] : memref<8x8x1xf32, #tpu.memory_space<vmem>>, vector<1x8x1xf32>
    %372 = vector.shape_cast %371 : vector<1x8x1xf32> to vector<8x1xf32>
    %373 = arith.index_cast %c3_i32 : i32 to index
    %c0_178 = arith.constant 0 : index
    %c0_179 = arith.constant 0 : index
    %374 = vector.load %arg17[%373, %c0_178, %c0_179] : memref<8x8x512xf32, #tpu.memory_space<vmem>>, vector<1x8x512xf32>
    %375 = vector.shape_cast %374 : vector<1x8x512xf32> to vector<8x512xf32>
    %376 = vector.extract_strided_slice %365 {offsets = [0, 0], sizes = [8, 512], strides = [1, 1]} : vector<8x1024xf32> to vector<8x512xf32>
    %377 = arith.addf %375, %376 : vector<8x512xf32>
    %378 = arith.index_cast %366 : i32 to index
    %c0_180 = arith.constant 0 : index
    %c0_181 = arith.constant 0 : index
    %379 = vector.load %arg18[%378, %c0_180, %c0_181] : memref<8x8x512xf32, #tpu.memory_space<vmem>>, vector<1x8x512xf32>
    %380 = vector.shape_cast %379 : vector<1x8x512xf32> to vector<8x512xf32>
    %381 = vector.extract_strided_slice %365 {offsets = [0, 512], sizes = [8, 512], strides = [1, 1]} : vector<8x1024xf32> to vector<8x512xf32>
    %382 = arith.addf %380, %381 : vector<8x512xf32>
    %c0_182 = arith.constant 0 : index
    %c0_183 = arith.constant 0 : index
    %383 = vector.load %arg22[%c0_182, %c0_183] : memref<8x128xf32, #tpu.memory_space<vmem>>, vector<8x128xf32>
    %384 = vector.extract_strided_slice %377 {offsets = [0, 0], sizes = [8, 128], strides = [1, 1]} : vector<8x512xf32> to vector<8x128xf32>
    %385 = arith.negf %384 : vector<8x128xf32>
    %386 = math.exp %385 : vector<8x128xf32>
    %cst_184 = arith.constant 1.000000e+00 : f32
    %387 = vector.broadcast %cst_184 : f32 to vector<8x128xf32>
    %388 = arith.addf %387, %386 : vector<8x128xf32>
    %389 = arith.divf %387, %388 : vector<8x128xf32>
    %390 = vector.extract_strided_slice %377 {offsets = [0, 128], sizes = [8, 128], strides = [1, 1]} : vector<8x512xf32> to vector<8x128xf32>
    %391 = arith.negf %390 : vector<8x128xf32>
    %392 = math.exp %391 : vector<8x128xf32>
    %cst_185 = arith.constant 1.000000e+00 : f32
    %393 = vector.broadcast %cst_185 : f32 to vector<8x128xf32>
    %394 = arith.addf %393, %392 : vector<8x128xf32>
    %395 = arith.divf %393, %394 : vector<8x128xf32>
    %396 = vector.extract_strided_slice %377 {offsets = [0, 256], sizes = [8, 128], strides = [1, 1]} : vector<8x512xf32> to vector<8x128xf32>
    %397 = math.tanh %396 : vector<8x128xf32>
    %398 = vector.extract_strided_slice %377 {offsets = [0, 384], sizes = [8, 128], strides = [1, 1]} : vector<8x512xf32> to vector<8x128xf32>
    %399 = arith.negf %398 : vector<8x128xf32>
    %400 = math.exp %399 : vector<8x128xf32>
    %cst_186 = arith.constant 1.000000e+00 : f32
    %401 = vector.broadcast %cst_186 : f32 to vector<8x128xf32>
    %402 = arith.addf %401, %400 : vector<8x128xf32>
    %403 = arith.divf %401, %402 : vector<8x128xf32>
    %404 = arith.mulf %395, %383 : vector<8x128xf32>
    %405 = arith.mulf %389, %397 : vector<8x128xf32>
    %406 = arith.addf %404, %405 : vector<8x128xf32>
    %407 = math.tanh %406 : vector<8x128xf32>
    %408 = arith.mulf %403, %407 : vector<8x128xf32>
    %c0_187 = arith.constant 0 : index
    %c0_188 = arith.constant 0 : index
    %409 = vector.load %arg23[%c0_187, %c0_188] : memref<8x128xf32, #tpu.memory_space<vmem>>, vector<8x128xf32>
    %410 = vector.extract_strided_slice %382 {offsets = [0, 0], sizes = [8, 128], strides = [1, 1]} : vector<8x512xf32> to vector<8x128xf32>
    %411 = arith.negf %410 : vector<8x128xf32>
    %412 = math.exp %411 : vector<8x128xf32>
    %cst_189 = arith.constant 1.000000e+00 : f32
    %413 = vector.broadcast %cst_189 : f32 to vector<8x128xf32>
    %414 = arith.addf %413, %412 : vector<8x128xf32>
    %415 = arith.divf %413, %414 : vector<8x128xf32>
    %416 = vector.extract_strided_slice %382 {offsets = [0, 128], sizes = [8, 128], strides = [1, 1]} : vector<8x512xf32> to vector<8x128xf32>
    %417 = arith.negf %416 : vector<8x128xf32>
    %418 = math.exp %417 : vector<8x128xf32>
    %cst_190 = arith.constant 1.000000e+00 : f32
    %419 = vector.broadcast %cst_190 : f32 to vector<8x128xf32>
    %420 = arith.addf %419, %418 : vector<8x128xf32>
    %421 = arith.divf %419, %420 : vector<8x128xf32>
    %422 = vector.extract_strided_slice %382 {offsets = [0, 256], sizes = [8, 128], strides = [1, 1]} : vector<8x512xf32> to vector<8x128xf32>
    %423 = math.tanh %422 : vector<8x128xf32>
    %424 = vector.extract_strided_slice %382 {offsets = [0, 384], sizes = [8, 128], strides = [1, 1]} : vector<8x512xf32> to vector<8x128xf32>
    %425 = arith.negf %424 : vector<8x128xf32>
    %426 = math.exp %425 : vector<8x128xf32>
    %cst_191 = arith.constant 1.000000e+00 : f32
    %427 = vector.broadcast %cst_191 : f32 to vector<8x128xf32>
    %428 = arith.addf %427, %426 : vector<8x128xf32>
    %429 = arith.divf %427, %428 : vector<8x128xf32>
    %430 = arith.mulf %421, %409 : vector<8x128xf32>
    %431 = arith.mulf %415, %423 : vector<8x128xf32>
    %432 = arith.addf %430, %431 : vector<8x128xf32>
    %433 = math.tanh %432 : vector<8x128xf32>
    %434 = arith.mulf %429, %433 : vector<8x128xf32>
    %cst_192 = arith.constant 0.000000e+00 : f32
    %435 = vector.broadcast %cst_192 : f32 to vector<8x1xf32>
    %436 = arith.cmpf ogt, %369, %435 : vector<8x1xf32>
    %c0_193 = arith.constant 0 : index
    %c0_194 = arith.constant 0 : index
    %437 = vector.load %arg21[%c0_193, %c0_194] : memref<8x256xf32, #tpu.memory_space<vmem>>, vector<8x128xf32>
    %438 = vector.shape_cast %436 : vector<8x1xi1> to vector<8x1xi1>
    %439 = vector.broadcast %438 : vector<8x1xi1> to vector<8x128xi1>
    %440 = arith.select %439, %408, %437 : vector<8x128xi1>, vector<8x128xf32>
    %cst_195 = arith.constant 0.000000e+00 : f32
    %441 = vector.broadcast %cst_195 : f32 to vector<8x1xf32>
    %442 = arith.cmpf ogt, %372, %441 : vector<8x1xf32>
    %c0_196 = arith.constant 0 : index
    %c128_197 = arith.constant 128 : index
    %443 = vector.load %arg21[%c0_196, %c128_197] : memref<8x256xf32, #tpu.memory_space<vmem>>, vector<8x128xf32>
    %444 = vector.shape_cast %442 : vector<8x1xi1> to vector<8x1xi1>
    %445 = vector.broadcast %444 : vector<8x1xi1> to vector<8x128xi1>
    %446 = arith.select %445, %434, %443 : vector<8x128xi1>, vector<8x128xf32>
    %cst_198 = arith.constant 0.000000e+00 : f32
    %447 = vector.broadcast %cst_198 : f32 to vector<8x1xf32>
    %448 = arith.cmpf ogt, %369, %447 : vector<8x1xf32>
    %c0_199 = arith.constant 0 : index
    %c0_200 = arith.constant 0 : index
    %449 = vector.load %arg22[%c0_199, %c0_200] : memref<8x128xf32, #tpu.memory_space<vmem>>, vector<8x128xf32>
    %450 = vector.shape_cast %448 : vector<8x1xi1> to vector<8x1xi1>
    %451 = vector.broadcast %450 : vector<8x1xi1> to vector<8x128xi1>
    %452 = arith.select %451, %406, %449 : vector<8x128xi1>, vector<8x128xf32>
    %c0_201 = arith.constant 0 : index
    %c0_202 = arith.constant 0 : index
    %453 = vector.load %arg22[%c0_201, %c0_202] : memref<8x128xf32, #tpu.memory_space<vmem>>, vector<8x128xf32>
    tpu.vector_store %arg22[%c0_201, %c0_202], %452 {strides = array<i32>} : memref<8x128xf32, #tpu.memory_space<vmem>>, vector<8x128xf32>,
    %cst_203 = arith.constant 0.000000e+00 : f32
    %454 = vector.broadcast %cst_203 : f32 to vector<8x1xf32>
    %455 = arith.cmpf ogt, %372, %454 : vector<8x1xf32>
    %c0_204 = arith.constant 0 : index
    %c0_205 = arith.constant 0 : index
    %456 = vector.load %arg23[%c0_204, %c0_205] : memref<8x128xf32, #tpu.memory_space<vmem>>, vector<8x128xf32>
    %457 = vector.shape_cast %455 : vector<8x1xi1> to vector<8x1xi1>
    %458 = vector.broadcast %457 : vector<8x1xi1> to vector<8x128xi1>
    %459 = arith.select %458, %432, %456 : vector<8x128xi1>, vector<8x128xf32>
    %c0_206 = arith.constant 0 : index
    %c0_207 = arith.constant 0 : index
    %460 = vector.load %arg23[%c0_206, %c0_207] : memref<8x128xf32, #tpu.memory_space<vmem>>, vector<8x128xf32>
    tpu.vector_store %arg23[%c0_206, %c0_207], %459 {strides = array<i32>} : memref<8x128xf32, #tpu.memory_space<vmem>>, vector<8x128xf32>,
    %c0_208 = arith.constant 0 : index
    %c0_209 = arith.constant 0 : index
    %461 = vector.load %arg21[%c0_208, %c0_209] : memref<8x256xf32, #tpu.memory_space<vmem>>, vector<8x128xf32>
    tpu.vector_store %arg21[%c0_208, %c0_209], %440 {strides = array<i32>} : memref<8x256xf32, #tpu.memory_space<vmem>>, vector<8x128xf32>,
    %c0_210 = arith.constant 0 : index
    %c128_211 = arith.constant 128 : index
    %462 = vector.load %arg21[%c0_210, %c128_211] : memref<8x256xf32, #tpu.memory_space<vmem>>, vector<8x128xf32>
    tpu.vector_store %arg21[%c0_210, %c128_211], %446 {strides = array<i32>} : memref<8x256xf32, #tpu.memory_space<vmem>>, vector<8x128xf32>,
    %463 = vector.broadcast %369 : vector<8x1xf32> to vector<8x128xf32>
    %464 = arith.mulf %440, %463 : vector<8x128xf32>
    %465 = arith.index_cast %c3_i32 : i32 to index
    %c0_212 = arith.constant 0 : index
    %c0_213 = arith.constant 0 : index
    %466 = vector.load %arg19[%465, %c0_212, %c0_213] : memref<8x8x128xf32, #tpu.memory_space<vmem>>, vector<1x8x128xf32>
    %467 = vector.shape_cast %466 : vector<1x8x128xf32> to vector<8x128xf32>
    %468 = vector.shape_cast %464 : vector<8x128xf32> to vector<1x8x128xf32>
    tpu.vector_store %arg19[%465, %c0_212, %c0_213], %468 {strides = array<i32>} : memref<8x8x128xf32, #tpu.memory_space<vmem>>, vector<1x8x128xf32>,
    %469 = vector.broadcast %372 : vector<8x1xf32> to vector<8x128xf32>
    %470 = arith.mulf %446, %469 : vector<8x128xf32>
    %471 = arith.index_cast %366 : i32 to index
    %c0_214 = arith.constant 0 : index
    %c0_215 = arith.constant 0 : index
    %472 = vector.load %arg20[%471, %c0_214, %c0_215] : memref<8x8x128xf32, #tpu.memory_space<vmem>>, vector<1x8x128xf32>
    %473 = vector.shape_cast %472 : vector<1x8x128xf32> to vector<8x128xf32>
    %474 = vector.shape_cast %470 : vector<8x128xf32> to vector<1x8x128xf32>
    tpu.vector_store %arg20[%471, %c0_214, %c0_215], %474 {strides = array<i32>} : memref<8x8x128xf32, #tpu.memory_space<vmem>>, vector<1x8x128xf32>,
    %c4_i32 = arith.constant 4 : i32
    %c0_216 = arith.constant 0 : index
    %c0_217 = arith.constant 0 : index
    %475 = vector.load %arg21[%c0_216, %c0_217] : memref<8x256xf32, #tpu.memory_space<vmem>>, vector<8x256xf32>
    %476 = arith.truncf %475 : vector<8x256xf32> to vector<8x256xbf16>
    %c0_218 = arith.constant 0 : index
    %c0_219 = arith.constant 0 : index
    %477 = vector.load %arg6[%c0_218, %c0_219] : memref<256x1024xbf16, #tpu.memory_space<vmem>>, vector<256x1024xbf16>
    %cst_220 = arith.constant dense<0.000000e+00> : vector<8x1024xf32>
    %478 = tpu.matmul %476, %477, %cst_220 {dimension_numbers = #tpu.dot_dimension_numbers<[1], [0], [0], [1], [0, 0, 1, 1], [], []>} : vector<8x256xbf16>, vector<256x1024xbf16>, vector<8x1024xf32> -> vector<8x1024xf32>
    %c7_i32_221 = arith.constant 7 : i32
    %479 = arith.subi %c7_i32_221, %c4_i32 : i32
    %480 = arith.index_cast %c4_i32 : i32 to index
    %c0_222 = arith.constant 0 : index
    %c0_223 = arith.constant 0 : index
    %481 = vector.load %arg1[%480, %c0_222, %c0_223] : memref<8x8x1xf32, #tpu.memory_space<vmem>>, vector<1x8x1xf32>
    %482 = vector.shape_cast %481 : vector<1x8x1xf32> to vector<8x1xf32>
    %483 = arith.index_cast %479 : i32 to index
    %c0_224 = arith.constant 0 : index
    %c0_225 = arith.constant 0 : index
    %484 = vector.load %arg1[%483, %c0_224, %c0_225] : memref<8x8x1xf32, #tpu.memory_space<vmem>>, vector<1x8x1xf32>
    %485 = vector.shape_cast %484 : vector<1x8x1xf32> to vector<8x1xf32>
    %486 = arith.index_cast %c4_i32 : i32 to index
    %c0_226 = arith.constant 0 : index
    %c0_227 = arith.constant 0 : index
    %487 = vector.load %arg17[%486, %c0_226, %c0_227] : memref<8x8x512xf32, #tpu.memory_space<vmem>>, vector<1x8x512xf32>
    %488 = vector.shape_cast %487 : vector<1x8x512xf32> to vector<8x512xf32>
    %489 = vector.extract_strided_slice %478 {offsets = [0, 0], sizes = [8, 512], strides = [1, 1]} : vector<8x1024xf32> to vector<8x512xf32>
    %490 = arith.addf %488, %489 : vector<8x512xf32>
    %491 = arith.index_cast %479 : i32 to index
    %c0_228 = arith.constant 0 : index
    %c0_229 = arith.constant 0 : index
    %492 = vector.load %arg18[%491, %c0_228, %c0_229] : memref<8x8x512xf32, #tpu.memory_space<vmem>>, vector<1x8x512xf32>
    %493 = vector.shape_cast %492 : vector<1x8x512xf32> to vector<8x512xf32>
    %494 = vector.extract_strided_slice %478 {offsets = [0, 512], sizes = [8, 512], strides = [1, 1]} : vector<8x1024xf32> to vector<8x512xf32>
    %495 = arith.addf %493, %494 : vector<8x512xf32>
    %c0_230 = arith.constant 0 : index
    %c0_231 = arith.constant 0 : index
    %496 = vector.load %arg22[%c0_230, %c0_231] : memref<8x128xf32, #tpu.memory_space<vmem>>, vector<8x128xf32>
    %497 = vector.extract_strided_slice %490 {offsets = [0, 0], sizes = [8, 128], strides = [1, 1]} : vector<8x512xf32> to vector<8x128xf32>
    %498 = arith.negf %497 : vector<8x128xf32>
    %499 = math.exp %498 : vector<8x128xf32>
    %cst_232 = arith.constant 1.000000e+00 : f32
    %500 = vector.broadcast %cst_232 : f32 to vector<8x128xf32>
    %501 = arith.addf %500, %499 : vector<8x128xf32>
    %502 = arith.divf %500, %501 : vector<8x128xf32>
    %503 = vector.extract_strided_slice %490 {offsets = [0, 128], sizes = [8, 128], strides = [1, 1]} : vector<8x512xf32> to vector<8x128xf32>
    %504 = arith.negf %503 : vector<8x128xf32>
    %505 = math.exp %504 : vector<8x128xf32>
    %cst_233 = arith.constant 1.000000e+00 : f32
    %506 = vector.broadcast %cst_233 : f32 to vector<8x128xf32>
    %507 = arith.addf %506, %505 : vector<8x128xf32>
    %508 = arith.divf %506, %507 : vector<8x128xf32>
    %509 = vector.extract_strided_slice %490 {offsets = [0, 256], sizes = [8, 128], strides = [1, 1]} : vector<8x512xf32> to vector<8x128xf32>
    %510 = math.tanh %509 : vector<8x128xf32>
    %511 = vector.extract_strided_slice %490 {offsets = [0, 384], sizes = [8, 128], strides = [1, 1]} : vector<8x512xf32> to vector<8x128xf32>
    %512 = arith.negf %511 : vector<8x128xf32>
    %513 = math.exp %512 : vector<8x128xf32>
    %cst_234 = arith.constant 1.000000e+00 : f32
    %514 = vector.broadcast %cst_234 : f32 to vector<8x128xf32>
    %515 = arith.addf %514, %513 : vector<8x128xf32>
    %516 = arith.divf %514, %515 : vector<8x128xf32>
    %517 = arith.mulf %508, %496 : vector<8x128xf32>
    %518 = arith.mulf %502, %510 : vector<8x128xf32>
    %519 = arith.addf %517, %518 : vector<8x128xf32>
    %520 = math.tanh %519 : vector<8x128xf32>
    %521 = arith.mulf %516, %520 : vector<8x128xf32>
    %c0_235 = arith.constant 0 : index
    %c0_236 = arith.constant 0 : index
    %522 = vector.load %arg23[%c0_235, %c0_236] : memref<8x128xf32, #tpu.memory_space<vmem>>, vector<8x128xf32>
    %523 = vector.extract_strided_slice %495 {offsets = [0, 0], sizes = [8, 128], strides = [1, 1]} : vector<8x512xf32> to vector<8x128xf32>
    %524 = arith.negf %523 : vector<8x128xf32>
    %525 = math.exp %524 : vector<8x128xf32>
    %cst_237 = arith.constant 1.000000e+00 : f32
    %526 = vector.broadcast %cst_237 : f32 to vector<8x128xf32>
    %527 = arith.addf %526, %525 : vector<8x128xf32>
    %528 = arith.divf %526, %527 : vector<8x128xf32>
    %529 = vector.extract_strided_slice %495 {offsets = [0, 128], sizes = [8, 128], strides = [1, 1]} : vector<8x512xf32> to vector<8x128xf32>
    %530 = arith.negf %529 : vector<8x128xf32>
    %531 = math.exp %530 : vector<8x128xf32>
    %cst_238 = arith.constant 1.000000e+00 : f32
    %532 = vector.broadcast %cst_238 : f32 to vector<8x128xf32>
    %533 = arith.addf %532, %531 : vector<8x128xf32>
    %534 = arith.divf %532, %533 : vector<8x128xf32>
    %535 = vector.extract_strided_slice %495 {offsets = [0, 256], sizes = [8, 128], strides = [1, 1]} : vector<8x512xf32> to vector<8x128xf32>
    %536 = math.tanh %535 : vector<8x128xf32>
    %537 = vector.extract_strided_slice %495 {offsets = [0, 384], sizes = [8, 128], strides = [1, 1]} : vector<8x512xf32> to vector<8x128xf32>
    %538 = arith.negf %537 : vector<8x128xf32>
    %539 = math.exp %538 : vector<8x128xf32>
    %cst_239 = arith.constant 1.000000e+00 : f32
    %540 = vector.broadcast %cst_239 : f32 to vector<8x128xf32>
    %541 = arith.addf %540, %539 : vector<8x128xf32>
    %542 = arith.divf %540, %541 : vector<8x128xf32>
    %543 = arith.mulf %534, %522 : vector<8x128xf32>
    %544 = arith.mulf %528, %536 : vector<8x128xf32>
    %545 = arith.addf %543, %544 : vector<8x128xf32>
    %546 = math.tanh %545 : vector<8x128xf32>
    %547 = arith.mulf %542, %546 : vector<8x128xf32>
    %cst_240 = arith.constant 0.000000e+00 : f32
    %548 = vector.broadcast %cst_240 : f32 to vector<8x1xf32>
    %549 = arith.cmpf ogt, %482, %548 : vector<8x1xf32>
    %c0_241 = arith.constant 0 : index
    %c0_242 = arith.constant 0 : index
    %550 = vector.load %arg21[%c0_241, %c0_242] : memref<8x256xf32, #tpu.memory_space<vmem>>, vector<8x128xf32>
    %551 = vector.shape_cast %549 : vector<8x1xi1> to vector<8x1xi1>
    %552 = vector.broadcast %551 : vector<8x1xi1> to vector<8x128xi1>
    %553 = arith.select %552, %521, %550 : vector<8x128xi1>, vector<8x128xf32>
    %cst_243 = arith.constant 0.000000e+00 : f32
    %554 = vector.broadcast %cst_243 : f32 to vector<8x1xf32>
    %555 = arith.cmpf ogt, %485, %554 : vector<8x1xf32>
    %c0_244 = arith.constant 0 : index
    %c128_245 = arith.constant 128 : index
    %556 = vector.load %arg21[%c0_244, %c128_245] : memref<8x256xf32, #tpu.memory_space<vmem>>, vector<8x128xf32>
    %557 = vector.shape_cast %555 : vector<8x1xi1> to vector<8x1xi1>
    %558 = vector.broadcast %557 : vector<8x1xi1> to vector<8x128xi1>
    %559 = arith.select %558, %547, %556 : vector<8x128xi1>, vector<8x128xf32>
    %cst_246 = arith.constant 0.000000e+00 : f32
    %560 = vector.broadcast %cst_246 : f32 to vector<8x1xf32>
    %561 = arith.cmpf ogt, %482, %560 : vector<8x1xf32>
    %c0_247 = arith.constant 0 : index
    %c0_248 = arith.constant 0 : index
    %562 = vector.load %arg22[%c0_247, %c0_248] : memref<8x128xf32, #tpu.memory_space<vmem>>, vector<8x128xf32>
    %563 = vector.shape_cast %561 : vector<8x1xi1> to vector<8x1xi1>
    %564 = vector.broadcast %563 : vector<8x1xi1> to vector<8x128xi1>
    %565 = arith.select %564, %519, %562 : vector<8x128xi1>, vector<8x128xf32>
    %c0_249 = arith.constant 0 : index
    %c0_250 = arith.constant 0 : index
    %566 = vector.load %arg22[%c0_249, %c0_250] : memref<8x128xf32, #tpu.memory_space<vmem>>, vector<8x128xf32>
    tpu.vector_store %arg22[%c0_249, %c0_250], %565 {strides = array<i32>} : memref<8x128xf32, #tpu.memory_space<vmem>>, vector<8x128xf32>,
    %cst_251 = arith.constant 0.000000e+00 : f32
    %567 = vector.broadcast %cst_251 : f32 to vector<8x1xf32>
    %568 = arith.cmpf ogt, %485, %567 : vector<8x1xf32>
    %c0_252 = arith.constant 0 : index
    %c0_253 = arith.constant 0 : index
    %569 = vector.load %arg23[%c0_252, %c0_253] : memref<8x128xf32, #tpu.memory_space<vmem>>, vector<8x128xf32>
    %570 = vector.shape_cast %568 : vector<8x1xi1> to vector<8x1xi1>
    %571 = vector.broadcast %570 : vector<8x1xi1> to vector<8x128xi1>
    %572 = arith.select %571, %545, %569 : vector<8x128xi1>, vector<8x128xf32>
    %c0_254 = arith.constant 0 : index
    %c0_255 = arith.constant 0 : index
    %573 = vector.load %arg23[%c0_254, %c0_255] : memref<8x128xf32, #tpu.memory_space<vmem>>, vector<8x128xf32>
    tpu.vector_store %arg23[%c0_254, %c0_255], %572 {strides = array<i32>} : memref<8x128xf32, #tpu.memory_space<vmem>>, vector<8x128xf32>,
    %c0_256 = arith.constant 0 : index
    %c0_257 = arith.constant 0 : index
    %574 = vector.load %arg21[%c0_256, %c0_257] : memref<8x256xf32, #tpu.memory_space<vmem>>, vector<8x128xf32>
    tpu.vector_store %arg21[%c0_256, %c0_257], %553 {strides = array<i32>} : memref<8x256xf32, #tpu.memory_space<vmem>>, vector<8x128xf32>,
    %c0_258 = arith.constant 0 : index
    %c128_259 = arith.constant 128 : index
    %575 = vector.load %arg21[%c0_258, %c128_259] : memref<8x256xf32, #tpu.memory_space<vmem>>, vector<8x128xf32>
    tpu.vector_store %arg21[%c0_258, %c128_259], %559 {strides = array<i32>} : memref<8x256xf32, #tpu.memory_space<vmem>>, vector<8x128xf32>,
    %576 = vector.broadcast %482 : vector<8x1xf32> to vector<8x128xf32>
    %577 = arith.mulf %553, %576 : vector<8x128xf32>
    %578 = arith.index_cast %c4_i32 : i32 to index
    %c0_260 = arith.constant 0 : index
    %c0_261 = arith.constant 0 : index
    %579 = vector.load %arg19[%578, %c0_260, %c0_261] : memref<8x8x128xf32, #tpu.memory_space<vmem>>, vector<1x8x128xf32>
    %580 = vector.shape_cast %579 : vector<1x8x128xf32> to vector<8x128xf32>
    %581 = vector.shape_cast %577 : vector<8x128xf32> to vector<1x8x128xf32>
    tpu.vector_store %arg19[%578, %c0_260, %c0_261], %581 {strides = array<i32>} : memref<8x8x128xf32, #tpu.memory_space<vmem>>, vector<1x8x128xf32>,
    %582 = vector.broadcast %485 : vector<8x1xf32> to vector<8x128xf32>
    %583 = arith.mulf %559, %582 : vector<8x128xf32>
    %584 = arith.index_cast %479 : i32 to index
    %c0_262 = arith.constant 0 : index
    %c0_263 = arith.constant 0 : index
    %585 = vector.load %arg20[%584, %c0_262, %c0_263] : memref<8x8x128xf32, #tpu.memory_space<vmem>>, vector<1x8x128xf32>
    %586 = vector.shape_cast %585 : vector<1x8x128xf32> to vector<8x128xf32>
    %587 = vector.shape_cast %583 : vector<8x128xf32> to vector<1x8x128xf32>
    tpu.vector_store %arg20[%584, %c0_262, %c0_263], %587 {strides = array<i32>} : memref<8x8x128xf32, #tpu.memory_space<vmem>>, vector<1x8x128xf32>,
    %c5_i32 = arith.constant 5 : i32
    %c0_264 = arith.constant 0 : index
    %c0_265 = arith.constant 0 : index
    %588 = vector.load %arg21[%c0_264, %c0_265] : memref<8x256xf32, #tpu.memory_space<vmem>>, vector<8x256xf32>
    %589 = arith.truncf %588 : vector<8x256xf32> to vector<8x256xbf16>
    %c0_266 = arith.constant 0 : index
    %c0_267 = arith.constant 0 : index
    %590 = vector.load %arg6[%c0_266, %c0_267] : memref<256x1024xbf16, #tpu.memory_space<vmem>>, vector<256x1024xbf16>
    %cst_268 = arith.constant dense<0.000000e+00> : vector<8x1024xf32>
    %591 = tpu.matmul %589, %590, %cst_268 {dimension_numbers = #tpu.dot_dimension_numbers<[1], [0], [0], [1], [0, 0, 1, 1], [], []>} : vector<8x256xbf16>, vector<256x1024xbf16>, vector<8x1024xf32> -> vector<8x1024xf32>
    %c7_i32_269 = arith.constant 7 : i32
    %592 = arith.subi %c7_i32_269, %c5_i32 : i32
    %593 = arith.index_cast %c5_i32 : i32 to index
    %c0_270 = arith.constant 0 : index
    %c0_271 = arith.constant 0 : index
    %594 = vector.load %arg1[%593, %c0_270, %c0_271] : memref<8x8x1xf32, #tpu.memory_space<vmem>>, vector<1x8x1xf32>
    %595 = vector.shape_cast %594 : vector<1x8x1xf32> to vector<8x1xf32>
    %596 = arith.index_cast %592 : i32 to index
    %c0_272 = arith.constant 0 : index
    %c0_273 = arith.constant 0 : index
    %597 = vector.load %arg1[%596, %c0_272, %c0_273] : memref<8x8x1xf32, #tpu.memory_space<vmem>>, vector<1x8x1xf32>
    %598 = vector.shape_cast %597 : vector<1x8x1xf32> to vector<8x1xf32>
    %599 = arith.index_cast %c5_i32 : i32 to index
    %c0_274 = arith.constant 0 : index
    %c0_275 = arith.constant 0 : index
    %600 = vector.load %arg17[%599, %c0_274, %c0_275] : memref<8x8x512xf32, #tpu.memory_space<vmem>>, vector<1x8x512xf32>
    %601 = vector.shape_cast %600 : vector<1x8x512xf32> to vector<8x512xf32>
    %602 = vector.extract_strided_slice %591 {offsets = [0, 0], sizes = [8, 512], strides = [1, 1]} : vector<8x1024xf32> to vector<8x512xf32>
    %603 = arith.addf %601, %602 : vector<8x512xf32>
    %604 = arith.index_cast %592 : i32 to index
    %c0_276 = arith.constant 0 : index
    %c0_277 = arith.constant 0 : index
    %605 = vector.load %arg18[%604, %c0_276, %c0_277] : memref<8x8x512xf32, #tpu.memory_space<vmem>>, vector<1x8x512xf32>
    %606 = vector.shape_cast %605 : vector<1x8x512xf32> to vector<8x512xf32>
    %607 = vector.extract_strided_slice %591 {offsets = [0, 512], sizes = [8, 512], strides = [1, 1]} : vector<8x1024xf32> to vector<8x512xf32>
    %608 = arith.addf %606, %607 : vector<8x512xf32>
    %c0_278 = arith.constant 0 : index
    %c0_279 = arith.constant 0 : index
    %609 = vector.load %arg22[%c0_278, %c0_279] : memref<8x128xf32, #tpu.memory_space<vmem>>, vector<8x128xf32>
    %610 = vector.extract_strided_slice %603 {offsets = [0, 0], sizes = [8, 128], strides = [1, 1]} : vector<8x512xf32> to vector<8x128xf32>
    %611 = arith.negf %610 : vector<8x128xf32>
    %612 = math.exp %611 : vector<8x128xf32>
    %cst_280 = arith.constant 1.000000e+00 : f32
    %613 = vector.broadcast %cst_280 : f32 to vector<8x128xf32>
    %614 = arith.addf %613, %612 : vector<8x128xf32>
    %615 = arith.divf %613, %614 : vector<8x128xf32>
    %616 = vector.extract_strided_slice %603 {offsets = [0, 128], sizes = [8, 128], strides = [1, 1]} : vector<8x512xf32> to vector<8x128xf32>
    %617 = arith.negf %616 : vector<8x128xf32>
    %618 = math.exp %617 : vector<8x128xf32>
    %cst_281 = arith.constant 1.000000e+00 : f32
    %619 = vector.broadcast %cst_281 : f32 to vector<8x128xf32>
    %620 = arith.addf %619, %618 : vector<8x128xf32>
    %621 = arith.divf %619, %620 : vector<8x128xf32>
    %622 = vector.extract_strided_slice %603 {offsets = [0, 256], sizes = [8, 128], strides = [1, 1]} : vector<8x512xf32> to vector<8x128xf32>
    %623 = math.tanh %622 : vector<8x128xf32>
    %624 = vector.extract_strided_slice %603 {offsets = [0, 384], sizes = [8, 128], strides = [1, 1]} : vector<8x512xf32> to vector<8x128xf32>
    %625 = arith.negf %624 : vector<8x128xf32>
    %626 = math.exp %625 : vector<8x128xf32>
    %cst_282 = arith.constant 1.000000e+00 : f32
    %627 = vector.broadcast %cst_282 : f32 to vector<8x128xf32>
    %628 = arith.addf %627, %626 : vector<8x128xf32>
    %629 = arith.divf %627, %628 : vector<8x128xf32>
    %630 = arith.mulf %621, %609 : vector<8x128xf32>
    %631 = arith.mulf %615, %623 : vector<8x128xf32>
    %632 = arith.addf %630, %631 : vector<8x128xf32>
    %633 = math.tanh %632 : vector<8x128xf32>
    %634 = arith.mulf %629, %633 : vector<8x128xf32>
    %c0_283 = arith.constant 0 : index
    %c0_284 = arith.constant 0 : index
    %635 = vector.load %arg23[%c0_283, %c0_284] : memref<8x128xf32, #tpu.memory_space<vmem>>, vector<8x128xf32>
    %636 = vector.extract_strided_slice %608 {offsets = [0, 0], sizes = [8, 128], strides = [1, 1]} : vector<8x512xf32> to vector<8x128xf32>
    %637 = arith.negf %636 : vector<8x128xf32>
    %638 = math.exp %637 : vector<8x128xf32>
    %cst_285 = arith.constant 1.000000e+00 : f32
    %639 = vector.broadcast %cst_285 : f32 to vector<8x128xf32>
    %640 = arith.addf %639, %638 : vector<8x128xf32>
    %641 = arith.divf %639, %640 : vector<8x128xf32>
    %642 = vector.extract_strided_slice %608 {offsets = [0, 128], sizes = [8, 128], strides = [1, 1]} : vector<8x512xf32> to vector<8x128xf32>
    %643 = arith.negf %642 : vector<8x128xf32>
    %644 = math.exp %643 : vector<8x128xf32>
    %cst_286 = arith.constant 1.000000e+00 : f32
    %645 = vector.broadcast %cst_286 : f32 to vector<8x128xf32>
    %646 = arith.addf %645, %644 : vector<8x128xf32>
    %647 = arith.divf %645, %646 : vector<8x128xf32>
    %648 = vector.extract_strided_slice %608 {offsets = [0, 256], sizes = [8, 128], strides = [1, 1]} : vector<8x512xf32> to vector<8x128xf32>
    %649 = math.tanh %648 : vector<8x128xf32>
    %650 = vector.extract_strided_slice %608 {offsets = [0, 384], sizes = [8, 128], strides = [1, 1]} : vector<8x512xf32> to vector<8x128xf32>
    %651 = arith.negf %650 : vector<8x128xf32>
    %652 = math.exp %651 : vector<8x128xf32>
    %cst_287 = arith.constant 1.000000e+00 : f32
    %653 = vector.broadcast %cst_287 : f32 to vector<8x128xf32>
    %654 = arith.addf %653, %652 : vector<8x128xf32>
    %655 = arith.divf %653, %654 : vector<8x128xf32>
    %656 = arith.mulf %647, %635 : vector<8x128xf32>
    %657 = arith.mulf %641, %649 : vector<8x128xf32>
    %658 = arith.addf %656, %657 : vector<8x128xf32>
    %659 = math.tanh %658 : vector<8x128xf32>
    %660 = arith.mulf %655, %659 : vector<8x128xf32>
    %cst_288 = arith.constant 0.000000e+00 : f32
    %661 = vector.broadcast %cst_288 : f32 to vector<8x1xf32>
    %662 = arith.cmpf ogt, %595, %661 : vector<8x1xf32>
    %c0_289 = arith.constant 0 : index
    %c0_290 = arith.constant 0 : index
    %663 = vector.load %arg21[%c0_289, %c0_290] : memref<8x256xf32, #tpu.memory_space<vmem>>, vector<8x128xf32>
    %664 = vector.shape_cast %662 : vector<8x1xi1> to vector<8x1xi1>
    %665 = vector.broadcast %664 : vector<8x1xi1> to vector<8x128xi1>
    %666 = arith.select %665, %634, %663 : vector<8x128xi1>, vector<8x128xf32>
    %cst_291 = arith.constant 0.000000e+00 : f32
    %667 = vector.broadcast %cst_291 : f32 to vector<8x1xf32>
    %668 = arith.cmpf ogt, %598, %667 : vector<8x1xf32>
    %c0_292 = arith.constant 0 : index
    %c128_293 = arith.constant 128 : index
    %669 = vector.load %arg21[%c0_292, %c128_293] : memref<8x256xf32, #tpu.memory_space<vmem>>, vector<8x128xf32>
    %670 = vector.shape_cast %668 : vector<8x1xi1> to vector<8x1xi1>
    %671 = vector.broadcast %670 : vector<8x1xi1> to vector<8x128xi1>
    %672 = arith.select %671, %660, %669 : vector<8x128xi1>, vector<8x128xf32>
    %cst_294 = arith.constant 0.000000e+00 : f32
    %673 = vector.broadcast %cst_294 : f32 to vector<8x1xf32>
    %674 = arith.cmpf ogt, %595, %673 : vector<8x1xf32>
    %c0_295 = arith.constant 0 : index
    %c0_296 = arith.constant 0 : index
    %675 = vector.load %arg22[%c0_295, %c0_296] : memref<8x128xf32, #tpu.memory_space<vmem>>, vector<8x128xf32>
    %676 = vector.shape_cast %674 : vector<8x1xi1> to vector<8x1xi1>
    %677 = vector.broadcast %676 : vector<8x1xi1> to vector<8x128xi1>
    %678 = arith.select %677, %632, %675 : vector<8x128xi1>, vector<8x128xf32>
    %c0_297 = arith.constant 0 : index
    %c0_298 = arith.constant 0 : index
    %679 = vector.load %arg22[%c0_297, %c0_298] : memref<8x128xf32, #tpu.memory_space<vmem>>, vector<8x128xf32>
    tpu.vector_store %arg22[%c0_297, %c0_298], %678 {strides = array<i32>} : memref<8x128xf32, #tpu.memory_space<vmem>>, vector<8x128xf32>,
    %cst_299 = arith.constant 0.000000e+00 : f32
    %680 = vector.broadcast %cst_299 : f32 to vector<8x1xf32>
    %681 = arith.cmpf ogt, %598, %680 : vector<8x1xf32>
    %c0_300 = arith.constant 0 : index
    %c0_301 = arith.constant 0 : index
    %682 = vector.load %arg23[%c0_300, %c0_301] : memref<8x128xf32, #tpu.memory_space<vmem>>, vector<8x128xf32>
    %683 = vector.shape_cast %681 : vector<8x1xi1> to vector<8x1xi1>
    %684 = vector.broadcast %683 : vector<8x1xi1> to vector<8x128xi1>
    %685 = arith.select %684, %658, %682 : vector<8x128xi1>, vector<8x128xf32>
    %c0_302 = arith.constant 0 : index
    %c0_303 = arith.constant 0 : index
    %686 = vector.load %arg23[%c0_302, %c0_303] : memref<8x128xf32, #tpu.memory_space<vmem>>, vector<8x128xf32>
    tpu.vector_store %arg23[%c0_302, %c0_303], %685 {strides = array<i32>} : memref<8x128xf32, #tpu.memory_space<vmem>>, vector<8x128xf32>,
    %c0_304 = arith.constant 0 : index
    %c0_305 = arith.constant 0 : index
    %687 = vector.load %arg21[%c0_304, %c0_305] : memref<8x256xf32, #tpu.memory_space<vmem>>, vector<8x128xf32>
    tpu.vector_store %arg21[%c0_304, %c0_305], %666 {strides = array<i32>} : memref<8x256xf32, #tpu.memory_space<vmem>>, vector<8x128xf32>,
    %c0_306 = arith.constant 0 : index
    %c128_307 = arith.constant 128 : index
    %688 = vector.load %arg21[%c0_306, %c128_307] : memref<8x256xf32, #tpu.memory_space<vmem>>, vector<8x128xf32>
    tpu.vector_store %arg21[%c0_306, %c128_307], %672 {strides = array<i32>} : memref<8x256xf32, #tpu.memory_space<vmem>>, vector<8x128xf32>,
    %689 = vector.broadcast %595 : vector<8x1xf32> to vector<8x128xf32>
    %690 = arith.mulf %666, %689 : vector<8x128xf32>
    %691 = arith.index_cast %c5_i32 : i32 to index
    %c0_308 = arith.constant 0 : index
    %c0_309 = arith.constant 0 : index
    %692 = vector.load %arg19[%691, %c0_308, %c0_309] : memref<8x8x128xf32, #tpu.memory_space<vmem>>, vector<1x8x128xf32>
    %693 = vector.shape_cast %692 : vector<1x8x128xf32> to vector<8x128xf32>
    %694 = vector.shape_cast %690 : vector<8x128xf32> to vector<1x8x128xf32>
    tpu.vector_store %arg19[%691, %c0_308, %c0_309], %694 {strides = array<i32>} : memref<8x8x128xf32, #tpu.memory_space<vmem>>, vector<1x8x128xf32>,
    %695 = vector.broadcast %598 : vector<8x1xf32> to vector<8x128xf32>
    %696 = arith.mulf %672, %695 : vector<8x128xf32>
    %697 = arith.index_cast %592 : i32 to index
    %c0_310 = arith.constant 0 : index
    %c0_311 = arith.constant 0 : index
    %698 = vector.load %arg20[%697, %c0_310, %c0_311] : memref<8x8x128xf32, #tpu.memory_space<vmem>>, vector<1x8x128xf32>
    %699 = vector.shape_cast %698 : vector<1x8x128xf32> to vector<8x128xf32>
    %700 = vector.shape_cast %696 : vector<8x128xf32> to vector<1x8x128xf32>
    tpu.vector_store %arg20[%697, %c0_310, %c0_311], %700 {strides = array<i32>} : memref<8x8x128xf32, #tpu.memory_space<vmem>>, vector<1x8x128xf32>,
    %c6_i32 = arith.constant 6 : i32
    %c0_312 = arith.constant 0 : index
    %c0_313 = arith.constant 0 : index
    %701 = vector.load %arg21[%c0_312, %c0_313] : memref<8x256xf32, #tpu.memory_space<vmem>>, vector<8x256xf32>
    %702 = arith.truncf %701 : vector<8x256xf32> to vector<8x256xbf16>
    %c0_314 = arith.constant 0 : index
    %c0_315 = arith.constant 0 : index
    %703 = vector.load %arg6[%c0_314, %c0_315] : memref<256x1024xbf16, #tpu.memory_space<vmem>>, vector<256x1024xbf16>
    %cst_316 = arith.constant dense<0.000000e+00> : vector<8x1024xf32>
    %704 = tpu.matmul %702, %703, %cst_316 {dimension_numbers = #tpu.dot_dimension_numbers<[1], [0], [0], [1], [0, 0, 1, 1], [], []>} : vector<8x256xbf16>, vector<256x1024xbf16>, vector<8x1024xf32> -> vector<8x1024xf32>
    %c7_i32_317 = arith.constant 7 : i32
    %705 = arith.subi %c7_i32_317, %c6_i32 : i32
    %706 = arith.index_cast %c6_i32 : i32 to index
    %c0_318 = arith.constant 0 : index
    %c0_319 = arith.constant 0 : index
    %707 = vector.load %arg1[%706, %c0_318, %c0_319] : memref<8x8x1xf32, #tpu.memory_space<vmem>>, vector<1x8x1xf32>
    %708 = vector.shape_cast %707 : vector<1x8x1xf32> to vector<8x1xf32>
    %709 = arith.index_cast %705 : i32 to index
    %c0_320 = arith.constant 0 : index
    %c0_321 = arith.constant 0 : index
    %710 = vector.load %arg1[%709, %c0_320, %c0_321] : memref<8x8x1xf32, #tpu.memory_space<vmem>>, vector<1x8x1xf32>
    %711 = vector.shape_cast %710 : vector<1x8x1xf32> to vector<8x1xf32>
    %712 = arith.index_cast %c6_i32 : i32 to index
    %c0_322 = arith.constant 0 : index
    %c0_323 = arith.constant 0 : index
    %713 = vector.load %arg17[%712, %c0_322, %c0_323] : memref<8x8x512xf32, #tpu.memory_space<vmem>>, vector<1x8x512xf32>
    %714 = vector.shape_cast %713 : vector<1x8x512xf32> to vector<8x512xf32>
    %715 = vector.extract_strided_slice %704 {offsets = [0, 0], sizes = [8, 512], strides = [1, 1]} : vector<8x1024xf32> to vector<8x512xf32>
    %716 = arith.addf %714, %715 : vector<8x512xf32>
    %717 = arith.index_cast %705 : i32 to index
    %c0_324 = arith.constant 0 : index
    %c0_325 = arith.constant 0 : index
    %718 = vector.load %arg18[%717, %c0_324, %c0_325] : memref<8x8x512xf32, #tpu.memory_space<vmem>>, vector<1x8x512xf32>
    %719 = vector.shape_cast %718 : vector<1x8x512xf32> to vector<8x512xf32>
    %720 = vector.extract_strided_slice %704 {offsets = [0, 512], sizes = [8, 512], strides = [1, 1]} : vector<8x1024xf32> to vector<8x512xf32>
    %721 = arith.addf %719, %720 : vector<8x512xf32>
    %c0_326 = arith.constant 0 : index
    %c0_327 = arith.constant 0 : index
    %722 = vector.load %arg22[%c0_326, %c0_327] : memref<8x128xf32, #tpu.memory_space<vmem>>, vector<8x128xf32>
    %723 = vector.extract_strided_slice %716 {offsets = [0, 0], sizes = [8, 128], strides = [1, 1]} : vector<8x512xf32> to vector<8x128xf32>
    %724 = arith.negf %723 : vector<8x128xf32>
    %725 = math.exp %724 : vector<8x128xf32>
    %cst_328 = arith.constant 1.000000e+00 : f32
    %726 = vector.broadcast %cst_328 : f32 to vector<8x128xf32>
    %727 = arith.addf %726, %725 : vector<8x128xf32>
    %728 = arith.divf %726, %727 : vector<8x128xf32>
    %729 = vector.extract_strided_slice %716 {offsets = [0, 128], sizes = [8, 128], strides = [1, 1]} : vector<8x512xf32> to vector<8x128xf32>
    %730 = arith.negf %729 : vector<8x128xf32>
    %731 = math.exp %730 : vector<8x128xf32>
    %cst_329 = arith.constant 1.000000e+00 : f32
    %732 = vector.broadcast %cst_329 : f32 to vector<8x128xf32>
    %733 = arith.addf %732, %731 : vector<8x128xf32>
    %734 = arith.divf %732, %733 : vector<8x128xf32>
    %735 = vector.extract_strided_slice %716 {offsets = [0, 256], sizes = [8, 128], strides = [1, 1]} : vector<8x512xf32> to vector<8x128xf32>
    %736 = math.tanh %735 : vector<8x128xf32>
    %737 = vector.extract_strided_slice %716 {offsets = [0, 384], sizes = [8, 128], strides = [1, 1]} : vector<8x512xf32> to vector<8x128xf32>
    %738 = arith.negf %737 : vector<8x128xf32>
    %739 = math.exp %738 : vector<8x128xf32>
    %cst_330 = arith.constant 1.000000e+00 : f32
    %740 = vector.broadcast %cst_330 : f32 to vector<8x128xf32>
    %741 = arith.addf %740, %739 : vector<8x128xf32>
    %742 = arith.divf %740, %741 : vector<8x128xf32>
    %743 = arith.mulf %734, %722 : vector<8x128xf32>
    %744 = arith.mulf %728, %736 : vector<8x128xf32>
    %745 = arith.addf %743, %744 : vector<8x128xf32>
    %746 = math.tanh %745 : vector<8x128xf32>
    %747 = arith.mulf %742, %746 : vector<8x128xf32>
    %c0_331 = arith.constant 0 : index
    %c0_332 = arith.constant 0 : index
    %748 = vector.load %arg23[%c0_331, %c0_332] : memref<8x128xf32, #tpu.memory_space<vmem>>, vector<8x128xf32>
    %749 = vector.extract_strided_slice %721 {offsets = [0, 0], sizes = [8, 128], strides = [1, 1]} : vector<8x512xf32> to vector<8x128xf32>
    %750 = arith.negf %749 : vector<8x128xf32>
    %751 = math.exp %750 : vector<8x128xf32>
    %cst_333 = arith.constant 1.000000e+00 : f32
    %752 = vector.broadcast %cst_333 : f32 to vector<8x128xf32>
    %753 = arith.addf %752, %751 : vector<8x128xf32>
    %754 = arith.divf %752, %753 : vector<8x128xf32>
    %755 = vector.extract_strided_slice %721 {offsets = [0, 128], sizes = [8, 128], strides = [1, 1]} : vector<8x512xf32> to vector<8x128xf32>
    %756 = arith.negf %755 : vector<8x128xf32>
    %757 = math.exp %756 : vector<8x128xf32>
    %cst_334 = arith.constant 1.000000e+00 : f32
    %758 = vector.broadcast %cst_334 : f32 to vector<8x128xf32>
    %759 = arith.addf %758, %757 : vector<8x128xf32>
    %760 = arith.divf %758, %759 : vector<8x128xf32>
    %761 = vector.extract_strided_slice %721 {offsets = [0, 256], sizes = [8, 128], strides = [1, 1]} : vector<8x512xf32> to vector<8x128xf32>
    %762 = math.tanh %761 : vector<8x128xf32>
    %763 = vector.extract_strided_slice %721 {offsets = [0, 384], sizes = [8, 128], strides = [1, 1]} : vector<8x512xf32> to vector<8x128xf32>
    %764 = arith.negf %763 : vector<8x128xf32>
    %765 = math.exp %764 : vector<8x128xf32>
    %cst_335 = arith.constant 1.000000e+00 : f32
    %766 = vector.broadcast %cst_335 : f32 to vector<8x128xf32>
    %767 = arith.addf %766, %765 : vector<8x128xf32>
    %768 = arith.divf %766, %767 : vector<8x128xf32>
    %769 = arith.mulf %760, %748 : vector<8x128xf32>
    %770 = arith.mulf %754, %762 : vector<8x128xf32>
    %771 = arith.addf %769, %770 : vector<8x128xf32>
    %772 = math.tanh %771 : vector<8x128xf32>
    %773 = arith.mulf %768, %772 : vector<8x128xf32>
    %cst_336 = arith.constant 0.000000e+00 : f32
    %774 = vector.broadcast %cst_336 : f32 to vector<8x1xf32>
    %775 = arith.cmpf ogt, %708, %774 : vector<8x1xf32>
    %c0_337 = arith.constant 0 : index
    %c0_338 = arith.constant 0 : index
    %776 = vector.load %arg21[%c0_337, %c0_338] : memref<8x256xf32, #tpu.memory_space<vmem>>, vector<8x128xf32>
    %777 = vector.shape_cast %775 : vector<8x1xi1> to vector<8x1xi1>
    %778 = vector.broadcast %777 : vector<8x1xi1> to vector<8x128xi1>
    %779 = arith.select %778, %747, %776 : vector<8x128xi1>, vector<8x128xf32>
    %cst_339 = arith.constant 0.000000e+00 : f32
    %780 = vector.broadcast %cst_339 : f32 to vector<8x1xf32>
    %781 = arith.cmpf ogt, %711, %780 : vector<8x1xf32>
    %c0_340 = arith.constant 0 : index
    %c128_341 = arith.constant 128 : index
    %782 = vector.load %arg21[%c0_340, %c128_341] : memref<8x256xf32, #tpu.memory_space<vmem>>, vector<8x128xf32>
    %783 = vector.shape_cast %781 : vector<8x1xi1> to vector<8x1xi1>
    %784 = vector.broadcast %783 : vector<8x1xi1> to vector<8x128xi1>
    %785 = arith.select %784, %773, %782 : vector<8x128xi1>, vector<8x128xf32>
    %cst_342 = arith.constant 0.000000e+00 : f32
    %786 = vector.broadcast %cst_342 : f32 to vector<8x1xf32>
    %787 = arith.cmpf ogt, %708, %786 : vector<8x1xf32>
    %c0_343 = arith.constant 0 : index
    %c0_344 = arith.constant 0 : index
    %788 = vector.load %arg22[%c0_343, %c0_344] : memref<8x128xf32, #tpu.memory_space<vmem>>, vector<8x128xf32>
    %789 = vector.shape_cast %787 : vector<8x1xi1> to vector<8x1xi1>
    %790 = vector.broadcast %789 : vector<8x1xi1> to vector<8x128xi1>
    %791 = arith.select %790, %745, %788 : vector<8x128xi1>, vector<8x128xf32>
    %c0_345 = arith.constant 0 : index
    %c0_346 = arith.constant 0 : index
    %792 = vector.load %arg22[%c0_345, %c0_346] : memref<8x128xf32, #tpu.memory_space<vmem>>, vector<8x128xf32>
    tpu.vector_store %arg22[%c0_345, %c0_346], %791 {strides = array<i32>} : memref<8x128xf32, #tpu.memory_space<vmem>>, vector<8x128xf32>,
    %cst_347 = arith.constant 0.000000e+00 : f32
    %793 = vector.broadcast %cst_347 : f32 to vector<8x1xf32>
    %794 = arith.cmpf ogt, %711, %793 : vector<8x1xf32>
    %c0_348 = arith.constant 0 : index
    %c0_349 = arith.constant 0 : index
    %795 = vector.load %arg23[%c0_348, %c0_349] : memref<8x128xf32, #tpu.memory_space<vmem>>, vector<8x128xf32>
    %796 = vector.shape_cast %794 : vector<8x1xi1> to vector<8x1xi1>
    %797 = vector.broadcast %796 : vector<8x1xi1> to vector<8x128xi1>
    %798 = arith.select %797, %771, %795 : vector<8x128xi1>, vector<8x128xf32>
    %c0_350 = arith.constant 0 : index
    %c0_351 = arith.constant 0 : index
    %799 = vector.load %arg23[%c0_350, %c0_351] : memref<8x128xf32, #tpu.memory_space<vmem>>, vector<8x128xf32>
    tpu.vector_store %arg23[%c0_350, %c0_351], %798 {strides = array<i32>} : memref<8x128xf32, #tpu.memory_space<vmem>>, vector<8x128xf32>,
    %c0_352 = arith.constant 0 : index
    %c0_353 = arith.constant 0 : index
    %800 = vector.load %arg21[%c0_352, %c0_353] : memref<8x256xf32, #tpu.memory_space<vmem>>, vector<8x128xf32>
    tpu.vector_store %arg21[%c0_352, %c0_353], %779 {strides = array<i32>} : memref<8x256xf32, #tpu.memory_space<vmem>>, vector<8x128xf32>,
    %c0_354 = arith.constant 0 : index
    %c128_355 = arith.constant 128 : index
    %801 = vector.load %arg21[%c0_354, %c128_355] : memref<8x256xf32, #tpu.memory_space<vmem>>, vector<8x128xf32>
    tpu.vector_store %arg21[%c0_354, %c128_355], %785 {strides = array<i32>} : memref<8x256xf32, #tpu.memory_space<vmem>>, vector<8x128xf32>,
    %802 = vector.broadcast %708 : vector<8x1xf32> to vector<8x128xf32>
    %803 = arith.mulf %779, %802 : vector<8x128xf32>
    %804 = arith.index_cast %c6_i32 : i32 to index
    %c0_356 = arith.constant 0 : index
    %c0_357 = arith.constant 0 : index
    %805 = vector.load %arg19[%804, %c0_356, %c0_357] : memref<8x8x128xf32, #tpu.memory_space<vmem>>, vector<1x8x128xf32>
    %806 = vector.shape_cast %805 : vector<1x8x128xf32> to vector<8x128xf32>
    %807 = vector.shape_cast %803 : vector<8x128xf32> to vector<1x8x128xf32>
    tpu.vector_store %arg19[%804, %c0_356, %c0_357], %807 {strides = array<i32>} : memref<8x8x128xf32, #tpu.memory_space<vmem>>, vector<1x8x128xf32>,
    %808 = vector.broadcast %711 : vector<8x1xf32> to vector<8x128xf32>
    %809 = arith.mulf %785, %808 : vector<8x128xf32>
    %810 = arith.index_cast %705 : i32 to index
    %c0_358 = arith.constant 0 : index
    %c0_359 = arith.constant 0 : index
    %811 = vector.load %arg20[%810, %c0_358, %c0_359] : memref<8x8x128xf32, #tpu.memory_space<vmem>>, vector<1x8x128xf32>
    %812 = vector.shape_cast %811 : vector<1x8x128xf32> to vector<8x128xf32>
    %813 = vector.shape_cast %809 : vector<8x128xf32> to vector<1x8x128xf32>
    tpu.vector_store %arg20[%810, %c0_358, %c0_359], %813 {strides = array<i32>} : memref<8x8x128xf32, #tpu.memory_space<vmem>>, vector<1x8x128xf32>,
    %c7_i32_360 = arith.constant 7 : i32
    %c0_361 = arith.constant 0 : index
    %c0_362 = arith.constant 0 : index
    %814 = vector.load %arg21[%c0_361, %c0_362] : memref<8x256xf32, #tpu.memory_space<vmem>>, vector<8x256xf32>
    %815 = arith.truncf %814 : vector<8x256xf32> to vector<8x256xbf16>
    %c0_363 = arith.constant 0 : index
    %c0_364 = arith.constant 0 : index
    %816 = vector.load %arg6[%c0_363, %c0_364] : memref<256x1024xbf16, #tpu.memory_space<vmem>>, vector<256x1024xbf16>
    %cst_365 = arith.constant dense<0.000000e+00> : vector<8x1024xf32>
    %817 = tpu.matmul %815, %816, %cst_365 {dimension_numbers = #tpu.dot_dimension_numbers<[1], [0], [0], [1], [0, 0, 1, 1], [], []>} : vector<8x256xbf16>, vector<256x1024xbf16>, vector<8x1024xf32> -> vector<8x1024xf32>
    %c7_i32_366 = arith.constant 7 : i32
    %818 = arith.subi %c7_i32_366, %c7_i32_360 : i32
    %819 = arith.index_cast %c7_i32_360 : i32 to index
    %c0_367 = arith.constant 0 : index
    %c0_368 = arith.constant 0 : index
    %820 = vector.load %arg1[%819, %c0_367, %c0_368] : memref<8x8x1xf32, #tpu.memory_space<vmem>>, vector<1x8x1xf32>
    %821 = vector.shape_cast %820 : vector<1x8x1xf32> to vector<8x1xf32>
    %822 = arith.index_cast %818 : i32 to index
    %c0_369 = arith.constant 0 : index
    %c0_370 = arith.constant 0 : index
    %823 = vector.load %arg1[%822, %c0_369, %c0_370] : memref<8x8x1xf32, #tpu.memory_space<vmem>>, vector<1x8x1xf32>
    %824 = vector.shape_cast %823 : vector<1x8x1xf32> to vector<8x1xf32>
    %825 = arith.index_cast %c7_i32_360 : i32 to index
    %c0_371 = arith.constant 0 : index
    %c0_372 = arith.constant 0 : index
    %826 = vector.load %arg17[%825, %c0_371, %c0_372] : memref<8x8x512xf32, #tpu.memory_space<vmem>>, vector<1x8x512xf32>
    %827 = vector.shape_cast %826 : vector<1x8x512xf32> to vector<8x512xf32>
    %828 = vector.extract_strided_slice %817 {offsets = [0, 0], sizes = [8, 512], strides = [1, 1]} : vector<8x1024xf32> to vector<8x512xf32>
    %829 = arith.addf %827, %828 : vector<8x512xf32>
    %830 = arith.index_cast %818 : i32 to index
    %c0_373 = arith.constant 0 : index
    %c0_374 = arith.constant 0 : index
    %831 = vector.load %arg18[%830, %c0_373, %c0_374] : memref<8x8x512xf32, #tpu.memory_space<vmem>>, vector<1x8x512xf32>
    %832 = vector.shape_cast %831 : vector<1x8x512xf32> to vector<8x512xf32>
    %833 = vector.extract_strided_slice %817 {offsets = [0, 512], sizes = [8, 512], strides = [1, 1]} : vector<8x1024xf32> to vector<8x512xf32>
    %834 = arith.addf %832, %833 : vector<8x512xf32>
    %c0_375 = arith.constant 0 : index
    %c0_376 = arith.constant 0 : index
    %835 = vector.load %arg22[%c0_375, %c0_376] : memref<8x128xf32, #tpu.memory_space<vmem>>, vector<8x128xf32>
    %836 = vector.extract_strided_slice %829 {offsets = [0, 0], sizes = [8, 128], strides = [1, 1]} : vector<8x512xf32> to vector<8x128xf32>
    %837 = arith.negf %836 : vector<8x128xf32>
    %838 = math.exp %837 : vector<8x128xf32>
    %cst_377 = arith.constant 1.000000e+00 : f32
    %839 = vector.broadcast %cst_377 : f32 to vector<8x128xf32>
    %840 = arith.addf %839, %838 : vector<8x128xf32>
    %841 = arith.divf %839, %840 : vector<8x128xf32>
    %842 = vector.extract_strided_slice %829 {offsets = [0, 128], sizes = [8, 128], strides = [1, 1]} : vector<8x512xf32> to vector<8x128xf32>
    %843 = arith.negf %842 : vector<8x128xf32>
    %844 = math.exp %843 : vector<8x128xf32>
    %cst_378 = arith.constant 1.000000e+00 : f32
    %845 = vector.broadcast %cst_378 : f32 to vector<8x128xf32>
    %846 = arith.addf %845, %844 : vector<8x128xf32>
    %847 = arith.divf %845, %846 : vector<8x128xf32>
    %848 = vector.extract_strided_slice %829 {offsets = [0, 256], sizes = [8, 128], strides = [1, 1]} : vector<8x512xf32> to vector<8x128xf32>
    %849 = math.tanh %848 : vector<8x128xf32>
    %850 = vector.extract_strided_slice %829 {offsets = [0, 384], sizes = [8, 128], strides = [1, 1]} : vector<8x512xf32> to vector<8x128xf32>
    %851 = arith.negf %850 : vector<8x128xf32>
    %852 = math.exp %851 : vector<8x128xf32>
    %cst_379 = arith.constant 1.000000e+00 : f32
    %853 = vector.broadcast %cst_379 : f32 to vector<8x128xf32>
    %854 = arith.addf %853, %852 : vector<8x128xf32>
    %855 = arith.divf %853, %854 : vector<8x128xf32>
    %856 = arith.mulf %847, %835 : vector<8x128xf32>
    %857 = arith.mulf %841, %849 : vector<8x128xf32>
    %858 = arith.addf %856, %857 : vector<8x128xf32>
    %859 = math.tanh %858 : vector<8x128xf32>
    %860 = arith.mulf %855, %859 : vector<8x128xf32>
    %c0_380 = arith.constant 0 : index
    %c0_381 = arith.constant 0 : index
    %861 = vector.load %arg23[%c0_380, %c0_381] : memref<8x128xf32, #tpu.memory_space<vmem>>, vector<8x128xf32>
    %862 = vector.extract_strided_slice %834 {offsets = [0, 0], sizes = [8, 128], strides = [1, 1]} : vector<8x512xf32> to vector<8x128xf32>
    %863 = arith.negf %862 : vector<8x128xf32>
    %864 = math.exp %863 : vector<8x128xf32>
    %cst_382 = arith.constant 1.000000e+00 : f32
    %865 = vector.broadcast %cst_382 : f32 to vector<8x128xf32>
    %866 = arith.addf %865, %864 : vector<8x128xf32>
    %867 = arith.divf %865, %866 : vector<8x128xf32>
    %868 = vector.extract_strided_slice %834 {offsets = [0, 128], sizes = [8, 128], strides = [1, 1]} : vector<8x512xf32> to vector<8x128xf32>
    %869 = arith.negf %868 : vector<8x128xf32>
    %870 = math.exp %869 : vector<8x128xf32>
    %cst_383 = arith.constant 1.000000e+00 : f32
    %871 = vector.broadcast %cst_383 : f32 to vector<8x128xf32>
    %872 = arith.addf %871, %870 : vector<8x128xf32>
    %873 = arith.divf %871, %872 : vector<8x128xf32>
    %874 = vector.extract_strided_slice %834 {offsets = [0, 256], sizes = [8, 128], strides = [1, 1]} : vector<8x512xf32> to vector<8x128xf32>
    %875 = math.tanh %874 : vector<8x128xf32>
    %876 = vector.extract_strided_slice %834 {offsets = [0, 384], sizes = [8, 128], strides = [1, 1]} : vector<8x512xf32> to vector<8x128xf32>
    %877 = arith.negf %876 : vector<8x128xf32>
    %878 = math.exp %877 : vector<8x128xf32>
    %cst_384 = arith.constant 1.000000e+00 : f32
    %879 = vector.broadcast %cst_384 : f32 to vector<8x128xf32>
    %880 = arith.addf %879, %878 : vector<8x128xf32>
    %881 = arith.divf %879, %880 : vector<8x128xf32>
    %882 = arith.mulf %873, %861 : vector<8x128xf32>
    %883 = arith.mulf %867, %875 : vector<8x128xf32>
    %884 = arith.addf %882, %883 : vector<8x128xf32>
    %885 = math.tanh %884 : vector<8x128xf32>
    %886 = arith.mulf %881, %885 : vector<8x128xf32>
    %cst_385 = arith.constant 0.000000e+00 : f32
    %887 = vector.broadcast %cst_385 : f32 to vector<8x1xf32>
    %888 = arith.cmpf ogt, %821, %887 : vector<8x1xf32>
    %c0_386 = arith.constant 0 : index
    %c0_387 = arith.constant 0 : index
    %889 = vector.load %arg21[%c0_386, %c0_387] : memref<8x256xf32, #tpu.memory_space<vmem>>, vector<8x128xf32>
    %890 = vector.shape_cast %888 : vector<8x1xi1> to vector<8x1xi1>
    %891 = vector.broadcast %890 : vector<8x1xi1> to vector<8x128xi1>
    %892 = arith.select %891, %860, %889 : vector<8x128xi1>, vector<8x128xf32>
    %cst_388 = arith.constant 0.000000e+00 : f32
    %893 = vector.broadcast %cst_388 : f32 to vector<8x1xf32>
    %894 = arith.cmpf ogt, %824, %893 : vector<8x1xf32>
    %c0_389 = arith.constant 0 : index
    %c128_390 = arith.constant 128 : index
    %895 = vector.load %arg21[%c0_389, %c128_390] : memref<8x256xf32, #tpu.memory_space<vmem>>, vector<8x128xf32>
    %896 = vector.shape_cast %894 : vector<8x1xi1> to vector<8x1xi1>
    %897 = vector.broadcast %896 : vector<8x1xi1> to vector<8x128xi1>
    %898 = arith.select %897, %886, %895 : vector<8x128xi1>, vector<8x128xf32>
    %cst_391 = arith.constant 0.000000e+00 : f32
    %899 = vector.broadcast %cst_391 : f32 to vector<8x1xf32>
    %900 = arith.cmpf ogt, %821, %899 : vector<8x1xf32>
    %c0_392 = arith.constant 0 : index
    %c0_393 = arith.constant 0 : index
    %901 = vector.load %arg22[%c0_392, %c0_393] : memref<8x128xf32, #tpu.memory_space<vmem>>, vector<8x128xf32>
    %902 = vector.shape_cast %900 : vector<8x1xi1> to vector<8x1xi1>
    %903 = vector.broadcast %902 : vector<8x1xi1> to vector<8x128xi1>
    %904 = arith.select %903, %858, %901 : vector<8x128xi1>, vector<8x128xf32>
    %c0_394 = arith.constant 0 : index
    %c0_395 = arith.constant 0 : index
    %905 = vector.load %arg22[%c0_394, %c0_395] : memref<8x128xf32, #tpu.memory_space<vmem>>, vector<8x128xf32>
    tpu.vector_store %arg22[%c0_394, %c0_395], %904 {strides = array<i32>} : memref<8x128xf32, #tpu.memory_space<vmem>>, vector<8x128xf32>,
    %cst_396 = arith.constant 0.000000e+00 : f32
    %906 = vector.broadcast %cst_396 : f32 to vector<8x1xf32>
    %907 = arith.cmpf ogt, %824, %906 : vector<8x1xf32>
    %c0_397 = arith.constant 0 : index
    %c0_398 = arith.constant 0 : index
    %908 = vector.load %arg23[%c0_397, %c0_398] : memref<8x128xf32, #tpu.memory_space<vmem>>, vector<8x128xf32>
    %909 = vector.shape_cast %907 : vector<8x1xi1> to vector<8x1xi1>
    %910 = vector.broadcast %909 : vector<8x1xi1> to vector<8x128xi1>
    %911 = arith.select %910, %884, %908 : vector<8x128xi1>, vector<8x128xf32>
    %c0_399 = arith.constant 0 : index
    %c0_400 = arith.constant 0 : index
    %912 = vector.load %arg23[%c0_399, %c0_400] : memref<8x128xf32, #tpu.memory_space<vmem>>, vector<8x128xf32>
    tpu.vector_store %arg23[%c0_399, %c0_400], %911 {strides = array<i32>} : memref<8x128xf32, #tpu.memory_space<vmem>>, vector<8x128xf32>,
    %c0_401 = arith.constant 0 : index
    %c0_402 = arith.constant 0 : index
    %913 = vector.load %arg21[%c0_401, %c0_402] : memref<8x256xf32, #tpu.memory_space<vmem>>, vector<8x128xf32>
    tpu.vector_store %arg21[%c0_401, %c0_402], %892 {strides = array<i32>} : memref<8x256xf32, #tpu.memory_space<vmem>>, vector<8x128xf32>,
    %c0_403 = arith.constant 0 : index
    %c128_404 = arith.constant 128 : index
    %914 = vector.load %arg21[%c0_403, %c128_404] : memref<8x256xf32, #tpu.memory_space<vmem>>, vector<8x128xf32>
    tpu.vector_store %arg21[%c0_403, %c128_404], %898 {strides = array<i32>} : memref<8x256xf32, #tpu.memory_space<vmem>>, vector<8x128xf32>,
    %915 = vector.broadcast %821 : vector<8x1xf32> to vector<8x128xf32>
    %916 = arith.mulf %892, %915 : vector<8x128xf32>
    %917 = arith.index_cast %c7_i32_360 : i32 to index
    %c0_405 = arith.constant 0 : index
    %c0_406 = arith.constant 0 : index
    %918 = vector.load %arg19[%917, %c0_405, %c0_406] : memref<8x8x128xf32, #tpu.memory_space<vmem>>, vector<1x8x128xf32>
    %919 = vector.shape_cast %918 : vector<1x8x128xf32> to vector<8x128xf32>
    %920 = vector.shape_cast %916 : vector<8x128xf32> to vector<1x8x128xf32>
    tpu.vector_store %arg19[%917, %c0_405, %c0_406], %920 {strides = array<i32>} : memref<8x8x128xf32, #tpu.memory_space<vmem>>, vector<1x8x128xf32>,
    %921 = vector.broadcast %824 : vector<8x1xf32> to vector<8x128xf32>
    %922 = arith.mulf %898, %921 : vector<8x128xf32>
    %923 = arith.index_cast %818 : i32 to index
    %c0_407 = arith.constant 0 : index
    %c0_408 = arith.constant 0 : index
    %924 = vector.load %arg20[%923, %c0_407, %c0_408] : memref<8x8x128xf32, #tpu.memory_space<vmem>>, vector<1x8x128xf32>
    %925 = vector.shape_cast %924 : vector<1x8x128xf32> to vector<8x128xf32>
    %926 = vector.shape_cast %922 : vector<8x128xf32> to vector<1x8x128xf32>
    tpu.vector_store %arg20[%923, %c0_407, %c0_408], %926 {strides = array<i32>} : memref<8x8x128xf32, #tpu.memory_space<vmem>>, vector<1x8x128xf32>,
    %c8_i32 = arith.constant 8 : i32
    %c0_409 = arith.constant 0 : index
    %c0_410 = arith.constant 0 : index
    %927 = vector.load %arg22[%c0_409, %c0_410] : memref<8x128xf32, #tpu.memory_space<vmem>>, vector<8x128xf32>
    %928 = arith.truncf %927 : vector<8x128xf32> to vector<8x128xbf16>
    %c0_411 = arith.constant 0 : index
    %c0_412 = arith.constant 0 : index
    %929 = vector.load %arg10[%c0_411, %c0_412] : memref<128x128xbf16, #tpu.memory_space<vmem>>, vector<128x128xbf16>
    %cst_413 = arith.constant dense<0.000000e+00> : vector<8x128xf32>
    %930 = tpu.matmul %928, %929, %cst_413 {dimension_numbers = #tpu.dot_dimension_numbers<[1], [0], [0], [1], [0, 0, 1, 1], [], []>} : vector<8x128xbf16>, vector<128x128xbf16>, vector<8x128xf32> -> vector<8x128xf32>
    %c0_414 = arith.constant 0 : index
    %c0_415 = arith.constant 0 : index
    %931 = vector.load %arg23[%c0_414, %c0_415] : memref<8x128xf32, #tpu.memory_space<vmem>>, vector<8x128xf32>
    %932 = arith.truncf %931 : vector<8x128xf32> to vector<8x128xbf16>
    %c0_416 = arith.constant 0 : index
    %c0_417 = arith.constant 0 : index
    %933 = vector.load %arg11[%c0_416, %c0_417] : memref<128x128xbf16, #tpu.memory_space<vmem>>, vector<128x128xbf16>
    %cst_418 = arith.constant dense<0.000000e+00> : vector<8x128xf32>
    %934 = tpu.matmul %932, %933, %cst_418 {dimension_numbers = #tpu.dot_dimension_numbers<[1], [0], [0], [1], [0, 0, 1, 1], [], []>} : vector<8x128xbf16>, vector<128x128xbf16>, vector<8x128xf32> -> vector<8x128xf32>
    %935 = arith.addf %930, %934 : vector<8x128xf32>
    %c0_419 = arith.constant 0 : index
    %c0_420 = arith.constant 0 : index
    %936 = vector.load %arg12[%c0_419, %c0_420] : memref<1x128xf32, #tpu.memory_space<vmem>>, vector<1x128xf32>
    %937 = vector.broadcast %936 : vector<1x128xf32> to vector<8x128xf32>
    %938 = arith.addf %935, %937 : vector<8x128xf32>
    %c0_421 = arith.constant 0 : index
    %c0_422 = arith.constant 0 : index
    %939 = vector.load %arg16[%c0_421, %c0_422] : memref<8x128xf32, #tpu.memory_space<vmem>>, vector<8x128xf32>
    tpu.vector_store %arg16[%c0_421, %c0_422], %938 {strides = array<i32>} : memref<8x128xf32, #tpu.memory_space<vmem>>, vector<8x128xf32>,
    %940 = math.tanh %938 : vector<8x128xf32>
    %c0_423 = arith.constant 0 : index
    %c0_424 = arith.constant 0 : index
    %941 = vector.load %arg15[%c0_423, %c0_424] : memref<8x128xf32, #tpu.memory_space<vmem>>, vector<8x128xf32>
    tpu.vector_store %arg15[%c0_423, %c0_424], %940 {strides = array<i32>} : memref<8x128xf32, #tpu.memory_space<vmem>>, vector<8x128xf32>,
    %c0_425 = arith.constant 0 : index
    %c0_426 = arith.constant 0 : index
    %c0_427 = arith.constant 0 : index
    %942 = vector.load %arg19[%c0_425, %c0_426, %c0_427] : memref<8x8x128xf32, #tpu.memory_space<vmem>>, vector<8x8x128xf32>
    %943 = vector.shape_cast %942 : vector<8x8x128xf32> to vector<64x128xf32>
    %944 = arith.truncf %943 : vector<64x128xf32> to vector<64x128xbf16>
    %c0_428 = arith.constant 0 : index
    %c0_429 = arith.constant 0 : index
    %c0_430 = arith.constant 0 : index
    %945 = vector.load %arg20[%c0_428, %c0_429, %c0_430] : memref<8x8x128xf32, #tpu.memory_space<vmem>>, vector<8x8x128xf32>
    %946 = vector.shape_cast %945 : vector<8x8x128xf32> to vector<64x128xf32>
    %947 = arith.truncf %946 : vector<64x128xf32> to vector<64x128xbf16>
    %c0_431 = arith.constant 0 : index
    %c0_432 = arith.constant 0 : index
    %948 = vector.load %arg7[%c0_431, %c0_432] : memref<128x256xbf16, #tpu.memory_space<vmem>>, vector<128x256xbf16>
    %cst_433 = arith.constant dense<0.000000e+00> : vector<64x256xf32>
    %949 = tpu.matmul %944, %948, %cst_433 {dimension_numbers = #tpu.dot_dimension_numbers<[1], [0], [0], [1], [0, 0, 1, 1], [], []>} : vector<64x128xbf16>, vector<128x256xbf16>, vector<64x256xf32> -> vector<64x256xf32>
    %c0_434 = arith.constant 0 : index
    %c0_435 = arith.constant 0 : index
    %950 = vector.load %arg8[%c0_434, %c0_435] : memref<128x256xbf16, #tpu.memory_space<vmem>>, vector<128x256xbf16>
    %cst_436 = arith.constant dense<0.000000e+00> : vector<64x256xf32>
    %951 = tpu.matmul %947, %950, %cst_436 {dimension_numbers = #tpu.dot_dimension_numbers<[1], [0], [0], [1], [0, 0, 1, 1], [], []>} : vector<64x128xbf16>, vector<128x256xbf16>, vector<64x256xf32> -> vector<64x256xf32>
    %952 = arith.addf %949, %951 : vector<64x256xf32>
    %c0_437 = arith.constant 0 : index
    %c0_438 = arith.constant 0 : index
    %953 = vector.load %arg9[%c0_437, %c0_438] : memref<1x256xf32, #tpu.memory_space<vmem>>, vector<1x256xf32>
    %954 = vector.broadcast %953 : vector<1x256xf32> to vector<64x256xf32>
    %955 = arith.addf %952, %954 : vector<64x256xf32>
    %956 = vector.extract_strided_slice %955 {offsets = [0, 0], sizes = [64, 128], strides = [1, 1]} : vector<64x256xf32> to vector<64x128xf32>
    %957 = vector.shape_cast %956 : vector<64x128xf32> to vector<8x8x128xf32>
    %c0_439 = arith.constant 0 : index
    %c0_440 = arith.constant 0 : index
    %c0_441 = arith.constant 0 : index
    %958 = vector.load %arg13[%c0_439, %c0_440, %c0_441] : memref<8x8x128xf32, #tpu.memory_space<vmem>>, vector<8x8x128xf32>
    tpu.vector_store %arg13[%c0_439, %c0_440, %c0_441], %957 {strides = array<i32>} : memref<8x8x128xf32, #tpu.memory_space<vmem>>, vector<8x8x128xf32>,
    %959 = vector.extract_strided_slice %955 {offsets = [0, 128], sizes = [64, 128], strides = [1, 1]} : vector<64x256xf32> to vector<64x128xf32>
    %960 = vector.shape_cast %959 : vector<64x128xf32> to vector<8x8x128xf32>
    %c0_442 = arith.constant 0 : index
    %c0_443 = arith.constant 0 : index
    %c0_444 = arith.constant 0 : index
    %961 = vector.load %arg14[%c0_442, %c0_443, %c0_444] : memref<8x8x128xf32, #tpu.memory_space<vmem>>, vector<8x8x128xf32>
    tpu.vector_store %arg14[%c0_442, %c0_443, %c0_444], %960 {strides = array<i32>} : memref<8x8x128xf32, #tpu.memory_space<vmem>>, vector<8x8x128xf32>,
    return
  }
}

</mosaic_0001>

<llo_original>
// kernel: tpu_custom_call.1
$region0: #{tpu_custom_call.1}
  #allocation0 [shape = 'u32[]', space=smem, size = 0x4, offset = 0x4, fixed_abs, tag = 'smem constant byte address 0x4 - core index']
  #allocation1 [shape = 'u32[72,128]{1,0:T(1,128)}', space=vmem, size = 0x9000, scoped, tag = 'internal scratch']
  #allocation2 [shape = 'f32[8,8,512]{2,1,0:T(8,128)}', space=vmem, size = 0x20000, scoped, tag = 'scratch operand']
  #allocation3 [shape = 'f32[8,8,512]{2,1,0:T(8,128)}', space=vmem, size = 0x20000, scoped, tag = 'scratch operand']
  #allocation4 [shape = 'f32[8,8,128]{2,1,0:T(8,128)}', space=vmem, size = 0x8000, scoped, tag = 'scratch operand']
  #allocation5 [shape = 'f32[8,8,128]{2,1,0:T(8,128)}', space=vmem, size = 0x8000, scoped, tag = 'scratch operand']
  #allocation6 [shape = 'f32[8,256]{1,0:T(8,128)}', space=vmem, size = 0x2000, scoped, tag = 'scratch operand']
  #allocation7 [shape = 'f32[8,128]{1,0:T(8,128)}', space=vmem, size = 0x1000, scoped, tag = 'scratch operand']
  #allocation8 [shape = 'f32[8,128]{1,0:T(8,128)}', space=vmem, size = 0x1000, scoped, tag = 'scratch operand']
  %s0 = inlined_call_operand.vmem [shape: f32[8,8,128], index: 0, kind: input, shape index: {}]
  %s1 = inlined_call_operand.vmem [shape: f32[8,8,1], index: 1, kind: input, shape index: {}]
  %s2 = inlined_call_operand.hbm [shape: bf16[128,512], index: 2, kind: input, shape index: {}]
  %s3 = inlined_call_operand.hbm [shape: bf16[128,512], index: 3, kind: input, shape index: {}]
  %s4 = inlined_call_operand.vmem [shape: f32[1,512], index: 4, kind: input, shape index: {}]
  %s5 = inlined_call_operand.vmem [shape: f32[1,512], index: 5, kind: input, shape index: {}]
  %s6 = inlined_call_operand.hbm [shape: bf16[256,1024], index: 6, kind: input, shape index: {}]
  %s7 = inlined_call_operand.hbm [shape: bf16[128,256], index: 7, kind: input, shape index: {}]
  %s8 = inlined_call_operand.hbm [shape: bf16[128,256], index: 8, kind: input, shape index: {}]
  %s9 = inlined_call_operand.vmem [shape: f32[1,256], index: 9, kind: input, shape index: {}]
  %s10 = inlined_call_operand.hbm [shape: bf16[128,128], index: 10, kind: input, shape index: {}]
  %s11 = inlined_call_operand.hbm [shape: bf16[128,128], index: 11, kind: input, shape index: {}]
  %s12 = inlined_call_operand.vmem [shape: f32[1,128], index: 12, kind: input, shape index: {}]
  %s13 = inlined_call_operand.hbm [shape: f32[8,8,128], index: 13, kind: output, shape index: {0}]
  %s14 = inlined_call_operand.hbm [shape: f32[8,8,128], index: 14, kind: output, shape index: {1}]
  %s15 = inlined_call_operand.hbm [shape: f32[8,128], index: 15, kind: output, shape index: {2}]
  %s16 = inlined_call_operand.hbm [shape: f32[8,128], index: 16, kind: output, shape index: {3}]
  %17 = xla_tuple %s13, %s14, %s15, %s16
  %s18 = sld [smem:[#allocation0]]
  $region114: #{tpu_custom_call.1} parent=0
    _
  %s20 = ssub.s32 1, %s18
  %s21 = scalar_select 0, %s20, %s18
  $region1: #{tpu_custom_call.1} parent=0
    #allocation9 [shape = 'u8[131072]{0}', space=vmem, size = 0x20000, scoped, tag = 'input window, operand 2, single buffered']
    #allocation10 [shape = 's32[1]{0}', space=sflag, size = 0x4, scoped, tag = 'scoped memory for tpu_custom_call.1']
    #allocation11 [shape = 's32[1]{0}', space=sflag, size = 0x4, scoped, tag = 'scoped memory for tpu_custom_call.1']
    #allocation12 [shape = 'u8[131072]{0}', space=vmem, size = 0x20000, scoped, tag = 'input window, operand 3, single buffered']
    #allocation13 [shape = 's32[1]{0}', space=sflag, size = 0x4, scoped, tag = 'scoped memory for tpu_custom_call.1']
    #allocation14 [shape = 'u8[524288]{0}', space=vmem, size = 0x80000, scoped, tag = 'input window, operand 6, single buffered']
    #allocation15 [shape = 'u8[65536]{0}', space=vmem, size = 0x10000, scoped, tag = 'input window, operand 7, single buffered']
    #allocation16 [shape = 's32[1]{0}', space=sflag, size = 0x4, scoped, tag = 'scoped memory for tpu_custom_call.1']
    #allocation17 [shape = 'u8[65536]{0}', space=vmem, size = 0x10000, scoped, tag = 'input window, operand 8, single buffered']
    #allocation18 [shape = 'u8[32768]{0}', space=vmem, size = 0x8000, scoped, tag = 'input window, operand 10, single buffered']
    #allocation19 [shape = 's32[1]{0}', space=sflag, size = 0x4, scoped, tag = 'scoped memory for tpu_custom_call.1']
    #allocation20 [shape = 'u8[32768]{0}', space=vmem, size = 0x8000, scoped, tag = 'input window, operand 11, single buffered']
    #allocation21 [shape = 'u8[32768]{0}', space=vmem, size = 0x8000, scoped, tag = 'output window, operand 0, single buffered']
    #allocation22 [shape = 'u8[32768]{0}', space=vmem, size = 0x8000, scoped, tag = 'output window, operand 1, single buffered']
    #allocation23 [shape = 's32[1]{0}', space=sflag, size = 0x4, scoped, tag = 'scoped memory for tpu_custom_call.1']
    #allocation24 [shape = 'u8[4096]{0}', space=vmem, size = 0x1000, scoped, tag = 'output window, operand 2, single buffered']
    #allocation25 [shape = 'u8[4096]{0}', space=vmem, size = 0x1000, scoped, tag = 'output window, operand 3, single buffered']
    #allocation26 [shape = 's32[1]{0}', space=sflag, size = 0x4, scoped, tag = 'scoped memory for tpu_custom_call.1']
    %22 = vsyncpa [#allocation10], 0
    %23 = vsyncpa [#allocation13], 0
    %24 = vsyncpa [#allocation16], 0
    %25 = vsyncpa [#allocation19], 0
    %26 = vsyncpa [#allocation11], 0
    %27 = vsyncpa [#allocation23], 0
    %28 = vsyncpa [#allocation26], 0
    // Predicated region
    $region2: #{tpu_custom_call.1} parent=1 // pred_check
      _
    $region3: #{tpu_custom_call.1} parent=1 // pred_check_branch
      %30 = sbr.rel (0) target = $region5
    $region4: #{tpu_custom_call.1} parent=1 // pred_region
      _
    $region5: #{tpu_custom_call.1} parent=1 // pred_fallthru
      _
    // Predicated region
    $region6: #{tpu_custom_call.1} parent=1 // pred_check
      _
    $region7: #{tpu_custom_call.1} parent=1 // pred_check_branch
      %32 = sbr.rel (0) target = $region9
    $region8: #{tpu_custom_call.1} parent=1 // pred_region
      _
    $region9: #{tpu_custom_call.1} parent=1 // pred_fallthru
      _
    // Predicated region
    $region10: #{tpu_custom_call.1} parent=1 // pred_check
      _
    $region11: #{tpu_custom_call.1} parent=1 // pred_check_branch
      %34 = sbr.rel (0) target = $region13
    $region12: #{tpu_custom_call.1} parent=1 // pred_region
      %36 = vsyncadd [#allocation10], 0
      %s37 = sshll.u32 %s2, 4
      %s38 = int_to_ptr.hbm [resolvable:$true] %s37
      %s39 = sshll.u32 [#allocation9], 4
      %s40 = int_to_ptr.vmem [resolvable:$true] %s39
      %45 = dma.hbm_to_vmem [thread:$0]  %s38, 4096, %s40, [#allocation10], 256, 256, 16
    $region13: #{tpu_custom_call.1} parent=1 // pred_fallthru
      _
    // Predicated region
    $region14: #{tpu_custom_call.1} parent=1 // pred_check
      _
    $region15: #{tpu_custom_call.1} parent=1 // pred_check_branch
      %47 = sbr.rel (0) target = $region17
    $region16: #{tpu_custom_call.1} parent=1 // pred_region
      %49 = vsyncadd [#allocation13], 0
      %s50 = sshll.u32 %s3, 4
      %s51 = int_to_ptr.hbm [resolvable:$true] %s50
      %s52 = sshll.u32 [#allocation12], 4
      %s53 = int_to_ptr.vmem [resolvable:$true] %s52
      %58 = dma.hbm_to_vmem [thread:$0]  %s51, 4096, %s53, [#allocation13], 256, 256, 16
    $region17: #{tpu_custom_call.1} parent=1 // pred_fallthru
      _
    // Predicated region
    $region18: #{tpu_custom_call.1} parent=1 // pred_check
      _
    $region19: #{tpu_custom_call.1} parent=1 // pred_check_branch
      %60 = sbr.rel (0) target = $region21
    $region20: #{tpu_custom_call.1} parent=1 // pred_region
      _
    $region21: #{tpu_custom_call.1} parent=1 // pred_fallthru
      _
    // Predicated region
    $region22: #{tpu_custom_call.1} parent=1 // pred_check
      _
    $region23: #{tpu_custom_call.1} parent=1 // pred_check_branch
      %62 = sbr.rel (0) target = $region25
    $region24: #{tpu_custom_call.1} parent=1 // pred_region
      _
    $region25: #{tpu_custom_call.1} parent=1 // pred_fallthru
      _
    // Predicated region
    $region26: #{tpu_custom_call.1} parent=1 // pred_check
      _
    $region27: #{tpu_custom_call.1} parent=1 // pred_check_branch
      %64 = sbr.rel (0) target = $region29
    $region28: #{tpu_custom_call.1} parent=1 // pred_region
      %66 = vsyncadd [#allocation13], 0
      %s67 = sshll.u32 %s6, 4
      %s68 = int_to_ptr.hbm [resolvable:$true] %s67
      %s69 = sshll.u32 [#allocation14], 4
      %s70 = int_to_ptr.vmem [resolvable:$true] %s69
      %75 = dma.hbm_to_vmem [thread:$0]  %s68, 16384, %s70, [#allocation13], 512, 512, 32
    $region29: #{tpu_custom_call.1} parent=1 // pred_fallthru
      _
    // Predicated region
    $region30: #{tpu_custom_call.1} parent=1 // pred_check
      _
    $region31: #{tpu_custom_call.1} parent=1 // pred_check_branch
      %77 = sbr.rel (0) target = $region33
    $region32: #{tpu_custom_call.1} parent=1 // pred_region
      %79 = vsyncadd [#allocation16], 0
      %s80 = sshll.u32 %s7, 4
      %s81 = int_to_ptr.hbm [resolvable:$true] %s80
      %s82 = sshll.u32 [#allocation15], 4
      %s83 = int_to_ptr.vmem [resolvable:$true] %s82
      %88 = dma.hbm_to_vmem [thread:$0]  %s81, 2048, %s83, [#allocation16], 128, 128, 8
    $region33: #{tpu_custom_call.1} parent=1 // pred_fallthru
      _
    // Predicated region
    $region34: #{tpu_custom_call.1} parent=1 // pred_check
      _
    $region35: #{tpu_custom_call.1} parent=1 // pred_check_branch
      %90 = sbr.rel (0) target = $region37
    $region36: #{tpu_custom_call.1} parent=1 // pred_region
      %92 = vsyncadd [#allocation16], 0
      %s93 = sshll.u32 %s8, 4
      %s94 = int_to_ptr.hbm [resolvable:$true] %s93
      %s95 = sshll.u32 [#allocation17], 4
      %s96 = int_to_ptr.vmem [resolvable:$true] %s95
      %101 = dma.hbm_to_vmem [thread:$0]  %s94, 2048, %s96, [#allocation16], 128, 128, 8
    $region37: #{tpu_custom_call.1} parent=1 // pred_fallthru
      _
    // Predicated region
    $region38: #{tpu_custom_call.1} parent=1 // pred_check
      _
    $region39: #{tpu_custom_call.1} parent=1 // pred_check_branch
      %103 = sbr.rel (0) target = $region41
    $region40: #{tpu_custom_call.1} parent=1 // pred_region
      _
    $region41: #{tpu_custom_call.1} parent=1 // pred_fallthru
      _
    // Predicated region
    $region42: #{tpu_custom_call.1} parent=1 // pred_check
      _
    $region43: #{tpu_custom_call.1} parent=1 // pred_check_branch
      %105 = sbr.rel (0) target = $region45
    $region44: #{tpu_custom_call.1} parent=1 // pred_region
      %107 = vsyncadd [#allocation19], 0
      %s108 = sshll.u32 %s10, 4
      %s109 = int_to_ptr.hbm [resolvable:$true] %s108
      %s110 = sshll.u32 [#allocation18], 4
      %s111 = int_to_ptr.vmem [resolvable:$true] %s110
      %116 = dma.hbm_to_vmem [thread:$0]  %s109, 1024, %s111, [#allocation19], 64, 64, 4
    $region45: #{tpu_custom_call.1} parent=1 // pred_fallthru
      _
    // Predicated region
    $region46: #{tpu_custom_call.1} parent=1 // pred_check
      _
    $region47: #{tpu_custom_call.1} parent=1 // pred_check_branch
      %118 = sbr.rel (0) target = $region49
    $region48: #{tpu_custom_call.1} parent=1 // pred_region
      %120 = vsyncadd [#allocation19], 0
      %s121 = sshll.u32 %s11, 4
      %s122 = int_to_ptr.hbm [resolvable:$true] %s121
      %s123 = sshll.u32 [#allocation20], 4
      %s124 = int_to_ptr.vmem [resolvable:$true] %s123
      %129 = dma.hbm_to_vmem [thread:$0]  %s122, 1024, %s124, [#allocation19], 64, 64, 4
    $region49: #{tpu_custom_call.1} parent=1 // pred_fallthru
      _
    // Predicated region
    $region50: #{tpu_custom_call.1} parent=1 // pred_check
      _
    $region51: #{tpu_custom_call.1} parent=1 // pred_check_branch
      %131 = sbr.rel (0) target = $region53
    $region52: #{tpu_custom_call.1} parent=1 // pred_region
      _
    $region53: #{tpu_custom_call.1} parent=1 // pred_fallthru
      _
    // Predicated region
    $region54: #{tpu_custom_call.1} parent=1 // pred_check
      _
    $region55: #{tpu_custom_call.1} parent=1 // pred_check_branch
      %133 = sbr.rel (0) target = $region57
    $region56: #{tpu_custom_call.1} parent=1 // pred_region
      %135 = dma.done [#allocation10], 4096
    $region57: #{tpu_custom_call.1} parent=1 // pred_fallthru
      _
    // Predicated region
    $region58: #{tpu_custom_call.1} parent=1 // pred_check
      _
    $region59: #{tpu_custom_call.1} parent=1 // pred_check_branch
      %137 = sbr.rel (0) target = $region61
    $region60: #{tpu_custom_call.1} parent=1 // pred_region
      %139 = dma.done [#allocation13], 4096
    $region61: #{tpu_custom_call.1} parent=1 // pred_fallthru
      _
    // Predicated region
    $region62: #{tpu_custom_call.1} parent=1 // pred_check
      _
    $region63: #{tpu_custom_call.1} parent=1 // pred_check_branch
      %141 = sbr.rel (0) target = $region65
    $region64: #{tpu_custom_call.1} parent=1 // pred_region
      %143 = dma.done [#allocation13], 16384
    $region65: #{tpu_custom_call.1} parent=1 // pred_fallthru
      _
    // Predicated region
    $region66: #{tpu_custom_call.1} parent=1 // pred_check
      _
    $region67: #{tpu_custom_call.1} parent=1 // pred_check_branch
      %145 = sbr.rel (0) target = $region69
    $region68: #{tpu_custom_call.1} parent=1 // pred_region
      %147 = dma.done [#allocation16], 2048
    $region69: #{tpu_custom_call.1} parent=1 // pred_fallthru
      _
    // Predicated region
    $region70: #{tpu_custom_call.1} parent=1 // pred_check
      _
    $region71: #{tpu_custom_call.1} parent=1 // pred_check_branch
      %149 = sbr.rel (0) target = $region73
    $region72: #{tpu_custom_call.1} parent=1 // pred_region
      %151 = dma.done [#allocation16], 2048
    $region73: #{tpu_custom_call.1} parent=1 // pred_fallthru
      _
    // Predicated region
    $region74: #{tpu_custom_call.1} parent=1 // pred_check
      _
    $region75: #{tpu_custom_call.1} parent=1 // pred_check_branch
      %153 = sbr.rel (0) target = $region77
    $region76: #{tpu_custom_call.1} parent=1 // pred_region
      %155 = dma.done [#allocation19], 1024
    $region77: #{tpu_custom_call.1} parent=1 // pred_fallthru
      _
    // Predicated region
    $region78: #{tpu_custom_call.1} parent=1 // pred_check
      _
    $region79: #{tpu_custom_call.1} parent=1 // pred_check_branch
      %157 = sbr.rel (0) target = $region81
    $region80: #{tpu_custom_call.1} parent=1 // pred_region
      %159 = dma.done [#allocation19], 1024
    $region81: #{tpu_custom_call.1} parent=1 // pred_fallthru
      _
    %v160 = vld [vmem:[%s0] sm:$0xff]
    %v161 = vld [vmem:[%s0 + $0x8] sm:$0xff]
    %v162 = vld [vmem:[%s0 + $0x10] sm:$0xff]
    %v163 = vld [vmem:[%s0 + $0x18] sm:$0xff]
    %v164 = vld [vmem:[%s0 + $0x20] sm:$0xff]
    %v165 = vld [vmem:[%s0 + $0x28] sm:$0xff]
    %v166 = vld [vmem:[%s0 + $0x30] sm:$0xff]
    %v167 = vld [vmem:[%s0 + $0x38] sm:$0xff]
    %v168 = vpack.c.bf16 %v161, %v160
    %v169 = vpack.c.bf16 %v163, %v162
    %v170 = vpack.c.bf16 %v165, %v164
    %v171 = vpack.c.bf16 %v167, %v166
    %v172 = vld [vmem:[#allocation9] sm:$0xff]
    %v173 = vld [vmem:[#allocation9 + $0x8] sm:$0xff]
    %v174 = vld [vmem:[#allocation9 + $0x10] sm:$0xff]
    %v175 = vld [vmem:[#allocation9 + $0x18] sm:$0xff]
    %v176 = vld [vmem:[#allocation9 + $0x20] sm:$0xff]
    %v177 = vld [vmem:[#allocation9 + $0x28] sm:$0xff]
    %v178 = vld [vmem:[#allocation9 + $0x30] sm:$0xff]
    %v179 = vld [vmem:[#allocation9 + $0x38] sm:$0xff]
    %v180 = vld [vmem:[#allocation9 + $0x40] sm:$0xff]
    %v181 = vld [vmem:[#allocation9 + $0x48] sm:$0xff]
    %v182 = vld [vmem:[#allocation9 + $0x50] sm:$0xff]
    %v183 = vld [vmem:[#allocation9 + $0x58] sm:$0xff]
    %v184 = vld [vmem:[#allocation9 + $0x60] sm:$0xff]
    %v185 = vld [vmem:[#allocation9 + $0x68] sm:$0xff]
    %v186 = vld [vmem:[#allocation9 + $0x70] sm:$0xff]
    %v187 = vld [vmem:[#allocation9 + $0x78] sm:$0xff]
    %v188 = vld [vmem:[#allocation9 + $0x80] sm:$0xff]
    %v189 = vld [vmem:[#allocation9 + $0x88] sm:$0xff]
    %v190 = vld [vmem:[#allocation9 + $0x90] sm:$0xff]
    %v191 = vld [vmem:[#allocation9 + $0x98] sm:$0xff]
    %v192 = vld [vmem:[#allocation9 + $0xa0] sm:$0xff]
    %v193 = vld [vmem:[#allocation9 + $0xa8] sm:$0xff]
    %v194 = vld [vmem:[#allocation9 + $0xb0] sm:$0xff]
    %v195 = vld [vmem:[#allocation9 + $0xb8] sm:$0xff]
    %v196 = vld [vmem:[#allocation9 + $0xc0] sm:$0xff]
    %v197 = vld [vmem:[#allocation9 + $0xc8] sm:$0xff]
    %v198 = vld [vmem:[#allocation9 + $0xd0] sm:$0xff]
    %v199 = vld [vmem:[#allocation9 + $0xd8] sm:$0xff]
    %v200 = vld [vmem:[#allocation9 + $0xe0] sm:$0xff]
    %v201 = vld [vmem:[#allocation9 + $0xe8] sm:$0xff]
    %v202 = vld [vmem:[#allocation9 + $0xf0] sm:$0xff]
    %v203 = vld [vmem:[#allocation9 + $0xf8] sm:$0xff]
    %v204 = vld [vmem:[%s4] sm:$0xf]
    %v206 = vperm.slane %v204, 0
    %v207 = vperm.slane %v204, 1
    %v208 = vperm.slane %v204, 2
    %v209 = vperm.slane %v204, 3
    %v246 = vunpack.c.l.b16 %v172
    %v247 = vunpack.c.h.b16 %v172
    %v248 = vunpack.c.l.b16 %v173
    %v249 = vunpack.c.h.b16 %v173
    %v250 = vunpack.c.l.b16 %v174
    %v251 = vunpack.c.h.b16 %v174
    %v252 = vunpack.c.l.b16 %v175
    %v253 = vunpack.c.h.b16 %v175
    %v254 = vunpack.c.l.b16 %v176
    %v255 = vunpack.c.h.b16 %v176
    %v256 = vunpack.c.l.b16 %v177
    %v257 = vunpack.c.h.b16 %v177
    %v258 = vunpack.c.l.b16 %v178
    %v259 = vunpack.c.h.b16 %v178
    %v260 = vunpack.c.l.b16 %v179
    %v261 = vunpack.c.h.b16 %v179
    %v262 = vunpack.c.l.b16 %v180
    %v263 = vunpack.c.h.b16 %v180
    %v264 = vunpack.c.l.b16 %v181
    %v265 = vunpack.c.h.b16 %v181
    %v266 = vunpack.c.l.b16 %v182
    %v267 = vunpack.c.h.b16 %v182
    %v268 = vunpack.c.l.b16 %v183
    %v269 = vunpack.c.h.b16 %v183
    %v270 = vunpack.c.l.b16 %v184
    %v271 = vunpack.c.h.b16 %v184
    %v272 = vunpack.c.l.b16 %v185
    %v273 = vunpack.c.h.b16 %v185
    %v274 = vunpack.c.l.b16 %v186
    %v275 = vunpack.c.h.b16 %v186
    %v276 = vunpack.c.l.b16 %v187
    %v277 = vunpack.c.h.b16 %v187
    %v278 = vunpack.c.l.b16 %v188
    %v279 = vunpack.c.h.b16 %v188
    %v280 = vunpack.c.l.b16 %v189
    %v281 = vunpack.c.h.b16 %v189
    %v282 = vunpack.c.l.b16 %v190
    %v283 = vunpack.c.h.b16 %v190
    %v284 = vunpack.c.l.b16 %v191
    %v285 = vunpack.c.h.b16 %v191
    %v286 = vunpack.c.l.b16 %v192
    %v287 = vunpack.c.h.b16 %v192
    %v288 = vunpack.c.l.b16 %v193
    %v289 = vunpack.c.h.b16 %v193
    %v290 = vunpack.c.l.b16 %v194
    %v291 = vunpack.c.h.b16 %v194
    %v292 = vunpack.c.l.b16 %v195
    %v293 = vunpack.c.h.b16 %v195
    %v294 = vunpack.c.l.b16 %v196
    %v295 = vunpack.c.h.b16 %v196
    %v296 = vunpack.c.l.b16 %v197
    %v297 = vunpack.c.h.b16 %v197
    %v298 = vunpack.c.l.b16 %v198
    %v299 = vunpack.c.h.b16 %v198
    %v300 = vunpack.c.l.b16 %v199
    %v301 = vunpack.c.h.b16 %v199
    %v302 = vunpack.c.l.b16 %v200
    %v303 = vunpack.c.h.b16 %v200
    %v304 = vunpack.c.l.b16 %v201
    %v305 = vunpack.c.h.b16 %v201
    %v306 = vunpack.c.l.b16 %v202
    %v307 = vunpack.c.h.b16 %v202
    %v308 = vunpack.c.l.b16 %v203
    %v309 = vunpack.c.h.b16 %v203
    %v310 = vpack.c.b16 %v250, %v246
    %v311 = vpack.c.b16 %v251, %v247
    %v312 = vpack.c.b16 %v252, %v248
    %v313 = vpack.c.b16 %v253, %v249
    %v314 = vpack.c.b16 %v258, %v254
    %v315 = vpack.c.b16 %v259, %v255
    %v316 = vpack.c.b16 %v260, %v256
    %v317 = vpack.c.b16 %v261, %v257
    %v318 = vpack.c.b16 %v266, %v262
    %v319 = vpack.c.b16 %v267, %v263
    %v320 = vpack.c.b16 %v268, %v264
    %v321 = vpack.c.b16 %v269, %v265
    %v322 = vpack.c.b16 %v274, %v270
    %v323 = vpack.c.b16 %v275, %v271
    %v324 = vpack.c.b16 %v276, %v272
    %v325 = vpack.c.b16 %v277, %v273
    %v326 = vpack.c.b16 %v282, %v278
    %v327 = vpack.c.b16 %v283, %v279
    %v328 = vpack.c.b16 %v284, %v280
    %v329 = vpack.c.b16 %v285, %v281
    %v330 = vpack.c.b16 %v290, %v286
    %v331 = vpack.c.b16 %v291, %v287
    %v332 = vpack.c.b16 %v292, %v288
    %v333 = vpack.c.b16 %v293, %v289
    %v334 = vpack.c.b16 %v298, %v294
    %v335 = vpack.c.b16 %v299, %v295
    %v336 = vpack.c.b16 %v300, %v296
    %v337 = vpack.c.b16 %v301, %v297
    %v338 = vpack.c.b16 %v306, %v302
    %v339 = vpack.c.b16 %v307, %v303
    %v340 = vpack.c.b16 %v308, %v304
    %v341 = vpack.c.b16 %v309, %v305
    %374 = vmatpush.bf16.msra.mxu0 %v338
    %375 = vmatpush.bf16.msra.mxu0 %v334
    %376 = vmatpush.bf16.msra.mxu0 %v330
    %377 = vmatpush.bf16.msra.mxu0 %v326
    %378 = vmatpush.bf16.msra.mxu0 %v322
    %379 = vmatpush.bf16.msra.mxu0 %v318
    %380 = vmatpush.bf16.msra.mxu0 %v314
    %381 = vmatpush.bf16.msra.mxu0 %v310
    %382 = vmatmul.bf16.gmra.mxu0 %v168
    %v383 = vpop.f32.mrf.mxu0
    %v384 = vadd.f32 %v206, %v383
    %v385 = vpop.f32.mrf.mxu0
    %v386 = vadd.f32 %v206, %v385
    %387 = vmatmul.bf16.gmra.mxu0 %v169
    %v388 = vpop.f32.mrf.mxu0
    %v389 = vadd.f32 %v206, %v388
    %v390 = vpop.f32.mrf.mxu0
    %v391 = vadd.f32 %v206, %v390
    %392 = vmatmul.bf16.gmra.mxu0 %v170
    %v393 = vpop.f32.mrf.mxu0
    %v394 = vadd.f32 %v206, %v393
    %v395 = vpop.f32.mrf.mxu0
    %v396 = vadd.f32 %v206, %v395
    %397 = vmatmul.bf16.gmra.mxu0 %v171
    %v398 = vpop.f32.mrf.mxu0
    %v399 = vadd.f32 %v206, %v398
    %v400 = vpop.f32.mrf.mxu0
    %v401 = vadd.f32 %v206, %v400
    %402 = vdwg.mxu0
    %403 = vmatpush.bf16.msra.mxu0 %v339
    %404 = vmatpush.bf16.msra.mxu0 %v335
    %405 = vmatpush.bf16.msra.mxu0 %v331
    %406 = vmatpush.bf16.msra.mxu0 %v327
    %407 = vmatpush.bf16.msra.mxu0 %v323
    %408 = vmatpush.bf16.msra.mxu0 %v319
    %409 = vmatpush.bf16.msra.mxu0 %v315
    %410 = vmatpush.bf16.msra.mxu0 %v311
    %411 = vmatmul.bf16.gmra.mxu0 %v168
    %v412 = vpop.f32.mrf.mxu0
    %v413 = vadd.f32 %v207, %v412
    %v414 = vpop.f32.mrf.mxu0
    %v415 = vadd.f32 %v207, %v414
    %416 = vmatmul.bf16.gmra.mxu0 %v169
    %v417 = vpop.f32.mrf.mxu0
    %v418 = vadd.f32 %v207, %v417
    %v419 = vpop.f32.mrf.mxu0
    %v420 = vadd.f32 %v207, %v419
    %421 = vmatmul.bf16.gmra.mxu0 %v170
    %v422 = vpop.f32.mrf.mxu0
    %v423 = vadd.f32 %v207, %v422
    %v424 = vpop.f32.mrf.mxu0
    %v425 = vadd.f32 %v207, %v424
    %426 = vmatmul.bf16.gmra.mxu0 %v171
    %v427 = vpop.f32.mrf.mxu0
    %v428 = vadd.f32 %v207, %v427
    %v429 = vpop.f32.mrf.mxu0
    %v430 = vadd.f32 %v207, %v429
    %431 = vdwg.mxu0
    %432 = vmatpush.bf16.msra.mxu0 %v340
    %433 = vmatpush.bf16.msra.mxu0 %v336
    %434 = vmatpush.bf16.msra.mxu0 %v332
    %435 = vmatpush.bf16.msra.mxu0 %v328
    %436 = vmatpush.bf16.msra.mxu0 %v324
    %437 = vmatpush.bf16.msra.mxu0 %v320
    %438 = vmatpush.bf16.msra.mxu0 %v316
    %439 = vmatpush.bf16.msra.mxu0 %v312
    %440 = vmatmul.bf16.gmra.mxu0 %v168
    %v441 = vpop.f32.mrf.mxu0
    %v442 = vadd.f32 %v208, %v441
    %v443 = vpop.f32.mrf.mxu0
    %v444 = vadd.f32 %v208, %v443
    %445 = vmatmul.bf16.gmra.mxu0 %v169
    %v446 = vpop.f32.mrf.mxu0
    %v447 = vadd.f32 %v208, %v446
    %v448 = vpop.f32.mrf.mxu0
    %v449 = vadd.f32 %v208, %v448
    %450 = vmatmul.bf16.gmra.mxu0 %v170
    %v451 = vpop.f32.mrf.mxu0
    %v452 = vadd.f32 %v208, %v451
    %v453 = vpop.f32.mrf.mxu0
    %v454 = vadd.f32 %v208, %v453
    %455 = vmatmul.bf16.gmra.mxu0 %v171
    %v456 = vpop.f32.mrf.mxu0
    %v457 = vadd.f32 %v208, %v456
    %v458 = vpop.f32.mrf.mxu0
    %v459 = vadd.f32 %v208, %v458
    %460 = vdwg.mxu0
    %461 = vmatpush.bf16.msra.mxu0 %v341
    %462 = vmatpush.bf16.msra.mxu0 %v337
    %463 = vmatpush.bf16.msra.mxu0 %v333
    %464 = vmatpush.bf16.msra.mxu0 %v329
    %465 = vmatpush.bf16.msra.mxu0 %v325
    %466 = vmatpush.bf16.msra.mxu0 %v321
    %467 = vmatpush.bf16.msra.mxu0 %v317
    %468 = vmatpush.bf16.msra.mxu0 %v313
    %469 = vmatmul.bf16.gmra.mxu0 %v168
    %v470 = vpop.f32.mrf.mxu0
    %v471 = vadd.f32 %v209, %v470
    %v472 = vpop.f32.mrf.mxu0
    %v473 = vadd.f32 %v209, %v472
    %474 = vmatmul.bf16.gmra.mxu0 %v169
    %v475 = vpop.f32.mrf.mxu0
    %v476 = vadd.f32 %v209, %v475
    %v477 = vpop.f32.mrf.mxu0
    %v478 = vadd.f32 %v209, %v477
    %479 = vmatmul.bf16.gmra.mxu0 %v170
    %v480 = vpop.f32.mrf.mxu0
    %v481 = vadd.f32 %v209, %v480
    %v482 = vpop.f32.mrf.mxu0
    %v483 = vadd.f32 %v209, %v482
    %484 = vmatmul.bf16.gmra.mxu0 %v171
    %v485 = vpop.f32.mrf.mxu0
    %v486 = vadd.f32 %v209, %v485
    %v487 = vpop.f32.mrf.mxu0
    %v488 = vadd.f32 %v209, %v487
    %489 = vdwg.mxu0
    %490 = vst [vmem:[#allocation2] sm:$0xff] %v384
    %491 = vst [vmem:[#allocation2 + $0x8] sm:$0xff] %v413
    %492 = vst [vmem:[#allocation2 + $0x10] sm:$0xff] %v442
    %493 = vst [vmem:[#allocation2 + $0x18] sm:$0xff] %v471
    %494 = vst [vmem:[#allocation2 + $0x20] sm:$0xff] %v386
    %495 = vst [vmem:[#allocation2 + $0x28] sm:$0xff] %v415
    %496 = vst [vmem:[#allocation2 + $0x30] sm:$0xff] %v444
    %497 = vst [vmem:[#allocation2 + $0x38] sm:$0xff] %v473
    %498 = vst [vmem:[#allocation2 + $0x40] sm:$0xff] %v389
    %499 = vst [vmem:[#allocation2 + $0x48] sm:$0xff] %v418
    %500 = vst [vmem:[#allocation2 + $0x50] sm:$0xff] %v447
    %501 = vst [vmem:[#allocation2 + $0x58] sm:$0xff] %v476
    %502 = vst [vmem:[#allocation2 + $0x60] sm:$0xff] %v391
    %503 = vst [vmem:[#allocation2 + $0x68] sm:$0xff] %v420
    %504 = vst [vmem:[#allocation2 + $0x70] sm:$0xff] %v449
    %505 = vst [vmem:[#allocation2 + $0x78] sm:$0xff] %v478
    %506 = vst [vmem:[#allocation2 + $0x80] sm:$0xff] %v394
    %507 = vst [vmem:[#allocation2 + $0x88] sm:$0xff] %v423
    %508 = vst [vmem:[#allocation2 + $0x90] sm:$0xff] %v452
    %509 = vst [vmem:[#allocation2 + $0x98] sm:$0xff] %v481
    %510 = vst [vmem:[#allocation2 + $0xa0] sm:$0xff] %v396
    %511 = vst [vmem:[#allocation2 + $0xa8] sm:$0xff] %v425
    %512 = vst [vmem:[#allocation2 + $0xb0] sm:$0xff] %v454
    %513 = vst [vmem:[#allocation2 + $0xb8] sm:$0xff] %v483
    %514 = vst [vmem:[#allocation2 + $0xc0] sm:$0xff] %v399
    %515 = vst [vmem:[#allocation2 + $0xc8] sm:$0xff] %v428
    %516 = vst [vmem:[#allocation2 + $0xd0] sm:$0xff] %v457
    %517 = vst [vmem:[#allocation2 + $0xd8] sm:$0xff] %v486
    %518 = vst [vmem:[#allocation2 + $0xe0] sm:$0xff] %v401
    %519 = vst [vmem:[#allocation2 + $0xe8] sm:$0xff] %v430
    %520 = vst [vmem:[#allocation2 + $0xf0] sm:$0xff] %v459
    %521 = vst [vmem:[#allocation2 + $0xf8] sm:$0xff] %v488
    %v522 = vld [vmem:[#allocation12] sm:$0xff]
    %v523 = vld [vmem:[#allocation12 + $0x8] sm:$0xff]
    %v524 = vld [vmem:[#allocation12 + $0x10] sm:$0xff]
    %v525 = vld [vmem:[#allocation12 + $0x18] sm:$0xff]
    %v526 = vld [vmem:[#allocation12 + $0x20] sm:$0xff]
    %v527 = vld [vmem:[#allocation12 + $0x28] sm:$0xff]
    %v528 = vld [vmem:[#allocation12 + $0x30] sm:$0xff]
    %v529 = vld [vmem:[#allocation12 + $0x38] sm:$0xff]
    %v530 = vld [vmem:[#allocation12 + $0x40] sm:$0xff]
    %v531 = vld [vmem:[#allocation12 + $0x48] sm:$0xff]
    %v532 = vld [vmem:[#allocation12 + $0x50] sm:$0xff]
    %v533 = vld [vmem:[#allocation12 + $0x58] sm:$0xff]
    %v534 = vld [vmem:[#allocation12 + $0x60] sm:$0xff]
    %v535 = vld [vmem:[#allocation12 + $0x68] sm:$0xff]
    %v536 = vld [vmem:[#allocation12 + $0x70] sm:$0xff]
    %v537 = vld [vmem:[#allocation12 + $0x78] sm:$0xff]
    %v538 = vld [vmem:[#allocation12 + $0x80] sm:$0xff]
    %v539 = vld [vmem:[#allocation12 + $0x88] sm:$0xff]
    %v540 = vld [vmem:[#allocation12 + $0x90] sm:$0xff]
    %v541 = vld [vmem:[#allocation12 + $0x98] sm:$0xff]
    %v542 = vld [vmem:[#allocation12 + $0xa0] sm:$0xff]
    %v543 = vld [vmem:[#allocation12 + $0xa8] sm:$0xff]
    %v544 = vld [vmem:[#allocation12 + $0xb0] sm:$0xff]
    %v545 = vld [vmem:[#allocation12 + $0xb8] sm:$0xff]
    %v546 = vld [vmem:[#allocation12 + $0xc0] sm:$0xff]
    %v547 = vld [vmem:[#allocation12 + $0xc8] sm:$0xff]
    %v548 = vld [vmem:[#allocation12 + $0xd0] sm:$0xff]
    %v549 = vld [vmem:[#allocation12 + $0xd8] sm:$0xff]
    %v550 = vld [vmem:[#allocation12 + $0xe0] sm:$0xff]
    %v551 = vld [vmem:[#allocation12 + $0xe8] sm:$0xff]
    %v552 = vld [vmem:[#allocation12 + $0xf0] sm:$0xff]
    %v553 = vld [vmem:[#allocation12 + $0xf8] sm:$0xff]
    %v554 = vld [vmem:[%s5] sm:$0xf]
    %v556 = vperm.slane %v554, 0
    %v557 = vperm.slane %v554, 1
    %v558 = vperm.slane %v554, 2
    %v559 = vperm.slane %v554, 3
    %v596 = vunpack.c.l.b16 %v522
    %v597 = vunpack.c.h.b16 %v522
    %v598 = vunpack.c.l.b16 %v523
    %v599 = vunpack.c.h.b16 %v523
    %v600 = vunpack.c.l.b16 %v524
    %v601 = vunpack.c.h.b16 %v524
    %v602 = vunpack.c.l.b16 %v525
    %v603 = vunpack.c.h.b16 %v525
    %v604 = vunpack.c.l.b16 %v526
    %v605 = vunpack.c.h.b16 %v526
    %v606 = vunpack.c.l.b16 %v527
    %v607 = vunpack.c.h.b16 %v527
    %v608 = vunpack.c.l.b16 %v528
    %v609 = vunpack.c.h.b16 %v528
    %v610 = vunpack.c.l.b16 %v529
    %v611 = vunpack.c.h.b16 %v529
    %v612 = vunpack.c.l.b16 %v530
    %v613 = vunpack.c.h.b16 %v530
    %v614 = vunpack.c.l.b16 %v531
    %v615 = vunpack.c.h.b16 %v531
    %v616 = vunpack.c.l.b16 %v532
    %v617 = vunpack.c.h.b16 %v532
    %v618 = vunpack.c.l.b16 %v533
    %v619 = vunpack.c.h.b16 %v533
    %v620 = vunpack.c.l.b16 %v534
    %v621 = vunpack.c.h.b16 %v534
    %v622 = vunpack.c.l.b16 %v535
    %v623 = vunpack.c.h.b16 %v535
    %v624 = vunpack.c.l.b16 %v536
    %v625 = vunpack.c.h.b16 %v536
    %v626 = vunpack.c.l.b16 %v537
    %v627 = vunpack.c.h.b16 %v537
    %v628 = vunpack.c.l.b16 %v538
    %v629 = vunpack.c.h.b16 %v538
    %v630 = vunpack.c.l.b16 %v539
    %v631 = vunpack.c.h.b16 %v539
    %v632 = vunpack.c.l.b16 %v540
    %v633 = vunpack.c.h.b16 %v540
    %v634 = vunpack.c.l.b16 %v541
    %v635 = vunpack.c.h.b16 %v541
    %v636 = vunpack.c.l.b16 %v542
    %v637 = vunpack.c.h.b16 %v542
    %v638 = vunpack.c.l.b16 %v543
    %v639 = vunpack.c.h.b16 %v543
    %v640 = vunpack.c.l.b16 %v544
    %v641 = vunpack.c.h.b16 %v544
    %v642 = vunpack.c.l.b16 %v545
    %v643 = vunpack.c.h.b16 %v545
    %v644 = vunpack.c.l.b16 %v546
    %v645 = vunpack.c.h.b16 %v546
    %v646 = vunpack.c.l.b16 %v547
    %v647 = vunpack.c.h.b16 %v547
    %v648 = vunpack.c.l.b16 %v548
    %v649 = vunpack.c.h.b16 %v548
    %v650 = vunpack.c.l.b16 %v549
    %v651 = vunpack.c.h.b16 %v549
    %v652 = vunpack.c.l.b16 %v550
    %v653 = vunpack.c.h.b16 %v550
    %v654 = vunpack.c.l.b16 %v551
    %v655 = vunpack.c.h.b16 %v551
    %v656 = vunpack.c.l.b16 %v552
    %v657 = vunpack.c.h.b16 %v552
    %v658 = vunpack.c.l.b16 %v553
    %v659 = vunpack.c.h.b16 %v553
    %v660 = vpack.c.b16 %v600, %v596
    %v661 = vpack.c.b16 %v601, %v597
    %v662 = vpack.c.b16 %v602, %v598
    %v663 = vpack.c.b16 %v603, %v599
    %v664 = vpack.c.b16 %v608, %v604
    %v665 = vpack.c.b16 %v609, %v605
    %v666 = vpack.c.b16 %v610, %v606
    %v667 = vpack.c.b16 %v611, %v607
    %v668 = vpack.c.b16 %v616, %v612
    %v669 = vpack.c.b16 %v617, %v613
    %v670 = vpack.c.b16 %v618, %v614
    %v671 = vpack.c.b16 %v619, %v615
    %v672 = vpack.c.b16 %v624, %v620
    %v673 = vpack.c.b16 %v625, %v621
    %v674 = vpack.c.b16 %v626, %v622
    %v675 = vpack.c.b16 %v627, %v623
    %v676 = vpack.c.b16 %v632, %v628
    %v677 = vpack.c.b16 %v633, %v629
    %v678 = vpack.c.b16 %v634, %v630
    %v679 = vpack.c.b16 %v635, %v631
    %v680 = vpack.c.b16 %v640, %v636
    %v681 = vpack.c.b16 %v641, %v637
    %v682 = vpack.c.b16 %v642, %v638
    %v683 = vpack.c.b16 %v643, %v639
    %v684 = vpack.c.b16 %v648, %v644
    %v685 = vpack.c.b16 %v649, %v645
    %v686 = vpack.c.b16 %v650, %v646
    %v687 = vpack.c.b16 %v651, %v647
    %v688 = vpack.c.b16 %v656, %v652
    %v689 = vpack.c.b16 %v657, %v653
    %v690 = vpack.c.b16 %v658, %v654
    %v691 = vpack.c.b16 %v659, %v655
    %724 = vmatpush.bf16.msra.mxu0 %v688
    %725 = vmatpush.bf16.msra.mxu0 %v684
    %726 = vmatpush.bf16.msra.mxu0 %v680
    %727 = vmatpush.bf16.msra.mxu0 %v676
    %728 = vmatpush.bf16.msra.mxu0 %v672
    %729 = vmatpush.bf16.msra.mxu0 %v668
    %730 = vmatpush.bf16.msra.mxu0 %v664
    %731 = vmatpush.bf16.msra.mxu0 %v660
    %732 = vmatmul.bf16.gmra.mxu0 %v168
    %v733 = vpop.f32.mrf.mxu0
    %v734 = vadd.f32 %v556, %v733
    %v735 = vpop.f32.mrf.mxu0
    %v736 = vadd.f32 %v556, %v735
    %737 = vmatmul.bf16.gmra.mxu0 %v169
    %v738 = vpop.f32.mrf.mxu0
    %v739 = vadd.f32 %v556, %v738
    %v740 = vpop.f32.mrf.mxu0
    %v741 = vadd.f32 %v556, %v740
    %742 = vmatmul.bf16.gmra.mxu0 %v170
    %v743 = vpop.f32.mrf.mxu0
    %v744 = vadd.f32 %v556, %v743
    %v745 = vpop.f32.mrf.mxu0
    %v746 = vadd.f32 %v556, %v745
    %747 = vmatmul.bf16.gmra.mxu0 %v171
    %v748 = vpop.f32.mrf.mxu0
    %v749 = vadd.f32 %v556, %v748
    %v750 = vpop.f32.mrf.mxu0
    %v751 = vadd.f32 %v556, %v750
    %752 = vdwg.mxu0
    %753 = vmatpush.bf16.msra.mxu0 %v689
    %754 = vmatpush.bf16.msra.mxu0 %v685
    %755 = vmatpush.bf16.msra.mxu0 %v681
    %756 = vmatpush.bf16.msra.mxu0 %v677
    %757 = vmatpush.bf16.msra.mxu0 %v673
    %758 = vmatpush.bf16.msra.mxu0 %v669
    %759 = vmatpush.bf16.msra.mxu0 %v665
    %760 = vmatpush.bf16.msra.mxu0 %v661
    %761 = vmatmul.bf16.gmra.mxu0 %v168
    %v762 = vpop.f32.mrf.mxu0
    %v763 = vadd.f32 %v557, %v762
    %v764 = vpop.f32.mrf.mxu0
    %v765 = vadd.f32 %v557, %v764
    %766 = vmatmul.bf16.gmra.mxu0 %v169
    %v767 = vpop.f32.mrf.mxu0
    %v768 = vadd.f32 %v557, %v767
    %v769 = vpop.f32.mrf.mxu0
    %v770 = vadd.f32 %v557, %v769
    %771 = vmatmul.bf16.gmra.mxu0 %v170
    %v772 = vpop.f32.mrf.mxu0
    %v773 = vadd.f32 %v557, %v772
    %v774 = vpop.f32.mrf.mxu0
    %v775 = vadd.f32 %v557, %v774
    %776 = vmatmul.bf16.gmra.mxu0 %v171
    %v777 = vpop.f32.mrf.mxu0
    %v778 = vadd.f32 %v557, %v777
    %v779 = vpop.f32.mrf.mxu0
    %v780 = vadd.f32 %v557, %v779
    %781 = vdwg.mxu0
    %782 = vmatpush.bf16.msra.mxu0 %v690
    %783 = vmatpush.bf16.msra.mxu0 %v686
    %784 = vmatpush.bf16.msra.mxu0 %v682
    %785 = vmatpush.bf16.msra.mxu0 %v678
    %786 = vmatpush.bf16.msra.mxu0 %v674
    %787 = vmatpush.bf16.msra.mxu0 %v670
    %788 = vmatpush.bf16.msra.mxu0 %v666
    %789 = vmatpush.bf16.msra.mxu0 %v662
    %790 = vmatmul.bf16.gmra.mxu0 %v168
    %v791 = vpop.f32.mrf.mxu0
    %v792 = vadd.f32 %v558, %v791
    %v793 = vpop.f32.mrf.mxu0
    %v794 = vadd.f32 %v558, %v793
    %795 = vmatmul.bf16.gmra.mxu0 %v169
    %v796 = vpop.f32.mrf.mxu0
    %v797 = vadd.f32 %v558, %v796
    %v798 = vpop.f32.mrf.mxu0
    %v799 = vadd.f32 %v558, %v798
    %800 = vmatmul.bf16.gmra.mxu0 %v170
    %v801 = vpop.f32.mrf.mxu0
    %v802 = vadd.f32 %v558, %v801
    %v803 = vpop.f32.mrf.mxu0
    %v804 = vadd.f32 %v558, %v803
    %805 = vmatmul.bf16.gmra.mxu0 %v171
    %v806 = vpop.f32.mrf.mxu0
    %v807 = vadd.f32 %v558, %v806
    %v808 = vpop.f32.mrf.mxu0
    %v809 = vadd.f32 %v558, %v808
    %810 = vdwg.mxu0
    %811 = vmatpush.bf16.msra.mxu0 %v691
    %812 = vmatpush.bf16.msra.mxu0 %v687
    %813 = vmatpush.bf16.msra.mxu0 %v683
    %814 = vmatpush.bf16.msra.mxu0 %v679
    %815 = vmatpush.bf16.msra.mxu0 %v675
    %816 = vmatpush.bf16.msra.mxu0 %v671
    %817 = vmatpush.bf16.msra.mxu0 %v667
    %818 = vmatpush.bf16.msra.mxu0 %v663
    %819 = vmatmul.bf16.gmra.mxu0 %v168
    %v820 = vpop.f32.mrf.mxu0
    %v821 = vadd.f32 %v559, %v820
    %v822 = vpop.f32.mrf.mxu0
    %v823 = vadd.f32 %v559, %v822
    %824 = vmatmul.bf16.gmra.mxu0 %v169
    %v825 = vpop.f32.mrf.mxu0
    %v826 = vadd.f32 %v559, %v825
    %v827 = vpop.f32.mrf.mxu0
    %v828 = vadd.f32 %v559, %v827
    %829 = vmatmul.bf16.gmra.mxu0 %v170
    %v830 = vpop.f32.mrf.mxu0
    %v831 = vadd.f32 %v559, %v830
    %v832 = vpop.f32.mrf.mxu0
    %v833 = vadd.f32 %v559, %v832
    %834 = vmatmul.bf16.gmra.mxu0 %v171
    %v835 = vpop.f32.mrf.mxu0
    %v836 = vadd.f32 %v559, %v835
    %v837 = vpop.f32.mrf.mxu0
    %v838 = vadd.f32 %v559, %v837
    %839 = vdwg.mxu0
    %840 = vst [vmem:[#allocation3] sm:$0xff] %v734
    %841 = vst [vmem:[#allocation3 + $0x8] sm:$0xff] %v763
    %842 = vst [vmem:[#allocation3 + $0x10] sm:$0xff] %v792
    %843 = vst [vmem:[#allocation3 + $0x18] sm:$0xff] %v821
    %844 = vst [vmem:[#allocation3 + $0x20] sm:$0xff] %v736
    %845 = vst [vmem:[#allocation3 + $0x28] sm:$0xff] %v765
    %846 = vst [vmem:[#allocation3 + $0x30] sm:$0xff] %v794
    %847 = vst [vmem:[#allocation3 + $0x38] sm:$0xff] %v823
    %848 = vst [vmem:[#allocation3 + $0x40] sm:$0xff] %v739
    %849 = vst [vmem:[#allocation3 + $0x48] sm:$0xff] %v768
    %850 = vst [vmem:[#allocation3 + $0x50] sm:$0xff] %v797
    %851 = vst [vmem:[#allocation3 + $0x58] sm:$0xff] %v826
    %852 = vst [vmem:[#allocation3 + $0x60] sm:$0xff] %v741
    %853 = vst [vmem:[#allocation3 + $0x68] sm:$0xff] %v770
    %854 = vst [vmem:[#allocation3 + $0x70] sm:$0xff] %v799
    %855 = vst [vmem:[#allocation3 + $0x78] sm:$0xff] %v828
    %856 = vst [vmem:[#allocation3 + $0x80] sm:$0xff] %v744
    %857 = vst [vmem:[#allocation3 + $0x88] sm:$0xff] %v773
    %858 = vst [vmem:[#allocation3 + $0x90] sm:$0xff] %v802
    %859 = vst [vmem:[#allocation3 + $0x98] sm:$0xff] %v831
    %860 = vst [vmem:[#allocation3 + $0xa0] sm:$0xff] %v746
    %861 = vst [vmem:[#allocation3 + $0xa8] sm:$0xff] %v775
    %862 = vst [vmem:[#allocation3 + $0xb0] sm:$0xff] %v804
    %863 = vst [vmem:[#allocation3 + $0xb8] sm:$0xff] %v833
    %864 = vst [vmem:[#allocation3 + $0xc0] sm:$0xff] %v749
    %865 = vst [vmem:[#allocation3 + $0xc8] sm:$0xff] %v778
    %866 = vst [vmem:[#allocation3 + $0xd0] sm:$0xff] %v807
    %867 = vst [vmem:[#allocation3 + $0xd8] sm:$0xff] %v836
    %868 = vst [vmem:[#allocation3 + $0xe0] sm:$0xff] %v751
    %869 = vst [vmem:[#allocation3 + $0xe8] sm:$0xff] %v780
    %870 = vst [vmem:[#allocation3 + $0xf0] sm:$0xff] %v809
    %871 = vst [vmem:[#allocation3 + $0xf8] sm:$0xff] %v838
    %872 = vst [vmem:[#allocation6] sm:$0xff] 0.0
    %873 = vst [vmem:[#allocation6 + $0x8] sm:$0xff] 0.0
    %874 = vst [vmem:[#allocation7] sm:$0xff] 0.0
    %875 = vst [vmem:[#allocation8] sm:$0xff] 0.0
    %v876 = vld [vmem:[#allocation6] sm:$0xff]
    %v877 = vld [vmem:[#allocation6 + $0x8] sm:$0xff]
    %v878 = vpack.c.bf16 %v876, %v876
    %v879 = vpack.c.bf16 %v877, %v877
    %v880 = vld [vmem:[#allocation14] sm:$0xff]
    %v881 = vld [vmem:[#allocation14 + $0x8] sm:$0xff]
    %v882 = vld [vmem:[#allocation14 + $0x10] sm:$0xff]
    %v883 = vld [vmem:[#allocation14 + $0x18] sm:$0xff]
    %v884 = vld [vmem:[#allocation14 + $0x20] sm:$0xff]
    %v885 = vld [vmem:[#allocation14 + $0x28] sm:$0xff]
    %v886 = vld [vmem:[#allocation14 + $0x30] sm:$0xff]
    %v887 = vld [vmem:[#allocation14 + $0x38] sm:$0xff]
    %v888 = vld [vmem:[#allocation14 + $0x40] sm:$0xff]
    %v889 = vld [vmem:[#allocation14 + $0x48] sm:$0xff]
    %v890 = vld [vmem:[#allocation14 + $0x50] sm:$0xff]
    %v891 = vld [vmem:[#allocation14 + $0x58] sm:$0xff]
    %v892 = vld [vmem:[#allocation14 + $0x60] sm:$0xff]
    %v893 = vld [vmem:[#allocation14 + $0x68] sm:$0xff]
    %v894 = vld [vmem:[#allocation14 + $0x70] sm:$0xff]
    %v895 = vld [vmem:[#allocation14 + $0x78] sm:$0xff]
    %v896 = vld [vmem:[#allocation14 + $0x80] sm:$0xff]
    %v897 = vld [vmem:[#allocation14 + $0x88] sm:$0xff]
    %v898 = vld [vmem:[#allocation14 + $0x90] sm:$0xff]
    %v899 = vld [vmem:[#allocation14 + $0x98] sm:$0xff]
    %v900 = vld [vmem:[#allocation14 + $0xa0] sm:$0xff]
    %v901 = vld [vmem:[#allocation14 + $0xa8] sm:$0xff]
    %v902 = vld [vmem:[#allocation14 + $0xb0] sm:$0xff]
    %v903 = vld [vmem:[#allocation14 + $0xb8] sm:$0xff]
    %v904 = vld [vmem:[#allocation14 + $0xc0] sm:$0xff]
    %v905 = vld [vmem:[#allocation14 + $0xc8] sm:$0xff]
    %v906 = vld [vmem:[#allocation14 + $0xd0] sm:$0xff]
    %v907 = vld [vmem:[#allocation14 + $0xd8] sm:$0xff]
    %v908 = vld [vmem:[#allocation14 + $0xe0] sm:$0xff]
    %v909 = vld [vmem:[#allocation14 + $0xe8] sm:$0xff]
    %v910 = vld [vmem:[#allocation14 + $0xf0] sm:$0xff]
    %v911 = vld [vmem:[#allocation14 + $0xf8] sm:$0xff]
    %v912 = vld [vmem:[#allocation14 + $0x100] sm:$0xff]
    %v913 = vld [vmem:[#allocation14 + $0x108] sm:$0xff]
    %v914 = vld [vmem:[#allocation14 + $0x110] sm:$0xff]
    %v915 = vld [vmem:[#allocation14 + $0x118] sm:$0xff]
    %v916 = vld [vmem:[#allocation14 + $0x120] sm:$0xff]
    %v917 = vld [vmem:[#allocation14 + $0x128] sm:$0xff]
    %v918 = vld [vmem:[#allocation14 + $0x130] sm:$0xff]
    %v919 = vld [vmem:[#allocation14 + $0x138] sm:$0xff]
    %v920 = vld [vmem:[#allocation14 + $0x140] sm:$0xff]
    %v921 = vld [vmem:[#allocation14 + $0x148] sm:$0xff]
    %v922 = vld [vmem:[#allocation14 + $0x150] sm:$0xff]
    %v923 = vld [vmem:[#allocation14 + $0x158] sm:$0xff]
    %v924 = vld [vmem:[#allocation14 + $0x160] sm:$0xff]
    %v925 = vld [vmem:[#allocation14 + $0x168] sm:$0xff]
    %v926 = vld [vmem:[#allocation14 + $0x170] sm:$0xff]
    %v927 = vld [vmem:[#allocation14 + $0x178] sm:$0xff]
    %v928 = vld [vmem:[#allocation14 + $0x180] sm:$0xff]
    %v929 = vld [vmem:[#allocation14 + $0x188] sm:$0xff]
    %v930 = vld [vmem:[#allocation14 + $0x190] sm:$0xff]
    %v931 = vld [vmem:[#allocation14 + $0x198] sm:$0xff]
    %v932 = vld [vmem:[#allocation14 + $0x1a0] sm:$0xff]
    %v933 = vld [vmem:[#allocation14 + $0x1a8] sm:$0xff]
    %v934 = vld [vmem:[#allocation14 + $0x1b0] sm:$0xff]
    %v935 = vld [vmem:[#allocation14 + $0x1b8] sm:$0xff]
    %v936 = vld [vmem:[#allocation14 + $0x1c0] sm:$0xff]
    %v937 = vld [vmem:[#allocation14 + $0x1c8] sm:$0xff]
    %v938 = vld [vmem:[#allocation14 + $0x1d0] sm:$0xff]
    %v939 = vld [vmem:[#allocation14 + $0x1d8] sm:$0xff]
    %v940 = vld [vmem:[#allocation14 + $0x1e0] sm:$0xff]
    %v941 = vld [vmem:[#allocation14 + $0x1e8] sm:$0xff]
    %v942 = vld [vmem:[#allocation14 + $0x1f0] sm:$0xff]
    %v943 = vld [vmem:[#allocation14 + $0x1f8] sm:$0xff]
    %v944 = vld [vmem:[#allocation14 + $0x200] sm:$0xff]
    %v945 = vld [vmem:[#allocation14 + $0x208] sm:$0xff]
    %v946 = vld [vmem:[#allocation14 + $0x210] sm:$0xff]
    %v947 = vld [vmem:[#allocation14 + $0x218] sm:$0xff]
    %v948 = vld [vmem:[#allocation14 + $0x220] sm:$0xff]
    %v949 = vld [vmem:[#allocation14 + $0x228] sm:$0xff]
    %v950 = vld [vmem:[#allocation14 + $0x230] sm:$0xff]
    %v951 = vld [vmem:[#allocation14 + $0x238] sm:$0xff]
    %v952 = vld [vmem:[#allocation14 + $0x240] sm:$0xff]
    %v953 = vld [vmem:[#allocation14 + $0x248] sm:$0xff]
    %v954 = vld [vmem:[#allocation14 + $0x250] sm:$0xff]
    %v955 = vld [vmem:[#allocation14 + $0x258] sm:$0xff]
    %v956 = vld [vmem:[#allocation14 + $0x260] sm:$0xff]
    %v957 = vld [vmem:[#allocation14 + $0x268] sm:$0xff]
    %v958 = vld [vmem:[#allocation14 + $0x270] sm:$0xff]
    %v959 = vld [vmem:[#allocation14 + $0x278] sm:$0xff]
    %v960 = vld [vmem:[#allocation14 + $0x280] sm:$0xff]
    %v961 = vld [vmem:[#allocation14 + $0x288] sm:$0xff]
    %v962 = vld [vmem:[#allocation14 + $0x290] sm:$0xff]
    %v963 = vld [vmem:[#allocation14 + $0x298] sm:$0xff]
    %v964 = vld [vmem:[#allocation14 + $0x2a0] sm:$0xff]
    %v965 = vld [vmem:[#allocation14 + $0x2a8] sm:$0xff]
    %v966 = vld [vmem:[#allocation14 + $0x2b0] sm:$0xff]
    %v967 = vld [vmem:[#allocation14 + $0x2b8] sm:$0xff]
    %v968 = vld [vmem:[#allocation14 + $0x2c0] sm:$0xff]
    %v969 = vld [vmem:[#allocation14 + $0x2c8] sm:$0xff]
    %v970 = vld [vmem:[#allocation14 + $0x2d0] sm:$0xff]
    %v971 = vld [vmem:[#allocation14 + $0x2d8] sm:$0xff]
    %v972 = vld [vmem:[#allocation14 + $0x2e0] sm:$0xff]
    %v973 = vld [vmem:[#allocation14 + $0x2e8] sm:$0xff]
    %v974 = vld [vmem:[#allocation14 + $0x2f0] sm:$0xff]
    %v975 = vld [vmem:[#allocation14 + $0x2f8] sm:$0xff]
    %v976 = vld [vmem:[#allocation14 + $0x300] sm:$0xff]
    %v977 = vld [vmem:[#allocation14 + $0x308] sm:$0xff]
    %v978 = vld [vmem:[#allocation14 + $0x310] sm:$0xff]
    %v979 = vld [vmem:[#allocation14 + $0x318] sm:$0xff]
    %v980 = vld [vmem:[#allocation14 + $0x320] sm:$0xff]
    %v981 = vld [vmem:[#allocation14 + $0x328] sm:$0xff]
    %v982 = vld [vmem:[#allocation14 + $0x330] sm:$0xff]
    %v983 = vld [vmem:[#allocation14 + $0x338] sm:$0xff]
    %v984 = vld [vmem:[#allocation14 + $0x340] sm:$0xff]
    %v985 = vld [vmem:[#allocation14 + $0x348] sm:$0xff]
    %v986 = vld [vmem:[#allocation14 + $0x350] sm:$0xff]
    %v987 = vld [vmem:[#allocation14 + $0x358] sm:$0xff]
    %v988 = vld [vmem:[#allocation14 + $0x360] sm:$0xff]
    %v989 = vld [vmem:[#allocation14 + $0x368] sm:$0xff]
    %v990 = vld [vmem:[#allocation14 + $0x370] sm:$0xff]
    %v991 = vld [vmem:[#allocation14 + $0x378] sm:$0xff]
    %v992 = vld [vmem:[#allocation14 + $0x380] sm:$0xff]
    %v993 = vld [vmem:[#allocation14 + $0x388] sm:$0xff]
    %v994 = vld [vmem:[#allocation14 + $0x390] sm:$0xff]
    %v995 = vld [vmem:[#allocation14 + $0x398] sm:$0xff]
    %v996 = vld [vmem:[#allocation14 + $0x3a0] sm:$0xff]
    %v997 = vld [vmem:[#allocation14 + $0x3a8] sm:$0xff]
    %v998 = vld [vmem:[#allocation14 + $0x3b0] sm:$0xff]
    %v999 = vld [vmem:[#allocation14 + $0x3b8] sm:$0xff]
    %v1000 = vld [vmem:[#allocation14 + $0x3c0] sm:$0xff]
    %v1001 = vld [vmem:[#allocation14 + $0x3c8] sm:$0xff]
    %v1002 = vld [vmem:[#allocation14 + $0x3d0] sm:$0xff]
    %v1003 = vld [vmem:[#allocation14 + $0x3d8] sm:$0xff]
    %v1004 = vld [vmem:[#allocation14 + $0x3e0] sm:$0xff]
    %v1005 = vld [vmem:[#allocation14 + $0x3e8] sm:$0xff]
    %v1006 = vld [vmem:[#allocation14 + $0x3f0] sm:$0xff]
    %v1007 = vld [vmem:[#allocation14 + $0x3f8] sm:$0xff]
    %v1136 = vunpack.c.l.b16 %v880
    %v1137 = vunpack.c.h.b16 %v880
    %v1138 = vunpack.c.l.b16 %v881
    %v1139 = vunpack.c.h.b16 %v881
    %v1140 = vunpack.c.l.b16 %v882
    %v1141 = vunpack.c.h.b16 %v882
    %v1142 = vunpack.c.l.b16 %v883
    %v1143 = vunpack.c.h.b16 %v883
    %v1144 = vunpack.c.l.b16 %v884
    %v1145 = vunpack.c.h.b16 %v884
    %v1146 = vunpack.c.l.b16 %v885
    %v1147 = vunpack.c.h.b16 %v885
    %v1148 = vunpack.c.l.b16 %v886
    %v1149 = vunpack.c.h.b16 %v886
    %v1150 = vunpack.c.l.b16 %v887
    %v1151 = vunpack.c.h.b16 %v887
    %v1152 = vunpack.c.l.b16 %v888
    %v1153 = vunpack.c.h.b16 %v888
    %v1154 = vunpack.c.l.b16 %v889
    %v1155 = vunpack.c.h.b16 %v889
    %v1156 = vunpack.c.l.b16 %v890
    %v1157 = vunpack.c.h.b16 %v890
    %v1158 = vunpack.c.l.b16 %v891
    %v1159 = vunpack.c.h.b16 %v891
    %v1160 = vunpack.c.l.b16 %v892
    %v1161 = vunpack.c.h.b16 %v892
    %v1162 = vunpack.c.l.b16 %v893
    %v1163 = vunpack.c.h.b16 %v893
    %v1164 = vunpack.c.l.b16 %v894
    %v1165 = vunpack.c.h.b16 %v894
    %v1166 = vunpack.c.l.b16 %v895
    %v1167 = vunpack.c.h.b16 %v895
    %v1168 = vunpack.c.l.b16 %v896
    %v1169 = vunpack.c.h.b16 %v896
    %v1170 = vunpack.c.l.b16 %v897
    %v1171 = vunpack.c.h.b16 %v897
    %v1172 = vunpack.c.l.b16 %v898
    %v1173 = vunpack.c.h.b16 %v898
    %v1174 = vunpack.c.l.b16 %v899
    %v1175 = vunpack.c.h.b16 %v899
    %v1176 = vunpack.c.l.b16 %v900
    %v1177 = vunpack.c.h.b16 %v900
    %v1178 = vunpack.c.l.b16 %v901
    %v1179 = vunpack.c.h.b16 %v901
    %v1180 = vunpack.c.l.b16 %v902
    %v1181 = vunpack.c.h.b16 %v902
    %v1182 = vunpack.c.l.b16 %v903
    %v1183 = vunpack.c.h.b16 %v903
    %v1184 = vunpack.c.l.b16 %v904
    %v1185 = vunpack.c.h.b16 %v904
    %v1186 = vunpack.c.l.b16 %v905
    %v1187 = vunpack.c.h.b16 %v905
    %v1188 = vunpack.c.l.b16 %v906
    %v1189 = vunpack.c.h.b16 %v906
    %v1190 = vunpack.c.l.b16 %v907
    %v1191 = vunpack.c.h.b16 %v907
    %v1192 = vunpack.c.l.b16 %v908
    %v1193 = vunpack.c.h.b16 %v908
    %v1194 = vunpack.c.l.b16 %v909
    %v1195 = vunpack.c.h.b16 %v909
    %v1196 = vunpack.c.l.b16 %v910
    %v1197 = vunpack.c.h.b16 %v910
    %v1198 = vunpack.c.l.b16 %v911
    %v1199 = vunpack.c.h.b16 %v911
    %v1200 = vunpack.c.l.b16 %v912
    %v1201 = vunpack.c.h.b16 %v912
    %v1202 = vunpack.c.l.b16 %v913
    %v1203 = vunpack.c.h.b16 %v913
    %v1204 = vunpack.c.l.b16 %v914
    %v1205 = vunpack.c.h.b16 %v914
    %v1206 = vunpack.c.l.b16 %v915
    %v1207 = vunpack.c.h.b16 %v915
    %v1208 = vunpack.c.l.b16 %v916
    %v1209 = vunpack.c.h.b16 %v916
    %v1210 = vunpack.c.l.b16 %v917
    %v1211 = vunpack.c.h.b16 %v917
    %v1212 = vunpack.c.l.b16 %v918
    %v1213 = vunpack.c.h.b16 %v918
    %v1214 = vunpack.c.l.b16 %v919
    %v1215 = vunpack.c.h.b16 %v919
    %v1216 = vunpack.c.l.b16 %v920
    %v1217 = vunpack.c.h.b16 %v920
    %v1218 = vunpack.c.l.b16 %v921
    %v1219 = vunpack.c.h.b16 %v921
    %v1220 = vunpack.c.l.b16 %v922
    %v1221 = vunpack.c.h.b16 %v922
    %v1222 = vunpack.c.l.b16 %v923
    %v1223 = vunpack.c.h.b16 %v923
    %v1224 = vunpack.c.l.b16 %v924
    %v1225 = vunpack.c.h.b16 %v924
    %v1226 = vunpack.c.l.b16 %v925
    %v1227 = vunpack.c.h.b16 %v925
    %v1228 = vunpack.c.l.b16 %v926
    %v1229 = vunpack.c.h.b16 %v926
    %v1230 = vunpack.c.l.b16 %v927
    %v1231 = vunpack.c.h.b16 %v927
    %v1232 = vunpack.c.l.b16 %v928
    %v1233 = vunpack.c.h.b16 %v928
    %v1234 = vunpack.c.l.b16 %v929
    %v1235 = vunpack.c.h.b16 %v929
    %v1236 = vunpack.c.l.b16 %v930
    %v1237 = vunpack.c.h.b16 %v930
    %v1238 = vunpack.c.l.b16 %v931
    %v1239 = vunpack.c.h.b16 %v931
    %v1240 = vunpack.c.l.b16 %v932
    %v1241 = vunpack.c.h.b16 %v932
    %v1242 = vunpack.c.l.b16 %v933
    %v1243 = vunpack.c.h.b16 %v933
    %v1244 = vunpack.c.l.b16 %v934
    %v1245 = vunpack.c.h.b16 %v934
    %v1246 = vunpack.c.l.b16 %v935
    %v1247 = vunpack.c.h.b16 %v935
    %v1248 = vunpack.c.l.b16 %v936
    %v1249 = vunpack.c.h.b16 %v936
    %v1250 = vunpack.c.l.b16 %v937
    %v1251 = vunpack.c.h.b16 %v937
    %v1252 = vunpack.c.l.b16 %v938
    %v1253 = vunpack.c.h.b16 %v938
    %v1254 = vunpack.c.l.b16 %v939
    %v1255 = vunpack.c.h.b16 %v939
    %v1256 = vunpack.c.l.b16 %v940
    %v1257 = vunpack.c.h.b16 %v940
    %v1258 = vunpack.c.l.b16 %v941
    %v1259 = vunpack.c.h.b16 %v941
    %v1260 = vunpack.c.l.b16 %v942
    %v1261 = vunpack.c.h.b16 %v942
    %v1262 = vunpack.c.l.b16 %v943
    %v1263 = vunpack.c.h.b16 %v943
    %v1264 = vunpack.c.l.b16 %v944
    %v1265 = vunpack.c.h.b16 %v944
    %v1266 = vunpack.c.l.b16 %v945
    %v1267 = vunpack.c.h.b16 %v945
    %v1268 = vunpack.c.l.b16 %v946
    %v1269 = vunpack.c.h.b16 %v946
    %v1270 = vunpack.c.l.b16 %v947
    %v1271 = vunpack.c.h.b16 %v947
    %v1272 = vunpack.c.l.b16 %v948
    %v1273 = vunpack.c.h.b16 %v948
    %v1274 = vunpack.c.l.b16 %v949
    %v1275 = vunpack.c.h.b16 %v949
    %v1276 = vunpack.c.l.b16 %v950
    %v1277 = vunpack.c.h.b16 %v950
    %v1278 = vunpack.c.l.b16 %v951
    %v1279 = vunpack.c.h.b16 %v951
    %v1280 = vunpack.c.l.b16 %v952
    %v1281 = vunpack.c.h.b16 %v952
    %v1282 = vunpack.c.l.b16 %v953
    %v1283 = vunpack.c.h.b16 %v953
    %v1284 = vunpack.c.l.b16 %v954
    %v1285 = vunpack.c.h.b16 %v954
    %v1286 = vunpack.c.l.b16 %v955
    %v1287 = vunpack.c.h.b16 %v955
    %v1288 = vunpack.c.l.b16 %v956
    %v1289 = vunpack.c.h.b16 %v956
    %v1290 = vunpack.c.l.b16 %v957
    %v1291 = vunpack.c.h.b16 %v957
    %v1292 = vunpack.c.l.b16 %v958
    %v1293 = vunpack.c.h.b16 %v958
    %v1294 = vunpack.c.l.b16 %v959
    %v1295 = vunpack.c.h.b16 %v959
    %v1296 = vunpack.c.l.b16 %v960
    %v1297 = vunpack.c.h.b16 %v960
    %v1298 = vunpack.c.l.b16 %v961
    %v1299 = vunpack.c.h.b16 %v961
    %v1300 = vunpack.c.l.b16 %v962
    %v1301 = vunpack.c.h.b16 %v962
    %v1302 = vunpack.c.l.b16 %v963
    %v1303 = vunpack.c.h.b16 %v963
    %v1304 = vunpack.c.l.b16 %v964
    %v1305 = vunpack.c.h.b16 %v964
    %v1306 = vunpack.c.l.b16 %v965
    %v1307 = vunpack.c.h.b16 %v965
    %v1308 = vunpack.c.l.b16 %v966
    %v1309 = vunpack.c.h.b16 %v966
    %v1310 = vunpack.c.l.b16 %v967
    %v1311 = vunpack.c.h.b16 %v967
    %v1312 = vunpack.c.l.b16 %v968
    %v1313 = vunpack.c.h.b16 %v968
    %v1314 = vunpack.c.l.b16 %v969
    %v1315 = vunpack.c.h.b16 %v969
    %v1316 = vunpack.c.l.b16 %v970
    %v1317 = vunpack.c.h.b16 %v970
    %v1318 = vunpack.c.l.b16 %v971
    %v1319 = vunpack.c.h.b16 %v971
    %v1320 = vunpack.c.l.b16 %v972
    %v1321 = vunpack.c.h.b16 %v972
    %v1322 = vunpack.c.l.b16 %v973
    %v1323 = vunpack.c.h.b16 %v973
    %v1324 = vunpack.c.l.b16 %v974
    %v1325 = vunpack.c.h.b16 %v974
    %v1326 = vunpack.c.l.b16 %v975
    %v1327 = vunpack.c.h.b16 %v975
    %v1328 = vunpack.c.l.b16 %v976
    %v1329 = vunpack.c.h.b16 %v976
    %v1330 = vunpack.c.l.b16 %v977
    %v1331 = vunpack.c.h.b16 %v977
    %v1332 = vunpack.c.l.b16 %v978
    %v1333 = vunpack.c.h.b16 %v978
    %v1334 = vunpack.c.l.b16 %v979
    %v1335 = vunpack.c.h.b16 %v979
    %v1336 = vunpack.c.l.b16 %v980
    %v1337 = vunpack.c.h.b16 %v980
    %v1338 = vunpack.c.l.b16 %v981
    %v1339 = vunpack.c.h.b16 %v981
    %v1340 = vunpack.c.l.b16 %v982
    %v1341 = vunpack.c.h.b16 %v982
    %v1342 = vunpack.c.l.b16 %v983
    %v1343 = vunpack.c.h.b16 %v983
    %v1344 = vunpack.c.l.b16 %v984
    %v1345 = vunpack.c.h.b16 %v984
    %v1346 = vunpack.c.l.b16 %v985
    %v1347 = vunpack.c.h.b16 %v985
    %v1348 = vunpack.c.l.b16 %v986
    %v1349 = vunpack.c.h.b16 %v986
    %v1350 = vunpack.c.l.b16 %v987
    %v1351 = vunpack.c.h.b16 %v987
    %v1352 = vunpack.c.l.b16 %v988
    %v1353 = vunpack.c.h.b16 %v988
    %v1354 = vunpack.c.l.b16 %v989
    %v1355 = vunpack.c.h.b16 %v989
    %v1356 = vunpack.c.l.b16 %v990
    %v1357 = vunpack.c.h.b16 %v990
    %v1358 = vunpack.c.l.b16 %v991
    %v1359 = vunpack.c.h.b16 %v991
    %v1360 = vunpack.c.l.b16 %v992
    %v1361 = vunpack.c.h.b16 %v992
    %v1362 = vunpack.c.l.b16 %v993
    %v1363 = vunpack.c.h.b16 %v993
    %v1364 = vunpack.c.l.b16 %v994
    %v1365 = vunpack.c.h.b16 %v994
    %v1366 = vunpack.c.l.b16 %v995
    %v1367 = vunpack.c.h.b16 %v995
    %v1368 = vunpack.c.l.b16 %v996
    %v1369 = vunpack.c.h.b16 %v996
    %v1370 = vunpack.c.l.b16 %v997
    %v1371 = vunpack.c.h.b16 %v997
    %v1372 = vunpack.c.l.b16 %v998
    %v1373 = vunpack.c.h.b16 %v998
    %v1374 = vunpack.c.l.b16 %v999
    %v1375 = vunpack.c.h.b16 %v999
    %v1376 = vunpack.c.l.b16 %v1000
    %v1377 = vunpack.c.h.b16 %v1000
    %v1378 = vunpack.c.l.b16 %v1001
    %v1379 = vunpack.c.h.b16 %v1001
    %v1380 = vunpack.c.l.b16 %v1002
    %v1381 = vunpack.c.h.b16 %v1002
    %v1382 = vunpack.c.l.b16 %v1003
    %v1383 = vunpack.c.h.b16 %v1003
    %v1384 = vunpack.c.l.b16 %v1004
    %v1385 = vunpack.c.h.b16 %v1004
    %v1386 = vunpack.c.l.b16 %v1005
    %v1387 = vunpack.c.h.b16 %v1005
    %v1388 = vunpack.c.l.b16 %v1006
    %v1389 = vunpack.c.h.b16 %v1006
    %v1390 = vunpack.c.l.b16 %v1007
    %v1391 = vunpack.c.h.b16 %v1007
    %v1392 = vpack.c.b16 %v1144, %v1136
    %v1393 = vpack.c.b16 %v1145, %v1137
    %v1394 = vpack.c.b16 %v1146, %v1138
    %v1395 = vpack.c.b16 %v1147, %v1139
    %v1396 = vpack.c.b16 %v1148, %v1140
    %v1397 = vpack.c.b16 %v1149, %v1141
    %v1398 = vpack.c.b16 %v1150, %v1142
    %v1399 = vpack.c.b16 %v1151, %v1143
    %v1400 = vpack.c.b16 %v1160, %v1152
    %v1401 = vpack.c.b16 %v1161, %v1153
    %v1402 = vpack.c.b16 %v1162, %v1154
    %v1403 = vpack.c.b16 %v1163, %v1155
    %v1404 = vpack.c.b16 %v1164, %v1156
    %v1405 = vpack.c.b16 %v1165, %v1157
    %v1406 = vpack.c.b16 %v1166, %v1158
    %v1407 = vpack.c.b16 %v1167, %v1159
    %v1408 = vpack.c.b16 %v1176, %v1168
    %v1409 = vpack.c.b16 %v1177, %v1169
    %v1410 = vpack.c.b16 %v1178, %v1170
    %v1411 = vpack.c.b16 %v1179, %v1171
    %v1412 = vpack.c.b16 %v1180, %v1172
    %v1413 = vpack.c.b16 %v1181, %v1173
    %v1414 = vpack.c.b16 %v1182, %v1174
    %v1415 = vpack.c.b16 %v1183, %v1175
    %v1416 = vpack.c.b16 %v1192, %v1184
    %v1417 = vpack.c.b16 %v1193, %v1185
    %v1418 = vpack.c.b16 %v1194, %v1186
    %v1419 = vpack.c.b16 %v1195, %v1187
    %v1420 = vpack.c.b16 %v1196, %v1188
    %v1421 = vpack.c.b16 %v1197, %v1189
    %v1422 = vpack.c.b16 %v1198, %v1190
    %v1423 = vpack.c.b16 %v1199, %v1191
    %v1424 = vpack.c.b16 %v1208, %v1200
    %v1425 = vpack.c.b16 %v1209, %v1201
    %v1426 = vpack.c.b16 %v1210, %v1202
    %v1427 = vpack.c.b16 %v1211, %v1203
    %v1428 = vpack.c.b16 %v1212, %v1204
    %v1429 = vpack.c.b16 %v1213, %v1205
    %v1430 = vpack.c.b16 %v1214, %v1206
    %v1431 = vpack.c.b16 %v1215, %v1207
    %v1432 = vpack.c.b16 %v1224, %v1216
    %v1433 = vpack.c.b16 %v1225, %v1217
    %v1434 = vpack.c.b16 %v1226, %v1218
    %v1435 = vpack.c.b16 %v1227, %v1219
    %v1436 = vpack.c.b16 %v1228, %v1220
    %v1437 = vpack.c.b16 %v1229, %v1221
    %v1438 = vpack.c.b16 %v1230, %v1222
    %v1439 = vpack.c.b16 %v1231, %v1223
    %v1440 = vpack.c.b16 %v1240, %v1232
    %v1441 = vpack.c.b16 %v1241, %v1233
    %v1442 = vpack.c.b16 %v1242, %v1234
    %v1443 = vpack.c.b16 %v1243, %v1235
    %v1444 = vpack.c.b16 %v1244, %v1236
    %v1445 = vpack.c.b16 %v1245, %v1237
    %v1446 = vpack.c.b16 %v1246, %v1238
    %v1447 = vpack.c.b16 %v1247, %v1239
    %v1448 = vpack.c.b16 %v1256, %v1248
    %v1449 = vpack.c.b16 %v1257, %v1249
    %v1450 = vpack.c.b16 %v1258, %v1250
    %v1451 = vpack.c.b16 %v1259, %v1251
    %v1452 = vpack.c.b16 %v1260, %v1252
    %v1453 = vpack.c.b16 %v1261, %v1253
    %v1454 = vpack.c.b16 %v1262, %v1254
    %v1455 = vpack.c.b16 %v1263, %v1255
    %v1456 = vpack.c.b16 %v1272, %v1264
    %v1457 = vpack.c.b16 %v1273, %v1265
    %v1458 = vpack.c.b16 %v1274, %v1266
    %v1459 = vpack.c.b16 %v1275, %v1267
    %v1460 = vpack.c.b16 %v1276, %v1268
    %v1461 = vpack.c.b16 %v1277, %v1269
    %v1462 = vpack.c.b16 %v1278, %v1270
    %v1463 = vpack.c.b16 %v1279, %v1271
    %v1464 = vpack.c.b16 %v1288, %v1280
    %v1465 = vpack.c.b16 %v1289, %v1281
    %v1466 = vpack.c.b16 %v1290, %v1282
    %v1467 = vpack.c.b16 %v1291, %v1283
    %v1468 = vpack.c.b16 %v1292, %v1284
    %v1469 = vpack.c.b16 %v1293, %v1285
    %v1470 = vpack.c.b16 %v1294, %v1286
    %v1471 = vpack.c.b16 %v1295, %v1287
    %v1472 = vpack.c.b16 %v1304, %v1296
    %v1473 = vpack.c.b16 %v1305, %v1297
    %v1474 = vpack.c.b16 %v1306, %v1298
    %v1475 = vpack.c.b16 %v1307, %v1299
    %v1476 = vpack.c.b16 %v1308, %v1300
    %v1477 = vpack.c.b16 %v1309, %v1301
    %v1478 = vpack.c.b16 %v1310, %v1302
    %v1479 = vpack.c.b16 %v1311, %v1303
    %v1480 = vpack.c.b16 %v1320, %v1312
    %v1481 = vpack.c.b16 %v1321, %v1313
    %v1482 = vpack.c.b16 %v1322, %v1314
    %v1483 = vpack.c.b16 %v1323, %v1315
    %v1484 = vpack.c.b16 %v1324, %v1316
    %v1485 = vpack.c.b16 %v1325, %v1317
    %v1486 = vpack.c.b16 %v1326, %v1318
    %v1487 = vpack.c.b16 %v1327, %v1319
    %v1488 = vpack.c.b16 %v1336, %v1328
    %v1489 = vpack.c.b16 %v1337, %v1329
    %v1490 = vpack.c.b16 %v1338, %v1330
    %v1491 = vpack.c.b16 %v1339, %v1331
    %v1492 = vpack.c.b16 %v1340, %v1332
    %v1493 = vpack.c.b16 %v1341, %v1333
    %v1494 = vpack.c.b16 %v1342, %v1334
    %v1495 = vpack.c.b16 %v1343, %v1335
    %v1496 = vpack.c.b16 %v1352, %v1344
    %v1497 = vpack.c.b16 %v1353, %v1345
    %v1498 = vpack.c.b16 %v1354, %v1346
    %v1499 = vpack.c.b16 %v1355, %v1347
    %v1500 = vpack.c.b16 %v1356, %v1348
    %v1501 = vpack.c.b16 %v1357, %v1349
    %v1502 = vpack.c.b16 %v1358, %v1350
    %v1503 = vpack.c.b16 %v1359, %v1351
    %v1504 = vpack.c.b16 %v1368, %v1360
    %v1505 = vpack.c.b16 %v1369, %v1361
    %v1506 = vpack.c.b16 %v1370, %v1362
    %v1507 = vpack.c.b16 %v1371, %v1363
    %v1508 = vpack.c.b16 %v1372, %v1364
    %v1509 = vpack.c.b16 %v1373, %v1365
    %v1510 = vpack.c.b16 %v1374, %v1366
    %v1511 = vpack.c.b16 %v1375, %v1367
    %v1512 = vpack.c.b16 %v1384, %v1376
    %v1513 = vpack.c.b16 %v1385, %v1377
    %v1514 = vpack.c.b16 %v1386, %v1378
    %v1515 = vpack.c.b16 %v1387, %v1379
    %v1516 = vpack.c.b16 %v1388, %v1380
    %v1517 = vpack.c.b16 %v1389, %v1381
    %v1518 = vpack.c.b16 %v1390, %v1382
    %v1519 = vpack.c.b16 %v1391, %v1383
    %1648 = vmatpush.bf16.msra.mxu0 %v1448
    %1649 = vmatpush.bf16.msra.mxu0 %v1440
    %1650 = vmatpush.bf16.msra.mxu0 %v1432
    %1651 = vmatpush.bf16.msra.mxu0 %v1424
    %1652 = vmatpush.bf16.msra.mxu0 %v1416
    %1653 = vmatpush.bf16.msra.mxu0 %v1408
    %1654 = vmatpush.bf16.msra.mxu0 %v1400
    %1655 = vmatpush.bf16.msra.mxu0 %v1392
    %1656 = vmatmul.bf16.gmra.mxu0 %v878
    %v1657 = vpop.f32.mrf.mxu0
    %v1658 = vadd.f32 0.0, %v1657
    %v1659 = vpop.f32.mrf.mxu0
    %1660 = vdwg.mxu0
    %1661 = vmatpush.bf16.msra.mxu0 %v1512
    %1662 = vmatpush.bf16.msra.mxu0 %v1504
    %1663 = vmatpush.bf16.msra.mxu0 %v1496
    %1664 = vmatpush.bf16.msra.mxu0 %v1488
    %1665 = vmatpush.bf16.msra.mxu0 %v1480
    %1666 = vmatpush.bf16.msra.mxu0 %v1472
    %1667 = vmatpush.bf16.msra.mxu0 %v1464
    %1668 = vmatpush.bf16.msra.mxu0 %v1456
    %1669 = vmatmul.bf16.gmra.mxu0 %v879
    %v1670 = vpop.f32.mrf.mxu0
    %v1671 = vadd.f32 %v1658, %v1670
    %v1672 = vpop.f32.mrf.mxu0
    %1673 = vdwg.mxu0
    %1674 = vmatpush.bf16.msra.mxu0 %v1449
    %1675 = vmatpush.bf16.msra.mxu0 %v1441
    %1676 = vmatpush.bf16.msra.mxu0 %v1433
    %1677 = vmatpush.bf16.msra.mxu0 %v1425
    %1678 = vmatpush.bf16.msra.mxu0 %v1417
    %1679 = vmatpush.bf16.msra.mxu0 %v1409
    %1680 = vmatpush.bf16.msra.mxu0 %v1401
    %1681 = vmatpush.bf16.msra.mxu0 %v1393
    %1682 = vmatmul.bf16.gmra.mxu0 %v878
    %v1683 = vpop.f32.mrf.mxu0
    %v1684 = vadd.f32 0.0, %v1683
    %v1685 = vpop.f32.mrf.mxu0
    %1686 = vdwg.mxu0
    %1687 = vmatpush.bf16.msra.mxu0 %v1513
    %1688 = vmatpush.bf16.msra.mxu0 %v1505
    %1689 = vmatpush.bf16.msra.mxu0 %v1497
    %1690 = vmatpush.bf16.msra.mxu0 %v1489
    %1691 = vmatpush.bf16.msra.mxu0 %v1481
    %1692 = vmatpush.bf16.msra.mxu0 %v1473
    %1693 = vmatpush.bf16.msra.mxu0 %v1465
    %1694 = vmatpush.bf16.msra.mxu0 %v1457
    %1695 = vmatmul.bf16.gmra.mxu0 %v879
    %v1696 = vpop.f32.mrf.mxu0
    %v1697 = vadd.f32 %v1684, %v1696
    %v1698 = vpop.f32.mrf.mxu0
    %1699 = vdwg.mxu0
    %1700 = vmatpush.bf16.msra.mxu0 %v1450
    %1701 = vmatpush.bf16.msra.mxu0 %v1442
    %1702 = vmatpush.bf16.msra.mxu0 %v1434
    %1703 = vmatpush.bf16.msra.mxu0 %v1426
    %1704 = vmatpush.bf16.msra.mxu0 %v1418
    %1705 = vmatpush.bf16.msra.mxu0 %v1410
    %1706 = vmatpush.bf16.msra.mxu0 %v1402
    %1707 = vmatpush.bf16.msra.mxu0 %v1394
    %1708 = vmatmul.bf16.gmra.mxu0 %v878
    %v1709 = vpop.f32.mrf.mxu0
    %v1710 = vadd.f32 0.0, %v1709
    %v1711 = vpop.f32.mrf.mxu0
    %1712 = vdwg.mxu0
    %1713 = vmatpush.bf16.msra.mxu0 %v1514
    %1714 = vmatpush.bf16.msra.mxu0 %v1506
    %1715 = vmatpush.bf16.msra.mxu0 %v1498
    %1716 = vmatpush.bf16.msra.mxu0 %v1490
    %1717 = vmatpush.bf16.msra.mxu0 %v1482
    %1718 = vmatpush.bf16.msra.mxu0 %v1474
    %1719 = vmatpush.bf16.msra.mxu0 %v1466
    %1720 = vmatpush.bf16.msra.mxu0 %v1458
    %1721 = vmatmul.bf16.gmra.mxu0 %v879
    %v1722 = vpop.f32.mrf.mxu0
    %v1723 = vadd.f32 %v1710, %v1722
    %v1724 = vpop.f32.mrf.mxu0
    %1725 = vdwg.mxu0
    %1726 = vmatpush.bf16.msra.mxu0 %v1451
    %1727 = vmatpush.bf16.msra.mxu0 %v1443
    %1728 = vmatpush.bf16.msra.mxu0 %v1435
    %1729 = vmatpush.bf16.msra.mxu0 %v1427
    %1730 = vmatpush.bf16.msra.mxu0 %v1419
    %1731 = vmatpush.bf16.msra.mxu0 %v1411
    %1732 = vmatpush.bf16.msra.mxu0 %v1403
    %1733 = vmatpush.bf16.msra.mxu0 %v1395
    %1734 = vmatmul.bf16.gmra.mxu0 %v878
    %v1735 = vpop.f32.mrf.mxu0
    %v1736 = vadd.f32 0.0, %v1735
    %v1737 = vpop.f32.mrf.mxu0
    %1738 = vdwg.mxu0
    %1739 = vmatpush.bf16.msra.mxu0 %v1515
    %1740 = vmatpush.bf16.msra.mxu0 %v1507
    %1741 = vmatpush.bf16.msra.mxu0 %v1499
    %1742 = vmatpush.bf16.msra.mxu0 %v1491
    %1743 = vmatpush.bf16.msra.mxu0 %v1483
    %1744 = vmatpush.bf16.msra.mxu0 %v1475
    %1745 = vmatpush.bf16.msra.mxu0 %v1467
    %1746 = vmatpush.bf16.msra.mxu0 %v1459
    %1747 = vmatmul.bf16.gmra.mxu0 %v879
    %v1748 = vpop.f32.mrf.mxu0
    %v1749 = vadd.f32 %v1736, %v1748
    %v1750 = vpop.f32.mrf.mxu0
    %1751 = vdwg.mxu0
    %1752 = vmatpush.bf16.msra.mxu0 %v1452
    %1753 = vmatpush.bf16.msra.mxu0 %v1444
    %1754 = vmatpush.bf16.msra.mxu0 %v1436
    %1755 = vmatpush.bf16.msra.mxu0 %v1428
    %1756 = vmatpush.bf16.msra.mxu0 %v1420
    %1757 = vmatpush.bf16.msra.mxu0 %v1412
    %1758 = vmatpush.bf16.msra.mxu0 %v1404
    %1759 = vmatpush.bf16.msra.mxu0 %v1396
    %1760 = vmatmul.bf16.gmra.mxu0 %v878
    %v1761 = vpop.f32.mrf.mxu0
    %v1762 = vadd.f32 0.0, %v1761
    %v1763 = vpop.f32.mrf.mxu0
    %1764 = vdwg.mxu0
    %1765 = vmatpush.bf16.msra.mxu0 %v1516
    %1766 = vmatpush.bf16.msra.mxu0 %v1508
    %1767 = vmatpush.bf16.msra.mxu0 %v1500
    %1768 = vmatpush.bf16.msra.mxu0 %v1492
    %1769 = vmatpush.bf16.msra.mxu0 %v1484
    %1770 = vmatpush.bf16.msra.mxu0 %v1476
    %1771 = vmatpush.bf16.msra.mxu0 %v1468
    %1772 = vmatpush.bf16.msra.mxu0 %v1460
    %1773 = vmatmul.bf16.gmra.mxu0 %v879
    %v1774 = vpop.f32.mrf.mxu0
    %v1775 = vadd.f32 %v1762, %v1774
    %v1776 = vpop.f32.mrf.mxu0
    %1777 = vdwg.mxu0
    %1778 = vmatpush.bf16.msra.mxu0 %v1453
    %1779 = vmatpush.bf16.msra.mxu0 %v1445
    %1780 = vmatpush.bf16.msra.mxu0 %v1437
    %1781 = vmatpush.bf16.msra.mxu0 %v1429
    %1782 = vmatpush.bf16.msra.mxu0 %v1421
    %1783 = vmatpush.bf16.msra.mxu0 %v1413
    %1784 = vmatpush.bf16.msra.mxu0 %v1405
    %1785 = vmatpush.bf16.msra.mxu0 %v1397
    %1786 = vmatmul.bf16.gmra.mxu0 %v878
    %v1787 = vpop.f32.mrf.mxu0
    %v1788 = vadd.f32 0.0, %v1787
    %v1789 = vpop.f32.mrf.mxu0
    %1790 = vdwg.mxu0
    %1791 = vmatpush.bf16.msra.mxu0 %v1517
    %1792 = vmatpush.bf16.msra.mxu0 %v1509
    %1793 = vmatpush.bf16.msra.mxu0 %v1501
    %1794 = vmatpush.bf16.msra.mxu0 %v1493
    %1795 = vmatpush.bf16.msra.mxu0 %v1485
    %1796 = vmatpush.bf16.msra.mxu0 %v1477
    %1797 = vmatpush.bf16.msra.mxu0 %v1469
    %1798 = vmatpush.bf16.msra.mxu0 %v1461
    %1799 = vmatmul.bf16.gmra.mxu0 %v879
    %v1800 = vpop.f32.mrf.mxu0
    %v1801 = vadd.f32 %v1788, %v1800
    %v1802 = vpop.f32.mrf.mxu0
    %1803 = vdwg.mxu0
    %1804 = vmatpush.bf16.msra.mxu0 %v1454
    %1805 = vmatpush.bf16.msra.mxu0 %v1446
    %1806 = vmatpush.bf16.msra.mxu0 %v1438
    %1807 = vmatpush.bf16.msra.mxu0 %v1430
    %1808 = vmatpush.bf16.msra.mxu0 %v1422
    %1809 = vmatpush.bf16.msra.mxu0 %v1414
    %1810 = vmatpush.bf16.msra.mxu0 %v1406
    %1811 = vmatpush.bf16.msra.mxu0 %v1398
    %1812 = vmatmul.bf16.gmra.mxu0 %v878
    %v1813 = vpop.f32.mrf.mxu0
    %v1814 = vadd.f32 0.0, %v1813
    %v1815 = vpop.f32.mrf.mxu0
    %1816 = vdwg.mxu0
    %1817 = vmatpush.bf16.msra.mxu0 %v1518
    %1818 = vmatpush.bf16.msra.mxu0 %v1510
    %1819 = vmatpush.bf16.msra.mxu0 %v1502
    %1820 = vmatpush.bf16.msra.mxu0 %v1494
    %1821 = vmatpush.bf16.msra.mxu0 %v1486
    %1822 = vmatpush.bf16.msra.mxu0 %v1478
    %1823 = vmatpush.bf16.msra.mxu0 %v1470
    %1824 = vmatpush.bf16.msra.mxu0 %v1462
    %1825 = vmatmul.bf16.gmra.mxu0 %v879
    %v1826 = vpop.f32.mrf.mxu0
    %v1827 = vadd.f32 %v1814, %v1826
    %v1828 = vpop.f32.mrf.mxu0
    %1829 = vdwg.mxu0
    %1830 = vmatpush.bf16.msra.mxu0 %v1455
    %1831 = vmatpush.bf16.msra.mxu0 %v1447
    %1832 = vmatpush.bf16.msra.mxu0 %v1439
    %1833 = vmatpush.bf16.msra.mxu0 %v1431
    %1834 = vmatpush.bf16.msra.mxu0 %v1423
    %1835 = vmatpush.bf16.msra.mxu0 %v1415
    %1836 = vmatpush.bf16.msra.mxu0 %v1407
    %1837 = vmatpush.bf16.msra.mxu0 %v1399
    %1838 = vmatmul.bf16.gmra.mxu0 %v878
    %v1839 = vpop.f32.mrf.mxu0
    %v1840 = vadd.f32 0.0, %v1839
    %v1841 = vpop.f32.mrf.mxu0
    %1842 = vdwg.mxu0
    %1843 = vmatpush.bf16.msra.mxu0 %v1519
    %1844 = vmatpush.bf16.msra.mxu0 %v1511
    %1845 = vmatpush.bf16.msra.mxu0 %v1503
    %1846 = vmatpush.bf16.msra.mxu0 %v1495
    %1847 = vmatpush.bf16.msra.mxu0 %v1487
    %1848 = vmatpush.bf16.msra.mxu0 %v1479
    %1849 = vmatpush.bf16.msra.mxu0 %v1471
    %1850 = vmatpush.bf16.msra.mxu0 %v1463
    %1851 = vmatmul.bf16.gmra.mxu0 %v879
    %v1852 = vpop.f32.mrf.mxu0
    %v1853 = vadd.f32 %v1840, %v1852
    %v1854 = vpop.f32.mrf.mxu0
    %1855 = vdwg.mxu0
    %v1856 = vld [vmem:[%s1] sm:$0xff]
    %s1857 = scalar_lea.vmem %s1, 56
    %v1858 = vld [vmem:[%s1857] sm:$0xff]
    %v1859 = vld [vmem:[#allocation2] sm:$0xff]
    %v1860 = vld [vmem:[#allocation2 + $0x8] sm:$0xff]
    %v1861 = vld [vmem:[#allocation2 + $0x10] sm:$0xff]
    %v1862 = vld [vmem:[#allocation2 + $0x18] sm:$0xff]
    %v1863 = vadd.f32 %v1859, %v1671
    %v1864 = vadd.f32 %v1860, %v1697
    %v1865 = vadd.f32 %v1861, %v1723
    %v1866 = vadd.f32 %v1862, %v1749
    %s1867 = scalar_lea.vmem [#allocation3], 224
    %v1868 = vld [vmem:[%s1867] sm:$0xff]
    %v1869 = vld [vmem:[%s1867 + $0x8] sm:$0xff]
    %v1870 = vld [vmem:[%s1867 + $0x10] sm:$0xff]
    %v1871 = vld [vmem:[%s1867 + $0x18] sm:$0xff]
    %v1872 = vadd.f32 %v1868, %v1775
    %v1873 = vadd.f32 %v1869, %v1801
    %v1874 = vadd.f32 %v1870, %v1827
    %v1875 = vadd.f32 %v1871, %v1853
    %v1876 = vld [vmem:[#allocation7] sm:$0xff]
    %v1877 = vxor.u32 %v1863, 2147483648
    %v1878 = vmul.f32 %v1877, 1.442695
    %v1879 = vpow.pop %v1878
    %v1880 = vadd.f32 %v1879, 1.0
    %v1881 = vrcp.pop %v1880
    %v1882 = vmul.f32 %v1880, %v1881
    %v1883 = vsub.f32 1.0, %v1882
    %v1884 = vmul.f32 %v1881, %v1883
    %v1885 = vadd.f32 %v1881, %v1884
    %vm1886 = vweird.f32 %v1880
    %vm1887 = vweird.f32 %v1881
    %vm1888 = vmor %vm1886, %vm1887
    %v1889 = vsel %vm1888, %v1881, %v1885
    %v1890 = vand.u32 2147483647, %v1880
    %vm1891 = vcmp.eq.f32.partialorder %v1890, 8.507059e+37
    %v1892 = vand.u32 %v1880, 2147483648
    %v1893 = vor.u32 1.1754944e-38, %v1892
    %v1894 = vsel %vm1891, %v1893, %v1889
    %v1895 = vmul.f32 1.0, %v1894
    %v1896 = vxor.u32 %v1864, 2147483648
    %v1897 = vmul.f32 %v1896, 1.442695
    %v1898 = vpow.pop %v1897
    %v1899 = vadd.f32 %v1898, 1.0
    %v1900 = vrcp.pop %v1899
    %v1901 = vmul.f32 %v1899, %v1900
    %v1902 = vsub.f32 1.0, %v1901
    %v1903 = vmul.f32 %v1900, %v1902
    %v1904 = vadd.f32 %v1900, %v1903
    %vm1905 = vweird.f32 %v1899
    %vm1906 = vweird.f32 %v1900
    %vm1907 = vmor %vm1905, %vm1906
    %v1908 = vsel %vm1907, %v1900, %v1904
    %v1909 = vand.u32 2147483647, %v1899
    %vm1910 = vcmp.eq.f32.partialorder %v1909, 8.507059e+37
    %v1911 = vand.u32 %v1899, 2147483648
    %v1912 = vor.u32 1.1754944e-38, %v1911
    %v1913 = vsel %vm1910, %v1912, %v1908
    %v1914 = vmul.f32 1.0, %v1913
    %v1915 = vtanh.pop %v1865
    %v1916 = vxor.u32 %v1866, 2147483648
    %v1917 = vmul.f32 %v1916, 1.442695
    %v1918 = vpow.pop %v1917
    %v1919 = vadd.f32 %v1918, 1.0
    %v1920 = vrcp.pop %v1919
    %v1921 = vmul.f32 %v1919, %v1920
    %v1922 = vsub.f32 1.0, %v1921
    %v1923 = vmul.f32 %v1920, %v1922
    %v1924 = vadd.f32 %v1920, %v1923
    %vm1925 = vweird.f32 %v1919
    %vm1926 = vweird.f32 %v1920
    %vm1927 = vmor %vm1925, %vm1926
    %v1928 = vsel %vm1927, %v1920, %v1924
    %v1929 = vand.u32 2147483647, %v1919
    %vm1930 = vcmp.eq.f32.partialorder %v1929, 8.507059e+37
    %v1931 = vand.u32 %v1919, 2147483648
    %v1932 = vor.u32 1.1754944e-38, %v1931
    %v1933 = vsel %vm1930, %v1932, %v1928
    %v1934 = vmul.f32 1.0, %v1933
    %v1935 = vmul.f32 %v1914, %v1876
    %v1936 = vmul.f32 %v1895, %v1915
    %v1937 = vadd.f32 %v1935, %v1936
    %v1938 = vtanh.pop %v1937
    %v1939 = vmul.f32 %v1934, %v1938
    %v1940 = vld [vmem:[#allocation8] sm:$0xff]
    %v1941 = vxor.u32 %v1872, 2147483648
    %v1942 = vmul.f32 %v1941, 1.442695
    %v1943 = vpow.pop %v1942
    %v1944 = vadd.f32 %v1943, 1.0
    %v1945 = vrcp.pop %v1944
    %v1946 = vmul.f32 %v1944, %v1945
    %v1947 = vsub.f32 1.0, %v1946
    %v1948 = vmul.f32 %v1945, %v1947
    %v1949 = vadd.f32 %v1945, %v1948
    %vm1950 = vweird.f32 %v1944
    %vm1951 = vweird.f32 %v1945
    %vm1952 = vmor %vm1950, %vm1951
    %v1953 = vsel %vm1952, %v1945, %v1949
    %v1954 = vand.u32 2147483647, %v1944
    %vm1955 = vcmp.eq.f32.partialorder %v1954, 8.507059e+37
    %v1956 = vand.u32 %v1944, 2147483648
    %v1957 = vor.u32 1.1754944e-38, %v1956
    %v1958 = vsel %vm1955, %v1957, %v1953
    %v1959 = vmul.f32 1.0, %v1958
    %v1960 = vxor.u32 %v1873, 2147483648
    %v1961 = vmul.f32 %v1960, 1.442695
    %v1962 = vpow.pop %v1961
    %v1963 = vadd.f32 %v1962, 1.0
    %v1964 = vrcp.pop %v1963
    %v1965 = vmul.f32 %v1963, %v1964
    %v1966 = vsub.f32 1.0, %v1965
    %v1967 = vmul.f32 %v1964, %v1966
    %v1968 = vadd.f32 %v1964, %v1967
    %vm1969 = vweird.f32 %v1963
    %vm1970 = vweird.f32 %v1964
    %vm1971 = vmor %vm1969, %vm1970
    %v1972 = vsel %vm1971, %v1964, %v1968
    %v1973 = vand.u32 2147483647, %v1963
    %vm1974 = vcmp.eq.f32.partialorder %v1973, 8.507059e+37
    %v1975 = vand.u32 %v1963, 2147483648
    %v1976 = vor.u32 1.1754944e-38, %v1975
    %v1977 = vsel %vm1974, %v1976, %v1972
    %v1978 = vmul.f32 1.0, %v1977
    %v1979 = vtanh.pop %v1874
    %v1980 = vxor.u32 %v1875, 2147483648
    %v1981 = vmul.f32 %v1980, 1.442695
    %v1982 = vpow.pop %v1981
    %v1983 = vadd.f32 %v1982, 1.0
    %v1984 = vrcp.pop %v1983
    %v1985 = vmul.f32 %v1983, %v1984
    %v1986 = vsub.f32 1.0, %v1985
    %v1987 = vmul.f32 %v1984, %v1986
    %v1988 = vadd.f32 %v1984, %v1987
    %vm1989 = vweird.f32 %v1983
    %vm1990 = vweird.f32 %v1984
    %vm1991 = vmor %vm1989, %vm1990
    %v1992 = vsel %vm1991, %v1984, %v1988
    %v1993 = vand.u32 2147483647, %v1983
    %vm1994 = vcmp.eq.f32.partialorder %v1993, 8.507059e+37
    %v1995 = vand.u32 %v1983, 2147483648
    %v1996 = vor.u32 1.1754944e-38, %v1995
    %v1997 = vsel %vm1994, %v1996, %v1992
    %v1998 = vmul.f32 1.0, %v1997
    %v1999 = vmul.f32 %v1978, %v1940
    %v2000 = vmul.f32 %v1959, %v1979
    %v2001 = vadd.f32 %v1999, %v2000
    %v2002 = vtanh.pop %v2001
    %v2003 = vmul.f32 %v1998, %v2002
    %vm2004 = vcmp.gt.f32.partialorder %v1856, 0.0
    %v2005 = vld [vmem:[#allocation6] sm:$0xff]
    %v2006 = vsel %vm2004, 1, 0
    %2007 = vset.pattern.permute.xlu0 0
    %2008 = vperm.xlu0 %2007, %v2006
    %v2009 = vpop.permute.xlu0 %2008
    %vm2010 = vcmp.eq.s32.totalorder %v2009, 1
    %v2011 = vsel %vm2010, %v1939, %v2005
    %vm2012 = vcmp.gt.f32.partialorder %v1858, 0.0
    %v2013 = vsel %vm2012, 1, 0
    %2014 = vset.pattern.permute.xlu0 0
    %2015 = vperm.xlu0 %2014, %v2013
    %v2016 = vpop.permute.xlu0 %2015
    %vm2017 = vcmp.eq.s32.totalorder %v2016, 1
    %v2018 = vsel %vm2017, %v2003, %v877
    %v2019 = vsel %vm2010, %v1937, %v1876
    %2020 = vst [vmem:[#allocation7] sm:$0xff] %v2019
    %v2021 = vld [vmem:[#allocation8] sm:$0xff]
    %v2022 = vsel %vm2017, %v2001, %v2021
    %2023 = vst [vmem:[#allocation8] sm:$0xff] %v2022
    %2024 = vst [vmem:[#allocation6] sm:$0xff] %v2011
    %2025 = vst [vmem:[#allocation6 + $0x8] sm:$0xff] %v2018
    %2027 = vset.pattern.permute.xlu0 0
    %2028 = vperm.xlu0 %2027, %v1856
    %v2029 = vpop.permute.xlu0 %2028
    %v2031 = vmul.f32 %v2011, %v2029
    %2032 = vst [vmem:[#allocation4] sm:$0xff] %v2031
    %2034 = vset.pattern.permute.xlu0 0
    %2035 = vperm.xlu0 %2034, %v1858
    %v2036 = vpop.permute.xlu0 %2035
    %v2038 = vmul.f32 %v2018, %v2036
    %s2039 = scalar_lea.vmem [#allocation5], 56
    %2040 = vst [vmem:[%s2039] sm:$0xff] %v2038
    %v2041 = vld [vmem:[#allocation6] sm:$0xff]
    %v2042 = vld [vmem:[#allocation6 + $0x8] sm:$0xff]
    %v2043 = vpack.c.bf16 %v2041, %v2041
    %v2044 = vpack.c.bf16 %v2042, %v2042
    %v2045 = vld [vmem:[#allocation14] sm:$0xff]
    %v2046 = vld [vmem:[#allocation14 + $0x8] sm:$0xff]
    %v2047 = vld [vmem:[#allocation14 + $0x10] sm:$0xff]
    %v2048 = vld [vmem:[#allocation14 + $0x18] sm:$0xff]
    %v2049 = vld [vmem:[#allocation14 + $0x20] sm:$0xff]
    %v2050 = vld [vmem:[#allocation14 + $0x28] sm:$0xff]
    %v2051 = vld [vmem:[#allocation14 + $0x30] sm:$0xff]
    %v2052 = vld [vmem:[#allocation14 + $0x38] sm:$0xff]
    %v2053 = vld [vmem:[#allocation14 + $0x40] sm:$0xff]
    %v2054 = vld [vmem:[#allocation14 + $0x48] sm:$0xff]
    %v2055 = vld [vmem:[#allocation14 + $0x50] sm:$0xff]
    %v2056 = vld [vmem:[#allocation14 + $0x58] sm:$0xff]
    %v2057 = vld [vmem:[#allocation14 + $0x60] sm:$0xff]
    %v2058 = vld [vmem:[#allocation14 + $0x68] sm:$0xff]
    %v2059 = vld [vmem:[#allocation14 + $0x70] sm:$0xff]
    %v2060 = vld [vmem:[#allocation14 + $0x78] sm:$0xff]
    %v2061 = vld [vmem:[#allocation14 + $0x80] sm:$0xff]
    %v2062 = vld [vmem:[#allocation14 + $0x88] sm:$0xff]
    %v2063 = vld [vmem:[#allocation14 + $0x90] sm:$0xff]
    %v2064 = vld [vmem:[#allocation14 + $0x98] sm:$0xff]
    %v2065 = vld [vmem:[#allocation14 + $0xa0] sm:$0xff]
    %v2066 = vld [vmem:[#allocation14 + $0xa8] sm:$0xff]
    %v2067 = vld [vmem:[#allocation14 + $0xb0] sm:$0xff]
    %v2068 = vld [vmem:[#allocation14 + $0xb8] sm:$0xff]
    %v2069 = vld [vmem:[#allocation14 + $0xc0] sm:$0xff]
    %v2070 = vld [vmem:[#allocation14 + $0xc8] sm:$0xff]
    %v2071 = vld [vmem:[#allocation14 + $0xd0] sm:$0xff]
    %v2072 = vld [vmem:[#allocation14 + $0xd8] sm:$0xff]
    %v2073 = vld [vmem:[#allocation14 + $0xe0] sm:$0xff]
    %v2074 = vld [vmem:[#allocation14 + $0xe8] sm:$0xff]
    %v2075 = vld [vmem:[#allocation14 + $0xf0] sm:$0xff]
    %v2076 = vld [vmem:[#allocation14 + $0xf8] sm:$0xff]
    %v2077 = vld [vmem:[#allocation14 + $0x100] sm:$0xff]
    %v2078 = vld [vmem:[#allocation14 + $0x108] sm:$0xff]
    %v2079 = vld [vmem:[#allocation14 + $0x110] sm:$0xff]
    %v2080 = vld [vmem:[#allocation14 + $0x118] sm:$0xff]
    %v2081 = vld [vmem:[#allocation14 + $0x120] sm:$0xff]
    %v2082 = vld [vmem:[#allocation14 + $0x128] sm:$0xff]
    %v2083 = vld [vmem:[#allocation14 + $0x130] sm:$0xff]
    %v2084 = vld [vmem:[#allocation14 + $0x138] sm:$0xff]
    %v2085 = vld [vmem:[#allocation14 + $0x140] sm:$0xff]
    %v2086 = vld [vmem:[#allocation14 + $0x148] sm:$0xff]
    %v2087 = vld [vmem:[#allocation14 + $0x150] sm:$0xff]
    %v2088 = vld [vmem:[#allocation14 + $0x158] sm:$0xff]
    %v2089 = vld [vmem:[#allocation14 + $0x160] sm:$0xff]
    %v2090 = vld [vmem:[#allocation14 + $0x168] sm:$0xff]
    %v2091 = vld [vmem:[#allocation14 + $0x170] sm:$0xff]
    %v2092 = vld [vmem:[#allocation14 + $0x178] sm:$0xff]
    %v2093 = vld [vmem:[#allocation14 + $0x180] sm:$0xff]
    %v2094 = vld [vmem:[#allocation14 + $0x188] sm:$0xff]
    %v2095 = vld [vmem:[#allocation14 + $0x190] sm:$0xff]
    %v2096 = vld [vmem:[#allocation14 + $0x198] sm:$0xff]
    %v2097 = vld [vmem:[#allocation14 + $0x1a0] sm:$0xff]
    %v2098 = vld [vmem:[#allocation14 + $0x1a8] sm:$0xff]
    %v2099 = vld [vmem:[#allocation14 + $0x1b0] sm:$0xff]
    %v2100 = vld [vmem:[#allocation14 + $0x1b8] sm:$0xff]
    %v2101 = vld [vmem:[#allocation14 + $0x1c0] sm:$0xff]
    %v2102 = vld [vmem:[#allocation14 + $0x1c8] sm:$0xff]
    %v2103 = vld [vmem:[#allocation14 + $0x1d0] sm:$0xff]
    %v2104 = vld [vmem:[#allocation14 + $0x1d8] sm:$0xff]
    %v2105 = vld [vmem:[#allocation14 + $0x1e0] sm:$0xff]
    %v2106 = vld [vmem:[#allocation14 + $0x1e8] sm:$0xff]
    %v2107 = vld [vmem:[#allocation14 + $0x1f0] sm:$0xff]
    %v2108 = vld [vmem:[#allocation14 + $0x1f8] sm:$0xff]
    %v2109 = vld [vmem:[#allocation14 + $0x200] sm:$0xff]
    %v2110 = vld [vmem:[#allocation14 + $0x208] sm:$0xff]
    %v2111 = vld [vmem:[#allocation14 + $0x210] sm:$0xff]
    %v2112 = vld [vmem:[#allocation14 + $0x218] sm:$0xff]
    %v2113 = vld [vmem:[#allocation14 + $0x220] sm:$0xff]
    %v2114 = vld [vmem:[#allocation14 + $0x228] sm:$0xff]
    %v2115 = vld [vmem:[#allocation14 + $0x230] sm:$0xff]
    %v2116 = vld [vmem:[#allocation14 + $0x238] sm:$0xff]
    %v2117 = vld [vmem:[#allocation14 + $0x240] sm:$0xff]
    %v2118 = vld [vmem:[#allocation14 + $0x248] sm:$0xff]
    %v2119 = vld [vmem:[#allocation14 + $0x250] sm:$0xff]
    %v2120 = vld [vmem:[#allocation14 + $0x258] sm:$0xff]
    %v2121 = vld [vmem:[#allocation14 + $0x260] sm:$0xff]
    %v2122 = vld [vmem:[#allocation14 + $0x268] sm:$0xff]
    %v2123 = vld [vmem:[#allocation14 + $0x270] sm:$0xff]
    %v2124 = vld [vmem:[#allocation14 + $0x278] sm:$0xff]
    %v2125 = vld [vmem:[#allocation14 + $0x280] sm:$0xff]
    %v2126 = vld [vmem:[#allocation14 + $0x288] sm:$0xff]
    %v2127 = vld [vmem:[#allocation14 + $0x290] sm:$0xff]
    %v2128 = vld [vmem:[#allocation14 + $0x298] sm:$0xff]
    %v2129 = vld [vmem:[#allocation14 + $0x2a0] sm:$0xff]
    %v2130 = vld [vmem:[#allocation14 + $0x2a8] sm:$0xff]
    %v2131 = vld [vmem:[#allocation14 + $0x2b0] sm:$0xff]
    %v2132 = vld [vmem:[#allocation14 + $0x2b8] sm:$0xff]
    %v2133 = vld [vmem:[#allocation14 + $0x2c0] sm:$0xff]
    %v2134 = vld [vmem:[#allocation14 + $0x2c8] sm:$0xff]
    %v2135 = vld [vmem:[#allocation14 + $0x2d0] sm:$0xff]
    %v2136 = vld [vmem:[#allocation14 + $0x2d8] sm:$0xff]
    %v2137 = vld [vmem:[#allocation14 + $0x2e0] sm:$0xff]
    %v2138 = vld [vmem:[#allocation14 + $0x2e8] sm:$0xff]
    %v2139 = vld [vmem:[#allocation14 + $0x2f0] sm:$0xff]
    %v2140 = vld [vmem:[#allocation14 + $0x2f8] sm:$0xff]
    %v2141 = vld [vmem:[#allocation14 + $0x300] sm:$0xff]
    %v2142 = vld [vmem:[#allocation14 + $0x308] sm:$0xff]
    %v2143 = vld [vmem:[#allocation14 + $0x310] sm:$0xff]
    %v2144 = vld [vmem:[#allocation14 + $0x318] sm:$0xff]
    %v2145 = vld [vmem:[#allocation14 + $0x320] sm:$0xff]
    %v2146 = vld [vmem:[#allocation14 + $0x328] sm:$0xff]
    %v2147 = vld [vmem:[#allocation14 + $0x330] sm:$0xff]
    %v2148 = vld [vmem:[#allocation14 + $0x338] sm:$0xff]
    %v2149 = vld [vmem:[#allocation14 + $0x340] sm:$0xff]
    %v2150 = vld [vmem:[#allocation14 + $0x348] sm:$0xff]
    %v2151 = vld [vmem:[#allocation14 + $0x350] sm:$0xff]
    %v2152 = vld [vmem:[#allocation14 + $0x358] sm:$0xff]
    %v2153 = vld [vmem:[#allocation14 + $0x360] sm:$0xff]
    %v2154 = vld [vmem:[#allocation14 + $0x368] sm:$0xff]
    %v2155 = vld [vmem:[#allocation14 + $0x370] sm:$0xff]
    %v2156 = vld [vmem:[#allocation14 + $0x378] sm:$0xff]
    %v2157 = vld [vmem:[#allocation14 + $0x380] sm:$0xff]
    %v2158 = vld [vmem:[#allocation14 + $0x388] sm:$0xff]
    %v2159 = vld [vmem:[#allocation14 + $0x390] sm:$0xff]
    %v2160 = vld [vmem:[#allocation14 + $0x398] sm:$0xff]
    %v2161 = vld [vmem:[#allocation14 + $0x3a0] sm:$0xff]
    %v2162 = vld [vmem:[#allocation14 + $0x3a8] sm:$0xff]
    %v2163 = vld [vmem:[#allocation14 + $0x3b0] sm:$0xff]
    %v2164 = vld [vmem:[#allocation14 + $0x3b8] sm:$0xff]
    %v2165 = vld [vmem:[#allocation14 + $0x3c0] sm:$0xff]
    %v2166 = vld [vmem:[#allocation14 + $0x3c8] sm:$0xff]
    %v2167 = vld [vmem:[#allocation14 + $0x3d0] sm:$0xff]
    %v2168 = vld [vmem:[#allocation14 + $0x3d8] sm:$0xff]
    %v2169 = vld [vmem:[#allocation14 + $0x3e0] sm:$0xff]
    %v2170 = vld [vmem:[#allocation14 + $0x3e8] sm:$0xff]
    %v2171 = vld [vmem:[#allocation14 + $0x3f0] sm:$0xff]
    %v2172 = vld [vmem:[#allocation14 + $0x3f8] sm:$0xff]
    %v2301 = vunpack.c.l.b16 %v2045
    %v2302 = vunpack.c.h.b16 %v2045
    %v2303 = vunpack.c.l.b16 %v2046
    %v2304 = vunpack.c.h.b16 %v2046
    %v2305 = vunpack.c.l.b16 %v2047
    %v2306 = vunpack.c.h.b16 %v2047
    %v2307 = vunpack.c.l.b16 %v2048
    %v2308 = vunpack.c.h.b16 %v2048
    %v2309 = vunpack.c.l.b16 %v2049
    %v2310 = vunpack.c.h.b16 %v2049
    %v2311 = vunpack.c.l.b16 %v2050
    %v2312 = vunpack.c.h.b16 %v2050
    %v2313 = vunpack.c.l.b16 %v2051
    %v2314 = vunpack.c.h.b16 %v2051
    %v2315 = vunpack.c.l.b16 %v2052
    %v2316 = vunpack.c.h.b16 %v2052
    %v2317 = vunpack.c.l.b16 %v2053
    %v2318 = vunpack.c.h.b16 %v2053
    %v2319 = vunpack.c.l.b16 %v2054
    %v2320 = vunpack.c.h.b16 %v2054
    %v2321 = vunpack.c.l.b16 %v2055
    %v2322 = vunpack.c.h.b16 %v2055
    %v2323 = vunpack.c.l.b16 %v2056
    %v2324 = vunpack.c.h.b16 %v2056
    %v2325 = vunpack.c.l.b16 %v2057
    %v2326 = vunpack.c.h.b16 %v2057
    %v2327 = vunpack.c.l.b16 %v2058
    %v2328 = vunpack.c.h.b16 %v2058
    %v2329 = vunpack.c.l.b16 %v2059
    %v2330 = vunpack.c.h.b16 %v2059
    %v2331 = vunpack.c.l.b16 %v2060
    %v2332 = vunpack.c.h.b16 %v2060
    %v2333 = vunpack.c.l.b16 %v2061
    %v2334 = vunpack.c.h.b16 %v2061
    %v2335 = vunpack.c.l.b16 %v2062
    %v2336 = vunpack.c.h.b16 %v2062
    %v2337 = vunpack.c.l.b16 %v2063
    %v2338 = vunpack.c.h.b16 %v2063
    %v2339 = vunpack.c.l.b16 %v2064
    %v2340 = vunpack.c.h.b16 %v2064
    %v2341 = vunpack.c.l.b16 %v2065
    %v2342 = vunpack.c.h.b16 %v2065
    %v2343 = vunpack.c.l.b16 %v2066
    %v2344 = vunpack.c.h.b16 %v2066
    %v2345 = vunpack.c.l.b16 %v2067
    %v2346 = vunpack.c.h.b16 %v2067
    %v2347 = vunpack.c.l.b16 %v2068
    %v2348 = vunpack.c.h.b16 %v2068
    %v2349 = vunpack.c.l.b16 %v2069
    %v2350 = vunpack.c.h.b16 %v2069
    %v2351 = vunpack.c.l.b16 %v2070
    %v2352 = vunpack.c.h.b16 %v2070
    %v2353 = vunpack.c.l.b16 %v2071
    %v2354 = vunpack.c.h.b16 %v2071
    %v2355 = vunpack.c.l.b16 %v2072
    %v2356 = vunpack.c.h.b16 %v2072
    %v2357 = vunpack.c.l.b16 %v2073
    %v2358 = vunpack.c.h.b16 %v2073
    %v2359 = vunpack.c.l.b16 %v2074
    %v2360 = vunpack.c.h.b16 %v2074
    %v2361 = vunpack.c.l.b16 %v2075
    %v2362 = vunpack.c.h.b16 %v2075
    %v2363 = vunpack.c.l.b16 %v2076
    %v2364 = vunpack.c.h.b16 %v2076
    %v2365 = vunpack.c.l.b16 %v2077
    %v2366 = vunpack.c.h.b16 %v2077
    %v2367 = vunpack.c.l.b16 %v2078
    %v2368 = vunpack.c.h.b16 %v2078
    %v2369 = vunpack.c.l.b16 %v2079
    %v2370 = vunpack.c.h.b16 %v2079
    %v2371 = vunpack.c.l.b16 %v2080
    %v2372 = vunpack.c.h.b16 %v2080
    %v2373 = vunpack.c.l.b16 %v2081
    %v2374 = vunpack.c.h.b16 %v2081
    %v2375 = vunpack.c.l.b16 %v2082
    %v2376 = vunpack.c.h.b16 %v2082
    %v2377 = vunpack.c.l.b16 %v2083
    %v2378 = vunpack.c.h.b16 %v2083
    %v2379 = vunpack.c.l.b16 %v2084
    %v2380 = vunpack.c.h.b16 %v2084
    %v2381 = vunpack.c.l.b16 %v2085
    %v2382 = vunpack.c.h.b16 %v2085
    %v2383 = vunpack.c.l.b16 %v2086
    %v2384 = vunpack.c.h.b16 %v2086
    %v2385 = vunpack.c.l.b16 %v2087
    %v2386 = vunpack.c.h.b16 %v2087
    %v2387 = vunpack.c.l.b16 %v2088
    %v2388 = vunpack.c.h.b16 %v2088
    %v2389 = vunpack.c.l.b16 %v2089
    %v2390 = vunpack.c.h.b16 %v2089
    %v2391 = vunpack.c.l.b16 %v2090
    %v2392 = vunpack.c.h.b16 %v2090
    %v2393 = vunpack.c.l.b16 %v2091
    %v2394 = vunpack.c.h.b16 %v2091
    %v2395 = vunpack.c.l.b16 %v2092
    %v2396 = vunpack.c.h.b16 %v2092
    %v2397 = vunpack.c.l.b16 %v2093
    %v2398 = vunpack.c.h.b16 %v2093
    %v2399 = vunpack.c.l.b16 %v2094
    %v2400 = vunpack.c.h.b16 %v2094
    %v2401 = vunpack.c.l.b16 %v2095
    %v2402 = vunpack.c.h.b16 %v2095
    %v2403 = vunpack.c.l.b16 %v2096
    %v2404 = vunpack.c.h.b16 %v2096
    %v2405 = vunpack.c.l.b16 %v2097
    %v2406 = vunpack.c.h.b16 %v2097
    %v2407 = vunpack.c.l.b16 %v2098
    %v2408 = vunpack.c.h.b16 %v2098
    %v2409 = vunpack.c.l.b16 %v2099
    %v2410 = vunpack.c.h.b16 %v2099
    %v2411 = vunpack.c.l.b16 %v2100
    %v2412 = vunpack.c.h.b16 %v2100
    %v2413 = vunpack.c.l.b16 %v2101
    %v2414 = vunpack.c.h.b16 %v2101
    %v2415 = vunpack.c.l.b16 %v2102
    %v2416 = vunpack.c.h.b16 %v2102
    %v2417 = vunpack.c.l.b16 %v2103
    %v2418 = vunpack.c.h.b16 %v2103
    %v2419 = vunpack.c.l.b16 %v2104
    %v2420 = vunpack.c.h.b16 %v2104
    %v2421 = vunpack.c.l.b16 %v2105
    %v2422 = vunpack.c.h.b16 %v2105
    %v2423 = vunpack.c.l.b16 %v2106
    %v2424 = vunpack.c.h.b16 %v2106
    %v2425 = vunpack.c.l.b16 %v2107
    %v2426 = vunpack.c.h.b16 %v2107
    %v2427 = vunpack.c.l.b16 %v2108
    %v2428 = vunpack.c.h.b16 %v2108
    %v2429 = vunpack.c.l.b16 %v2109
    %v2430 = vunpack.c.h.b16 %v2109
    %v2431 = vunpack.c.l.b16 %v2110
    %v2432 = vunpack.c.h.b16 %v2110
    %v2433 = vunpack.c.l.b16 %v2111
    %v2434 = vunpack.c.h.b16 %v2111
    %v2435 = vunpack.c.l.b16 %v2112
    %v2436 = vunpack.c.h.b16 %v2112
    %v2437 = vunpack.c.l.b16 %v2113
    %v2438 = vunpack.c.h.b16 %v2113
    %v2439 = vunpack.c.l.b16 %v2114
    %v2440 = vunpack.c.h.b16 %v2114
    %v2441 = vunpack.c.l.b16 %v2115
    %v2442 = vunpack.c.h.b16 %v2115
    %v2443 = vunpack.c.l.b16 %v2116
    %v2444 = vunpack.c.h.b16 %v2116
    %v2445 = vunpack.c.l.b16 %v2117
    %v2446 = vunpack.c.h.b16 %v2117
    %v2447 = vunpack.c.l.b16 %v2118
    %v2448 = vunpack.c.h.b16 %v2118
    %v2449 = vunpack.c.l.b16 %v2119
    %v2450 = vunpack.c.h.b16 %v2119
    %v2451 = vunpack.c.l.b16 %v2120
    %v2452 = vunpack.c.h.b16 %v2120
    %v2453 = vunpack.c.l.b16 %v2121
    %v2454 = vunpack.c.h.b16 %v2121
    %v2455 = vunpack.c.l.b16 %v2122
    %v2456 = vunpack.c.h.b16 %v2122
    %v2457 = vunpack.c.l.b16 %v2123
    %v2458 = vunpack.c.h.b16 %v2123
    %v2459 = vunpack.c.l.b16 %v2124
    %v2460 = vunpack.c.h.b16 %v2124
    %v2461 = vunpack.c.l.b16 %v2125
    %v2462 = vunpack.c.h.b16 %v2125
    %v2463 = vunpack.c.l.b16 %v2126
    %v2464 = vunpack.c.h.b16 %v2126
    %v2465 = vunpack.c.l.b16 %v2127
    %v2466 = vunpack.c.h.b16 %v2127
    %v2467 = vunpack.c.l.b16 %v2128
    %v2468 = vunpack.c.h.b16 %v2128
    %v2469 = vunpack.c.l.b16 %v2129
    %v2470 = vunpack.c.h.b16 %v2129
    %v2471 = vunpack.c.l.b16 %v2130
    %v2472 = vunpack.c.h.b16 %v2130
    %v2473 = vunpack.c.l.b16 %v2131
    %v2474 = vunpack.c.h.b16 %v2131
    %v2475 = vunpack.c.l.b16 %v2132
    %v2476 = vunpack.c.h.b16 %v2132
    %v2477 = vunpack.c.l.b16 %v2133
    %v2478 = vunpack.c.h.b16 %v2133
    %v2479 = vunpack.c.l.b16 %v2134
    %v2480 = vunpack.c.h.b16 %v2134
    %v2481 = vunpack.c.l.b16 %v2135
    %v2482 = vunpack.c.h.b16 %v2135
    %v2483 = vunpack.c.l.b16 %v2136
    %v2484 = vunpack.c.h.b16 %v2136
    %v2485 = vunpack.c.l.b16 %v2137
    %v2486 = vunpack.c.h.b16 %v2137
    %v2487 = vunpack.c.l.b16 %v2138
    %v2488 = vunpack.c.h.b16 %v2138
    %v2489 = vunpack.c.l.b16 %v2139
    %v2490 = vunpack.c.h.b16 %v2139
    %v2491 = vunpack.c.l.b16 %v2140
    %v2492 = vunpack.c.h.b16 %v2140
    %v2493 = vunpack.c.l.b16 %v2141
    %v2494 = vunpack.c.h.b16 %v2141
    %v2495 = vunpack.c.l.b16 %v2142
    %v2496 = vunpack.c.h.b16 %v2142
    %v2497 = vunpack.c.l.b16 %v2143
    %v2498 = vunpack.c.h.b16 %v2143
    %v2499 = vunpack.c.l.b16 %v2144
    %v2500 = vunpack.c.h.b16 %v2144
    %v2501 = vunpack.c.l.b16 %v2145
    %v2502 = vunpack.c.h.b16 %v2145
    %v2503 = vunpack.c.l.b16 %v2146
    %v2504 = vunpack.c.h.b16 %v2146
    %v2505 = vunpack.c.l.b16 %v2147
    %v2506 = vunpack.c.h.b16 %v2147
    %v2507 = vunpack.c.l.b16 %v2148
    %v2508 = vunpack.c.h.b16 %v2148
    %v2509 = vunpack.c.l.b16 %v2149
    %v2510 = vunpack.c.h.b16 %v2149
    %v2511 = vunpack.c.l.b16 %v2150
    %v2512 = vunpack.c.h.b16 %v2150
    %v2513 = vunpack.c.l.b16 %v2151
    %v2514 = vunpack.c.h.b16 %v2151
    %v2515 = vunpack.c.l.b16 %v2152
    %v2516 = vunpack.c.h.b16 %v2152
    %v2517 = vunpack.c.l.b16 %v2153
    %v2518 = vunpack.c.h.b16 %v2153
    %v2519 = vunpack.c.l.b16 %v2154
    %v2520 = vunpack.c.h.b16 %v2154
    %v2521 = vunpack.c.l.b16 %v2155
    %v2522 = vunpack.c.h.b16 %v2155
    %v2523 = vunpack.c.l.b16 %v2156
    %v2524 = vunpack.c.h.b16 %v2156
    %v2525 = vunpack.c.l.b16 %v2157
    %v2526 = vunpack.c.h.b16 %v2157
    %v2527 = vunpack.c.l.b16 %v2158
    %v2528 = vunpack.c.h.b16 %v2158
    %v2529 = vunpack.c.l.b16 %v2159
    %v2530 = vunpack.c.h.b16 %v2159
    %v2531 = vunpack.c.l.b16 %v2160
    %v2532 = vunpack.c.h.b16 %v2160
    %v2533 = vunpack.c.l.b16 %v2161
    %v2534 = vunpack.c.h.b16 %v2161
    %v2535 = vunpack.c.l.b16 %v2162
    %v2536 = vunpack.c.h.b16 %v2162
    %v2537 = vunpack.c.l.b16 %v2163
    %v2538 = vunpack.c.h.b16 %v2163
    %v2539 = vunpack.c.l.b16 %v2164
    %v2540 = vunpack.c.h.b16 %v2164
    %v2541 = vunpack.c.l.b16 %v2165
    %v2542 = vunpack.c.h.b16 %v2165
    %v2543 = vunpack.c.l.b16 %v2166
    %v2544 = vunpack.c.h.b16 %v2166
    %v2545 = vunpack.c.l.b16 %v2167
    %v2546 = vunpack.c.h.b16 %v2167
    %v2547 = vunpack.c.l.b16 %v2168
    %v2548 = vunpack.c.h.b16 %v2168
    %v2549 = vunpack.c.l.b16 %v2169
    %v2550 = vunpack.c.h.b16 %v2169
    %v2551 = vunpack.c.l.b16 %v2170
    %v2552 = vunpack.c.h.b16 %v2170
    %v2553 = vunpack.c.l.b16 %v2171
    %v2554 = vunpack.c.h.b16 %v2171
    %v2555 = vunpack.c.l.b16 %v2172
    %v2556 = vunpack.c.h.b16 %v2172
    %v2557 = vpack.c.b16 %v2309, %v2301
    %v2558 = vpack.c.b16 %v2310, %v2302
    %v2559 = vpack.c.b16 %v2311, %v2303
    %v2560 = vpack.c.b16 %v2312, %v2304
    %v2561 = vpack.c.b16 %v2313, %v2305
    %v2562 = vpack.c.b16 %v2314, %v2306
    %v2563 = vpack.c.b16 %v2315, %v2307
    %v2564 = vpack.c.b16 %v2316, %v2308
    %v2565 = vpack.c.b16 %v2325, %v2317
    %v2566 = vpack.c.b16 %v2326, %v2318
    %v2567 = vpack.c.b16 %v2327, %v2319
    %v2568 = vpack.c.b16 %v2328, %v2320
    %v2569 = vpack.c.b16 %v2329, %v2321
    %v2570 = vpack.c.b16 %v2330, %v2322
    %v2571 = vpack.c.b16 %v2331, %v2323
    %v2572 = vpack.c.b16 %v2332, %v2324
    %v2573 = vpack.c.b16 %v2341, %v2333
    %v2574 = vpack.c.b16 %v2342, %v2334
    %v2575 = vpack.c.b16 %v2343, %v2335
    %v2576 = vpack.c.b16 %v2344, %v2336
    %v2577 = vpack.c.b16 %v2345, %v2337
    %v2578 = vpack.c.b16 %v2346, %v2338
    %v2579 = vpack.c.b16 %v2347, %v2339
    %v2580 = vpack.c.b16 %v2348, %v2340
    %v2581 = vpack.c.b16 %v2357, %v2349
    %v2582 = vpack.c.b16 %v2358, %v2350
    %v2583 = vpack.c.b16 %v2359, %v2351
    %v2584 = vpack.c.b16 %v2360, %v2352
    %v2585 = vpack.c.b16 %v2361, %v2353
    %v2586 = vpack.c.b16 %v2362, %v2354
    %v2587 = vpack.c.b16 %v2363, %v2355
    %v2588 = vpack.c.b16 %v2364, %v2356
    %v2589 = vpack.c.b16 %v2373, %v2365
    %v2590 = vpack.c.b16 %v2374, %v2366
    %v2591 = vpack.c.b16 %v2375, %v2367
    %v2592 = vpack.c.b16 %v2376, %v2368
    %v2593 = vpack.c.b16 %v2377, %v2369
    %v2594 = vpack.c.b16 %v2378, %v2370
    %v2595 = vpack.c.b16 %v2379, %v2371
    %v2596 = vpack.c.b16 %v2380, %v2372
    %v2597 = vpack.c.b16 %v2389, %v2381
    %v2598 = vpack.c.b16 %v2390, %v2382
    %v2599 = vpack.c.b16 %v2391, %v2383
    %v2600 = vpack.c.b16 %v2392, %v2384
    %v2601 = vpack.c.b16 %v2393, %v2385
    %v2602 = vpack.c.b16 %v2394, %v2386
    %v2603 = vpack.c.b16 %v2395, %v2387
    %v2604 = vpack.c.b16 %v2396, %v2388
    %v2605 = vpack.c.b16 %v2405, %v2397
    %v2606 = vpack.c.b16 %v2406, %v2398
    %v2607 = vpack.c.b16 %v2407, %v2399
    %v2608 = vpack.c.b16 %v2408, %v2400
    %v2609 = vpack.c.b16 %v2409, %v2401
    %v2610 = vpack.c.b16 %v2410, %v2402
    %v2611 = vpack.c.b16 %v2411, %v2403
    %v2612 = vpack.c.b16 %v2412, %v2404
    %v2613 = vpack.c.b16 %v2421, %v2413
    %v2614 = vpack.c.b16 %v2422, %v2414
    %v2615 = vpack.c.b16 %v2423, %v2415
    %v2616 = vpack.c.b16 %v2424, %v2416
    %v2617 = vpack.c.b16 %v2425, %v2417
    %v2618 = vpack.c.b16 %v2426, %v2418
    %v2619 = vpack.c.b16 %v2427, %v2419
    %v2620 = vpack.c.b16 %v2428, %v2420
    %v2621 = vpack.c.b16 %v2437, %v2429
    %v2622 = vpack.c.b16 %v2438, %v2430
    %v2623 = vpack.c.b16 %v2439, %v2431
    %v2624 = vpack.c.b16 %v2440, %v2432
    %v2625 = vpack.c.b16 %v2441, %v2433
    %v2626 = vpack.c.b16 %v2442, %v2434
    %v2627 = vpack.c.b16 %v2443, %v2435
    %v2628 = vpack.c.b16 %v2444, %v2436
    %v2629 = vpack.c.b16 %v2453, %v2445
    %v2630 = vpack.c.b16 %v2454, %v2446
    %v2631 = vpack.c.b16 %v2455, %v2447
    %v2632 = vpack.c.b16 %v2456, %v2448
    %v2633 = vpack.c.b16 %v2457, %v2449
    %v2634 = vpack.c.b16 %v2458, %v2450
    %v2635 = vpack.c.b16 %v2459, %v2451
    %v2636 = vpack.c.b16 %v2460, %v2452
    %v2637 = vpack.c.b16 %v2469, %v2461
    %v2638 = vpack.c.b16 %v2470, %v2462
    %v2639 = vpack.c.b16 %v2471, %v2463
    %v2640 = vpack.c.b16 %v2472, %v2464
    %v2641 = vpack.c.b16 %v2473, %v2465
    %v2642 = vpack.c.b16 %v2474, %v2466
    %v2643 = vpack.c.b16 %v2475, %v2467
    %v2644 = vpack.c.b16 %v2476, %v2468
    %v2645 = vpack.c.b16 %v2485, %v2477
    %v2646 = vpack.c.b16 %v2486, %v2478
    %v2647 = vpack.c.b16 %v2487, %v2479
    %v2648 = vpack.c.b16 %v2488, %v2480
    %v2649 = vpack.c.b16 %v2489, %v2481
    %v2650 = vpack.c.b16 %v2490, %v2482
    %v2651 = vpack.c.b16 %v2491, %v2483
    %v2652 = vpack.c.b16 %v2492, %v2484
    %v2653 = vpack.c.b16 %v2501, %v2493
    %v2654 = vpack.c.b16 %v2502, %v2494
    %v2655 = vpack.c.b16 %v2503, %v2495
    %v2656 = vpack.c.b16 %v2504, %v2496
    %v2657 = vpack.c.b16 %v2505, %v2497
    %v2658 = vpack.c.b16 %v2506, %v2498
    %v2659 = vpack.c.b16 %v2507, %v2499
    %v2660 = vpack.c.b16 %v2508, %v2500
    %v2661 = vpack.c.b16 %v2517, %v2509
    %v2662 = vpack.c.b16 %v2518, %v2510
    %v2663 = vpack.c.b16 %v2519, %v2511
    %v2664 = vpack.c.b16 %v2520, %v2512
    %v2665 = vpack.c.b16 %v2521, %v2513
    %v2666 = vpack.c.b16 %v2522, %v2514
    %v2667 = vpack.c.b16 %v2523, %v2515
    %v2668 = vpack.c.b16 %v2524, %v2516
    %v2669 = vpack.c.b16 %v2533, %v2525
    %v2670 = vpack.c.b16 %v2534, %v2526
    %v2671 = vpack.c.b16 %v2535, %v2527
    %v2672 = vpack.c.b16 %v2536, %v2528
    %v2673 = vpack.c.b16 %v2537, %v2529
    %v2674 = vpack.c.b16 %v2538, %v2530
    %v2675 = vpack.c.b16 %v2539, %v2531
    %v2676 = vpack.c.b16 %v2540, %v2532
    %v2677 = vpack.c.b16 %v2549, %v2541
    %v2678 = vpack.c.b16 %v2550, %v2542
    %v2679 = vpack.c.b16 %v2551, %v2543
    %v2680 = vpack.c.b16 %v2552, %v2544
    %v2681 = vpack.c.b16 %v2553, %v2545
    %v2682 = vpack.c.b16 %v2554, %v2546
    %v2683 = vpack.c.b16 %v2555, %v2547
    %v2684 = vpack.c.b16 %v2556, %v2548
    %2813 = vmatpush.bf16.msra.mxu0 %v2613
    %2814 = vmatpush.bf16.msra.mxu0 %v2605
    %2815 = vmatpush.bf16.msra.mxu0 %v2597
    %2816 = vmatpush.bf16.msra.mxu0 %v2589
    %2817 = vmatpush.bf16.msra.mxu0 %v2581
    %2818 = vmatpush.bf16.msra.mxu0 %v2573
    %2819 = vmatpush.bf16.msra.mxu0 %v2565
    %2820 = vmatpush.bf16.msra.mxu0 %v2557
    %2821 = vmatmul.bf16.gmra.mxu0 %v2043
    %v2822 = vpop.f32.mrf.mxu0
    %v2823 = vadd.f32 0.0, %v2822
    %v2824 = vpop.f32.mrf.mxu0
    %2825 = vdwg.mxu0
    %2826 = vmatpush.bf16.msra.mxu0 %v2677
    %2827 = vmatpush.bf16.msra.mxu0 %v2669
    %2828 = vmatpush.bf16.msra.mxu0 %v2661
    %2829 = vmatpush.bf16.msra.mxu0 %v2653
    %2830 = vmatpush.bf16.msra.mxu0 %v2645
    %2831 = vmatpush.bf16.msra.mxu0 %v2637
    %2832 = vmatpush.bf16.msra.mxu0 %v2629
    %2833 = vmatpush.bf16.msra.mxu0 %v2621
    %2834 = vmatmul.bf16.gmra.mxu0 %v2044
    %v2835 = vpop.f32.mrf.mxu0
    %v2836 = vadd.f32 %v2823, %v2835
    %v2837 = vpop.f32.mrf.mxu0
    %2838 = vdwg.mxu0
    %2839 = vmatpush.bf16.msra.mxu0 %v2614
    %2840 = vmatpush.bf16.msra.mxu0 %v2606
    %2841 = vmatpush.bf16.msra.mxu0 %v2598
    %2842 = vmatpush.bf16.msra.mxu0 %v2590
    %2843 = vmatpush.bf16.msra.mxu0 %v2582
    %2844 = vmatpush.bf16.msra.mxu0 %v2574
    %2845 = vmatpush.bf16.msra.mxu0 %v2566
    %2846 = vmatpush.bf16.msra.mxu0 %v2558
    %2847 = vmatmul.bf16.gmra.mxu0 %v2043
    %v2848 = vpop.f32.mrf.mxu0
    %v2849 = vadd.f32 0.0, %v2848
    %v2850 = vpop.f32.mrf.mxu0
    %2851 = vdwg.mxu0
    %2852 = vmatpush.bf16.msra.mxu0 %v2678
    %2853 = vmatpush.bf16.msra.mxu0 %v2670
    %2854 = vmatpush.bf16.msra.mxu0 %v2662
    %2855 = vmatpush.bf16.msra.mxu0 %v2654
    %2856 = vmatpush.bf16.msra.mxu0 %v2646
    %2857 = vmatpush.bf16.msra.mxu0 %v2638
    %2858 = vmatpush.bf16.msra.mxu0 %v2630
    %2859 = vmatpush.bf16.msra.mxu0 %v2622
    %2860 = vmatmul.bf16.gmra.mxu0 %v2044
    %v2861 = vpop.f32.mrf.mxu0
    %v2862 = vadd.f32 %v2849, %v2861
    %v2863 = vpop.f32.mrf.mxu0
    %2864 = vdwg.mxu0
    %2865 = vmatpush.bf16.msra.mxu0 %v2615
    %2866 = vmatpush.bf16.msra.mxu0 %v2607
    %2867 = vmatpush.bf16.msra.mxu0 %v2599
    %2868 = vmatpush.bf16.msra.mxu0 %v2591
    %2869 = vmatpush.bf16.msra.mxu0 %v2583
    %2870 = vmatpush.bf16.msra.mxu0 %v2575
    %2871 = vmatpush.bf16.msra.mxu0 %v2567
    %2872 = vmatpush.bf16.msra.mxu0 %v2559
    %2873 = vmatmul.bf16.gmra.mxu0 %v2043
    %v2874 = vpop.f32.mrf.mxu0
    %v2875 = vadd.f32 0.0, %v2874
    %v2876 = vpop.f32.mrf.mxu0
    %2877 = vdwg.mxu0
    %2878 = vmatpush.bf16.msra.mxu0 %v2679
    %2879 = vmatpush.bf16.msra.mxu0 %v2671
    %2880 = vmatpush.bf16.msra.mxu0 %v2663
    %2881 = vmatpush.bf16.msra.mxu0 %v2655
    %2882 = vmatpush.bf16.msra.mxu0 %v2647
    %2883 = vmatpush.bf16.msra.mxu0 %v2639
    %2884 = vmatpush.bf16.msra.mxu0 %v2631
    %2885 = vmatpush.bf16.msra.mxu0 %v2623
    %2886 = vmatmul.bf16.gmra.mxu0 %v2044
    %v2887 = vpop.f32.mrf.mxu0
    %v2888 = vadd.f32 %v2875, %v2887
    %v2889 = vpop.f32.mrf.mxu0
    %2890 = vdwg.mxu0
    %2891 = vmatpush.bf16.msra.mxu0 %v2616
    %2892 = vmatpush.bf16.msra.mxu0 %v2608
    %2893 = vmatpush.bf16.msra.mxu0 %v2600
    %2894 = vmatpush.bf16.msra.mxu0 %v2592
    %2895 = vmatpush.bf16.msra.mxu0 %v2584
    %2896 = vmatpush.bf16.msra.mxu0 %v2576
    %2897 = vmatpush.bf16.msra.mxu0 %v2568
    %2898 = vmatpush.bf16.msra.mxu0 %v2560
    %2899 = vmatmul.bf16.gmra.mxu0 %v2043
    %v2900 = vpop.f32.mrf.mxu0
    %v2901 = vadd.f32 0.0, %v2900
    %v2902 = vpop.f32.mrf.mxu0
    %2903 = vdwg.mxu0
    %2904 = vmatpush.bf16.msra.mxu0 %v2680
    %2905 = vmatpush.bf16.msra.mxu0 %v2672
    %2906 = vmatpush.bf16.msra.mxu0 %v2664
    %2907 = vmatpush.bf16.msra.mxu0 %v2656
    %2908 = vmatpush.bf16.msra.mxu0 %v2648
    %2909 = vmatpush.bf16.msra.mxu0 %v2640
    %2910 = vmatpush.bf16.msra.mxu0 %v2632
    %2911 = vmatpush.bf16.msra.mxu0 %v2624
    %2912 = vmatmul.bf16.gmra.mxu0 %v2044
    %v2913 = vpop.f32.mrf.mxu0
    %v2914 = vadd.f32 %v2901, %v2913
    %v2915 = vpop.f32.mrf.mxu0
    %2916 = vdwg.mxu0
    %2917 = vmatpush.bf16.msra.mxu0 %v2617
    %2918 = vmatpush.bf16.msra.mxu0 %v2609
    %2919 = vmatpush.bf16.msra.mxu0 %v2601
    %2920 = vmatpush.bf16.msra.mxu0 %v2593
    %2921 = vmatpush.bf16.msra.mxu0 %v2585
    %2922 = vmatpush.bf16.msra.mxu0 %v2577
    %2923 = vmatpush.bf16.msra.mxu0 %v2569
    %2924 = vmatpush.bf16.msra.mxu0 %v2561
    %2925 = vmatmul.bf16.gmra.mxu0 %v2043
    %v2926 = vpop.f32.mrf.mxu0
    %v2927 = vadd.f32 0.0, %v2926
    %v2928 = vpop.f32.mrf.mxu0
    %2929 = vdwg.mxu0
    %2930 = vmatpush.bf16.msra.mxu0 %v2681
    %2931 = vmatpush.bf16.msra.mxu0 %v2673
    %2932 = vmatpush.bf16.msra.mxu0 %v2665
    %2933 = vmatpush.bf16.msra.mxu0 %v2657
    %2934 = vmatpush.bf16.msra.mxu0 %v2649
    %2935 = vmatpush.bf16.msra.mxu0 %v2641
    %2936 = vmatpush.bf16.msra.mxu0 %v2633
    %2937 = vmatpush.bf16.msra.mxu0 %v2625
    %2938 = vmatmul.bf16.gmra.mxu0 %v2044
    %v2939 = vpop.f32.mrf.mxu0
    %v2940 = vadd.f32 %v2927, %v2939
    %v2941 = vpop.f32.mrf.mxu0
    %2942 = vdwg.mxu0
    %2943 = vmatpush.bf16.msra.mxu0 %v2618
    %2944 = vmatpush.bf16.msra.mxu0 %v2610
    %2945 = vmatpush.bf16.msra.mxu0 %v2602
    %2946 = vmatpush.bf16.msra.mxu0 %v2594
    %2947 = vmatpush.bf16.msra.mxu0 %v2586
    %2948 = vmatpush.bf16.msra.mxu0 %v2578
    %2949 = vmatpush.bf16.msra.mxu0 %v2570
    %2950 = vmatpush.bf16.msra.mxu0 %v2562
    %2951 = vmatmul.bf16.gmra.mxu0 %v2043
    %v2952 = vpop.f32.mrf.mxu0
    %v2953 = vadd.f32 0.0, %v2952
    %v2954 = vpop.f32.mrf.mxu0
    %2955 = vdwg.mxu0
    %2956 = vmatpush.bf16.msra.mxu0 %v2682
    %2957 = vmatpush.bf16.msra.mxu0 %v2674
    %2958 = vmatpush.bf16.msra.mxu0 %v2666
    %2959 = vmatpush.bf16.msra.mxu0 %v2658
    %2960 = vmatpush.bf16.msra.mxu0 %v2650
    %2961 = vmatpush.bf16.msra.mxu0 %v2642
    %2962 = vmatpush.bf16.msra.mxu0 %v2634
    %2963 = vmatpush.bf16.msra.mxu0 %v2626
    %2964 = vmatmul.bf16.gmra.mxu0 %v2044
    %v2965 = vpop.f32.mrf.mxu0
    %v2966 = vadd.f32 %v2953, %v2965
    %v2967 = vpop.f32.mrf.mxu0
    %2968 = vdwg.mxu0
    %2969 = vmatpush.bf16.msra.mxu0 %v2619
    %2970 = vmatpush.bf16.msra.mxu0 %v2611
    %2971 = vmatpush.bf16.msra.mxu0 %v2603
    %2972 = vmatpush.bf16.msra.mxu0 %v2595
    %2973 = vmatpush.bf16.msra.mxu0 %v2587
    %2974 = vmatpush.bf16.msra.mxu0 %v2579
    %2975 = vmatpush.bf16.msra.mxu0 %v2571
    %2976 = vmatpush.bf16.msra.mxu0 %v2563
    %2977 = vmatmul.bf16.gmra.mxu0 %v2043
    %v2978 = vpop.f32.mrf.mxu0
    %v2979 = vadd.f32 0.0, %v2978
    %v2980 = vpop.f32.mrf.mxu0
    %2981 = vdwg.mxu0
    %2982 = vmatpush.bf16.msra.mxu0 %v2683
    %2983 = vmatpush.bf16.msra.mxu0 %v2675
    %2984 = vmatpush.bf16.msra.mxu0 %v2667
    %2985 = vmatpush.bf16.msra.mxu0 %v2659
    %2986 = vmatpush.bf16.msra.mxu0 %v2651
    %2987 = vmatpush.bf16.msra.mxu0 %v2643
    %2988 = vmatpush.bf16.msra.mxu0 %v2635
    %2989 = vmatpush.bf16.msra.mxu0 %v2627
    %2990 = vmatmul.bf16.gmra.mxu0 %v2044
    %v2991 = vpop.f32.mrf.mxu0
    %v2992 = vadd.f32 %v2979, %v2991
    %v2993 = vpop.f32.mrf.mxu0
    %2994 = vdwg.mxu0
    %2995 = vmatpush.bf16.msra.mxu0 %v2620
    %2996 = vmatpush.bf16.msra.mxu0 %v2612
    %2997 = vmatpush.bf16.msra.mxu0 %v2604
    %2998 = vmatpush.bf16.msra.mxu0 %v2596
    %2999 = vmatpush.bf16.msra.mxu0 %v2588
    %3000 = vmatpush.bf16.msra.mxu0 %v2580
    %3001 = vmatpush.bf16.msra.mxu0 %v2572
    %3002 = vmatpush.bf16.msra.mxu0 %v2564
    %3003 = vmatmul.bf16.gmra.mxu0 %v2043
    %v3004 = vpop.f32.mrf.mxu0
    %v3005 = vadd.f32 0.0, %v3004
    %v3006 = vpop.f32.mrf.mxu0
    %3007 = vdwg.mxu0
    %3008 = vmatpush.bf16.msra.mxu0 %v2684
    %3009 = vmatpush.bf16.msra.mxu0 %v2676
    %3010 = vmatpush.bf16.msra.mxu0 %v2668
    %3011 = vmatpush.bf16.msra.mxu0 %v2660
    %3012 = vmatpush.bf16.msra.mxu0 %v2652
    %3013 = vmatpush.bf16.msra.mxu0 %v2644
    %3014 = vmatpush.bf16.msra.mxu0 %v2636
    %3015 = vmatpush.bf16.msra.mxu0 %v2628
    %3016 = vmatmul.bf16.gmra.mxu0 %v2044
    %v3017 = vpop.f32.mrf.mxu0
    %v3018 = vadd.f32 %v3005, %v3017
    %v3019 = vpop.f32.mrf.mxu0
    %3020 = vdwg.mxu0
    %s3021 = scalar_lea.vmem %s1, 8
    %v3022 = vld [vmem:[%s3021] sm:$0xff]
    %s3023 = scalar_lea.vmem %s1, 48
    %v3024 = vld [vmem:[%s3023] sm:$0xff]
    %s3025 = scalar_lea.vmem [#allocation2], 32
    %v3026 = vld [vmem:[%s3025] sm:$0xff]
    %v3027 = vld [vmem:[%s3025 + $0x8] sm:$0xff]
    %v3028 = vld [vmem:[%s3025 + $0x10] sm:$0xff]
    %v3029 = vld [vmem:[%s3025 + $0x18] sm:$0xff]
    %v3030 = vadd.f32 %v3026, %v2836
    %v3031 = vadd.f32 %v3027, %v2862
    %v3032 = vadd.f32 %v3028, %v2888
    %v3033 = vadd.f32 %v3029, %v2914
    %s3034 = scalar_lea.vmem [#allocation3], 192
    %v3035 = vld [vmem:[%s3034] sm:$0xff]
    %v3036 = vld [vmem:[%s3034 + $0x8] sm:$0xff]
    %v3037 = vld [vmem:[%s3034 + $0x10] sm:$0xff]
    %v3038 = vld [vmem:[%s3034 + $0x18] sm:$0xff]
    %v3039 = vadd.f32 %v3035, %v2940
    %v3040 = vadd.f32 %v3036, %v2966
    %v3041 = vadd.f32 %v3037, %v2992
    %v3042 = vadd.f32 %v3038, %v3018
    %v3043 = vld [vmem:[#allocation7] sm:$0xff]
    %v3044 = vxor.u32 %v3030, 2147483648
    %v3045 = vmul.f32 %v3044, 1.442695
    %v3046 = vpow.pop %v3045
    %v3047 = vadd.f32 %v3046, 1.0
    %v3048 = vrcp.pop %v3047
    %v3049 = vmul.f32 %v3047, %v3048
    %v3050 = vsub.f32 1.0, %v3049
    %v3051 = vmul.f32 %v3048, %v3050
    %v3052 = vadd.f32 %v3048, %v3051
    %vm3053 = vweird.f32 %v3047
    %vm3054 = vweird.f32 %v3048
    %vm3055 = vmor %vm3053, %vm3054
    %v3056 = vsel %vm3055, %v3048, %v3052
    %v3057 = vand.u32 2147483647, %v3047
    %vm3058 = vcmp.eq.f32.partialorder %v3057, 8.507059e+37
    %v3059 = vand.u32 %v3047, 2147483648
    %v3060 = vor.u32 1.1754944e-38, %v3059
    %v3061 = vsel %vm3058, %v3060, %v3056
    %v3062 = vmul.f32 1.0, %v3061
    %v3063 = vxor.u32 %v3031, 2147483648
    %v3064 = vmul.f32 %v3063, 1.442695
    %v3065 = vpow.pop %v3064
    %v3066 = vadd.f32 %v3065, 1.0
    %v3067 = vrcp.pop %v3066
    %v3068 = vmul.f32 %v3066, %v3067
    %v3069 = vsub.f32 1.0, %v3068
    %v3070 = vmul.f32 %v3067, %v3069
    %v3071 = vadd.f32 %v3067, %v3070
    %vm3072 = vweird.f32 %v3066
    %vm3073 = vweird.f32 %v3067
    %vm3074 = vmor %vm3072, %vm3073
    %v3075 = vsel %vm3074, %v3067, %v3071
    %v3076 = vand.u32 2147483647, %v3066
    %vm3077 = vcmp.eq.f32.partialorder %v3076, 8.507059e+37
    %v3078 = vand.u32 %v3066, 2147483648
    %v3079 = vor.u32 1.1754944e-38, %v3078
    %v3080 = vsel %vm3077, %v3079, %v3075
    %v3081 = vmul.f32 1.0, %v3080
    %v3082 = vtanh.pop %v3032
    %v3083 = vxor.u32 %v3033, 2147483648
    %v3084 = vmul.f32 %v3083, 1.442695
    %v3085 = vpow.pop %v3084
    %v3086 = vadd.f32 %v3085, 1.0
    %v3087 = vrcp.pop %v3086
    %v3088 = vmul.f32 %v3086, %v3087
    %v3089 = vsub.f32 1.0, %v3088
    %v3090 = vmul.f32 %v3087, %v3089
    %v3091 = vadd.f32 %v3087, %v3090
    %vm3092 = vweird.f32 %v3086
    %vm3093 = vweird.f32 %v3087
    %vm3094 = vmor %vm3092, %vm3093
    %v3095 = vsel %vm3094, %v3087, %v3091
    %v3096 = vand.u32 2147483647, %v3086
    %vm3097 = vcmp.eq.f32.partialorder %v3096, 8.507059e+37
    %v3098 = vand.u32 %v3086, 2147483648
    %v3099 = vor.u32 1.1754944e-38, %v3098
    %v3100 = vsel %vm3097, %v3099, %v3095
    %v3101 = vmul.f32 1.0, %v3100
    %v3102 = vmul.f32 %v3081, %v3043
    %v3103 = vmul.f32 %v3062, %v3082
    %v3104 = vadd.f32 %v3102, %v3103
    %v3105 = vtanh.pop %v3104
    %v3106 = vmul.f32 %v3101, %v3105
    %v3107 = vld [vmem:[#allocation8] sm:$0xff]
    %v3108 = vxor.u32 %v3039, 2147483648
    %v3109 = vmul.f32 %v3108, 1.442695
    %v3110 = vpow.pop %v3109
    %v3111 = vadd.f32 %v3110, 1.0
    %v3112 = vrcp.pop %v3111
    %v3113 = vmul.f32 %v3111, %v3112
    %v3114 = vsub.f32 1.0, %v3113
    %v3115 = vmul.f32 %v3112, %v3114
    %v3116 = vadd.f32 %v3112, %v3115
    %vm3117 = vweird.f32 %v3111
    %vm3118 = vweird.f32 %v3112
    %vm3119 = vmor %vm3117, %vm3118
    %v3120 = vsel %vm3119, %v3112, %v3116
    %v3121 = vand.u32 2147483647, %v3111
    %vm3122 = vcmp.eq.f32.partialorder %v3121, 8.507059e+37
    %v3123 = vand.u32 %v3111, 2147483648
    %v3124 = vor.u32 1.1754944e-38, %v3123
    %v3125 = vsel %vm3122, %v3124, %v3120
    %v3126 = vmul.f32 1.0, %v3125
    %v3127 = vxor.u32 %v3040, 2147483648
    %v3128 = vmul.f32 %v3127, 1.442695
    %v3129 = vpow.pop %v3128
    %v3130 = vadd.f32 %v3129, 1.0
    %v3131 = vrcp.pop %v3130
    %v3132 = vmul.f32 %v3130, %v3131
    %v3133 = vsub.f32 1.0, %v3132
    %v3134 = vmul.f32 %v3131, %v3133
    %v3135 = vadd.f32 %v3131, %v3134
    %vm3136 = vweird.f32 %v3130
    %vm3137 = vweird.f32 %v3131
    %vm3138 = vmor %vm3136, %vm3137
    %v3139 = vsel %vm3138, %v3131, %v3135
    %v3140 = vand.u32 2147483647, %v3130
    %vm3141 = vcmp.eq.f32.partialorder %v3140, 8.507059e+37
    %v3142 = vand.u32 %v3130, 2147483648
    %v3143 = vor.u32 1.1754944e-38, %v3142
    %v3144 = vsel %vm3141, %v3143, %v3139
    %v3145 = vmul.f32 1.0, %v3144
    %v3146 = vtanh.pop %v3041
    %v3147 = vxor.u32 %v3042, 2147483648
    %v3148 = vmul.f32 %v3147, 1.442695
    %v3149 = vpow.pop %v3148
    %v3150 = vadd.f32 %v3149, 1.0
    %v3151 = vrcp.pop %v3150
    %v3152 = vmul.f32 %v3150, %v3151
    %v3153 = vsub.f32 1.0, %v3152
    %v3154 = vmul.f32 %v3151, %v3153
    %v3155 = vadd.f32 %v3151, %v3154
    %vm3156 = vweird.f32 %v3150
    %vm3157 = vweird.f32 %v3151
    %vm3158 = vmor %vm3156, %vm3157
    %v3159 = vsel %vm3158, %v3151, %v3155
    %v3160 = vand.u32 2147483647, %v3150
    %vm3161 = vcmp.eq.f32.partialorder %v3160, 8.507059e+37
    %v3162 = vand.u32 %v3150, 2147483648
    %v3163 = vor.u32 1.1754944e-38, %v3162
    %v3164 = vsel %vm3161, %v3163, %v3159
    %v3165 = vmul.f32 1.0, %v3164
    %v3166 = vmul.f32 %v3145, %v3107
    %v3167 = vmul.f32 %v3126, %v3146
    %v3168 = vadd.f32 %v3166, %v3167
    %v3169 = vtanh.pop %v3168
    %v3170 = vmul.f32 %v3165, %v3169
    %vm3171 = vcmp.gt.f32.partialorder %v3022, 0.0
    %v3172 = vld [vmem:[#allocation6] sm:$0xff]
    %v3173 = vsel %vm3171, 1, 0
    %3174 = vset.pattern.permute.xlu0 0
    %3175 = vperm.xlu0 %3174, %v3173
    %v3176 = vpop.permute.xlu0 %3175
    %vm3177 = vcmp.eq.s32.totalorder %v3176, 1
    %v3178 = vsel %vm3177, %v3106, %v3172
    %vm3179 = vcmp.gt.f32.partialorder %v3024, 0.0
    %v3180 = vsel %vm3179, 1, 0
    %3181 = vset.pattern.permute.xlu0 0
    %3182 = vperm.xlu0 %3181, %v3180
    %v3183 = vpop.permute.xlu0 %3182
    %vm3184 = vcmp.eq.s32.totalorder %v3183, 1
    %v3185 = vsel %vm3184, %v3170, %v2042
    %v3186 = vsel %vm3177, %v3104, %v3043
    %3187 = vst [vmem:[#allocation7] sm:$0xff] %v3186
    %v3188 = vld [vmem:[#allocation8] sm:$0xff]
    %v3189 = vsel %vm3184, %v3168, %v3188
    %3190 = vst [vmem:[#allocation8] sm:$0xff] %v3189
    %3191 = vst [vmem:[#allocation6] sm:$0xff] %v3178
    %3192 = vst [vmem:[#allocation6 + $0x8] sm:$0xff] %v3185
    %3194 = vset.pattern.permute.xlu0 0
    %3195 = vperm.xlu0 %3194, %v3022
    %v3196 = vpop.permute.xlu0 %3195
    %v3198 = vmul.f32 %v3178, %v3196
    %s3199 = scalar_lea.vmem [#allocation4], 8
    %3200 = vst [vmem:[%s3199] sm:$0xff] %v3198
    %3202 = vset.pattern.permute.xlu0 0
    %3203 = vperm.xlu0 %3202, %v3024
    %v3204 = vpop.permute.xlu0 %3203
    %v3206 = vmul.f32 %v3185, %v3204
    %s3207 = scalar_lea.vmem [#allocation5], 48
    %3208 = vst [vmem:[%s3207] sm:$0xff] %v3206
    %v3209 = vld [vmem:[#allocation6] sm:$0xff]
    %v3210 = vld [vmem:[#allocation6 + $0x8] sm:$0xff]
    %v3211 = vpack.c.bf16 %v3209, %v3209
    %v3212 = vpack.c.bf16 %v3210, %v3210
    %v3213 = vld [vmem:[#allocation14] sm:$0xff]
    %v3214 = vld [vmem:[#allocation14 + $0x8] sm:$0xff]
    %v3215 = vld [vmem:[#allocation14 + $0x10] sm:$0xff]
    %v3216 = vld [vmem:[#allocation14 + $0x18] sm:$0xff]
    %v3217 = vld [vmem:[#allocation14 + $0x20] sm:$0xff]
    %v3218 = vld [vmem:[#allocation14 + $0x28] sm:$0xff]
    %v3219 = vld [vmem:[#allocation14 + $0x30] sm:$0xff]
    %v3220 = vld [vmem:[#allocation14 + $0x38] sm:$0xff]
    %v3221 = vld [vmem:[#allocation14 + $0x40] sm:$0xff]
    %v3222 = vld [vmem:[#allocation14 + $0x48] sm:$0xff]
    %v3223 = vld [vmem:[#allocation14 + $0x50] sm:$0xff]
    %v3224 = vld [vmem:[#allocation14 + $0x58] sm:$0xff]
    %v3225 = vld [vmem:[#allocation14 + $0x60] sm:$0xff]
    %v3226 = vld [vmem:[#allocation14 + $0x68] sm:$0xff]
    %v3227 = vld [vmem:[#allocation14 + $0x70] sm:$0xff]
    %v3228 = vld [vmem:[#allocation14 + $0x78] sm:$0xff]
    %v3229 = vld [vmem:[#allocation14 + $0x80] sm:$0xff]
    %v3230 = vld [vmem:[#allocation14 + $0x88] sm:$0xff]
    %v3231 = vld [vmem:[#allocation14 + $0x90] sm:$0xff]
    %v3232 = vld [vmem:[#allocation14 + $0x98] sm:$0xff]
    %v3233 = vld [vmem:[#allocation14 + $0xa0] sm:$0xff]
    %v3234 = vld [vmem:[#allocation14 + $0xa8] sm:$0xff]
    %v3235 = vld [vmem:[#allocation14 + $0xb0] sm:$0xff]
    %v3236 = vld [vmem:[#allocation14 + $0xb8] sm:$0xff]
    %v3237 = vld [vmem:[#allocation14 + $0xc0] sm:$0xff]
    %v3238 = vld [vmem:[#allocation14 + $0xc8] sm:$0xff]
    %v3239 = vld [vmem:[#allocation14 + $0xd0] sm:$0xff]
    %v3240 = vld [vmem:[#allocation14 + $0xd8] sm:$0xff]
    %v3241 = vld [vmem:[#allocation14 + $0xe0] sm:$0xff]
    %v3242 = vld [vmem:[#allocation14 + $0xe8] sm:$0xff]
    %v3243 = vld [vmem:[#allocation14 + $0xf0] sm:$0xff]
    %v3244 = vld [vmem:[#allocation14 + $0xf8] sm:$0xff]
    %v3245 = vld [vmem:[#allocation14 + $0x100] sm:$0xff]
    %v3246 = vld [vmem:[#allocation14 + $0x108] sm:$0xff]
    %v3247 = vld [vmem:[#allocation14 + $0x110] sm:$0xff]
    %v3248 = vld [vmem:[#allocation14 + $0x118] sm:$0xff]
    %v3249 = vld [vmem:[#allocation14 + $0x120] sm:$0xff]
    %v3250 = vld [vmem:[#allocation14 + $0x128] sm:$0xff]
    %v3251 = vld [vmem:[#allocation14 + $0x130] sm:$0xff]
    %v3252 = vld [vmem:[#allocation14 + $0x138] sm:$0xff]
    %v3253 = vld [vmem:[#allocation14 + $0x140] sm:$0xff]
    %v3254 = vld [vmem:[#allocation14 + $0x148] sm:$0xff]
    %v3255 = vld [vmem:[#allocation14 + $0x150] sm:$0xff]
    %v3256 = vld [vmem:[#allocation14 + $0x158] sm:$0xff]
    %v3257 = vld [vmem:[#allocation14 + $0x160] sm:$0xff]
    %v3258 = vld [vmem:[#allocation14 + $0x168] sm:$0xff]
    %v3259 = vld [vmem:[#allocation14 + $0x170] sm:$0xff]
    %v3260 = vld [vmem:[#allocation14 + $0x178] sm:$0xff]
    %v3261 = vld [vmem:[#allocation14 + $0x180] sm:$0xff]
    %v3262 = vld [vmem:[#allocation14 + $0x188] sm:$0xff]
    %v3263 = vld [vmem:[#allocation14 + $0x190] sm:$0xff]
    %v3264 = vld [vmem:[#allocation14 + $0x198] sm:$0xff]
    %v3265 = vld [vmem:[#allocation14 + $0x1a0] sm:$0xff]
    %v3266 = vld [vmem:[#allocation14 + $0x1a8] sm:$0xff]
    %v3267 = vld [vmem:[#allocation14 + $0x1b0] sm:$0xff]
    %v3268 = vld [vmem:[#allocation14 + $0x1b8] sm:$0xff]
    %v3269 = vld [vmem:[#allocation14 + $0x1c0] sm:$0xff]
    %v3270 = vld [vmem:[#allocation14 + $0x1c8] sm:$0xff]
    %v3271 = vld [vmem:[#allocation14 + $0x1d0] sm:$0xff]
    %v3272 = vld [vmem:[#allocation14 + $0x1d8] sm:$0xff]
    %v3273 = vld [vmem:[#allocation14 + $0x1e0] sm:$0xff]
    %v3274 = vld [vmem:[#allocation14 + $0x1e8] sm:$0xff]
    %v3275 = vld [vmem:[#allocation14 + $0x1f0] sm:$0xff]
    %v3276 = vld [vmem:[#allocation14 + $0x1f8] sm:$0xff]
    %v3277 = vld [vmem:[#allocation14 + $0x200] sm:$0xff]
    %v3278 = vld [vmem:[#allocation14 + $0x208] sm:$0xff]
    %v3279 = vld [vmem:[#allocation14 + $0x210] sm:$0xff]
    %v3280 = vld [vmem:[#allocation14 + $0x218] sm:$0xff]
    %v3281 = vld [vmem:[#allocation14 + $0x220] sm:$0xff]
    %v3282 = vld [vmem:[#allocation14 + $0x228] sm:$0xff]
    %v3283 = vld [vmem:[#allocation14 + $0x230] sm:$0xff]
    %v3284 = vld [vmem:[#allocation14 + $0x238] sm:$0xff]
    %v3285 = vld [vmem:[#allocation14 + $0x240] sm:$0xff]
    %v3286 = vld [vmem:[#allocation14 + $0x248] sm:$0xff]
    %v3287 = vld [vmem:[#allocation14 + $0x250] sm:$0xff]
    %v3288 = vld [vmem:[#allocation14 + $0x258] sm:$0xff]
    %v3289 = vld [vmem:[#allocation14 + $0x260] sm:$0xff]
    %v3290 = vld [vmem:[#allocation14 + $0x268] sm:$0xff]
    %v3291 = vld [vmem:[#allocation14 + $0x270] sm:$0xff]
    %v3292 = vld [vmem:[#allocation14 + $0x278] sm:$0xff]
    %v3293 = vld [vmem:[#allocation14 + $0x280] sm:$0xff]
    %v3294 = vld [vmem:[#allocation14 + $0x288] sm:$0xff]
    %v3295 = vld [vmem:[#allocation14 + $0x290] sm:$0xff]
    %v3296 = vld [vmem:[#allocation14 + $0x298] sm:$0xff]
    %v3297 = vld [vmem:[#allocation14 + $0x2a0] sm:$0xff]
    %v3298 = vld [vmem:[#allocation14 + $0x2a8] sm:$0xff]
    %v3299 = vld [vmem:[#allocation14 + $0x2b0] sm:$0xff]
    %v3300 = vld [vmem:[#allocation14 + $0x2b8] sm:$0xff]
    %v3301 = vld [vmem:[#allocation14 + $0x2c0] sm:$0xff]
    %v3302 = vld [vmem:[#allocation14 + $0x2c8] sm:$0xff]
    %v3303 = vld [vmem:[#allocation14 + $0x2d0] sm:$0xff]
    %v3304 = vld [vmem:[#allocation14 + $0x2d8] sm:$0xff]
    %v3305 = vld [vmem:[#allocation14 + $0x2e0] sm:$0xff]
    %v3306 = vld [vmem:[#allocation14 + $0x2e8] sm:$0xff]
    %v3307 = vld [vmem:[#allocation14 + $0x2f0] sm:$0xff]
    %v3308 = vld [vmem:[#allocation14 + $0x2f8] sm:$0xff]
    %v3309 = vld [vmem:[#allocation14 + $0x300] sm:$0xff]
    %v3310 = vld [vmem:[#allocation14 + $0x308] sm:$0xff]
    %v3311 = vld [vmem:[#allocation14 + $0x310] sm:$0xff]
    %v3312 = vld [vmem:[#allocation14 + $0x318] sm:$0xff]
    %v3313 = vld [vmem:[#allocation14 + $0x320] sm:$0xff]
    %v3314 = vld [vmem:[#allocation14 + $0x328] sm:$0xff]
    %v3315 = vld [vmem:[#allocation14 + $0x330] sm:$0xff]
    %v3316 = vld [vmem:[#allocation14 + $0x338] sm:$0xff]
    %v3317 = vld [vmem:[#allocation14 + $0x340] sm:$0xff]
    %v3318 = vld [vmem:[#allocation14 + $0x348] sm:$0xff]
    %v3319 = vld [vmem:[#allocation14 + $0x350] sm:$0xff]
    %v3320 = vld [vmem:[#allocation14 + $0x358] sm:$0xff]
    %v3321 = vld [vmem:[#allocation14 + $0x360] sm:$0xff]
    %v3322 = vld [vmem:[#allocation14 + $0x368] sm:$0xff]
    %v3323 = vld [vmem:[#allocation14 + $0x370] sm:$0xff]
    %v3324 = vld [vmem:[#allocation14 + $0x378] sm:$0xff]
    %v3325 = vld [vmem:[#allocation14 + $0x380] sm:$0xff]
    %v3326 = vld [vmem:[#allocation14 + $0x388] sm:$0xff]
    %v3327 = vld [vmem:[#allocation14 + $0x390] sm:$0xff]
    %v3328 = vld [vmem:[#allocation14 + $0x398] sm:$0xff]
    %v3329 = vld [vmem:[#allocation14 + $0x3a0] sm:$0xff]
    %v3330 = vld [vmem:[#allocation14 + $0x3a8] sm:$0xff]
    %v3331 = vld [vmem:[#allocation14 + $0x3b0] sm:$0xff]
    %v3332 = vld [vmem:[#allocation14 + $0x3b8] sm:$0xff]
    %v3333 = vld [vmem:[#allocation14 + $0x3c0] sm:$0xff]
    %v3334 = vld [vmem:[#allocation14 + $0x3c8] sm:$0xff]
    %v3335 = vld [vmem:[#allocation14 + $0x3d0] sm:$0xff]
    %v3336 = vld [vmem:[#allocation14 + $0x3d8] sm:$0xff]
    %v3337 = vld [vmem:[#allocation14 + $0x3e0] sm:$0xff]
    %v3338 = vld [vmem:[#allocation14 + $0x3e8] sm:$0xff]
    %v3339 = vld [vmem:[#allocation14 + $0x3f0] sm:$0xff]
    %v3340 = vld [vmem:[#allocation14 + $0x3f8] sm:$0xff]
    %v3469 = vunpack.c.l.b16 %v3213
    %v3470 = vunpack.c.h.b16 %v3213
    %v3471 = vunpack.c.l.b16 %v3214
    %v3472 = vunpack.c.h.b16 %v3214
    %v3473 = vunpack.c.l.b16 %v3215
    %v3474 = vunpack.c.h.b16 %v3215
    %v3475 = vunpack.c.l.b16 %v3216
    %v3476 = vunpack.c.h.b16 %v3216
    %v3477 = vunpack.c.l.b16 %v3217
    %v3478 = vunpack.c.h.b16 %v3217
    %v3479 = vunpack.c.l.b16 %v3218
    %v3480 = vunpack.c.h.b16 %v3218
    %v3481 = vunpack.c.l.b16 %v3219
    %v3482 = vunpack.c.h.b16 %v3219
    %v3483 = vunpack.c.l.b16 %v3220
    %v3484 = vunpack.c.h.b16 %v3220
    %v3485 = vunpack.c.l.b16 %v3221
    %v3486 = vunpack.c.h.b16 %v3221
    %v3487 = vunpack.c.l.b16 %v3222
    %v3488 = vunpack.c.h.b16 %v3222
    %v3489 = vunpack.c.l.b16 %v3223
    %v3490 = vunpack.c.h.b16 %v3223
    %v3491 = vunpack.c.l.b16 %v3224
    %v3492 = vunpack.c.h.b16 %v3224
    %v3493 = vunpack.c.l.b16 %v3225
    %v3494 = vunpack.c.h.b16 %v3225
    %v3495 = vunpack.c.l.b16 %v3226
    %v3496 = vunpack.c.h.b16 %v3226
    %v3497 = vunpack.c.l.b16 %v3227
    %v3498 = vunpack.c.h.b16 %v3227
    %v3499 = vunpack.c.l.b16 %v3228
    %v3500 = vunpack.c.h.b16 %v3228
    %v3501 = vunpack.c.l.b16 %v3229
    %v3502 = vunpack.c.h.b16 %v3229
    %v3503 = vunpack.c.l.b16 %v3230
    %v3504 = vunpack.c.h.b16 %v3230
    %v3505 = vunpack.c.l.b16 %v3231
    %v3506 = vunpack.c.h.b16 %v3231
    %v3507 = vunpack.c.l.b16 %v3232
    %v3508 = vunpack.c.h.b16 %v3232
    %v3509 = vunpack.c.l.b16 %v3233
    %v3510 = vunpack.c.h.b16 %v3233
    %v3511 = vunpack.c.l.b16 %v3234
    %v3512 = vunpack.c.h.b16 %v3234
    %v3513 = vunpack.c.l.b16 %v3235
    %v3514 = vunpack.c.h.b16 %v3235
    %v3515 = vunpack.c.l.b16 %v3236
    %v3516 = vunpack.c.h.b16 %v3236
    %v3517 = vunpack.c.l.b16 %v3237
    %v3518 = vunpack.c.h.b16 %v3237
    %v3519 = vunpack.c.l.b16 %v3238
    %v3520 = vunpack.c.h.b16 %v3238
    %v3521 = vunpack.c.l.b16 %v3239
    %v3522 = vunpack.c.h.b16 %v3239
    %v3523 = vunpack.c.l.b16 %v3240
    %v3524 = vunpack.c.h.b16 %v3240
    %v3525 = vunpack.c.l.b16 %v3241
    %v3526 = vunpack.c.h.b16 %v3241
    %v3527 = vunpack.c.l.b16 %v3242
    %v3528 = vunpack.c.h.b16 %v3242
    %v3529 = vunpack.c.l.b16 %v3243
    %v3530 = vunpack.c.h.b16 %v3243
    %v3531 = vunpack.c.l.b16 %v3244
    %v3532 = vunpack.c.h.b16 %v3244
    %v3533 = vunpack.c.l.b16 %v3245
    %v3534 = vunpack.c.h.b16 %v3245
    %v3535 = vunpack.c.l.b16 %v3246
    %v3536 = vunpack.c.h.b16 %v3246
    %v3537 = vunpack.c.l.b16 %v3247
    %v3538 = vunpack.c.h.b16 %v3247
    %v3539 = vunpack.c.l.b16 %v3248
    %v3540 = vunpack.c.h.b16 %v3248
    %v3541 = vunpack.c.l.b16 %v3249
    %v3542 = vunpack.c.h.b16 %v3249
    %v3543 = vunpack.c.l.b16 %v3250
    %v3544 = vunpack.c.h.b16 %v3250
    %v3545 = vunpack.c.l.b16 %v3251
    %v3546 = vunpack.c.h.b16 %v3251
    %v3547 = vunpack.c.l.b16 %v3252
    %v3548 = vunpack.c.h.b16 %v3252
    %v3549 = vunpack.c.l.b16 %v3253
    %v3550 = vunpack.c.h.b16 %v3253
    %v3551 = vunpack.c.l.b16 %v3254
    %v3552 = vunpack.c.h.b16 %v3254
    %v3553 = vunpack.c.l.b16 %v3255
    %v3554 = vunpack.c.h.b16 %v3255
    %v3555 = vunpack.c.l.b16 %v3256
    %v3556 = vunpack.c.h.b16 %v3256
    %v3557 = vunpack.c.l.b16 %v3257
    %v3558 = vunpack.c.h.b16 %v3257
    %v3559 = vunpack.c.l.b16 %v3258
    %v3560 = vunpack.c.h.b16 %v3258
    %v3561 = vunpack.c.l.b16 %v3259
    %v3562 = vunpack.c.h.b16 %v3259
    %v3563 = vunpack.c.l.b16 %v3260
    %v3564 = vunpack.c.h.b16 %v3260
    %v3565 = vunpack.c.l.b16 %v3261
    %v3566 = vunpack.c.h.b16 %v3261
    %v3567 = vunpack.c.l.b16 %v3262
    %v3568 = vunpack.c.h.b16 %v3262
    %v3569 = vunpack.c.l.b16 %v3263
    %v3570 = vunpack.c.h.b16 %v3263
    %v3571 = vunpack.c.l.b16 %v3264
    %v3572 = vunpack.c.h.b16 %v3264
    %v3573 = vunpack.c.l.b16 %v3265
    %v3574 = vunpack.c.h.b16 %v3265
    %v3575 = vunpack.c.l.b16 %v3266
    %v3576 = vunpack.c.h.b16 %v3266
    %v3577 = vunpack.c.l.b16 %v3267
    %v3578 = vunpack.c.h.b16 %v3267
    %v3579 = vunpack.c.l.b16 %v3268
    %v3580 = vunpack.c.h.b16 %v3268
    %v3581 = vunpack.c.l.b16 %v3269
    %v3582 = vunpack.c.h.b16 %v3269
    %v3583 = vunpack.c.l.b16 %v3270
    %v3584 = vunpack.c.h.b16 %v3270
    %v3585 = vunpack.c.l.b16 %v3271
    %v3586 = vunpack.c.h.b16 %v3271
    %v3587 = vunpack.c.l.b16 %v3272
    %v3588 = vunpack.c.h.b16 %v3272
    %v3589 = vunpack.c.l.b16 %v3273
    %v3590 = vunpack.c.h.b16 %v3273
    %v3591 = vunpack.c.l.b16 %v3274
    %v3592 = vunpack.c.h.b16 %v3274
    %v3593 = vunpack.c.l.b16 %v3275
    %v3594 = vunpack.c.h.b16 %v3275
    %v3595 = vunpack.c.l.b16 %v3276
    %v3596 = vunpack.c.h.b16 %v3276
    %v3597 = vunpack.c.l.b16 %v3277
    %v3598 = vunpack.c.h.b16 %v3277
    %v3599 = vunpack.c.l.b16 %v3278
    %v3600 = vunpack.c.h.b16 %v3278
    %v3601 = vunpack.c.l.b16 %v3279
    %v3602 = vunpack.c.h.b16 %v3279
    %v3603 = vunpack.c.l.b16 %v3280
    %v3604 = vunpack.c.h.b16 %v3280
    %v3605 = vunpack.c.l.b16 %v3281
    %v3606 = vunpack.c.h.b16 %v3281
    %v3607 = vunpack.c.l.b16 %v3282
    %v3608 = vunpack.c.h.b16 %v3282
    %v3609 = vunpack.c.l.b16 %v3283
    %v3610 = vunpack.c.h.b16 %v3283
    %v3611 = vunpack.c.l.b16 %v3284
    %v3612 = vunpack.c.h.b16 %v3284
    %v3613 = vunpack.c.l.b16 %v3285
    %v3614 = vunpack.c.h.b16 %v3285
    %v3615 = vunpack.c.l.b16 %v3286
    %v3616 = vunpack.c.h.b16 %v3286
    %v3617 = vunpack.c.l.b16 %v3287
    %v3618 = vunpack.c.h.b16 %v3287
    %v3619 = vunpack.c.l.b16 %v3288
    %v3620 = vunpack.c.h.b16 %v3288
    %v3621 = vunpack.c.l.b16 %v3289
    %v3622 = vunpack.c.h.b16 %v3289
    %v3623 = vunpack.c.l.b16 %v3290
    %v3624 = vunpack.c.h.b16 %v3290
    %v3625 = vunpack.c.l.b16 %v3291
    %v3626 = vunpack.c.h.b16 %v3291
    %v3627 = vunpack.c.l.b16 %v3292
    %v3628 = vunpack.c.h.b16 %v3292
    %v3629 = vunpack.c.l.b16 %v3293
    %v3630 = vunpack.c.h.b16 %v3293
    %v3631 = vunpack.c.l.b16 %v3294
    %v3632 = vunpack.c.h.b16 %v3294
    %v3633 = vunpack.c.l.b16 %v3295
    %v3634 = vunpack.c.h.b16 %v3295
    %v3635 = vunpack.c.l.b16 %v3296
    %v3636 = vunpack.c.h.b16 %v3296
    %v3637 = vunpack.c.l.b16 %v3297
    %v3638 = vunpack.c.h.b16 %v3297
    %v3639 = vunpack.c.l.b16 %v3298
    %v3640 = vunpack.c.h.b16 %v3298
    %v3641 = vunpack.c.l.b16 %v3299
    %v3642 = vunpack.c.h.b16 %v3299
    %v3643 = vunpack.c.l.b16 %v3300
    %v3644 = vunpack.c.h.b16 %v3300
    %v3645 = vunpack.c.l.b16 %v3301
    %v3646 = vunpack.c.h.b16 %v3301
    %v3647 = vunpack.c.l.b16 %v3302
    %v3648 = vunpack.c.h.b16 %v3302
    %v3649 = vunpack.c.l.b16 %v3303
    %v3650 = vunpack.c.h.b16 %v3303
    %v3651 = vunpack.c.l.b16 %v3304
    %v3652 = vunpack.c.h.b16 %v3304
    %v3653 = vunpack.c.l.b16 %v3305
    %v3654 = vunpack.c.h.b16 %v3305
    %v3655 = vunpack.c.l.b16 %v3306
    %v3656 = vunpack.c.h.b16 %v3306
    %v3657 = vunpack.c.l.b16 %v3307
    %v3658 = vunpack.c.h.b16 %v3307
    %v3659 = vunpack.c.l.b16 %v3308
    %v3660 = vunpack.c.h.b16 %v3308
    %v3661 = vunpack.c.l.b16 %v3309
    %v3662 = vunpack.c.h.b16 %v3309
    %v3663 = vunpack.c.l.b16 %v3310
    %v3664 = vunpack.c.h.b16 %v3310
    %v3665 = vunpack.c.l.b16 %v3311
    %v3666 = vunpack.c.h.b16 %v3311
    %v3667 = vunpack.c.l.b16 %v3312
    %v3668 = vunpack.c.h.b16 %v3312
    %v3669 = vunpack.c.l.b16 %v3313
    %v3670 = vunpack.c.h.b16 %v3313
    %v3671 = vunpack.c.l.b16 %v3314
    %v3672 = vunpack.c.h.b16 %v3314
    %v3673 = vunpack.c.l.b16 %v3315
    %v3674 = vunpack.c.h.b16 %v3315
    %v3675 = vunpack.c.l.b16 %v3316
    %v3676 = vunpack.c.h.b16 %v3316
    %v3677 = vunpack.c.l.b16 %v3317
    %v3678 = vunpack.c.h.b16 %v3317
    %v3679 = vunpack.c.l.b16 %v3318
    %v3680 = vunpack.c.h.b16 %v3318
    %v3681 = vunpack.c.l.b16 %v3319
    %v3682 = vunpack.c.h.b16 %v3319
    %v3683 = vunpack.c.l.b16 %v3320
    %v3684 = vunpack.c.h.b16 %v3320
    %v3685 = vunpack.c.l.b16 %v3321
    %v3686 = vunpack.c.h.b16 %v3321
    %v3687 = vunpack.c.l.b16 %v3322
    %v3688 = vunpack.c.h.b16 %v3322
    %v3689 = vunpack.c.l.b16 %v3323
    %v3690 = vunpack.c.h.b16 %v3323
    %v3691 = vunpack.c.l.b16 %v3324
    %v3692 = vunpack.c.h.b16 %v3324
    %v3693 = vunpack.c.l.b16 %v3325
    %v3694 = vunpack.c.h.b16 %v3325
    %v3695 = vunpack.c.l.b16 %v3326
    %v3696 = vunpack.c.h.b16 %v3326
    %v3697 = vunpack.c.l.b16 %v3327
    %v3698 = vunpack.c.h.b16 %v3327
    %v3699 = vunpack.c.l.b16 %v3328
    %v3700 = vunpack.c.h.b16 %v3328
    %v3701 = vunpack.c.l.b16 %v3329
    %v3702 = vunpack.c.h.b16 %v3329
    %v3703 = vunpack.c.l.b16 %v3330
    %v3704 = vunpack.c.h.b16 %v3330
    %v3705 = vunpack.c.l.b16 %v3331
    %v3706 = vunpack.c.h.b16 %v3331
    %v3707 = vunpack.c.l.b16 %v3332
    %v3708 = vunpack.c.h.b16 %v3332
    %v3709 = vunpack.c.l.b16 %v3333
    %v3710 = vunpack.c.h.b16 %v3333
    %v3711 = vunpack.c.l.b16 %v3334
    %v3712 = vunpack.c.h.b16 %v3334
    %v3713 = vunpack.c.l.b16 %v3335
    %v3714 = vunpack.c.h.b16 %v3335
    %v3715 = vunpack.c.l.b16 %v3336
    %v3716 = vunpack.c.h.b16 %v3336
    %v3717 = vunpack.c.l.b16 %v3337
    %v3718 = vunpack.c.h.b16 %v3337
    %v3719 = vunpack.c.l.b16 %v3338
    %v3720 = vunpack.c.h.b16 %v3338
    %v3721 = vunpack.c.l.b16 %v3339
    %v3722 = vunpack.c.h.b16 %v3339
    %v3723 = vunpack.c.l.b16 %v3340
    %v3724 = vunpack.c.h.b16 %v3340
    %v3725 = vpack.c.b16 %v3477, %v3469
    %v3726 = vpack.c.b16 %v3478, %v3470
    %v3727 = vpack.c.b16 %v3479, %v3471
    %v3728 = vpack.c.b16 %v3480, %v3472
    %v3729 = vpack.c.b16 %v3481, %v3473
    %v3730 = vpack.c.b16 %v3482, %v3474
    %v3731 = vpack.c.b16 %v3483, %v3475
    %v3732 = vpack.c.b16 %v3484, %v3476
    %v3733 = vpack.c.b16 %v3493, %v3485
    %v3734 = vpack.c.b16 %v3494, %v3486
    %v3735 = vpack.c.b16 %v3495, %v3487
    %v3736 = vpack.c.b16 %v3496, %v3488
    %v3737 = vpack.c.b16 %v3497, %v3489
    %v3738 = vpack.c.b16 %v3498, %v3490
    %v3739 = vpack.c.b16 %v3499, %v3491
    %v3740 = vpack.c.b16 %v3500, %v3492
    %v3741 = vpack.c.b16 %v3509, %v3501
    %v3742 = vpack.c.b16 %v3510, %v3502
    %v3743 = vpack.c.b16 %v3511, %v3503
    %v3744 = vpack.c.b16 %v3512, %v3504
    %v3745 = vpack.c.b16 %v3513, %v3505
    %v3746 = vpack.c.b16 %v3514, %v3506
    %v3747 = vpack.c.b16 %v3515, %v3507
    %v3748 = vpack.c.b16 %v3516, %v3508
    %v3749 = vpack.c.b16 %v3525, %v3517
    %v3750 = vpack.c.b16 %v3526, %v3518
    %v3751 = vpack.c.b16 %v3527, %v3519
    %v3752 = vpack.c.b16 %v3528, %v3520
    %v3753 = vpack.c.b16 %v3529, %v3521
    %v3754 = vpack.c.b16 %v3530, %v3522
    %v3755 = vpack.c.b16 %v3531, %v3523
    %v3756 = vpack.c.b16 %v3532, %v3524
    %v3757 = vpack.c.b16 %v3541, %v3533
    %v3758 = vpack.c.b16 %v3542, %v3534
    %v3759 = vpack.c.b16 %v3543, %v3535
    %v3760 = vpack.c.b16 %v3544, %v3536
    %v3761 = vpack.c.b16 %v3545, %v3537
    %v3762 = vpack.c.b16 %v3546, %v3538
    %v3763 = vpack.c.b16 %v3547, %v3539
    %v3764 = vpack.c.b16 %v3548, %v3540
    %v3765 = vpack.c.b16 %v3557, %v3549
    %v3766 = vpack.c.b16 %v3558, %v3550
    %v3767 = vpack.c.b16 %v3559, %v3551
    %v3768 = vpack.c.b16 %v3560, %v3552
    %v3769 = vpack.c.b16 %v3561, %v3553
    %v3770 = vpack.c.b16 %v3562, %v3554
    %v3771 = vpack.c.b16 %v3563, %v3555
    %v3772 = vpack.c.b16 %v3564, %v3556
    %v3773 = vpack.c.b16 %v3573, %v3565
    %v3774 = vpack.c.b16 %v3574, %v3566
    %v3775 = vpack.c.b16 %v3575, %v3567
    %v3776 = vpack.c.b16 %v3576, %v3568
    %v3777 = vpack.c.b16 %v3577, %v3569
    %v3778 = vpack.c.b16 %v3578, %v3570
    %v3779 = vpack.c.b16 %v3579, %v3571
    %v3780 = vpack.c.b16 %v3580, %v3572
    %v3781 = vpack.c.b16 %v3589, %v3581
    %v3782 = vpack.c.b16 %v3590, %v3582
    %v3783 = vpack.c.b16 %v3591, %v3583
    %v3784 = vpack.c.b16 %v3592, %v3584
    %v3785 = vpack.c.b16 %v3593, %v3585
    %v3786 = vpack.c.b16 %v3594, %v3586
    %v3787 = vpack.c.b16 %v3595, %v3587
    %v3788 = vpack.c.b16 %v3596, %v3588
    %v3789 = vpack.c.b16 %v3605, %v3597
    %v3790 = vpack.c.b16 %v3606, %v3598
    %v3791 = vpack.c.b16 %v3607, %v3599
    %v3792 = vpack.c.b16 %v3608, %v3600
    %v3793 = vpack.c.b16 %v3609, %v3601
    %v3794 = vpack.c.b16 %v3610, %v3602
    %v3795 = vpack.c.b16 %v3611, %v3603
    %v3796 = vpack.c.b16 %v3612, %v3604
    %v3797 = vpack.c.b16 %v3621, %v3613
    %v3798 = vpack.c.b16 %v3622, %v3614
    %v3799 = vpack.c.b16 %v3623, %v3615
    %v3800 = vpack.c.b16 %v3624, %v3616
    %v3801 = vpack.c.b16 %v3625, %v3617
    %v3802 = vpack.c.b16 %v3626, %v3618
    %v3803 = vpack.c.b16 %v3627, %v3619
    %v3804 = vpack.c.b16 %v3628, %v3620
    %v3805 = vpack.c.b16 %v3637, %v3629
    %v3806 = vpack.c.b16 %v3638, %v3630
    %v3807 = vpack.c.b16 %v3639, %v3631
    %v3808 = vpack.c.b16 %v3640, %v3632
    %v3809 = vpack.c.b16 %v3641, %v3633
    %v3810 = vpack.c.b16 %v3642, %v3634
    %v3811 = vpack.c.b16 %v3643, %v3635
    %v3812 = vpack.c.b16 %v3644, %v3636
    %v3813 = vpack.c.b16 %v3653, %v3645
    %v3814 = vpack.c.b16 %v3654, %v3646
    %v3815 = vpack.c.b16 %v3655, %v3647
    %v3816 = vpack.c.b16 %v3656, %v3648
    %v3817 = vpack.c.b16 %v3657, %v3649
    %v3818 = vpack.c.b16 %v3658, %v3650
    %v3819 = vpack.c.b16 %v3659, %v3651
    %v3820 = vpack.c.b16 %v3660, %v3652
    %v3821 = vpack.c.b16 %v3669, %v3661
    %v3822 = vpack.c.b16 %v3670, %v3662
    %v3823 = vpack.c.b16 %v3671, %v3663
    %v3824 = vpack.c.b16 %v3672, %v3664
    %v3825 = vpack.c.b16 %v3673, %v3665
    %v3826 = vpack.c.b16 %v3674, %v3666
    %v3827 = vpack.c.b16 %v3675, %v3667
    %v3828 = vpack.c.b16 %v3676, %v3668
    %v3829 = vpack.c.b16 %v3685, %v3677
    %v3830 = vpack.c.b16 %v3686, %v3678
    %v3831 = vpack.c.b16 %v3687, %v3679
    %v3832 = vpack.c.b16 %v3688, %v3680
    %v3833 = vpack.c.b16 %v3689, %v3681
    %v3834 = vpack.c.b16 %v3690, %v3682
    %v3835 = vpack.c.b16 %v3691, %v3683
    %v3836 = vpack.c.b16 %v3692, %v3684
    %v3837 = vpack.c.b16 %v3701, %v3693
    %v3838 = vpack.c.b16 %v3702, %v3694
    %v3839 = vpack.c.b16 %v3703, %v3695
    %v3840 = vpack.c.b16 %v3704, %v3696
    %v3841 = vpack.c.b16 %v3705, %v3697
    %v3842 = vpack.c.b16 %v3706, %v3698
    %v3843 = vpack.c.b16 %v3707, %v3699
    %v3844 = vpack.c.b16 %v3708, %v3700
    %v3845 = vpack.c.b16 %v3717, %v3709
    %v3846 = vpack.c.b16 %v3718, %v3710
    %v3847 = vpack.c.b16 %v3719, %v3711
    %v3848 = vpack.c.b16 %v3720, %v3712
    %v3849 = vpack.c.b16 %v3721, %v3713
    %v3850 = vpack.c.b16 %v3722, %v3714
    %v3851 = vpack.c.b16 %v3723, %v3715
    %v3852 = vpack.c.b16 %v3724, %v3716
    %3981 = vmatpush.bf16.msra.mxu0 %v3781
    %3982 = vmatpush.bf16.msra.mxu0 %v3773
    %3983 = vmatpush.bf16.msra.mxu0 %v3765
    %3984 = vmatpush.bf16.msra.mxu0 %v3757
    %3985 = vmatpush.bf16.msra.mxu0 %v3749
    %3986 = vmatpush.bf16.msra.mxu0 %v3741
    %3987 = vmatpush.bf16.msra.mxu0 %v3733
    %3988 = vmatpush.bf16.msra.mxu0 %v3725
    %3989 = vmatmul.bf16.gmra.mxu0 %v3211
    %v3990 = vpop.f32.mrf.mxu0
    %v3991 = vadd.f32 0.0, %v3990
    %v3992 = vpop.f32.mrf.mxu0
    %3993 = vdwg.mxu0
    %3994 = vmatpush.bf16.msra.mxu0 %v3845
    %3995 = vmatpush.bf16.msra.mxu0 %v3837
    %3996 = vmatpush.bf16.msra.mxu0 %v3829
    %3997 = vmatpush.bf16.msra.mxu0 %v3821
    %3998 = vmatpush.bf16.msra.mxu0 %v3813
    %3999 = vmatpush.bf16.msra.mxu0 %v3805
    %4000 = vmatpush.bf16.msra.mxu0 %v3797
    %4001 = vmatpush.bf16.msra.mxu0 %v3789
    %4002 = vmatmul.bf16.gmra.mxu0 %v3212
    %v4003 = vpop.f32.mrf.mxu0
    %v4004 = vadd.f32 %v3991, %v4003
    %v4005 = vpop.f32.mrf.mxu0
    %4006 = vdwg.mxu0
    %4007 = vmatpush.bf16.msra.mxu0 %v3782
    %4008 = vmatpush.bf16.msra.mxu0 %v3774
    %4009 = vmatpush.bf16.msra.mxu0 %v3766
    %4010 = vmatpush.bf16.msra.mxu0 %v3758
    %4011 = vmatpush.bf16.msra.mxu0 %v3750
    %4012 = vmatpush.bf16.msra.mxu0 %v3742
    %4013 = vmatpush.bf16.msra.mxu0 %v3734
    %4014 = vmatpush.bf16.msra.mxu0 %v3726
    %4015 = vmatmul.bf16.gmra.mxu0 %v3211
    %v4016 = vpop.f32.mrf.mxu0
    %v4017 = vadd.f32 0.0, %v4016
    %v4018 = vpop.f32.mrf.mxu0
    %4019 = vdwg.mxu0
    %4020 = vmatpush.bf16.msra.mxu0 %v3846
    %4021 = vmatpush.bf16.msra.mxu0 %v3838
    %4022 = vmatpush.bf16.msra.mxu0 %v3830
    %4023 = vmatpush.bf16.msra.mxu0 %v3822
    %4024 = vmatpush.bf16.msra.mxu0 %v3814
    %4025 = vmatpush.bf16.msra.mxu0 %v3806
    %4026 = vmatpush.bf16.msra.mxu0 %v3798
    %4027 = vmatpush.bf16.msra.mxu0 %v3790
    %4028 = vmatmul.bf16.gmra.mxu0 %v3212
    %v4029 = vpop.f32.mrf.mxu0
    %v4030 = vadd.f32 %v4017, %v4029
    %v4031 = vpop.f32.mrf.mxu0
    %4032 = vdwg.mxu0
    %4033 = vmatpush.bf16.msra.mxu0 %v3783
    %4034 = vmatpush.bf16.msra.mxu0 %v3775
    %4035 = vmatpush.bf16.msra.mxu0 %v3767
    %4036 = vmatpush.bf16.msra.mxu0 %v3759
    %4037 = vmatpush.bf16.msra.mxu0 %v3751
    %4038 = vmatpush.bf16.msra.mxu0 %v3743
    %4039 = vmatpush.bf16.msra.mxu0 %v3735
    %4040 = vmatpush.bf16.msra.mxu0 %v3727
    %4041 = vmatmul.bf16.gmra.mxu0 %v3211
    %v4042 = vpop.f32.mrf.mxu0
    %v4043 = vadd.f32 0.0, %v4042
    %v4044 = vpop.f32.mrf.mxu0
    %4045 = vdwg.mxu0
    %4046 = vmatpush.bf16.msra.mxu0 %v3847
    %4047 = vmatpush.bf16.msra.mxu0 %v3839
    %4048 = vmatpush.bf16.msra.mxu0 %v3831
    %4049 = vmatpush.bf16.msra.mxu0 %v3823
    %4050 = vmatpush.bf16.msra.mxu0 %v3815
    %4051 = vmatpush.bf16.msra.mxu0 %v3807
    %4052 = vmatpush.bf16.msra.mxu0 %v3799
    %4053 = vmatpush.bf16.msra.mxu0 %v3791
    %4054 = vmatmul.bf16.gmra.mxu0 %v3212
    %v4055 = vpop.f32.mrf.mxu0
    %v4056 = vadd.f32 %v4043, %v4055
    %v4057 = vpop.f32.mrf.mxu0
    %4058 = vdwg.mxu0
    %4059 = vmatpush.bf16.msra.mxu0 %v3784
    %4060 = vmatpush.bf16.msra.mxu0 %v3776
    %4061 = vmatpush.bf16.msra.mxu0 %v3768
    %4062 = vmatpush.bf16.msra.mxu0 %v3760
    %4063 = vmatpush.bf16.msra.mxu0 %v3752
    %4064 = vmatpush.bf16.msra.mxu0 %v3744
    %4065 = vmatpush.bf16.msra.mxu0 %v3736
    %4066 = vmatpush.bf16.msra.mxu0 %v3728
    %4067 = vmatmul.bf16.gmra.mxu0 %v3211
    %v4068 = vpop.f32.mrf.mxu0
    %v4069 = vadd.f32 0.0, %v4068
    %v4070 = vpop.f32.mrf.mxu0
    %4071 = vdwg.mxu0
    %4072 = vmatpush.bf16.msra.mxu0 %v3848
    %4073 = vmatpush.bf16.msra.mxu0 %v3840
    %4074 = vmatpush.bf16.msra.mxu0 %v3832
    %4075 = vmatpush.bf16.msra.mxu0 %v3824
    %4076 = vmatpush.bf16.msra.mxu0 %v3816
    %4077 = vmatpush.bf16.msra.mxu0 %v3808
    %4078 = vmatpush.bf16.msra.mxu0 %v3800
    %4079 = vmatpush.bf16.msra.mxu0 %v3792
    %4080 = vmatmul.bf16.gmra.mxu0 %v3212
    %v4081 = vpop.f32.mrf.mxu0
    %v4082 = vadd.f32 %v4069, %v4081
    %v4083 = vpop.f32.mrf.mxu0
    %4084 = vdwg.mxu0
    %4085 = vmatpush.bf16.msra.mxu0 %v3785
    %4086 = vmatpush.bf16.msra.mxu0 %v3777
    %4087 = vmatpush.bf16.msra.mxu0 %v3769
    %4088 = vmatpush.bf16.msra.mxu0 %v3761
    %4089 = vmatpush.bf16.msra.mxu0 %v3753
    %4090 = vmatpush.bf16.msra.mxu0 %v3745
    %4091 = vmatpush.bf16.msra.mxu0 %v3737
    %4092 = vmatpush.bf16.msra.mxu0 %v3729
    %4093 = vmatmul.bf16.gmra.mxu0 %v3211
    %v4094 = vpop.f32.mrf.mxu0
    %v4095 = vadd.f32 0.0, %v4094
    %v4096 = vpop.f32.mrf.mxu0
    %4097 = vdwg.mxu0
    %4098 = vmatpush.bf16.msra.mxu0 %v3849
    %4099 = vmatpush.bf16.msra.mxu0 %v3841
    %4100 = vmatpush.bf16.msra.mxu0 %v3833
    %4101 = vmatpush.bf16.msra.mxu0 %v3825
    %4102 = vmatpush.bf16.msra.mxu0 %v3817
    %4103 = vmatpush.bf16.msra.mxu0 %v3809
    %4104 = vmatpush.bf16.msra.mxu0 %v3801
    %4105 = vmatpush.bf16.msra.mxu0 %v3793
    %4106 = vmatmul.bf16.gmra.mxu0 %v3212
    %v4107 = vpop.f32.mrf.mxu0
    %v4108 = vadd.f32 %v4095, %v4107
    %v4109 = vpop.f32.mrf.mxu0
    %4110 = vdwg.mxu0
    %4111 = vmatpush.bf16.msra.mxu0 %v3786
    %4112 = vmatpush.bf16.msra.mxu0 %v3778
    %4113 = vmatpush.bf16.msra.mxu0 %v3770
    %4114 = vmatpush.bf16.msra.mxu0 %v3762
    %4115 = vmatpush.bf16.msra.mxu0 %v3754
    %4116 = vmatpush.bf16.msra.mxu0 %v3746
    %4117 = vmatpush.bf16.msra.mxu0 %v3738
    %4118 = vmatpush.bf16.msra.mxu0 %v3730
    %4119 = vmatmul.bf16.gmra.mxu0 %v3211
    %v4120 = vpop.f32.mrf.mxu0
    %v4121 = vadd.f32 0.0, %v4120
    %v4122 = vpop.f32.mrf.mxu0
    %4123 = vdwg.mxu0
    %4124 = vmatpush.bf16.msra.mxu0 %v3850
    %4125 = vmatpush.bf16.msra.mxu0 %v3842
    %4126 = vmatpush.bf16.msra.mxu0 %v3834
    %4127 = vmatpush.bf16.msra.mxu0 %v3826
    %4128 = vmatpush.bf16.msra.mxu0 %v3818
    %4129 = vmatpush.bf16.msra.mxu0 %v3810
    %4130 = vmatpush.bf16.msra.mxu0 %v3802
    %4131 = vmatpush.bf16.msra.mxu0 %v3794
    %4132 = vmatmul.bf16.gmra.mxu0 %v3212
    %v4133 = vpop.f32.mrf.mxu0
    %v4134 = vadd.f32 %v4121, %v4133
    %v4135 = vpop.f32.mrf.mxu0
    %4136 = vdwg.mxu0
    %4137 = vmatpush.bf16.msra.mxu0 %v3787
    %4138 = vmatpush.bf16.msra.mxu0 %v3779
    %4139 = vmatpush.bf16.msra.mxu0 %v3771
    %4140 = vmatpush.bf16.msra.mxu0 %v3763
    %4141 = vmatpush.bf16.msra.mxu0 %v3755
    %4142 = vmatpush.bf16.msra.mxu0 %v3747
    %4143 = vmatpush.bf16.msra.mxu0 %v3739
    %4144 = vmatpush.bf16.msra.mxu0 %v3731
    %4145 = vmatmul.bf16.gmra.mxu0 %v3211
    %v4146 = vpop.f32.mrf.mxu0
    %v4147 = vadd.f32 0.0, %v4146
    %v4148 = vpop.f32.mrf.mxu0
    %4149 = vdwg.mxu0
    %4150 = vmatpush.bf16.msra.mxu0 %v3851
    %4151 = vmatpush.bf16.msra.mxu0 %v3843
    %4152 = vmatpush.bf16.msra.mxu0 %v3835
    %4153 = vmatpush.bf16.msra.mxu0 %v3827
    %4154 = vmatpush.bf16.msra.mxu0 %v3819
    %4155 = vmatpush.bf16.msra.mxu0 %v3811
    %4156 = vmatpush.bf16.msra.mxu0 %v3803
    %4157 = vmatpush.bf16.msra.mxu0 %v3795
    %4158 = vmatmul.bf16.gmra.mxu0 %v3212
    %v4159 = vpop.f32.mrf.mxu0
    %v4160 = vadd.f32 %v4147, %v4159
    %v4161 = vpop.f32.mrf.mxu0
    %4162 = vdwg.mxu0
    %4163 = vmatpush.bf16.msra.mxu0 %v3788
    %4164 = vmatpush.bf16.msra.mxu0 %v3780
    %4165 = vmatpush.bf16.msra.mxu0 %v3772
    %4166 = vmatpush.bf16.msra.mxu0 %v3764
    %4167 = vmatpush.bf16.msra.mxu0 %v3756
    %4168 = vmatpush.bf16.msra.mxu0 %v3748
    %4169 = vmatpush.bf16.msra.mxu0 %v3740
    %4170 = vmatpush.bf16.msra.mxu0 %v3732
    %4171 = vmatmul.bf16.gmra.mxu0 %v3211
    %v4172 = vpop.f32.mrf.mxu0
    %v4173 = vadd.f32 0.0, %v4172
    %v4174 = vpop.f32.mrf.mxu0
    %4175 = vdwg.mxu0
    %4176 = vmatpush.bf16.msra.mxu0 %v3852
    %4177 = vmatpush.bf16.msra.mxu0 %v3844
    %4178 = vmatpush.bf16.msra.mxu0 %v3836
    %4179 = vmatpush.bf16.msra.mxu0 %v3828
    %4180 = vmatpush.bf16.msra.mxu0 %v3820
    %4181 = vmatpush.bf16.msra.mxu0 %v3812
    %4182 = vmatpush.bf16.msra.mxu0 %v3804
    %4183 = vmatpush.bf16.msra.mxu0 %v3796
    %4184 = vmatmul.bf16.gmra.mxu0 %v3212
    %v4185 = vpop.f32.mrf.mxu0
    %v4186 = vadd.f32 %v4173, %v4185
    %v4187 = vpop.f32.mrf.mxu0
    %4188 = vdwg.mxu0
    %s4189 = scalar_lea.vmem %s1, 16
    %v4190 = vld [vmem:[%s4189] sm:$0xff]
    %s4191 = scalar_lea.vmem %s1, 40
    %v4192 = vld [vmem:[%s4191] sm:$0xff]
    %s4193 = scalar_lea.vmem [#allocation2], 64
    %v4194 = vld [vmem:[%s4193] sm:$0xff]
    %v4195 = vld [vmem:[%s4193 + $0x8] sm:$0xff]
    %v4196 = vld [vmem:[%s4193 + $0x10] sm:$0xff]
    %v4197 = vld [vmem:[%s4193 + $0x18] sm:$0xff]
    %v4198 = vadd.f32 %v4194, %v4004
    %v4199 = vadd.f32 %v4195, %v4030
    %v4200 = vadd.f32 %v4196, %v4056
    %v4201 = vadd.f32 %v4197, %v4082
    %s4202 = scalar_lea.vmem [#allocation3], 160
    %v4203 = vld [vmem:[%s4202] sm:$0xff]
    %v4204 = vld [vmem:[%s4202 + $0x8] sm:$0xff]
    %v4205 = vld [vmem:[%s4202 + $0x10] sm:$0xff]
    %v4206 = vld [vmem:[%s4202 + $0x18] sm:$0xff]
    %v4207 = vadd.f32 %v4203, %v4108
    %v4208 = vadd.f32 %v4204, %v4134
    %v4209 = vadd.f32 %v4205, %v4160
    %v4210 = vadd.f32 %v4206, %v4186
    %v4211 = vld [vmem:[#allocation7] sm:$0xff]
    %v4212 = vxor.u32 %v4198, 2147483648
    %v4213 = vmul.f32 %v4212, 1.442695
    %v4214 = vpow.pop %v4213
    %v4215 = vadd.f32 %v4214, 1.0
    %v4216 = vrcp.pop %v4215
    %v4217 = vmul.f32 %v4215, %v4216
    %v4218 = vsub.f32 1.0, %v4217
    %v4219 = vmul.f32 %v4216, %v4218
    %v4220 = vadd.f32 %v4216, %v4219
    %vm4221 = vweird.f32 %v4215
    %vm4222 = vweird.f32 %v4216
    %vm4223 = vmor %vm4221, %vm4222
    %v4224 = vsel %vm4223, %v4216, %v4220
    %v4225 = vand.u32 2147483647, %v4215
    %vm4226 = vcmp.eq.f32.partialorder %v4225, 8.507059e+37
    %v4227 = vand.u32 %v4215, 2147483648
    %v4228 = vor.u32 1.1754944e-38, %v4227
    %v4229 = vsel %vm4226, %v4228, %v4224
    %v4230 = vmul.f32 1.0, %v4229
    %v4231 = vxor.u32 %v4199, 2147483648
    %v4232 = vmul.f32 %v4231, 1.442695
    %v4233 = vpow.pop %v4232
    %v4234 = vadd.f32 %v4233, 1.0
    %v4235 = vrcp.pop %v4234
    %v4236 = vmul.f32 %v4234, %v4235
    %v4237 = vsub.f32 1.0, %v4236
    %v4238 = vmul.f32 %v4235, %v4237
    %v4239 = vadd.f32 %v4235, %v4238
    %vm4240 = vweird.f32 %v4234
    %vm4241 = vweird.f32 %v4235
    %vm4242 = vmor %vm4240, %vm4241
    %v4243 = vsel %vm4242, %v4235, %v4239
    %v4244 = vand.u32 2147483647, %v4234
    %vm4245 = vcmp.eq.f32.partialorder %v4244, 8.507059e+37
    %v4246 = vand.u32 %v4234, 2147483648
    %v4247 = vor.u32 1.1754944e-38, %v4246
    %v4248 = vsel %vm4245, %v4247, %v4243
    %v4249 = vmul.f32 1.0, %v4248
    %v4250 = vtanh.pop %v4200
    %v4251 = vxor.u32 %v4201, 2147483648
    %v4252 = vmul.f32 %v4251, 1.442695
    %v4253 = vpow.pop %v4252
    %v4254 = vadd.f32 %v4253, 1.0
    %v4255 = vrcp.pop %v4254
    %v4256 = vmul.f32 %v4254, %v4255
    %v4257 = vsub.f32 1.0, %v4256
    %v4258 = vmul.f32 %v4255, %v4257
    %v4259 = vadd.f32 %v4255, %v4258
    %vm4260 = vweird.f32 %v4254
    %vm4261 = vweird.f32 %v4255
    %vm4262 = vmor %vm4260, %vm4261
    %v4263 = vsel %vm4262, %v4255, %v4259
    %v4264 = vand.u32 2147483647, %v4254
    %vm4265 = vcmp.eq.f32.partialorder %v4264, 8.507059e+37
    %v4266 = vand.u32 %v4254, 2147483648
    %v4267 = vor.u32 1.1754944e-38, %v4266
    %v4268 = vsel %vm4265, %v4267, %v4263
    %v4269 = vmul.f32 1.0, %v4268
    %v4270 = vmul.f32 %v4249, %v4211
    %v4271 = vmul.f32 %v4230, %v4250
    %v4272 = vadd.f32 %v4270, %v4271
    %v4273 = vtanh.pop %v4272
    %v4274 = vmul.f32 %v4269, %v4273
    %v4275 = vld [vmem:[#allocation8] sm:$0xff]
    %v4276 = vxor.u32 %v4207, 2147483648
    %v4277 = vmul.f32 %v4276, 1.442695
    %v4278 = vpow.pop %v4277
    %v4279 = vadd.f32 %v4278, 1.0
    %v4280 = vrcp.pop %v4279
    %v4281 = vmul.f32 %v4279, %v4280
    %v4282 = vsub.f32 1.0, %v4281
    %v4283 = vmul.f32 %v4280, %v4282
    %v4284 = vadd.f32 %v4280, %v4283
    %vm4285 = vweird.f32 %v4279
    %vm4286 = vweird.f32 %v4280
    %vm4287 = vmor %vm4285, %vm4286
    %v4288 = vsel %vm4287, %v4280, %v4284
    %v4289 = vand.u32 2147483647, %v4279
    %vm4290 = vcmp.eq.f32.partialorder %v4289, 8.507059e+37
    %v4291 = vand.u32 %v4279, 2147483648
    %v4292 = vor.u32 1.1754944e-38, %v4291
    %v4293 = vsel %vm4290, %v4292, %v4288
    %v4294 = vmul.f32 1.0, %v4293
    %v4295 = vxor.u32 %v4208, 2147483648
    %v4296 = vmul.f32 %v4295, 1.442695
    %v4297 = vpow.pop %v4296
    %v4298 = vadd.f32 %v4297, 1.0
    %v4299 = vrcp.pop %v4298
    %v4300 = vmul.f32 %v4298, %v4299
    %v4301 = vsub.f32 1.0, %v4300
    %v4302 = vmul.f32 %v4299, %v4301
    %v4303 = vadd.f32 %v4299, %v4302
    %vm4304 = vweird.f32 %v4298
    %vm4305 = vweird.f32 %v4299
    %vm4306 = vmor %vm4304, %vm4305
    %v4307 = vsel %vm4306, %v4299, %v4303
    %v4308 = vand.u32 2147483647, %v4298
    %vm4309 = vcmp.eq.f32.partialorder %v4308, 8.507059e+37
    %v4310 = vand.u32 %v4298, 2147483648
    %v4311 = vor.u32 1.1754944e-38, %v4310
    %v4312 = vsel %vm4309, %v4311, %v4307
    %v4313 = vmul.f32 1.0, %v4312
    %v4314 = vtanh.pop %v4209
    %v4315 = vxor.u32 %v4210, 2147483648
    %v4316 = vmul.f32 %v4315, 1.442695
    %v4317 = vpow.pop %v4316
    %v4318 = vadd.f32 %v4317, 1.0
    %v4319 = vrcp.pop %v4318
    %v4320 = vmul.f32 %v4318, %v4319
    %v4321 = vsub.f32 1.0, %v4320
    %v4322 = vmul.f32 %v4319, %v4321
    %v4323 = vadd.f32 %v4319, %v4322
    %vm4324 = vweird.f32 %v4318
    %vm4325 = vweird.f32 %v4319
    %vm4326 = vmor %vm4324, %vm4325
    %v4327 = vsel %vm4326, %v4319, %v4323
    %v4328 = vand.u32 2147483647, %v4318
    %vm4329 = vcmp.eq.f32.partialorder %v4328, 8.507059e+37
    %v4330 = vand.u32 %v4318, 2147483648
    %v4331 = vor.u32 1.1754944e-38, %v4330
    %v4332 = vsel %vm4329, %v4331, %v4327
    %v4333 = vmul.f32 1.0, %v4332
    %v4334 = vmul.f32 %v4313, %v4275
    %v4335 = vmul.f32 %v4294, %v4314
    %v4336 = vadd.f32 %v4334, %v4335
    %v4337 = vtanh.pop %v4336
    %v4338 = vmul.f32 %v4333, %v4337
    %vm4339 = vcmp.gt.f32.partialorder %v4190, 0.0
    %v4340 = vld [vmem:[#allocation6] sm:$0xff]
    %v4341 = vsel %vm4339, 1, 0
    %4342 = vset.pattern.permute.xlu0 0
    %4343 = vperm.xlu0 %4342, %v4341
    %v4344 = vpop.permute.xlu0 %4343
    %vm4345 = vcmp.eq.s32.totalorder %v4344, 1
    %v4346 = vsel %vm4345, %v4274, %v4340
    %vm4347 = vcmp.gt.f32.partialorder %v4192, 0.0
    %v4348 = vsel %vm4347, 1, 0
    %4349 = vset.pattern.permute.xlu0 0
    %4350 = vperm.xlu0 %4349, %v4348
    %v4351 = vpop.permute.xlu0 %4350
    %vm4352 = vcmp.eq.s32.totalorder %v4351, 1
    %v4353 = vsel %vm4352, %v4338, %v3210
    %v4354 = vsel %vm4345, %v4272, %v4211
    %4355 = vst [vmem:[#allocation7] sm:$0xff] %v4354
    %v4356 = vld [vmem:[#allocation8] sm:$0xff]
    %v4357 = vsel %vm4352, %v4336, %v4356
    %4358 = vst [vmem:[#allocation8] sm:$0xff] %v4357
    %4359 = vst [vmem:[#allocation6] sm:$0xff] %v4346
    %4360 = vst [vmem:[#allocation6 + $0x8] sm:$0xff] %v4353
    %4362 = vset.pattern.permute.xlu0 0
    %4363 = vperm.xlu0 %4362, %v4190
    %v4364 = vpop.permute.xlu0 %4363
    %v4366 = vmul.f32 %v4346, %v4364
    %s4367 = scalar_lea.vmem [#allocation4], 16
    %4368 = vst [vmem:[%s4367] sm:$0xff] %v4366
    %4370 = vset.pattern.permute.xlu0 0
    %4371 = vperm.xlu0 %4370, %v4192
    %v4372 = vpop.permute.xlu0 %4371
    %v4374 = vmul.f32 %v4353, %v4372
    %s4375 = scalar_lea.vmem [#allocation5], 40
    %4376 = vst [vmem:[%s4375] sm:$0xff] %v4374
    %v4377 = vld [vmem:[#allocation6] sm:$0xff]
    %v4378 = vld [vmem:[#allocation6 + $0x8] sm:$0xff]
    %v4379 = vpack.c.bf16 %v4377, %v4377
    %v4380 = vpack.c.bf16 %v4378, %v4378
    %v4381 = vld [vmem:[#allocation14] sm:$0xff]
    %v4382 = vld [vmem:[#allocation14 + $0x8] sm:$0xff]
    %v4383 = vld [vmem:[#allocation14 + $0x10] sm:$0xff]
    %v4384 = vld [vmem:[#allocation14 + $0x18] sm:$0xff]
    %v4385 = vld [vmem:[#allocation14 + $0x20] sm:$0xff]
    %v4386 = vld [vmem:[#allocation14 + $0x28] sm:$0xff]
    %v4387 = vld [vmem:[#allocation14 + $0x30] sm:$0xff]
    %v4388 = vld [vmem:[#allocation14 + $0x38] sm:$0xff]
    %v4389 = vld [vmem:[#allocation14 + $0x40] sm:$0xff]
    %v4390 = vld [vmem:[#allocation14 + $0x48] sm:$0xff]
    %v4391 = vld [vmem:[#allocation14 + $0x50] sm:$0xff]
    %v4392 = vld [vmem:[#allocation14 + $0x58] sm:$0xff]
    %v4393 = vld [vmem:[#allocation14 + $0x60] sm:$0xff]
    %v4394 = vld [vmem:[#allocation14 + $0x68] sm:$0xff]
    %v4395 = vld [vmem:[#allocation14 + $0x70] sm:$0xff]
    %v4396 = vld [vmem:[#allocation14 + $0x78] sm:$0xff]
    %v4397 = vld [vmem:[#allocation14 + $0x80] sm:$0xff]
    %v4398 = vld [vmem:[#allocation14 + $0x88] sm:$0xff]
    %v4399 = vld [vmem:[#allocation14 + $0x90] sm:$0xff]
    %v4400 = vld [vmem:[#allocation14 + $0x98] sm:$0xff]
    %v4401 = vld [vmem:[#allocation14 + $0xa0] sm:$0xff]
    %v4402 = vld [vmem:[#allocation14 + $0xa8] sm:$0xff]
    %v4403 = vld [vmem:[#allocation14 + $0xb0] sm:$0xff]
    %v4404 = vld [vmem:[#allocation14 + $0xb8] sm:$0xff]
    %v4405 = vld [vmem:[#allocation14 + $0xc0] sm:$0xff]
    %v4406 = vld [vmem:[#allocation14 + $0xc8] sm:$0xff]
    %v4407 = vld [vmem:[#allocation14 + $0xd0] sm:$0xff]
    %v4408 = vld [vmem:[#allocation14 + $0xd8] sm:$0xff]
    %v4409 = vld [vmem:[#allocation14 + $0xe0] sm:$0xff]
    %v4410 = vld [vmem:[#allocation14 + $0xe8] sm:$0xff]
    %v4411 = vld [vmem:[#allocation14 + $0xf0] sm:$0xff]
    %v4412 = vld [vmem:[#allocation14 + $0xf8] sm:$0xff]
    %v4413 = vld [vmem:[#allocation14 + $0x100] sm:$0xff]
    %v4414 = vld [vmem:[#allocation14 + $0x108] sm:$0xff]
    %v4415 = vld [vmem:[#allocation14 + $0x110] sm:$0xff]
    %v4416 = vld [vmem:[#allocation14 + $0x118] sm:$0xff]
    %v4417 = vld [vmem:[#allocation14 + $0x120] sm:$0xff]
    %v4418 = vld [vmem:[#allocation14 + $0x128] sm:$0xff]
    %v4419 = vld [vmem:[#allocation14 + $0x130] sm:$0xff]
    %v4420 = vld [vmem:[#allocation14 + $0x138] sm:$0xff]
    %v4421 = vld [vmem:[#allocation14 + $0x140] sm:$0xff]
    %v4422 = vld [vmem:[#allocation14 + $0x148] sm:$0xff]
    %v4423 = vld [vmem:[#allocation14 + $0x150] sm:$0xff]
    %v4424 = vld [vmem:[#allocation14 + $0x158] sm:$0xff]
    %v4425 = vld [vmem:[#allocation14 + $0x160] sm:$0xff]
    %v4426 = vld [vmem:[#allocation14 + $0x168] sm:$0xff]
    %v4427 = vld [vmem:[#allocation14 + $0x170] sm:$0xff]
    %v4428 = vld [vmem:[#allocation14 + $0x178] sm:$0xff]
    %v4429 = vld [vmem:[#allocation14 + $0x180] sm:$0xff]
    %v4430 = vld [vmem:[#allocation14 + $0x188] sm:$0xff]
    %v4431 = vld [vmem:[#allocation14 + $0x190] sm:$0xff]
    %v4432 = vld [vmem:[#allocation14 + $0x198] sm:$0xff]
    %v4433 = vld [vmem:[#allocation14 + $0x1a0] sm:$0xff]
    %v4434 = vld [vmem:[#allocation14 + $0x1a8] sm:$0xff]
    %v4435 = vld [vmem:[#allocation14 + $0x1b0] sm:$0xff]
    %v4436 = vld [vmem:[#allocation14 + $0x1b8] sm:$0xff]
    %v4437 = vld [vmem:[#allocation14 + $0x1c0] sm:$0xff]
    %v4438 = vld [vmem:[#allocation14 + $0x1c8] sm:$0xff]
    %v4439 = vld [vmem:[#allocation14 + $0x1d0] sm:$0xff]
    %v4440 = vld [vmem:[#allocation14 + $0x1d8] sm:$0xff]
    %v4441 = vld [vmem:[#allocation14 + $0x1e0] sm:$0xff]
    %v4442 = vld [vmem:[#allocation14 + $0x1e8] sm:$0xff]
    %v4443 = vld [vmem:[#allocation14 + $0x1f0] sm:$0xff]
    %v4444 = vld [vmem:[#allocation14 + $0x1f8] sm:$0xff]
    %v4445 = vld [vmem:[#allocation14 + $0x200] sm:$0xff]
    %v4446 = vld [vmem:[#allocation14 + $0x208] sm:$0xff]
    %v4447 = vld [vmem:[#allocation14 + $0x210] sm:$0xff]
    %v4448 = vld [vmem:[#allocation14 + $0x218] sm:$0xff]
    %v4449 = vld [vmem:[#allocation14 + $0x220] sm:$0xff]
    %v4450 = vld [vmem:[#allocation14 + $0x228] sm:$0xff]
    %v4451 = vld [vmem:[#allocation14 + $0x230] sm:$0xff]
    %v4452 = vld [vmem:[#allocation14 + $0x238] sm:$0xff]
    %v4453 = vld [vmem:[#allocation14 + $0x240] sm:$0xff]
    %v4454 = vld [vmem:[#allocation14 + $0x248] sm:$0xff]
    %v4455 = vld [vmem:[#allocation14 + $0x250] sm:$0xff]
    %v4456 = vld [vmem:[#allocation14 + $0x258] sm:$0xff]
    %v4457 = vld [vmem:[#allocation14 + $0x260] sm:$0xff]
    %v4458 = vld [vmem:[#allocation14 + $0x268] sm:$0xff]
    %v4459 = vld [vmem:[#allocation14 + $0x270] sm:$0xff]
    %v4460 = vld [vmem:[#allocation14 + $0x278] sm:$0xff]
    %v4461 = vld [vmem:[#allocation14 + $0x280] sm:$0xff]
    %v4462 = vld [vmem:[#allocation14 + $0x288] sm:$0xff]
    %v4463 = vld [vmem:[#allocation14 + $0x290] sm:$0xff]
    %v4464 = vld [vmem:[#allocation14 + $0x298] sm:$0xff]
    %v4465 = vld [vmem:[#allocation14 + $0x2a0] sm:$0xff]
    %v4466 = vld [vmem:[#allocation14 + $0x2a8] sm:$0xff]
    %v4467 = vld [vmem:[#allocation14 + $0x2b0] sm:$0xff]
    %v4468 = vld [vmem:[#allocation14 + $0x2b8] sm:$0xff]
    %v4469 = vld [vmem:[#allocation14 + $0x2c0] sm:$0xff]
    %v4470 = vld [vmem:[#allocation14 + $0x2c8] sm:$0xff]
    %v4471 = vld [vmem:[#allocation14 + $0x2d0] sm:$0xff]
    %v4472 = vld [vmem:[#allocation14 + $0x2d8] sm:$0xff]
    %v4473 = vld [vmem:[#allocation14 + $0x2e0] sm:$0xff]
    %v4474 = vld [vmem:[#allocation14 + $0x2e8] sm:$0xff]
    %v4475 = vld [vmem:[#allocation14 + $0x2f0] sm:$0xff]
    %v4476 = vld [vmem:[#allocation14 + $0x2f8] sm:$0xff]
    %v4477 = vld [vmem:[#allocation14 + $0x300] sm:$0xff]
    %v4478 = vld [vmem:[#allocation14 + $0x308] sm:$0xff]
    %v4479 = vld [vmem:[#allocation14 + $0x310] sm:$0xff]
    %v4480 = vld [vmem:[#allocation14 + $0x318] sm:$0xff]
    %v4481 = vld [vmem:[#allocation14 + $0x320] sm:$0xff]
    %v4482 = vld [vmem:[#allocation14 + $0x328] sm:$0xff]
    %v4483 = vld [vmem:[#allocation14 + $0x330] sm:$0xff]
    %v4484 = vld [vmem:[#allocation14 + $0x338] sm:$0xff]
    %v4485 = vld [vmem:[#allocation14 + $0x340] sm:$0xff]
    %v4486 = vld [vmem:[#allocation14 + $0x348] sm:$0xff]
    %v4487 = vld [vmem:[#allocation14 + $0x350] sm:$0xff]
    %v4488 = vld [vmem:[#allocation14 + $0x358] sm:$0xff]
    %v4489 = vld [vmem:[#allocation14 + $0x360] sm:$0xff]
    %v4490 = vld [vmem:[#allocation14 + $0x368] sm:$0xff]
    %v4491 = vld [vmem:[#allocation14 + $0x370] sm:$0xff]
    %v4492 = vld [vmem:[#allocation14 + $0x378] sm:$0xff]
    %v4493 = vld [vmem:[#allocation14 + $0x380] sm:$0xff]
    %v4494 = vld [vmem:[#allocation14 + $0x388] sm:$0xff]
    %v4495 = vld [vmem:[#allocation14 + $0x390] sm:$0xff]
    %v4496 = vld [vmem:[#allocation14 + $0x398] sm:$0xff]
    %v4497 = vld [vmem:[#allocation14 + $0x3a0] sm:$0xff]
    %v4498 = vld [vmem:[#allocation14 + $0x3a8] sm:$0xff]
    %v4499 = vld [vmem:[#allocation14 + $0x3b0] sm:$0xff]
    %v4500 = vld [vmem:[#allocation14 + $0x3b8] sm:$0xff]
    %v4501 = vld [vmem:[#allocation14 + $0x3c0] sm:$0xff]
    %v4502 = vld [vmem:[#allocation14 + $0x3c8] sm:$0xff]
    %v4503 = vld [vmem:[#allocation14 + $0x3d0] sm:$0xff]
    %v4504 = vld [vmem:[#allocation14 + $0x3d8] sm:$0xff]
    %v4505 = vld [vmem:[#allocation14 + $0x3e0] sm:$0xff]
    %v4506 = vld [vmem:[#allocation14 + $0x3e8] sm:$0xff]
    %v4507 = vld [vmem:[#allocation14 + $0x3f0] sm:$0xff]
    %v4508 = vld [vmem:[#allocation14 + $0x3f8] sm:$0xff]
    %v4637 = vunpack.c.l.b16 %v4381
    %v4638 = vunpack.c.h.b16 %v4381
    %v4639 = vunpack.c.l.b16 %v4382
    %v4640 = vunpack.c.h.b16 %v4382
    %v4641 = vunpack.c.l.b16 %v4383
    %v4642 = vunpack.c.h.b16 %v4383
    %v4643 = vunpack.c.l.b16 %v4384
    %v4644 = vunpack.c.h.b16 %v4384
    %v4645 = vunpack.c.l.b16 %v4385
    %v4646 = vunpack.c.h.b16 %v4385
    %v4647 = vunpack.c.l.b16 %v4386
    %v4648 = vunpack.c.h.b16 %v4386
    %v4649 = vunpack.c.l.b16 %v4387
    %v4650 = vunpack.c.h.b16 %v4387
    %v4651 = vunpack.c.l.b16 %v4388
    %v4652 = vunpack.c.h.b16 %v4388
    %v4653 = vunpack.c.l.b16 %v4389
    %v4654 = vunpack.c.h.b16 %v4389
    %v4655 = vunpack.c.l.b16 %v4390
    %v4656 = vunpack.c.h.b16 %v4390
    %v4657 = vunpack.c.l.b16 %v4391
    %v4658 = vunpack.c.h.b16 %v4391
    %v4659 = vunpack.c.l.b16 %v4392
    %v4660 = vunpack.c.h.b16 %v4392
    %v4661 = vunpack.c.l.b16 %v4393
    %v4662 = vunpack.c.h.b16 %v4393
    %v4663 = vunpack.c.l.b16 %v4394
    %v4664 = vunpack.c.h.b16 %v4394
    %v4665 = vunpack.c.l.b16 %v4395
    %v4666 = vunpack.c.h.b16 %v4395
    %v4667 = vunpack.c.l.b16 %v4396
    %v4668 = vunpack.c.h.b16 %v4396
    %v4669 = vunpack.c.l.b16 %v4397
    %v4670 = vunpack.c.h.b16 %v4397
    %v4671 = vunpack.c.l.b16 %v4398
    %v4672 = vunpack.c.h.b16 %v4398
    %v4673 = vunpack.c.l.b16 %v4399
    %v4674 = vunpack.c.h.b16 %v4399
    %v4675 = vunpack.c.l.b16 %v4400
    %v4676 = vunpack.c.h.b16 %v4400
    %v4677 = vunpack.c.l.b16 %v4401
    %v4678 = vunpack.c.h.b16 %v4401
    %v4679 = vunpack.c.l.b16 %v4402
    %v4680 = vunpack.c.h.b16 %v4402
    %v4681 = vunpack.c.l.b16 %v4403
    %v4682 = vunpack.c.h.b16 %v4403
    %v4683 = vunpack.c.l.b16 %v4404
    %v4684 = vunpack.c.h.b16 %v4404
    %v4685 = vunpack.c.l.b16 %v4405
    %v4686 = vunpack.c.h.b16 %v4405
    %v4687 = vunpack.c.l.b16 %v4406
    %v4688 = vunpack.c.h.b16 %v4406
    %v4689 = vunpack.c.l.b16 %v4407
    %v4690 = vunpack.c.h.b16 %v4407
    %v4691 = vunpack.c.l.b16 %v4408
    %v4692 = vunpack.c.h.b16 %v4408
    %v4693 = vunpack.c.l.b16 %v4409
    %v4694 = vunpack.c.h.b16 %v4409
    %v4695 = vunpack.c.l.b16 %v4410
    %v4696 = vunpack.c.h.b16 %v4410
    %v4697 = vunpack.c.l.b16 %v4411
    %v4698 = vunpack.c.h.b16 %v4411
    %v4699 = vunpack.c.l.b16 %v4412
    %v4700 = vunpack.c.h.b16 %v4412
    %v4701 = vunpack.c.l.b16 %v4413
    %v4702 = vunpack.c.h.b16 %v4413
    %v4703 = vunpack.c.l.b16 %v4414
    %v4704 = vunpack.c.h.b16 %v4414
    %v4705 = vunpack.c.l.b16 %v4415
    %v4706 = vunpack.c.h.b16 %v4415
    %v4707 = vunpack.c.l.b16 %v4416
    %v4708 = vunpack.c.h.b16 %v4416
    %v4709 = vunpack.c.l.b16 %v4417
    %v4710 = vunpack.c.h.b16 %v4417
    %v4711 = vunpack.c.l.b16 %v4418
    %v4712 = vunpack.c.h.b16 %v4418
    %v4713 = vunpack.c.l.b16 %v4419
    %v4714 = vunpack.c.h.b16 %v4419
    %v4715 = vunpack.c.l.b16 %v4420
    %v4716 = vunpack.c.h.b16 %v4420
    %v4717 = vunpack.c.l.b16 %v4421
    %v4718 = vunpack.c.h.b16 %v4421
    %v4719 = vunpack.c.l.b16 %v4422
    %v4720 = vunpack.c.h.b16 %v4422
    %v4721 = vunpack.c.l.b16 %v4423
    %v4722 = vunpack.c.h.b16 %v4423
    %v4723 = vunpack.c.l.b16 %v4424
    %v4724 = vunpack.c.h.b16 %v4424
    %v4725 = vunpack.c.l.b16 %v4425
    %v4726 = vunpack.c.h.b16 %v4425
    %v4727 = vunpack.c.l.b16 %v4426
    %v4728 = vunpack.c.h.b16 %v4426
    %v4729 = vunpack.c.l.b16 %v4427
    %v4730 = vunpack.c.h.b16 %v4427
    %v4731 = vunpack.c.l.b16 %v4428
    %v4732 = vunpack.c.h.b16 %v4428
    %v4733 = vunpack.c.l.b16 %v4429
    %v4734 = vunpack.c.h.b16 %v4429
    %v4735 = vunpack.c.l.b16 %v4430
    %v4736 = vunpack.c.h.b16 %v4430
    %v4737 = vunpack.c.l.b16 %v4431
    %v4738 = vunpack.c.h.b16 %v4431
    %v4739 = vunpack.c.l.b16 %v4432
    %v4740 = vunpack.c.h.b16 %v4432
    %v4741 = vunpack.c.l.b16 %v4433
    %v4742 = vunpack.c.h.b16 %v4433
    %v4743 = vunpack.c.l.b16 %v4434
    %v4744 = vunpack.c.h.b16 %v4434
    %v4745 = vunpack.c.l.b16 %v4435
    %v4746 = vunpack.c.h.b16 %v4435
    %v4747 = vunpack.c.l.b16 %v4436
    %v4748 = vunpack.c.h.b16 %v4436
    %v4749 = vunpack.c.l.b16 %v4437
    %v4750 = vunpack.c.h.b16 %v4437
    %v4751 = vunpack.c.l.b16 %v4438
    %v4752 = vunpack.c.h.b16 %v4438
    %v4753 = vunpack.c.l.b16 %v4439
    %v4754 = vunpack.c.h.b16 %v4439
    %v4755 = vunpack.c.l.b16 %v4440
    %v4756 = vunpack.c.h.b16 %v4440
    %v4757 = vunpack.c.l.b16 %v4441
    %v4758 = vunpack.c.h.b16 %v4441
    %v4759 = vunpack.c.l.b16 %v4442
    %v4760 = vunpack.c.h.b16 %v4442
    %v4761 = vunpack.c.l.b16 %v4443
    %v4762 = vunpack.c.h.b16 %v4443
    %v4763 = vunpack.c.l.b16 %v4444
    %v4764 = vunpack.c.h.b16 %v4444
    %v4765 = vunpack.c.l.b16 %v4445
    %v4766 = vunpack.c.h.b16 %v4445
    %v4767 = vunpack.c.l.b16 %v4446
    %v4768 = vunpack.c.h.b16 %v4446
    %v4769 = vunpack.c.l.b16 %v4447
    %v4770 = vunpack.c.h.b16 %v4447
    %v4771 = vunpack.c.l.b16 %v4448
    %v4772 = vunpack.c.h.b16 %v4448
    %v4773 = vunpack.c.l.b16 %v4449
    %v4774 = vunpack.c.h.b16 %v4449
    %v4775 = vunpack.c.l.b16 %v4450
    %v4776 = vunpack.c.h.b16 %v4450
    %v4777 = vunpack.c.l.b16 %v4451
    %v4778 = vunpack.c.h.b16 %v4451
    %v4779 = vunpack.c.l.b16 %v4452
    %v4780 = vunpack.c.h.b16 %v4452
    %v4781 = vunpack.c.l.b16 %v4453
    %v4782 = vunpack.c.h.b16 %v4453
    %v4783 = vunpack.c.l.b16 %v4454
    %v4784 = vunpack.c.h.b16 %v4454
    %v4785 = vunpack.c.l.b16 %v4455
    %v4786 = vunpack.c.h.b16 %v4455
    %v4787 = vunpack.c.l.b16 %v4456
    %v4788 = vunpack.c.h.b16 %v4456
    %v4789 = vunpack.c.l.b16 %v4457
    %v4790 = vunpack.c.h.b16 %v4457
    %v4791 = vunpack.c.l.b16 %v4458
    %v4792 = vunpack.c.h.b16 %v4458
    %v4793 = vunpack.c.l.b16 %v4459
    %v4794 = vunpack.c.h.b16 %v4459
    %v4795 = vunpack.c.l.b16 %v4460
    %v4796 = vunpack.c.h.b16 %v4460
    %v4797 = vunpack.c.l.b16 %v4461
    %v4798 = vunpack.c.h.b16 %v4461
    %v4799 = vunpack.c.l.b16 %v4462
    %v4800 = vunpack.c.h.b16 %v4462
    %v4801 = vunpack.c.l.b16 %v4463
    %v4802 = vunpack.c.h.b16 %v4463
    %v4803 = vunpack.c.l.b16 %v4464
    %v4804 = vunpack.c.h.b16 %v4464
    %v4805 = vunpack.c.l.b16 %v4465
    %v4806 = vunpack.c.h.b16 %v4465
    %v4807 = vunpack.c.l.b16 %v4466
    %v4808 = vunpack.c.h.b16 %v4466
    %v4809 = vunpack.c.l.b16 %v4467
    %v4810 = vunpack.c.h.b16 %v4467
    %v4811 = vunpack.c.l.b16 %v4468
    %v4812 = vunpack.c.h.b16 %v4468
    %v4813 = vunpack.c.l.b16 %v4469
    %v4814 = vunpack.c.h.b16 %v4469
    %v4815 = vunpack.c.l.b16 %v4470
    %v4816 = vunpack.c.h.b16 %v4470
    %v4817 = vunpack.c.l.b16 %v4471
    %v4818 = vunpack.c.h.b16 %v4471
    %v4819 = vunpack.c.l.b16 %v4472
    %v4820 = vunpack.c.h.b16 %v4472
    %v4821 = vunpack.c.l.b16 %v4473
    %v4822 = vunpack.c.h.b16 %v4473
    %v4823 = vunpack.c.l.b16 %v4474
    %v4824 = vunpack.c.h.b16 %v4474
    %v4825 = vunpack.c.l.b16 %v4475
    %v4826 = vunpack.c.h.b16 %v4475
    %v4827 = vunpack.c.l.b16 %v4476
    %v4828 = vunpack.c.h.b16 %v4476
    %v4829 = vunpack.c.l.b16 %v4477
    %v4830 = vunpack.c.h.b16 %v4477
    %v4831 = vunpack.c.l.b16 %v4478
    %v4832 = vunpack.c.h.b16 %v4478
    %v4833 = vunpack.c.l.b16 %v4479
    %v4834 = vunpack.c.h.b16 %v4479
    %v4835 = vunpack.c.l.b16 %v4480
    %v4836 = vunpack.c.h.b16 %v4480
    %v4837 = vunpack.c.l.b16 %v4481
    %v4838 = vunpack.c.h.b16 %v4481
    %v4839 = vunpack.c.l.b16 %v4482
    %v4840 = vunpack.c.h.b16 %v4482
    %v4841 = vunpack.c.l.b16 %v4483
    %v4842 = vunpack.c.h.b16 %v4483
    %v4843 = vunpack.c.l.b16 %v4484
    %v4844 = vunpack.c.h.b16 %v4484
    %v4845 = vunpack.c.l.b16 %v4485
    %v4846 = vunpack.c.h.b16 %v4485
    %v4847 = vunpack.c.l.b16 %v4486
    %v4848 = vunpack.c.h.b16 %v4486
    %v4849 = vunpack.c.l.b16 %v4487
    %v4850 = vunpack.c.h.b16 %v4487
    %v4851 = vunpack.c.l.b16 %v4488
    %v4852 = vunpack.c.h.b16 %v4488
    %v4853 = vunpack.c.l.b16 %v4489
    %v4854 = vunpack.c.h.b16 %v4489
    %v4855 = vunpack.c.l.b16 %v4490
    %v4856 = vunpack.c.h.b16 %v4490
    %v4857 = vunpack.c.l.b16 %v4491
    %v4858 = vunpack.c.h.b16 %v4491
    %v4859 = vunpack.c.l.b16 %v4492
    %v4860 = vunpack.c.h.b16 %v4492
    %v4861 = vunpack.c.l.b16 %v4493
    %v4862 = vunpack.c.h.b16 %v4493
    %v4863 = vunpack.c.l.b16 %v4494
    %v4864 = vunpack.c.h.b16 %v4494
    %v4865 = vunpack.c.l.b16 %v4495
    %v4866 = vunpack.c.h.b16 %v4495
    %v4867 = vunpack.c.l.b16 %v4496
    %v4868 = vunpack.c.h.b16 %v4496
    %v4869 = vunpack.c.l.b16 %v4497
    %v4870 = vunpack.c.h.b16 %v4497
    %v4871 = vunpack.c.l.b16 %v4498
    %v4872 = vunpack.c.h.b16 %v4498
    %v4873 = vunpack.c.l.b16 %v4499
    %v4874 = vunpack.c.h.b16 %v4499
    %v4875 = vunpack.c.l.b16 %v4500
    %v4876 = vunpack.c.h.b16 %v4500
    %v4877 = vunpack.c.l.b16 %v4501
    %v4878 = vunpack.c.h.b16 %v4501
    %v4879 = vunpack.c.l.b16 %v4502
    %v4880 = vunpack.c.h.b16 %v4502
    %v4881 = vunpack.c.l.b16 %v4503
    %v4882 = vunpack.c.h.b16 %v4503
    %v4883 = vunpack.c.l.b16 %v4504
    %v4884 = vunpack.c.h.b16 %v4504
    %v4885 = vunpack.c.l.b16 %v4505
    %v4886 = vunpack.c.h.b16 %v4505
    %v4887 = vunpack.c.l.b16 %v4506
    %v4888 = vunpack.c.h.b16 %v4506
    %v4889 = vunpack.c.l.b16 %v4507
    %v4890 = vunpack.c.h.b16 %v4507
    %v4891 = vunpack.c.l.b16 %v4508
    %v4892 = vunpack.c.h.b16 %v4508
    %v4893 = vpack.c.b16 %v4645, %v4637
    %v4894 = vpack.c.b16 %v4646, %v4638
    %v4895 = vpack.c.b16 %v4647, %v4639
    %v4896 = vpack.c.b16 %v4648, %v4640
    %v4897 = vpack.c.b16 %v4649, %v4641
    %v4898 = vpack.c.b16 %v4650, %v4642
    %v4899 = vpack.c.b16 %v4651, %v4643
    %v4900 = vpack.c.b16 %v4652, %v4644
    %v4901 = vpack.c.b16 %v4661, %v4653
    %v4902 = vpack.c.b16 %v4662, %v4654
    %v4903 = vpack.c.b16 %v4663, %v4655
    %v4904 = vpack.c.b16 %v4664, %v4656
    %v4905 = vpack.c.b16 %v4665, %v4657
    %v4906 = vpack.c.b16 %v4666, %v4658
    %v4907 = vpack.c.b16 %v4667, %v4659
    %v4908 = vpack.c.b16 %v4668, %v4660
    %v4909 = vpack.c.b16 %v4677, %v4669
    %v4910 = vpack.c.b16 %v4678, %v4670
    %v4911 = vpack.c.b16 %v4679, %v4671
    %v4912 = vpack.c.b16 %v4680, %v4672
    %v4913 = vpack.c.b16 %v4681, %v4673
    %v4914 = vpack.c.b16 %v4682, %v4674
    %v4915 = vpack.c.b16 %v4683, %v4675
    %v4916 = vpack.c.b16 %v4684, %v4676
    %v4917 = vpack.c.b16 %v4693, %v4685
    %v4918 = vpack.c.b16 %v4694, %v4686
    %v4919 = vpack.c.b16 %v4695, %v4687
    %v4920 = vpack.c.b16 %v4696, %v4688
    %v4921 = vpack.c.b16 %v4697, %v4689
    %v4922 = vpack.c.b16 %v4698, %v4690
    %v4923 = vpack.c.b16 %v4699, %v4691
    %v4924 = vpack.c.b16 %v4700, %v4692
    %v4925 = vpack.c.b16 %v4709, %v4701
    %v4926 = vpack.c.b16 %v4710, %v4702
    %v4927 = vpack.c.b16 %v4711, %v4703
    %v4928 = vpack.c.b16 %v4712, %v4704
    %v4929 = vpack.c.b16 %v4713, %v4705
    %v4930 = vpack.c.b16 %v4714, %v4706
    %v4931 = vpack.c.b16 %v4715, %v4707
    %v4932 = vpack.c.b16 %v4716, %v4708
    %v4933 = vpack.c.b16 %v4725, %v4717
    %v4934 = vpack.c.b16 %v4726, %v4718
    %v4935 = vpack.c.b16 %v4727, %v4719
    %v4936 = vpack.c.b16 %v4728, %v4720
    %v4937 = vpack.c.b16 %v4729, %v4721
    %v4938 = vpack.c.b16 %v4730, %v4722
    %v4939 = vpack.c.b16 %v4731, %v4723
    %v4940 = vpack.c.b16 %v4732, %v4724
    %v4941 = vpack.c.b16 %v4741, %v4733
    %v4942 = vpack.c.b16 %v4742, %v4734
    %v4943 = vpack.c.b16 %v4743, %v4735
    %v4944 = vpack.c.b16 %v4744, %v4736
    %v4945 = vpack.c.b16 %v4745, %v4737
    %v4946 = vpack.c.b16 %v4746, %v4738
    %v4947 = vpack.c.b16 %v4747, %v4739
    %v4948 = vpack.c.b16 %v4748, %v4740
    %v4949 = vpack.c.b16 %v4757, %v4749
    %v4950 = vpack.c.b16 %v4758, %v4750
    %v4951 = vpack.c.b16 %v4759, %v4751
    %v4952 = vpack.c.b16 %v4760, %v4752
    %v4953 = vpack.c.b16 %v4761, %v4753
    %v4954 = vpack.c.b16 %v4762, %v4754
    %v4955 = vpack.c.b16 %v4763, %v4755
    %v4956 = vpack.c.b16 %v4764, %v4756
    %v4957 = vpack.c.b16 %v4773, %v4765
    %v4958 = vpack.c.b16 %v4774, %v4766
    %v4959 = vpack.c.b16 %v4775, %v4767
    %v4960 = vpack.c.b16 %v4776, %v4768
    %v4961 = vpack.c.b16 %v4777, %v4769
    %v4962 = vpack.c.b16 %v4778, %v4770
    %v4963 = vpack.c.b16 %v4779, %v4771
    %v4964 = vpack.c.b16 %v4780, %v4772
    %v4965 = vpack.c.b16 %v4789, %v4781
    %v4966 = vpack.c.b16 %v4790, %v4782
    %v4967 = vpack.c.b16 %v4791, %v4783
    %v4968 = vpack.c.b16 %v4792, %v4784
    %v4969 = vpack.c.b16 %v4793, %v4785
    %v4970 = vpack.c.b16 %v4794, %v4786
    %v4971 = vpack.c.b16 %v4795, %v4787
    %v4972 = vpack.c.b16 %v4796, %v4788
    %v4973 = vpack.c.b16 %v4805, %v4797
    %v4974 = vpack.c.b16 %v4806, %v4798
    %v4975 = vpack.c.b16 %v4807, %v4799
    %v4976 = vpack.c.b16 %v4808, %v4800
    %v4977 = vpack.c.b16 %v4809, %v4801
    %v4978 = vpack.c.b16 %v4810, %v4802
    %v4979 = vpack.c.b16 %v4811, %v4803
    %v4980 = vpack.c.b16 %v4812, %v4804
    %v4981 = vpack.c.b16 %v4821, %v4813
    %v4982 = vpack.c.b16 %v4822, %v4814
    %v4983 = vpack.c.b16 %v4823, %v4815
    %v4984 = vpack.c.b16 %v4824, %v4816
    %v4985 = vpack.c.b16 %v4825, %v4817
    %v4986 = vpack.c.b16 %v4826, %v4818
    %v4987 = vpack.c.b16 %v4827, %v4819
    %v4988 = vpack.c.b16 %v4828, %v4820
    %v4989 = vpack.c.b16 %v4837, %v4829
    %v4990 = vpack.c.b16 %v4838, %v4830
    %v4991 = vpack.c.b16 %v4839, %v4831
    %v4992 = vpack.c.b16 %v4840, %v4832
    %v4993 = vpack.c.b16 %v4841, %v4833
    %v4994 = vpack.c.b16 %v4842, %v4834
    %v4995 = vpack.c.b16 %v4843, %v4835
    %v4996 = vpack.c.b16 %v4844, %v4836
    %v4997 = vpack.c.b16 %v4853, %v4845
    %v4998 = vpack.c.b16 %v4854, %v4846
    %v4999 = vpack.c.b16 %v4855, %v4847
    %v5000 = vpack.c.b16 %v4856, %v4848
    %v5001 = vpack.c.b16 %v4857, %v4849
    %v5002 = vpack.c.b16 %v4858, %v4850
    %v5003 = vpack.c.b16 %v4859, %v4851
    %v5004 = vpack.c.b16 %v4860, %v4852
    %v5005 = vpack.c.b16 %v4869, %v4861
    %v5006 = vpack.c.b16 %v4870, %v4862
    %v5007 = vpack.c.b16 %v4871, %v4863
    %v5008 = vpack.c.b16 %v4872, %v4864
    %v5009 = vpack.c.b16 %v4873, %v4865
    %v5010 = vpack.c.b16 %v4874, %v4866
    %v5011 = vpack.c.b16 %v4875, %v4867
    %v5012 = vpack.c.b16 %v4876, %v4868
    %v5013 = vpack.c.b16 %v4885, %v4877
    %v5014 = vpack.c.b16 %v4886, %v4878
    %v5015 = vpack.c.b16 %v4887, %v4879
    %v5016 = vpack.c.b16 %v4888, %v4880
    %v5017 = vpack.c.b16 %v4889, %v4881
    %v5018 = vpack.c.b16 %v4890, %v4882
    %v5019 = vpack.c.b16 %v4891, %v4883
    %v5020 = vpack.c.b16 %v4892, %v4884
    %5149 = vmatpush.bf16.msra.mxu0 %v4949
    %5150 = vmatpush.bf16.msra.mxu0 %v4941
    %5151 = vmatpush.bf16.msra.mxu0 %v4933
    %5152 = vmatpush.bf16.msra.mxu0 %v4925
    %5153 = vmatpush.bf16.msra.mxu0 %v4917
    %5154 = vmatpush.bf16.msra.mxu0 %v4909
    %5155 = vmatpush.bf16.msra.mxu0 %v4901
    %5156 = vmatpush.bf16.msra.mxu0 %v4893
    %5157 = vmatmul.bf16.gmra.mxu0 %v4379
    %v5158 = vpop.f32.mrf.mxu0
    %v5159 = vadd.f32 0.0, %v5158
    %v5160 = vpop.f32.mrf.mxu0
    %5161 = vdwg.mxu0
    %5162 = vmatpush.bf16.msra.mxu0 %v5013
    %5163 = vmatpush.bf16.msra.mxu0 %v5005
    %5164 = vmatpush.bf16.msra.mxu0 %v4997
    %5165 = vmatpush.bf16.msra.mxu0 %v4989
    %5166 = vmatpush.bf16.msra.mxu0 %v4981
    %5167 = vmatpush.bf16.msra.mxu0 %v4973
    %5168 = vmatpush.bf16.msra.mxu0 %v4965
    %5169 = vmatpush.bf16.msra.mxu0 %v4957
    %5170 = vmatmul.bf16.gmra.mxu0 %v4380
    %v5171 = vpop.f32.mrf.mxu0
    %v5172 = vadd.f32 %v5159, %v5171
    %v5173 = vpop.f32.mrf.mxu0
    %5174 = vdwg.mxu0
    %5175 = vmatpush.bf16.msra.mxu0 %v4950
    %5176 = vmatpush.bf16.msra.mxu0 %v4942
    %5177 = vmatpush.bf16.msra.mxu0 %v4934
    %5178 = vmatpush.bf16.msra.mxu0 %v4926
    %5179 = vmatpush.bf16.msra.mxu0 %v4918
    %5180 = vmatpush.bf16.msra.mxu0 %v4910
    %5181 = vmatpush.bf16.msra.mxu0 %v4902
    %5182 = vmatpush.bf16.msra.mxu0 %v4894
    %5183 = vmatmul.bf16.gmra.mxu0 %v4379
    %v5184 = vpop.f32.mrf.mxu0
    %v5185 = vadd.f32 0.0, %v5184
    %v5186 = vpop.f32.mrf.mxu0
    %5187 = vdwg.mxu0
    %5188 = vmatpush.bf16.msra.mxu0 %v5014
    %5189 = vmatpush.bf16.msra.mxu0 %v5006
    %5190 = vmatpush.bf16.msra.mxu0 %v4998
    %5191 = vmatpush.bf16.msra.mxu0 %v4990
    %5192 = vmatpush.bf16.msra.mxu0 %v4982
    %5193 = vmatpush.bf16.msra.mxu0 %v4974
    %5194 = vmatpush.bf16.msra.mxu0 %v4966
    %5195 = vmatpush.bf16.msra.mxu0 %v4958
    %5196 = vmatmul.bf16.gmra.mxu0 %v4380
    %v5197 = vpop.f32.mrf.mxu0
    %v5198 = vadd.f32 %v5185, %v5197
    %v5199 = vpop.f32.mrf.mxu0
    %5200 = vdwg.mxu0
    %5201 = vmatpush.bf16.msra.mxu0 %v4951
    %5202 = vmatpush.bf16.msra.mxu0 %v4943
    %5203 = vmatpush.bf16.msra.mxu0 %v4935
    %5204 = vmatpush.bf16.msra.mxu0 %v4927
    %5205 = vmatpush.bf16.msra.mxu0 %v4919
    %5206 = vmatpush.bf16.msra.mxu0 %v4911
    %5207 = vmatpush.bf16.msra.mxu0 %v4903
    %5208 = vmatpush.bf16.msra.mxu0 %v4895
    %5209 = vmatmul.bf16.gmra.mxu0 %v4379
    %v5210 = vpop.f32.mrf.mxu0
    %v5211 = vadd.f32 0.0, %v5210
    %v5212 = vpop.f32.mrf.mxu0
    %5213 = vdwg.mxu0
    %5214 = vmatpush.bf16.msra.mxu0 %v5015
    %5215 = vmatpush.bf16.msra.mxu0 %v5007
    %5216 = vmatpush.bf16.msra.mxu0 %v4999
    %5217 = vmatpush.bf16.msra.mxu0 %v4991
    %5218 = vmatpush.bf16.msra.mxu0 %v4983
    %5219 = vmatpush.bf16.msra.mxu0 %v4975
    %5220 = vmatpush.bf16.msra.mxu0 %v4967
    %5221 = vmatpush.bf16.msra.mxu0 %v4959
    %5222 = vmatmul.bf16.gmra.mxu0 %v4380
    %v5223 = vpop.f32.mrf.mxu0
    %v5224 = vadd.f32 %v5211, %v5223
    %v5225 = vpop.f32.mrf.mxu0
    %5226 = vdwg.mxu0
    %5227 = vmatpush.bf16.msra.mxu0 %v4952
    %5228 = vmatpush.bf16.msra.mxu0 %v4944
    %5229 = vmatpush.bf16.msra.mxu0 %v4936
    %5230 = vmatpush.bf16.msra.mxu0 %v4928
    %5231 = vmatpush.bf16.msra.mxu0 %v4920
    %5232 = vmatpush.bf16.msra.mxu0 %v4912
    %5233 = vmatpush.bf16.msra.mxu0 %v4904
    %5234 = vmatpush.bf16.msra.mxu0 %v4896
    %5235 = vmatmul.bf16.gmra.mxu0 %v4379
    %v5236 = vpop.f32.mrf.mxu0
    %v5237 = vadd.f32 0.0, %v5236
    %v5238 = vpop.f32.mrf.mxu0
    %5239 = vdwg.mxu0
    %5240 = vmatpush.bf16.msra.mxu0 %v5016
    %5241 = vmatpush.bf16.msra.mxu0 %v5008
    %5242 = vmatpush.bf16.msra.mxu0 %v5000
    %5243 = vmatpush.bf16.msra.mxu0 %v4992
    %5244 = vmatpush.bf16.msra.mxu0 %v4984
    %5245 = vmatpush.bf16.msra.mxu0 %v4976
    %5246 = vmatpush.bf16.msra.mxu0 %v4968
    %5247 = vmatpush.bf16.msra.mxu0 %v4960
    %5248 = vmatmul.bf16.gmra.mxu0 %v4380
    %v5249 = vpop.f32.mrf.mxu0
    %v5250 = vadd.f32 %v5237, %v5249
    %v5251 = vpop.f32.mrf.mxu0
    %5252 = vdwg.mxu0
    %5253 = vmatpush.bf16.msra.mxu0 %v4953
    %5254 = vmatpush.bf16.msra.mxu0 %v4945
    %5255 = vmatpush.bf16.msra.mxu0 %v4937
    %5256 = vmatpush.bf16.msra.mxu0 %v4929
    %5257 = vmatpush.bf16.msra.mxu0 %v4921
    %5258 = vmatpush.bf16.msra.mxu0 %v4913
    %5259 = vmatpush.bf16.msra.mxu0 %v4905
    %5260 = vmatpush.bf16.msra.mxu0 %v4897
    %5261 = vmatmul.bf16.gmra.mxu0 %v4379
    %v5262 = vpop.f32.mrf.mxu0
    %v5263 = vadd.f32 0.0, %v5262
    %v5264 = vpop.f32.mrf.mxu0
    %5265 = vdwg.mxu0
    %5266 = vmatpush.bf16.msra.mxu0 %v5017
    %5267 = vmatpush.bf16.msra.mxu0 %v5009
    %5268 = vmatpush.bf16.msra.mxu0 %v5001
    %5269 = vmatpush.bf16.msra.mxu0 %v4993
    %5270 = vmatpush.bf16.msra.mxu0 %v4985
    %5271 = vmatpush.bf16.msra.mxu0 %v4977
    %5272 = vmatpush.bf16.msra.mxu0 %v4969
    %5273 = vmatpush.bf16.msra.mxu0 %v4961
    %5274 = vmatmul.bf16.gmra.mxu0 %v4380
    %v5275 = vpop.f32.mrf.mxu0
    %v5276 = vadd.f32 %v5263, %v5275
    %v5277 = vpop.f32.mrf.mxu0
    %5278 = vdwg.mxu0
    %5279 = vmatpush.bf16.msra.mxu0 %v4954
    %5280 = vmatpush.bf16.msra.mxu0 %v4946
    %5281 = vmatpush.bf16.msra.mxu0 %v4938
    %5282 = vmatpush.bf16.msra.mxu0 %v4930
    %5283 = vmatpush.bf16.msra.mxu0 %v4922
    %5284 = vmatpush.bf16.msra.mxu0 %v4914
    %5285 = vmatpush.bf16.msra.mxu0 %v4906
    %5286 = vmatpush.bf16.msra.mxu0 %v4898
    %5287 = vmatmul.bf16.gmra.mxu0 %v4379
    %v5288 = vpop.f32.mrf.mxu0
    %v5289 = vadd.f32 0.0, %v5288
    %v5290 = vpop.f32.mrf.mxu0
    %5291 = vdwg.mxu0
    %5292 = vmatpush.bf16.msra.mxu0 %v5018
    %5293 = vmatpush.bf16.msra.mxu0 %v5010
    %5294 = vmatpush.bf16.msra.mxu0 %v5002
    %5295 = vmatpush.bf16.msra.mxu0 %v4994
    %5296 = vmatpush.bf16.msra.mxu0 %v4986
    %5297 = vmatpush.bf16.msra.mxu0 %v4978
    %5298 = vmatpush.bf16.msra.mxu0 %v4970
    %5299 = vmatpush.bf16.msra.mxu0 %v4962
    %5300 = vmatmul.bf16.gmra.mxu0 %v4380
    %v5301 = vpop.f32.mrf.mxu0
    %v5302 = vadd.f32 %v5289, %v5301
    %v5303 = vpop.f32.mrf.mxu0
    %5304 = vdwg.mxu0
    %5305 = vmatpush.bf16.msra.mxu0 %v4955
    %5306 = vmatpush.bf16.msra.mxu0 %v4947
    %5307 = vmatpush.bf16.msra.mxu0 %v4939
    %5308 = vmatpush.bf16.msra.mxu0 %v4931
    %5309 = vmatpush.bf16.msra.mxu0 %v4923
    %5310 = vmatpush.bf16.msra.mxu0 %v4915
    %5311 = vmatpush.bf16.msra.mxu0 %v4907
    %5312 = vmatpush.bf16.msra.mxu0 %v4899
    %5313 = vmatmul.bf16.gmra.mxu0 %v4379
    %v5314 = vpop.f32.mrf.mxu0
    %v5315 = vadd.f32 0.0, %v5314
    %v5316 = vpop.f32.mrf.mxu0
    %5317 = vdwg.mxu0
    %5318 = vmatpush.bf16.msra.mxu0 %v5019
    %5319 = vmatpush.bf16.msra.mxu0 %v5011
    %5320 = vmatpush.bf16.msra.mxu0 %v5003
    %5321 = vmatpush.bf16.msra.mxu0 %v4995
    %5322 = vmatpush.bf16.msra.mxu0 %v4987
    %5323 = vmatpush.bf16.msra.mxu0 %v4979
    %5324 = vmatpush.bf16.msra.mxu0 %v4971
    %5325 = vmatpush.bf16.msra.mxu0 %v4963
    %5326 = vmatmul.bf16.gmra.mxu0 %v4380
    %v5327 = vpop.f32.mrf.mxu0
    %v5328 = vadd.f32 %v5315, %v5327
    %v5329 = vpop.f32.mrf.mxu0
    %5330 = vdwg.mxu0
    %5331 = vmatpush.bf16.msra.mxu0 %v4956
    %5332 = vmatpush.bf16.msra.mxu0 %v4948
    %5333 = vmatpush.bf16.msra.mxu0 %v4940
    %5334 = vmatpush.bf16.msra.mxu0 %v4932
    %5335 = vmatpush.bf16.msra.mxu0 %v4924
    %5336 = vmatpush.bf16.msra.mxu0 %v4916
    %5337 = vmatpush.bf16.msra.mxu0 %v4908
    %5338 = vmatpush.bf16.msra.mxu0 %v4900
    %5339 = vmatmul.bf16.gmra.mxu0 %v4379
    %v5340 = vpop.f32.mrf.mxu0
    %v5341 = vadd.f32 0.0, %v5340
    %v5342 = vpop.f32.mrf.mxu0
    %5343 = vdwg.mxu0
    %5344 = vmatpush.bf16.msra.mxu0 %v5020
    %5345 = vmatpush.bf16.msra.mxu0 %v5012
    %5346 = vmatpush.bf16.msra.mxu0 %v5004
    %5347 = vmatpush.bf16.msra.mxu0 %v4996
    %5348 = vmatpush.bf16.msra.mxu0 %v4988
    %5349 = vmatpush.bf16.msra.mxu0 %v4980
    %5350 = vmatpush.bf16.msra.mxu0 %v4972
    %5351 = vmatpush.bf16.msra.mxu0 %v4964
    %5352 = vmatmul.bf16.gmra.mxu0 %v4380
    %v5353 = vpop.f32.mrf.mxu0
    %v5354 = vadd.f32 %v5341, %v5353
    %v5355 = vpop.f32.mrf.mxu0
    %5356 = vdwg.mxu0
    %s5357 = scalar_lea.vmem %s1, 24
    %v5358 = vld [vmem:[%s5357] sm:$0xff]
    %s5359 = scalar_lea.vmem %s1, 32
    %v5360 = vld [vmem:[%s5359] sm:$0xff]
    %s5361 = scalar_lea.vmem [#allocation2], 96
    %v5362 = vld [vmem:[%s5361] sm:$0xff]
    %v5363 = vld [vmem:[%s5361 + $0x8] sm:$0xff]
    %v5364 = vld [vmem:[%s5361 + $0x10] sm:$0xff]
    %v5365 = vld [vmem:[%s5361 + $0x18] sm:$0xff]
    %v5366 = vadd.f32 %v5362, %v5172
    %v5367 = vadd.f32 %v5363, %v5198
    %v5368 = vadd.f32 %v5364, %v5224
    %v5369 = vadd.f32 %v5365, %v5250
    %s5370 = scalar_lea.vmem [#allocation3], 128
    %v5371 = vld [vmem:[%s5370] sm:$0xff]
    %v5372 = vld [vmem:[%s5370 + $0x8] sm:$0xff]
    %v5373 = vld [vmem:[%s5370 + $0x10] sm:$0xff]
    %v5374 = vld [vmem:[%s5370 + $0x18] sm:$0xff]
    %v5375 = vadd.f32 %v5371, %v5276
    %v5376 = vadd.f32 %v5372, %v5302
    %v5377 = vadd.f32 %v5373, %v5328
    %v5378 = vadd.f32 %v5374, %v5354
    %v5379 = vld [vmem:[#allocation7] sm:$0xff]
    %v5380 = vxor.u32 %v5366, 2147483648
    %v5381 = vmul.f32 %v5380, 1.442695
    %v5382 = vpow.pop %v5381
    %v5383 = vadd.f32 %v5382, 1.0
    %v5384 = vrcp.pop %v5383
    %v5385 = vmul.f32 %v5383, %v5384
    %v5386 = vsub.f32 1.0, %v5385
    %v5387 = vmul.f32 %v5384, %v5386
    %v5388 = vadd.f32 %v5384, %v5387
    %vm5389 = vweird.f32 %v5383
    %vm5390 = vweird.f32 %v5384
    %vm5391 = vmor %vm5389, %vm5390
    %v5392 = vsel %vm5391, %v5384, %v5388
    %v5393 = vand.u32 2147483647, %v5383
    %vm5394 = vcmp.eq.f32.partialorder %v5393, 8.507059e+37
    %v5395 = vand.u32 %v5383, 2147483648
    %v5396 = vor.u32 1.1754944e-38, %v5395
    %v5397 = vsel %vm5394, %v5396, %v5392
    %v5398 = vmul.f32 1.0, %v5397
    %v5399 = vxor.u32 %v5367, 2147483648
    %v5400 = vmul.f32 %v5399, 1.442695
    %v5401 = vpow.pop %v5400
    %v5402 = vadd.f32 %v5401, 1.0
    %v5403 = vrcp.pop %v5402
    %v5404 = vmul.f32 %v5402, %v5403
    %v5405 = vsub.f32 1.0, %v5404
    %v5406 = vmul.f32 %v5403, %v5405
    %v5407 = vadd.f32 %v5403, %v5406
    %vm5408 = vweird.f32 %v5402
    %vm5409 = vweird.f32 %v5403
    %vm5410 = vmor %vm5408, %vm5409
    %v5411 = vsel %vm5410, %v5403, %v5407
    %v5412 = vand.u32 2147483647, %v5402
    %vm5413 = vcmp.eq.f32.partialorder %v5412, 8.507059e+37
    %v5414 = vand.u32 %v5402, 2147483648
    %v5415 = vor.u32 1.1754944e-38, %v5414
    %v5416 = vsel %vm5413, %v5415, %v5411
    %v5417 = vmul.f32 1.0, %v5416
    %v5418 = vtanh.pop %v5368
    %v5419 = vxor.u32 %v5369, 2147483648
    %v5420 = vmul.f32 %v5419, 1.442695
    %v5421 = vpow.pop %v5420
    %v5422 = vadd.f32 %v5421, 1.0
    %v5423 = vrcp.pop %v5422
    %v5424 = vmul.f32 %v5422, %v5423
    %v5425 = vsub.f32 1.0, %v5424
    %v5426 = vmul.f32 %v5423, %v5425
    %v5427 = vadd.f32 %v5423, %v5426
    %vm5428 = vweird.f32 %v5422
    %vm5429 = vweird.f32 %v5423
    %vm5430 = vmor %vm5428, %vm5429
    %v5431 = vsel %vm5430, %v5423, %v5427
    %v5432 = vand.u32 2147483647, %v5422
    %vm5433 = vcmp.eq.f32.partialorder %v5432, 8.507059e+37
    %v5434 = vand.u32 %v5422, 2147483648
    %v5435 = vor.u32 1.1754944e-38, %v5434
    %v5436 = vsel %vm5433, %v5435, %v5431
    %v5437 = vmul.f32 1.0, %v5436
    %v5438 = vmul.f32 %v5417, %v5379
    %v5439 = vmul.f32 %v5398, %v5418
    %v5440 = vadd.f32 %v5438, %v5439
    %v5441 = vtanh.pop %v5440
    %v5442 = vmul.f32 %v5437, %v5441
    %v5443 = vld [vmem:[#allocation8] sm:$0xff]
    %v5444 = vxor.u32 %v5375, 2147483648
    %v5445 = vmul.f32 %v5444, 1.442695
    %v5446 = vpow.pop %v5445
    %v5447 = vadd.f32 %v5446, 1.0
    %v5448 = vrcp.pop %v5447
    %v5449 = vmul.f32 %v5447, %v5448
    %v5450 = vsub.f32 1.0, %v5449
    %v5451 = vmul.f32 %v5448, %v5450
    %v5452 = vadd.f32 %v5448, %v5451
    %vm5453 = vweird.f32 %v5447
    %vm5454 = vweird.f32 %v5448
    %vm5455 = vmor %vm5453, %vm5454
    %v5456 = vsel %vm5455, %v5448, %v5452
    %v5457 = vand.u32 2147483647, %v5447
    %vm5458 = vcmp.eq.f32.partialorder %v5457, 8.507059e+37
    %v5459 = vand.u32 %v5447, 2147483648
    %v5460 = vor.u32 1.1754944e-38, %v5459
    %v5461 = vsel %vm5458, %v5460, %v5456
    %v5462 = vmul.f32 1.0, %v5461
    %v5463 = vxor.u32 %v5376, 2147483648
    %v5464 = vmul.f32 %v5463, 1.442695
    %v5465 = vpow.pop %v5464
    %v5466 = vadd.f32 %v5465, 1.0
    %v5467 = vrcp.pop %v5466
    %v5468 = vmul.f32 %v5466, %v5467
    %v5469 = vsub.f32 1.0, %v5468
    %v5470 = vmul.f32 %v5467, %v5469
    %v5471 = vadd.f32 %v5467, %v5470
    %vm5472 = vweird.f32 %v5466
    %vm5473 = vweird.f32 %v5467
    %vm5474 = vmor %vm5472, %vm5473
    %v5475 = vsel %vm5474, %v5467, %v5471
    %v5476 = vand.u32 2147483647, %v5466
    %vm5477 = vcmp.eq.f32.partialorder %v5476, 8.507059e+37
    %v5478 = vand.u32 %v5466, 2147483648
    %v5479 = vor.u32 1.1754944e-38, %v5478
    %v5480 = vsel %vm5477, %v5479, %v5475
    %v5481 = vmul.f32 1.0, %v5480
    %v5482 = vtanh.pop %v5377
    %v5483 = vxor.u32 %v5378, 2147483648
    %v5484 = vmul.f32 %v5483, 1.442695
    %v5485 = vpow.pop %v5484
    %v5486 = vadd.f32 %v5485, 1.0
    %v5487 = vrcp.pop %v5486
    %v5488 = vmul.f32 %v5486, %v5487
    %v5489 = vsub.f32 1.0, %v5488
    %v5490 = vmul.f32 %v5487, %v5489
    %v5491 = vadd.f32 %v5487, %v5490
    %vm5492 = vweird.f32 %v5486
    %vm5493 = vweird.f32 %v5487
    %vm5494 = vmor %vm5492, %vm5493
    %v5495 = vsel %vm5494, %v5487, %v5491
    %v5496 = vand.u32 2147483647, %v5486
    %vm5497 = vcmp.eq.f32.partialorder %v5496, 8.507059e+37
    %v5498 = vand.u32 %v5486, 2147483648
    %v5499 = vor.u32 1.1754944e-38, %v5498
    %v5500 = vsel %vm5497, %v5499, %v5495
    %v5501 = vmul.f32 1.0, %v5500
    %v5502 = vmul.f32 %v5481, %v5443
    %v5503 = vmul.f32 %v5462, %v5482
    %v5504 = vadd.f32 %v5502, %v5503
    %v5505 = vtanh.pop %v5504
    %v5506 = vmul.f32 %v5501, %v5505
    %vm5507 = vcmp.gt.f32.partialorder %v5358, 0.0
    %v5508 = vld [vmem:[#allocation6] sm:$0xff]
    %v5509 = vsel %vm5507, 1, 0
    %5510 = vset.pattern.permute.xlu0 0
    %5511 = vperm.xlu0 %5510, %v5509
    %v5512 = vpop.permute.xlu0 %5511
    %vm5513 = vcmp.eq.s32.totalorder %v5512, 1
    %v5514 = vsel %vm5513, %v5442, %v5508
    %vm5515 = vcmp.gt.f32.partialorder %v5360, 0.0
    %v5516 = vsel %vm5515, 1, 0
    %5517 = vset.pattern.permute.xlu0 0
    %5518 = vperm.xlu0 %5517, %v5516
    %v5519 = vpop.permute.xlu0 %5518
    %vm5520 = vcmp.eq.s32.totalorder %v5519, 1
    %v5521 = vsel %vm5520, %v5506, %v4378
    %v5522 = vsel %vm5513, %v5440, %v5379
    %5523 = vst [vmem:[#allocation7] sm:$0xff] %v5522
    %v5524 = vld [vmem:[#allocation8] sm:$0xff]
    %v5525 = vsel %vm5520, %v5504, %v5524
    %5526 = vst [vmem:[#allocation8] sm:$0xff] %v5525
    %5527 = vst [vmem:[#allocation6] sm:$0xff] %v5514
    %5528 = vst [vmem:[#allocation6 + $0x8] sm:$0xff] %v5521
    %5530 = vset.pattern.permute.xlu0 0
    %5531 = vperm.xlu0 %5530, %v5358
    %v5532 = vpop.permute.xlu0 %5531
    %v5534 = vmul.f32 %v5514, %v5532
    %s5535 = scalar_lea.vmem [#allocation4], 24
    %5536 = vst [vmem:[%s5535] sm:$0xff] %v5534
    %5538 = vset.pattern.permute.xlu0 0
    %5539 = vperm.xlu0 %5538, %v5360
    %v5540 = vpop.permute.xlu0 %5539
    %v5542 = vmul.f32 %v5521, %v5540
    %s5543 = scalar_lea.vmem [#allocation5], 32
    %5544 = vst [vmem:[%s5543] sm:$0xff] %v5542
    %v5545 = vld [vmem:[#allocation6] sm:$0xff]
    %v5546 = vld [vmem:[#allocation6 + $0x8] sm:$0xff]
    %v5547 = vpack.c.bf16 %v5545, %v5545
    %v5548 = vpack.c.bf16 %v5546, %v5546
    %v5549 = vld [vmem:[#allocation14] sm:$0xff]
    %v5550 = vld [vmem:[#allocation14 + $0x8] sm:$0xff]
    %v5551 = vld [vmem:[#allocation14 + $0x10] sm:$0xff]
    %v5552 = vld [vmem:[#allocation14 + $0x18] sm:$0xff]
    %v5553 = vld [vmem:[#allocation14 + $0x20] sm:$0xff]
    %v5554 = vld [vmem:[#allocation14 + $0x28] sm:$0xff]
    %v5555 = vld [vmem:[#allocation14 + $0x30] sm:$0xff]
    %v5556 = vld [vmem:[#allocation14 + $0x38] sm:$0xff]
    %v5557 = vld [vmem:[#allocation14 + $0x40] sm:$0xff]
    %v5558 = vld [vmem:[#allocation14 + $0x48] sm:$0xff]
    %v5559 = vld [vmem:[#allocation14 + $0x50] sm:$0xff]
    %v5560 = vld [vmem:[#allocation14 + $0x58] sm:$0xff]
    %v5561 = vld [vmem:[#allocation14 + $0x60] sm:$0xff]
    %v5562 = vld [vmem:[#allocation14 + $0x68] sm:$0xff]
    %v5563 = vld [vmem:[#allocation14 + $0x70] sm:$0xff]
    %v5564 = vld [vmem:[#allocation14 + $0x78] sm:$0xff]
    %v5565 = vld [vmem:[#allocation14 + $0x80] sm:$0xff]
    %v5566 = vld [vmem:[#allocation14 + $0x88] sm:$0xff]
    %v5567 = vld [vmem:[#allocation14 + $0x90] sm:$0xff]
    %v5568 = vld [vmem:[#allocation14 + $0x98] sm:$0xff]
    %v5569 = vld [vmem:[#allocation14 + $0xa0] sm:$0xff]
    %v5570 = vld [vmem:[#allocation14 + $0xa8] sm:$0xff]
    %v5571 = vld [vmem:[#allocation14 + $0xb0] sm:$0xff]
    %v5572 = vld [vmem:[#allocation14 + $0xb8] sm:$0xff]
    %v5573 = vld [vmem:[#allocation14 + $0xc0] sm:$0xff]
    %v5574 = vld [vmem:[#allocation14 + $0xc8] sm:$0xff]
    %v5575 = vld [vmem:[#allocation14 + $0xd0] sm:$0xff]
    %v5576 = vld [vmem:[#allocation14 + $0xd8] sm:$0xff]
    %v5577 = vld [vmem:[#allocation14 + $0xe0] sm:$0xff]
    %v5578 = vld [vmem:[#allocation14 + $0xe8] sm:$0xff]
    %v5579 = vld [vmem:[#allocation14 + $0xf0] sm:$0xff]
    %v5580 = vld [vmem:[#allocation14 + $0xf8] sm:$0xff]
    %v5581 = vld [vmem:[#allocation14 + $0x100] sm:$0xff]
    %v5582 = vld [vmem:[#allocation14 + $0x108] sm:$0xff]
    %v5583 = vld [vmem:[#allocation14 + $0x110] sm:$0xff]
    %v5584 = vld [vmem:[#allocation14 + $0x118] sm:$0xff]
    %v5585 = vld [vmem:[#allocation14 + $0x120] sm:$0xff]
    %v5586 = vld [vmem:[#allocation14 + $0x128] sm:$0xff]
    %v5587 = vld [vmem:[#allocation14 + $0x130] sm:$0xff]
    %v5588 = vld [vmem:[#allocation14 + $0x138] sm:$0xff]
    %v5589 = vld [vmem:[#allocation14 + $0x140] sm:$0xff]
    %v5590 = vld [vmem:[#allocation14 + $0x148] sm:$0xff]
    %v5591 = vld [vmem:[#allocation14 + $0x150] sm:$0xff]
    %v5592 = vld [vmem:[#allocation14 + $0x158] sm:$0xff]
    %v5593 = vld [vmem:[#allocation14 + $0x160] sm:$0xff]
    %v5594 = vld [vmem:[#allocation14 + $0x168] sm:$0xff]
    %v5595 = vld [vmem:[#allocation14 + $0x170] sm:$0xff]
    %v5596 = vld [vmem:[#allocation14 + $0x178] sm:$0xff]
    %v5597 = vld [vmem:[#allocation14 + $0x180] sm:$0xff]
    %v5598 = vld [vmem:[#allocation14 + $0x188] sm:$0xff]
    %v5599 = vld [vmem:[#allocation14 + $0x190] sm:$0xff]
    %v5600 = vld [vmem:[#allocation14 + $0x198] sm:$0xff]
    %v5601 = vld [vmem:[#allocation14 + $0x1a0] sm:$0xff]
    %v5602 = vld [vmem:[#allocation14 + $0x1a8] sm:$0xff]
    %v5603 = vld [vmem:[#allocation14 + $0x1b0] sm:$0xff]
    %v5604 = vld [vmem:[#allocation14 + $0x1b8] sm:$0xff]
    %v5605 = vld [vmem:[#allocation14 + $0x1c0] sm:$0xff]
    %v5606 = vld [vmem:[#allocation14 + $0x1c8] sm:$0xff]
    %v5607 = vld [vmem:[#allocation14 + $0x1d0] sm:$0xff]
    %v5608 = vld [vmem:[#allocation14 + $0x1d8] sm:$0xff]
    %v5609 = vld [vmem:[#allocation14 + $0x1e0] sm:$0xff]
    %v5610 = vld [vmem:[#allocation14 + $0x1e8] sm:$0xff]
    %v5611 = vld [vmem:[#allocation14 + $0x1f0] sm:$0xff]
    %v5612 = vld [vmem:[#allocation14 + $0x1f8] sm:$0xff]
    %v5613 = vld [vmem:[#allocation14 + $0x200] sm:$0xff]
    %v5614 = vld [vmem:[#allocation14 + $0x208] sm:$0xff]
    %v5615 = vld [vmem:[#allocation14 + $0x210] sm:$0xff]
    %v5616 = vld [vmem:[#allocation14 + $0x218] sm:$0xff]
    %v5617 = vld [vmem:[#allocation14 + $0x220] sm:$0xff]
    %v5618 = vld [vmem:[#allocation14 + $0x228] sm:$0xff]
    %v5619 = vld [vmem:[#allocation14 + $0x230] sm:$0xff]
    %v5620 = vld [vmem:[#allocation14 + $0x238] sm:$0xff]
    %v5621 = vld [vmem:[#allocation14 + $0x240] sm:$0xff]
    %v5622 = vld [vmem:[#allocation14 + $0x248] sm:$0xff]
    %v5623 = vld [vmem:[#allocation14 + $0x250] sm:$0xff]
    %v5624 = vld [vmem:[#allocation14 + $0x258] sm:$0xff]
    %v5625 = vld [vmem:[#allocation14 + $0x260] sm:$0xff]
    %v5626 = vld [vmem:[#allocation14 + $0x268] sm:$0xff]
    %v5627 = vld [vmem:[#allocation14 + $0x270] sm:$0xff]
    %v5628 = vld [vmem:[#allocation14 + $0x278] sm:$0xff]
    %v5629 = vld [vmem:[#allocation14 + $0x280] sm:$0xff]
    %v5630 = vld [vmem:[#allocation14 + $0x288] sm:$0xff]
    %v5631 = vld [vmem:[#allocation14 + $0x290] sm:$0xff]
    %v5632 = vld [vmem:[#allocation14 + $0x298] sm:$0xff]
    %v5633 = vld [vmem:[#allocation14 + $0x2a0] sm:$0xff]
    %v5634 = vld [vmem:[#allocation14 + $0x2a8] sm:$0xff]
    %v5635 = vld [vmem:[#allocation14 + $0x2b0] sm:$0xff]
    %v5636 = vld [vmem:[#allocation14 + $0x2b8] sm:$0xff]
    %v5637 = vld [vmem:[#allocation14 + $0x2c0] sm:$0xff]
    %v5638 = vld [vmem:[#allocation14 + $0x2c8] sm:$0xff]
    %v5639 = vld [vmem:[#allocation14 + $0x2d0] sm:$0xff]
    %v5640 = vld [vmem:[#allocation14 + $0x2d8] sm:$0xff]
    %v5641 = vld [vmem:[#allocation14 + $0x2e0] sm:$0xff]
    %v5642 = vld [vmem:[#allocation14 + $0x2e8] sm:$0xff]
    %v5643 = vld [vmem:[#allocation14 + $0x2f0] sm:$0xff]
    %v5644 = vld [vmem:[#allocation14 + $0x2f8] sm:$0xff]
    %v5645 = vld [vmem:[#allocation14 + $0x300] sm:$0xff]
    %v5646 = vld [vmem:[#allocation14 + $0x308] sm:$0xff]
    %v5647 = vld [vmem:[#allocation14 + $0x310] sm:$0xff]
    %v5648 = vld [vmem:[#allocation14 + $0x318] sm:$0xff]
    %v5649 = vld [vmem:[#allocation14 + $0x320] sm:$0xff]
    %v5650 = vld [vmem:[#allocation14 + $0x328] sm:$0xff]
    %v5651 = vld [vmem:[#allocation14 + $0x330] sm:$0xff]
    %v5652 = vld [vmem:[#allocation14 + $0x338] sm:$0xff]
    %v5653 = vld [vmem:[#allocation14 + $0x340] sm:$0xff]
    %v5654 = vld [vmem:[#allocation14 + $0x348] sm:$0xff]
    %v5655 = vld [vmem:[#allocation14 + $0x350] sm:$0xff]
    %v5656 = vld [vmem:[#allocation14 + $0x358] sm:$0xff]
    %v5657 = vld [vmem:[#allocation14 + $0x360] sm:$0xff]
    %v5658 = vld [vmem:[#allocation14 + $0x368] sm:$0xff]
    %v5659 = vld [vmem:[#allocation14 + $0x370] sm:$0xff]
    %v5660 = vld [vmem:[#allocation14 + $0x378] sm:$0xff]
    %v5661 = vld [vmem:[#allocation14 + $0x380] sm:$0xff]
    %v5662 = vld [vmem:[#allocation14 + $0x388] sm:$0xff]
    %v5663 = vld [vmem:[#allocation14 + $0x390] sm:$0xff]
    %v5664 = vld [vmem:[#allocation14 + $0x398] sm:$0xff]
    %v5665 = vld [vmem:[#allocation14 + $0x3a0] sm:$0xff]
    %v5666 = vld [vmem:[#allocation14 + $0x3a8] sm:$0xff]
    %v5667 = vld [vmem:[#allocation14 + $0x3b0] sm:$0xff]
    %v5668 = vld [vmem:[#allocation14 + $0x3b8] sm:$0xff]
    %v5669 = vld [vmem:[#allocation14 + $0x3c0] sm:$0xff]
    %v5670 = vld [vmem:[#allocation14 + $0x3c8] sm:$0xff]
    %v5671 = vld [vmem:[#allocation14 + $0x3d0] sm:$0xff]
    %v5672 = vld [vmem:[#allocation14 + $0x3d8] sm:$0xff]
    %v5673 = vld [vmem:[#allocation14 + $0x3e0] sm:$0xff]
    %v5674 = vld [vmem:[#allocation14 + $0x3e8] sm:$0xff]
    %v5675 = vld [vmem:[#allocation14 + $0x3f0] sm:$0xff]
    %v5676 = vld [vmem:[#allocation14 + $0x3f8] sm:$0xff]
    %v5805 = vunpack.c.l.b16 %v5549
    %v5806 = vunpack.c.h.b16 %v5549
    %v5807 = vunpack.c.l.b16 %v5550
    %v5808 = vunpack.c.h.b16 %v5550
    %v5809 = vunpack.c.l.b16 %v5551
    %v5810 = vunpack.c.h.b16 %v5551
    %v5811 = vunpack.c.l.b16 %v5552
    %v5812 = vunpack.c.h.b16 %v5552
    %v5813 = vunpack.c.l.b16 %v5553
    %v5814 = vunpack.c.h.b16 %v5553
    %v5815 = vunpack.c.l.b16 %v5554
    %v5816 = vunpack.c.h.b16 %v5554
    %v5817 = vunpack.c.l.b16 %v5555
    %v5818 = vunpack.c.h.b16 %v5555
    %v5819 = vunpack.c.l.b16 %v5556
    %v5820 = vunpack.c.h.b16 %v5556
    %v5821 = vunpack.c.l.b16 %v5557
    %v5822 = vunpack.c.h.b16 %v5557
    %v5823 = vunpack.c.l.b16 %v5558
    %v5824 = vunpack.c.h.b16 %v5558
    %v5825 = vunpack.c.l.b16 %v5559
    %v5826 = vunpack.c.h.b16 %v5559
    %v5827 = vunpack.c.l.b16 %v5560
    %v5828 = vunpack.c.h.b16 %v5560
    %v5829 = vunpack.c.l.b16 %v5561
    %v5830 = vunpack.c.h.b16 %v5561
    %v5831 = vunpack.c.l.b16 %v5562
    %v5832 = vunpack.c.h.b16 %v5562
    %v5833 = vunpack.c.l.b16 %v5563
    %v5834 = vunpack.c.h.b16 %v5563
    %v5835 = vunpack.c.l.b16 %v5564
    %v5836 = vunpack.c.h.b16 %v5564
    %v5837 = vunpack.c.l.b16 %v5565
    %v5838 = vunpack.c.h.b16 %v5565
    %v5839 = vunpack.c.l.b16 %v5566
    %v5840 = vunpack.c.h.b16 %v5566
    %v5841 = vunpack.c.l.b16 %v5567
    %v5842 = vunpack.c.h.b16 %v5567
    %v5843 = vunpack.c.l.b16 %v5568
    %v5844 = vunpack.c.h.b16 %v5568
    %v5845 = vunpack.c.l.b16 %v5569
    %v5846 = vunpack.c.h.b16 %v5569
    %v5847 = vunpack.c.l.b16 %v5570
    %v5848 = vunpack.c.h.b16 %v5570
    %v5849 = vunpack.c.l.b16 %v5571
    %v5850 = vunpack.c.h.b16 %v5571
    %v5851 = vunpack.c.l.b16 %v5572
    %v5852 = vunpack.c.h.b16 %v5572
    %v5853 = vunpack.c.l.b16 %v5573
    %v5854 = vunpack.c.h.b16 %v5573
    %v5855 = vunpack.c.l.b16 %v5574
    %v5856 = vunpack.c.h.b16 %v5574
    %v5857 = vunpack.c.l.b16 %v5575
    %v5858 = vunpack.c.h.b16 %v5575
    %v5859 = vunpack.c.l.b16 %v5576
    %v5860 = vunpack.c.h.b16 %v5576
    %v5861 = vunpack.c.l.b16 %v5577
    %v5862 = vunpack.c.h.b16 %v5577
    %v5863 = vunpack.c.l.b16 %v5578
    %v5864 = vunpack.c.h.b16 %v5578
    %v5865 = vunpack.c.l.b16 %v5579
    %v5866 = vunpack.c.h.b16 %v5579
    %v5867 = vunpack.c.l.b16 %v5580
    %v5868 = vunpack.c.h.b16 %v5580
    %v5869 = vunpack.c.l.b16 %v5581
    %v5870 = vunpack.c.h.b16 %v5581
    %v5871 = vunpack.c.l.b16 %v5582
    %v5872 = vunpack.c.h.b16 %v5582
    %v5873 = vunpack.c.l.b16 %v5583
    %v5874 = vunpack.c.h.b16 %v5583
    %v5875 = vunpack.c.l.b16 %v5584
    %v5876 = vunpack.c.h.b16 %v5584
    %v5877 = vunpack.c.l.b16 %v5585
    %v5878 = vunpack.c.h.b16 %v5585
    %v5879 = vunpack.c.l.b16 %v5586
    %v5880 = vunpack.c.h.b16 %v5586
    %v5881 = vunpack.c.l.b16 %v5587
    %v5882 = vunpack.c.h.b16 %v5587
    %v5883 = vunpack.c.l.b16 %v5588
    %v5884 = vunpack.c.h.b16 %v5588
    %v5885 = vunpack.c.l.b16 %v5589
    %v5886 = vunpack.c.h.b16 %v5589
    %v5887 = vunpack.c.l.b16 %v5590
    %v5888 = vunpack.c.h.b16 %v5590
    %v5889 = vunpack.c.l.b16 %v5591
    %v5890 = vunpack.c.h.b16 %v5591
    %v5891 = vunpack.c.l.b16 %v5592
    %v5892 = vunpack.c.h.b16 %v5592
    %v5893 = vunpack.c.l.b16 %v5593
    %v5894 = vunpack.c.h.b16 %v5593
    %v5895 = vunpack.c.l.b16 %v5594
    %v5896 = vunpack.c.h.b16 %v5594
    %v5897 = vunpack.c.l.b16 %v5595
    %v5898 = vunpack.c.h.b16 %v5595
    %v5899 = vunpack.c.l.b16 %v5596
    %v5900 = vunpack.c.h.b16 %v5596
    %v5901 = vunpack.c.l.b16 %v5597
    %v5902 = vunpack.c.h.b16 %v5597
    %v5903 = vunpack.c.l.b16 %v5598
    %v5904 = vunpack.c.h.b16 %v5598
    %v5905 = vunpack.c.l.b16 %v5599
    %v5906 = vunpack.c.h.b16 %v5599
    %v5907 = vunpack.c.l.b16 %v5600
    %v5908 = vunpack.c.h.b16 %v5600
    %v5909 = vunpack.c.l.b16 %v5601
    %v5910 = vunpack.c.h.b16 %v5601
    %v5911 = vunpack.c.l.b16 %v5602
    %v5912 = vunpack.c.h.b16 %v5602
    %v5913 = vunpack.c.l.b16 %v5603
    %v5914 = vunpack.c.h.b16 %v5603
    %v5915 = vunpack.c.l.b16 %v5604
    %v5916 = vunpack.c.h.b16 %v5604
    %v5917 = vunpack.c.l.b16 %v5605
    %v5918 = vunpack.c.h.b16 %v5605
    %v5919 = vunpack.c.l.b16 %v5606
    %v5920 = vunpack.c.h.b16 %v5606
    %v5921 = vunpack.c.l.b16 %v5607
    %v5922 = vunpack.c.h.b16 %v5607
    %v5923 = vunpack.c.l.b16 %v5608
    %v5924 = vunpack.c.h.b16 %v5608
    %v5925 = vunpack.c.l.b16 %v5609
    %v5926 = vunpack.c.h.b16 %v5609
    %v5927 = vunpack.c.l.b16 %v5610
    %v5928 = vunpack.c.h.b16 %v5610
    %v5929 = vunpack.c.l.b16 %v5611
    %v5930 = vunpack.c.h.b16 %v5611
    %v5931 = vunpack.c.l.b16 %v5612
    %v5932 = vunpack.c.h.b16 %v5612
    %v5933 = vunpack.c.l.b16 %v5613
    %v5934 = vunpack.c.h.b16 %v5613
    %v5935 = vunpack.c.l.b16 %v5614
    %v5936 = vunpack.c.h.b16 %v5614
    %v5937 = vunpack.c.l.b16 %v5615
    %v5938 = vunpack.c.h.b16 %v5615
    %v5939 = vunpack.c.l.b16 %v5616
    %v5940 = vunpack.c.h.b16 %v5616
    %v5941 = vunpack.c.l.b16 %v5617
    %v5942 = vunpack.c.h.b16 %v5617
    %v5943 = vunpack.c.l.b16 %v5618
    %v5944 = vunpack.c.h.b16 %v5618
    %v5945 = vunpack.c.l.b16 %v5619
    %v5946 = vunpack.c.h.b16 %v5619
    %v5947 = vunpack.c.l.b16 %v5620
    %v5948 = vunpack.c.h.b16 %v5620
    %v5949 = vunpack.c.l.b16 %v5621
    %v5950 = vunpack.c.h.b16 %v5621
    %v5951 = vunpack.c.l.b16 %v5622
    %v5952 = vunpack.c.h.b16 %v5622
    %v5953 = vunpack.c.l.b16 %v5623
    %v5954 = vunpack.c.h.b16 %v5623
    %v5955 = vunpack.c.l.b16 %v5624
    %v5956 = vunpack.c.h.b16 %v5624
    %v5957 = vunpack.c.l.b16 %v5625
    %v5958 = vunpack.c.h.b16 %v5625
    %v5959 = vunpack.c.l.b16 %v5626
    %v5960 = vunpack.c.h.b16 %v5626
    %v5961 = vunpack.c.l.b16 %v5627
    %v5962 = vunpack.c.h.b16 %v5627
    %v5963 = vunpack.c.l.b16 %v5628
    %v5964 = vunpack.c.h.b16 %v5628
    %v5965 = vunpack.c.l.b16 %v5629
    %v5966 = vunpack.c.h.b16 %v5629
    %v5967 = vunpack.c.l.b16 %v5630
    %v5968 = vunpack.c.h.b16 %v5630
    %v5969 = vunpack.c.l.b16 %v5631
    %v5970 = vunpack.c.h.b16 %v5631
    %v5971 = vunpack.c.l.b16 %v5632
    %v5972 = vunpack.c.h.b16 %v5632
    %v5973 = vunpack.c.l.b16 %v5633
    %v5974 = vunpack.c.h.b16 %v5633
    %v5975 = vunpack.c.l.b16 %v5634
    %v5976 = vunpack.c.h.b16 %v5634
    %v5977 = vunpack.c.l.b16 %v5635
    %v5978 = vunpack.c.h.b16 %v5635
    %v5979 = vunpack.c.l.b16 %v5636
    %v5980 = vunpack.c.h.b16 %v5636
    %v5981 = vunpack.c.l.b16 %v5637
    %v5982 = vunpack.c.h.b16 %v5637
    %v5983 = vunpack.c.l.b16 %v5638
    %v5984 = vunpack.c.h.b16 %v5638
    %v5985 = vunpack.c.l.b16 %v5639
    %v5986 = vunpack.c.h.b16 %v5639
    %v5987 = vunpack.c.l.b16 %v5640
    %v5988 = vunpack.c.h.b16 %v5640
    %v5989 = vunpack.c.l.b16 %v5641
    %v5990 = vunpack.c.h.b16 %v5641
    %v5991 = vunpack.c.l.b16 %v5642
    %v5992 = vunpack.c.h.b16 %v5642
    %v5993 = vunpack.c.l.b16 %v5643
    %v5994 = vunpack.c.h.b16 %v5643
    %v5995 = vunpack.c.l.b16 %v5644
    %v5996 = vunpack.c.h.b16 %v5644
    %v5997 = vunpack.c.l.b16 %v5645
    %v5998 = vunpack.c.h.b16 %v5645
    %v5999 = vunpack.c.l.b16 %v5646
    %v6000 = vunpack.c.h.b16 %v5646
    %v6001 = vunpack.c.l.b16 %v5647
    %v6002 = vunpack.c.h.b16 %v5647
    %v6003 = vunpack.c.l.b16 %v5648
    %v6004 = vunpack.c.h.b16 %v5648
    %v6005 = vunpack.c.l.b16 %v5649
    %v6006 = vunpack.c.h.b16 %v5649
    %v6007 = vunpack.c.l.b16 %v5650
    %v6008 = vunpack.c.h.b16 %v5650
    %v6009 = vunpack.c.l.b16 %v5651
    %v6010 = vunpack.c.h.b16 %v5651
    %v6011 = vunpack.c.l.b16 %v5652
    %v6012 = vunpack.c.h.b16 %v5652
    %v6013 = vunpack.c.l.b16 %v5653
    %v6014 = vunpack.c.h.b16 %v5653
    %v6015 = vunpack.c.l.b16 %v5654
    %v6016 = vunpack.c.h.b16 %v5654
    %v6017 = vunpack.c.l.b16 %v5655
    %v6018 = vunpack.c.h.b16 %v5655
    %v6019 = vunpack.c.l.b16 %v5656
    %v6020 = vunpack.c.h.b16 %v5656
    %v6021 = vunpack.c.l.b16 %v5657
    %v6022 = vunpack.c.h.b16 %v5657
    %v6023 = vunpack.c.l.b16 %v5658
    %v6024 = vunpack.c.h.b16 %v5658
    %v6025 = vunpack.c.l.b16 %v5659
    %v6026 = vunpack.c.h.b16 %v5659
    %v6027 = vunpack.c.l.b16 %v5660
    %v6028 = vunpack.c.h.b16 %v5660
    %v6029 = vunpack.c.l.b16 %v5661
    %v6030 = vunpack.c.h.b16 %v5661
    %v6031 = vunpack.c.l.b16 %v5662
    %v6032 = vunpack.c.h.b16 %v5662
    %v6033 = vunpack.c.l.b16 %v5663
    %v6034 = vunpack.c.h.b16 %v5663
    %v6035 = vunpack.c.l.b16 %v5664
    %v6036 = vunpack.c.h.b16 %v5664
    %v6037 = vunpack.c.l.b16 %v5665
    %v6038 = vunpack.c.h.b16 %v5665
    %v6039 = vunpack.c.l.b16 %v5666
    %v6040 = vunpack.c.h.b16 %v5666
    %v6041 = vunpack.c.l.b16 %v5667
    %v6042 = vunpack.c.h.b16 %v5667
    %v6043 = vunpack.c.l.b16 %v5668
    %v6044 = vunpack.c.h.b16 %v5668
    %v6045 = vunpack.c.l.b16 %v5669
    %v6046 = vunpack.c.h.b16 %v5669
    %v6047 = vunpack.c.l.b16 %v5670
    %v6048 = vunpack.c.h.b16 %v5670
    %v6049 = vunpack.c.l.b16 %v5671
    %v6050 = vunpack.c.h.b16 %v5671
    %v6051 = vunpack.c.l.b16 %v5672
    %v6052 = vunpack.c.h.b16 %v5672
    %v6053 = vunpack.c.l.b16 %v5673
    %v6054 = vunpack.c.h.b16 %v5673
    %v6055 = vunpack.c.l.b16 %v5674
    %v6056 = vunpack.c.h.b16 %v5674
    %v6057 = vunpack.c.l.b16 %v5675
    %v6058 = vunpack.c.h.b16 %v5675
    %v6059 = vunpack.c.l.b16 %v5676
    %v6060 = vunpack.c.h.b16 %v5676
    %v6061 = vpack.c.b16 %v5813, %v5805
    %v6062 = vpack.c.b16 %v5814, %v5806
    %v6063 = vpack.c.b16 %v5815, %v5807
    %v6064 = vpack.c.b16 %v5816, %v5808
    %v6065 = vpack.c.b16 %v5817, %v5809
    %v6066 = vpack.c.b16 %v5818, %v5810
    %v6067 = vpack.c.b16 %v5819, %v5811
    %v6068 = vpack.c.b16 %v5820, %v5812
    %v6069 = vpack.c.b16 %v5829, %v5821
    %v6070 = vpack.c.b16 %v5830, %v5822
    %v6071 = vpack.c.b16 %v5831, %v5823
    %v6072 = vpack.c.b16 %v5832, %v5824
    %v6073 = vpack.c.b16 %v5833, %v5825
    %v6074 = vpack.c.b16 %v5834, %v5826
    %v6075 = vpack.c.b16 %v5835, %v5827
    %v6076 = vpack.c.b16 %v5836, %v5828
    %v6077 = vpack.c.b16 %v5845, %v5837
    %v6078 = vpack.c.b16 %v5846, %v5838
    %v6079 = vpack.c.b16 %v5847, %v5839
    %v6080 = vpack.c.b16 %v5848, %v5840
    %v6081 = vpack.c.b16 %v5849, %v5841
    %v6082 = vpack.c.b16 %v5850, %v5842
    %v6083 = vpack.c.b16 %v5851, %v5843
    %v6084 = vpack.c.b16 %v5852, %v5844
    %v6085 = vpack.c.b16 %v5861, %v5853
    %v6086 = vpack.c.b16 %v5862, %v5854
    %v6087 = vpack.c.b16 %v5863, %v5855
    %v6088 = vpack.c.b16 %v5864, %v5856
    %v6089 = vpack.c.b16 %v5865, %v5857
    %v6090 = vpack.c.b16 %v5866, %v5858
    %v6091 = vpack.c.b16 %v5867, %v5859
    %v6092 = vpack.c.b16 %v5868, %v5860
    %v6093 = vpack.c.b16 %v5877, %v5869
    %v6094 = vpack.c.b16 %v5878, %v5870
    %v6095 = vpack.c.b16 %v5879, %v5871
    %v6096 = vpack.c.b16 %v5880, %v5872
    %v6097 = vpack.c.b16 %v5881, %v5873
    %v6098 = vpack.c.b16 %v5882, %v5874
    %v6099 = vpack.c.b16 %v5883, %v5875
    %v6100 = vpack.c.b16 %v5884, %v5876
    %v6101 = vpack.c.b16 %v5893, %v5885
    %v6102 = vpack.c.b16 %v5894, %v5886
    %v6103 = vpack.c.b16 %v5895, %v5887
    %v6104 = vpack.c.b16 %v5896, %v5888
    %v6105 = vpack.c.b16 %v5897, %v5889
    %v6106 = vpack.c.b16 %v5898, %v5890
    %v6107 = vpack.c.b16 %v5899, %v5891
    %v6108 = vpack.c.b16 %v5900, %v5892
    %v6109 = vpack.c.b16 %v5909, %v5901
    %v6110 = vpack.c.b16 %v5910, %v5902
    %v6111 = vpack.c.b16 %v5911, %v5903
    %v6112 = vpack.c.b16 %v5912, %v5904
    %v6113 = vpack.c.b16 %v5913, %v5905
    %v6114 = vpack.c.b16 %v5914, %v5906
    %v6115 = vpack.c.b16 %v5915, %v5907
    %v6116 = vpack.c.b16 %v5916, %v5908
    %v6117 = vpack.c.b16 %v5925, %v5917
    %v6118 = vpack.c.b16 %v5926, %v5918
    %v6119 = vpack.c.b16 %v5927, %v5919
    %v6120 = vpack.c.b16 %v5928, %v5920
    %v6121 = vpack.c.b16 %v5929, %v5921
    %v6122 = vpack.c.b16 %v5930, %v5922
    %v6123 = vpack.c.b16 %v5931, %v5923
    %v6124 = vpack.c.b16 %v5932, %v5924
    %v6125 = vpack.c.b16 %v5941, %v5933
    %v6126 = vpack.c.b16 %v5942, %v5934
    %v6127 = vpack.c.b16 %v5943, %v5935
    %v6128 = vpack.c.b16 %v5944, %v5936
    %v6129 = vpack.c.b16 %v5945, %v5937
    %v6130 = vpack.c.b16 %v5946, %v5938
    %v6131 = vpack.c.b16 %v5947, %v5939
    %v6132 = vpack.c.b16 %v5948, %v5940
    %v6133 = vpack.c.b16 %v5957, %v5949
    %v6134 = vpack.c.b16 %v5958, %v5950
    %v6135 = vpack.c.b16 %v5959, %v5951
    %v6136 = vpack.c.b16 %v5960, %v5952
    %v6137 = vpack.c.b16 %v5961, %v5953
    %v6138 = vpack.c.b16 %v5962, %v5954
    %v6139 = vpack.c.b16 %v5963, %v5955
    %v6140 = vpack.c.b16 %v5964, %v5956
    %v6141 = vpack.c.b16 %v5973, %v5965
    %v6142 = vpack.c.b16 %v5974, %v5966
    %v6143 = vpack.c.b16 %v5975, %v5967
    %v6144 = vpack.c.b16 %v5976, %v5968
    %v6145 = vpack.c.b16 %v5977, %v5969
    %v6146 = vpack.c.b16 %v5978, %v5970
    %v6147 = vpack.c.b16 %v5979, %v5971
    %v6148 = vpack.c.b16 %v5980, %v5972
    %v6149 = vpack.c.b16 %v5989, %v5981
    %v6150 = vpack.c.b16 %v5990, %v5982
    %v6151 = vpack.c.b16 %v5991, %v5983
    %v6152 = vpack.c.b16 %v5992, %v5984
    %v6153 = vpack.c.b16 %v5993, %v5985
    %v6154 = vpack.c.b16 %v5994, %v5986
    %v6155 = vpack.c.b16 %v5995, %v5987
    %v6156 = vpack.c.b16 %v5996, %v5988
    %v6157 = vpack.c.b16 %v6005, %v5997
    %v6158 = vpack.c.b16 %v6006, %v5998
    %v6159 = vpack.c.b16 %v6007, %v5999
    %v6160 = vpack.c.b16 %v6008, %v6000
    %v6161 = vpack.c.b16 %v6009, %v6001
    %v6162 = vpack.c.b16 %v6010, %v6002
    %v6163 = vpack.c.b16 %v6011, %v6003
    %v6164 = vpack.c.b16 %v6012, %v6004
    %v6165 = vpack.c.b16 %v6021, %v6013
    %v6166 = vpack.c.b16 %v6022, %v6014
    %v6167 = vpack.c.b16 %v6023, %v6015
    %v6168 = vpack.c.b16 %v6024, %v6016
    %v6169 = vpack.c.b16 %v6025, %v6017
    %v6170 = vpack.c.b16 %v6026, %v6018
    %v6171 = vpack.c.b16 %v6027, %v6019
    %v6172 = vpack.c.b16 %v6028, %v6020
    %v6173 = vpack.c.b16 %v6037, %v6029
    %v6174 = vpack.c.b16 %v6038, %v6030
    %v6175 = vpack.c.b16 %v6039, %v6031
    %v6176 = vpack.c.b16 %v6040, %v6032
    %v6177 = vpack.c.b16 %v6041, %v6033
    %v6178 = vpack.c.b16 %v6042, %v6034
    %v6179 = vpack.c.b16 %v6043, %v6035
    %v6180 = vpack.c.b16 %v6044, %v6036
    %v6181 = vpack.c.b16 %v6053, %v6045
    %v6182 = vpack.c.b16 %v6054, %v6046
    %v6183 = vpack.c.b16 %v6055, %v6047
    %v6184 = vpack.c.b16 %v6056, %v6048
    %v6185 = vpack.c.b16 %v6057, %v6049
    %v6186 = vpack.c.b16 %v6058, %v6050
    %v6187 = vpack.c.b16 %v6059, %v6051
    %v6188 = vpack.c.b16 %v6060, %v6052
    %6317 = vmatpush.bf16.msra.mxu0 %v6117
    %6318 = vmatpush.bf16.msra.mxu0 %v6109
    %6319 = vmatpush.bf16.msra.mxu0 %v6101
    %6320 = vmatpush.bf16.msra.mxu0 %v6093
    %6321 = vmatpush.bf16.msra.mxu0 %v6085
    %6322 = vmatpush.bf16.msra.mxu0 %v6077
    %6323 = vmatpush.bf16.msra.mxu0 %v6069
    %6324 = vmatpush.bf16.msra.mxu0 %v6061
    %6325 = vmatmul.bf16.gmra.mxu0 %v5547
    %v6326 = vpop.f32.mrf.mxu0
    %v6327 = vadd.f32 0.0, %v6326
    %v6328 = vpop.f32.mrf.mxu0
    %6329 = vdwg.mxu0
    %6330 = vmatpush.bf16.msra.mxu0 %v6181
    %6331 = vmatpush.bf16.msra.mxu0 %v6173
    %6332 = vmatpush.bf16.msra.mxu0 %v6165
    %6333 = vmatpush.bf16.msra.mxu0 %v6157
    %6334 = vmatpush.bf16.msra.mxu0 %v6149
    %6335 = vmatpush.bf16.msra.mxu0 %v6141
    %6336 = vmatpush.bf16.msra.mxu0 %v6133
    %6337 = vmatpush.bf16.msra.mxu0 %v6125
    %6338 = vmatmul.bf16.gmra.mxu0 %v5548
    %v6339 = vpop.f32.mrf.mxu0
    %v6340 = vadd.f32 %v6327, %v6339
    %v6341 = vpop.f32.mrf.mxu0
    %6342 = vdwg.mxu0
    %6343 = vmatpush.bf16.msra.mxu0 %v6118
    %6344 = vmatpush.bf16.msra.mxu0 %v6110
    %6345 = vmatpush.bf16.msra.mxu0 %v6102
    %6346 = vmatpush.bf16.msra.mxu0 %v6094
    %6347 = vmatpush.bf16.msra.mxu0 %v6086
    %6348 = vmatpush.bf16.msra.mxu0 %v6078
    %6349 = vmatpush.bf16.msra.mxu0 %v6070
    %6350 = vmatpush.bf16.msra.mxu0 %v6062
    %6351 = vmatmul.bf16.gmra.mxu0 %v5547
    %v6352 = vpop.f32.mrf.mxu0
    %v6353 = vadd.f32 0.0, %v6352
    %v6354 = vpop.f32.mrf.mxu0
    %6355 = vdwg.mxu0
    %6356 = vmatpush.bf16.msra.mxu0 %v6182
    %6357 = vmatpush.bf16.msra.mxu0 %v6174
    %6358 = vmatpush.bf16.msra.mxu0 %v6166
    %6359 = vmatpush.bf16.msra.mxu0 %v6158
    %6360 = vmatpush.bf16.msra.mxu0 %v6150
    %6361 = vmatpush.bf16.msra.mxu0 %v6142
    %6362 = vmatpush.bf16.msra.mxu0 %v6134
    %6363 = vmatpush.bf16.msra.mxu0 %v6126
    %6364 = vmatmul.bf16.gmra.mxu0 %v5548
    %v6365 = vpop.f32.mrf.mxu0
    %v6366 = vadd.f32 %v6353, %v6365
    %v6367 = vpop.f32.mrf.mxu0
    %6368 = vdwg.mxu0
    %6369 = vmatpush.bf16.msra.mxu0 %v6119
    %6370 = vmatpush.bf16.msra.mxu0 %v6111
    %6371 = vmatpush.bf16.msra.mxu0 %v6103
    %6372 = vmatpush.bf16.msra.mxu0 %v6095
    %6373 = vmatpush.bf16.msra.mxu0 %v6087
    %6374 = vmatpush.bf16.msra.mxu0 %v6079
    %6375 = vmatpush.bf16.msra.mxu0 %v6071
    %6376 = vmatpush.bf16.msra.mxu0 %v6063
    %6377 = vmatmul.bf16.gmra.mxu0 %v5547
    %v6378 = vpop.f32.mrf.mxu0
    %v6379 = vadd.f32 0.0, %v6378
    %v6380 = vpop.f32.mrf.mxu0
    %6381 = vdwg.mxu0
    %6382 = vmatpush.bf16.msra.mxu0 %v6183
    %6383 = vmatpush.bf16.msra.mxu0 %v6175
    %6384 = vmatpush.bf16.msra.mxu0 %v6167
    %6385 = vmatpush.bf16.msra.mxu0 %v6159
    %6386 = vmatpush.bf16.msra.mxu0 %v6151
    %6387 = vmatpush.bf16.msra.mxu0 %v6143
    %6388 = vmatpush.bf16.msra.mxu0 %v6135
    %6389 = vmatpush.bf16.msra.mxu0 %v6127
    %6390 = vmatmul.bf16.gmra.mxu0 %v5548
    %v6391 = vpop.f32.mrf.mxu0
    %v6392 = vadd.f32 %v6379, %v6391
    %v6393 = vpop.f32.mrf.mxu0
    %6394 = vdwg.mxu0
    %6395 = vmatpush.bf16.msra.mxu0 %v6120
    %6396 = vmatpush.bf16.msra.mxu0 %v6112
    %6397 = vmatpush.bf16.msra.mxu0 %v6104
    %6398 = vmatpush.bf16.msra.mxu0 %v6096
    %6399 = vmatpush.bf16.msra.mxu0 %v6088
    %6400 = vmatpush.bf16.msra.mxu0 %v6080
    %6401 = vmatpush.bf16.msra.mxu0 %v6072
    %6402 = vmatpush.bf16.msra.mxu0 %v6064
    %6403 = vmatmul.bf16.gmra.mxu0 %v5547
    %v6404 = vpop.f32.mrf.mxu0
    %v6405 = vadd.f32 0.0, %v6404
    %v6406 = vpop.f32.mrf.mxu0
    %6407 = vdwg.mxu0
    %6408 = vmatpush.bf16.msra.mxu0 %v6184
    %6409 = vmatpush.bf16.msra.mxu0 %v6176
    %6410 = vmatpush.bf16.msra.mxu0 %v6168
    %6411 = vmatpush.bf16.msra.mxu0 %v6160
    %6412 = vmatpush.bf16.msra.mxu0 %v6152
    %6413 = vmatpush.bf16.msra.mxu0 %v6144
    %6414 = vmatpush.bf16.msra.mxu0 %v6136
    %6415 = vmatpush.bf16.msra.mxu0 %v6128
    %6416 = vmatmul.bf16.gmra.mxu0 %v5548
    %v6417 = vpop.f32.mrf.mxu0
    %v6418 = vadd.f32 %v6405, %v6417
    %v6419 = vpop.f32.mrf.mxu0
    %6420 = vdwg.mxu0
    %6421 = vmatpush.bf16.msra.mxu0 %v6121
    %6422 = vmatpush.bf16.msra.mxu0 %v6113
    %6423 = vmatpush.bf16.msra.mxu0 %v6105
    %6424 = vmatpush.bf16.msra.mxu0 %v6097
    %6425 = vmatpush.bf16.msra.mxu0 %v6089
    %6426 = vmatpush.bf16.msra.mxu0 %v6081
    %6427 = vmatpush.bf16.msra.mxu0 %v6073
    %6428 = vmatpush.bf16.msra.mxu0 %v6065
    %6429 = vmatmul.bf16.gmra.mxu0 %v5547
    %v6430 = vpop.f32.mrf.mxu0
    %v6431 = vadd.f32 0.0, %v6430
    %v6432 = vpop.f32.mrf.mxu0
    %6433 = vdwg.mxu0
    %6434 = vmatpush.bf16.msra.mxu0 %v6185
    %6435 = vmatpush.bf16.msra.mxu0 %v6177
    %6436 = vmatpush.bf16.msra.mxu0 %v6169
    %6437 = vmatpush.bf16.msra.mxu0 %v6161
    %6438 = vmatpush.bf16.msra.mxu0 %v6153
    %6439 = vmatpush.bf16.msra.mxu0 %v6145
    %6440 = vmatpush.bf16.msra.mxu0 %v6137
    %6441 = vmatpush.bf16.msra.mxu0 %v6129
    %6442 = vmatmul.bf16.gmra.mxu0 %v5548
    %v6443 = vpop.f32.mrf.mxu0
    %v6444 = vadd.f32 %v6431, %v6443
    %v6445 = vpop.f32.mrf.mxu0
    %6446 = vdwg.mxu0
    %6447 = vmatpush.bf16.msra.mxu0 %v6122
    %6448 = vmatpush.bf16.msra.mxu0 %v6114
    %6449 = vmatpush.bf16.msra.mxu0 %v6106
    %6450 = vmatpush.bf16.msra.mxu0 %v6098
    %6451 = vmatpush.bf16.msra.mxu0 %v6090
    %6452 = vmatpush.bf16.msra.mxu0 %v6082
    %6453 = vmatpush.bf16.msra.mxu0 %v6074
    %6454 = vmatpush.bf16.msra.mxu0 %v6066
    %6455 = vmatmul.bf16.gmra.mxu0 %v5547
    %v6456 = vpop.f32.mrf.mxu0
    %v6457 = vadd.f32 0.0, %v6456
    %v6458 = vpop.f32.mrf.mxu0
    %6459 = vdwg.mxu0
    %6460 = vmatpush.bf16.msra.mxu0 %v6186
    %6461 = vmatpush.bf16.msra.mxu0 %v6178
    %6462 = vmatpush.bf16.msra.mxu0 %v6170
    %6463 = vmatpush.bf16.msra.mxu0 %v6162
    %6464 = vmatpush.bf16.msra.mxu0 %v6154
    %6465 = vmatpush.bf16.msra.mxu0 %v6146
    %6466 = vmatpush.bf16.msra.mxu0 %v6138
    %6467 = vmatpush.bf16.msra.mxu0 %v6130
    %6468 = vmatmul.bf16.gmra.mxu0 %v5548
    %v6469 = vpop.f32.mrf.mxu0
    %v6470 = vadd.f32 %v6457, %v6469
    %v6471 = vpop.f32.mrf.mxu0
    %6472 = vdwg.mxu0
    %6473 = vmatpush.bf16.msra.mxu0 %v6123
    %6474 = vmatpush.bf16.msra.mxu0 %v6115
    %6475 = vmatpush.bf16.msra.mxu0 %v6107
    %6476 = vmatpush.bf16.msra.mxu0 %v6099
    %6477 = vmatpush.bf16.msra.mxu0 %v6091
    %6478 = vmatpush.bf16.msra.mxu0 %v6083
    %6479 = vmatpush.bf16.msra.mxu0 %v6075
    %6480 = vmatpush.bf16.msra.mxu0 %v6067
    %6481 = vmatmul.bf16.gmra.mxu0 %v5547
    %v6482 = vpop.f32.mrf.mxu0
    %v6483 = vadd.f32 0.0, %v6482
    %v6484 = vpop.f32.mrf.mxu0
    %6485 = vdwg.mxu0
    %6486 = vmatpush.bf16.msra.mxu0 %v6187
    %6487 = vmatpush.bf16.msra.mxu0 %v6179
    %6488 = vmatpush.bf16.msra.mxu0 %v6171
    %6489 = vmatpush.bf16.msra.mxu0 %v6163
    %6490 = vmatpush.bf16.msra.mxu0 %v6155
    %6491 = vmatpush.bf16.msra.mxu0 %v6147
    %6492 = vmatpush.bf16.msra.mxu0 %v6139
    %6493 = vmatpush.bf16.msra.mxu0 %v6131
    %6494 = vmatmul.bf16.gmra.mxu0 %v5548
    %v6495 = vpop.f32.mrf.mxu0
    %v6496 = vadd.f32 %v6483, %v6495
    %v6497 = vpop.f32.mrf.mxu0
    %6498 = vdwg.mxu0
    %6499 = vmatpush.bf16.msra.mxu0 %v6124
    %6500 = vmatpush.bf16.msra.mxu0 %v6116
    %6501 = vmatpush.bf16.msra.mxu0 %v6108
    %6502 = vmatpush.bf16.msra.mxu0 %v6100
    %6503 = vmatpush.bf16.msra.mxu0 %v6092
    %6504 = vmatpush.bf16.msra.mxu0 %v6084
    %6505 = vmatpush.bf16.msra.mxu0 %v6076
    %6506 = vmatpush.bf16.msra.mxu0 %v6068
    %6507 = vmatmul.bf16.gmra.mxu0 %v5547
    %v6508 = vpop.f32.mrf.mxu0
    %v6509 = vadd.f32 0.0, %v6508
    %v6510 = vpop.f32.mrf.mxu0
    %6511 = vdwg.mxu0
    %6512 = vmatpush.bf16.msra.mxu0 %v6188
    %6513 = vmatpush.bf16.msra.mxu0 %v6180
    %6514 = vmatpush.bf16.msra.mxu0 %v6172
    %6515 = vmatpush.bf16.msra.mxu0 %v6164
    %6516 = vmatpush.bf16.msra.mxu0 %v6156
    %6517 = vmatpush.bf16.msra.mxu0 %v6148
    %6518 = vmatpush.bf16.msra.mxu0 %v6140
    %6519 = vmatpush.bf16.msra.mxu0 %v6132
    %6520 = vmatmul.bf16.gmra.mxu0 %v5548
    %v6521 = vpop.f32.mrf.mxu0
    %v6522 = vadd.f32 %v6509, %v6521
    %v6523 = vpop.f32.mrf.mxu0
    %6524 = vdwg.mxu0
    %v6525 = vld [vmem:[%s5359] sm:$0xff]
    %v6526 = vld [vmem:[%s5357] sm:$0xff]
    %s6527 = scalar_lea.vmem [#allocation2], 128
    %v6528 = vld [vmem:[%s6527] sm:$0xff]
    %v6529 = vld [vmem:[%s6527 + $0x8] sm:$0xff]
    %v6530 = vld [vmem:[%s6527 + $0x10] sm:$0xff]
    %v6531 = vld [vmem:[%s6527 + $0x18] sm:$0xff]
    %v6532 = vadd.f32 %v6528, %v6340
    %v6533 = vadd.f32 %v6529, %v6366
    %v6534 = vadd.f32 %v6530, %v6392
    %v6535 = vadd.f32 %v6531, %v6418
    %s6536 = scalar_lea.vmem [#allocation3], 96
    %v6537 = vld [vmem:[%s6536] sm:$0xff]
    %v6538 = vld [vmem:[%s6536 + $0x8] sm:$0xff]
    %v6539 = vld [vmem:[%s6536 + $0x10] sm:$0xff]
    %v6540 = vld [vmem:[%s6536 + $0x18] sm:$0xff]
    %v6541 = vadd.f32 %v6537, %v6444
    %v6542 = vadd.f32 %v6538, %v6470
    %v6543 = vadd.f32 %v6539, %v6496
    %v6544 = vadd.f32 %v6540, %v6522
    %v6545 = vld [vmem:[#allocation7] sm:$0xff]
    %v6546 = vxor.u32 %v6532, 2147483648
    %v6547 = vmul.f32 %v6546, 1.442695
    %v6548 = vpow.pop %v6547
    %v6549 = vadd.f32 %v6548, 1.0
    %v6550 = vrcp.pop %v6549
    %v6551 = vmul.f32 %v6549, %v6550
    %v6552 = vsub.f32 1.0, %v6551
    %v6553 = vmul.f32 %v6550, %v6552
    %v6554 = vadd.f32 %v6550, %v6553
    %vm6555 = vweird.f32 %v6549
    %vm6556 = vweird.f32 %v6550
    %vm6557 = vmor %vm6555, %vm6556
    %v6558 = vsel %vm6557, %v6550, %v6554
    %v6559 = vand.u32 2147483647, %v6549
    %vm6560 = vcmp.eq.f32.partialorder %v6559, 8.507059e+37
    %v6561 = vand.u32 %v6549, 2147483648
    %v6562 = vor.u32 1.1754944e-38, %v6561
    %v6563 = vsel %vm6560, %v6562, %v6558
    %v6564 = vmul.f32 1.0, %v6563
    %v6565 = vxor.u32 %v6533, 2147483648
    %v6566 = vmul.f32 %v6565, 1.442695
    %v6567 = vpow.pop %v6566
    %v6568 = vadd.f32 %v6567, 1.0
    %v6569 = vrcp.pop %v6568
    %v6570 = vmul.f32 %v6568, %v6569
    %v6571 = vsub.f32 1.0, %v6570
    %v6572 = vmul.f32 %v6569, %v6571
    %v6573 = vadd.f32 %v6569, %v6572
    %vm6574 = vweird.f32 %v6568
    %vm6575 = vweird.f32 %v6569
    %vm6576 = vmor %vm6574, %vm6575
    %v6577 = vsel %vm6576, %v6569, %v6573
    %v6578 = vand.u32 2147483647, %v6568
    %vm6579 = vcmp.eq.f32.partialorder %v6578, 8.507059e+37
    %v6580 = vand.u32 %v6568, 2147483648
    %v6581 = vor.u32 1.1754944e-38, %v6580
    %v6582 = vsel %vm6579, %v6581, %v6577
    %v6583 = vmul.f32 1.0, %v6582
    %v6584 = vtanh.pop %v6534
    %v6585 = vxor.u32 %v6535, 2147483648
    %v6586 = vmul.f32 %v6585, 1.442695
    %v6587 = vpow.pop %v6586
    %v6588 = vadd.f32 %v6587, 1.0
    %v6589 = vrcp.pop %v6588
    %v6590 = vmul.f32 %v6588, %v6589
    %v6591 = vsub.f32 1.0, %v6590
    %v6592 = vmul.f32 %v6589, %v6591
    %v6593 = vadd.f32 %v6589, %v6592
    %vm6594 = vweird.f32 %v6588
    %vm6595 = vweird.f32 %v6589
    %vm6596 = vmor %vm6594, %vm6595
    %v6597 = vsel %vm6596, %v6589, %v6593
    %v6598 = vand.u32 2147483647, %v6588
    %vm6599 = vcmp.eq.f32.partialorder %v6598, 8.507059e+37
    %v6600 = vand.u32 %v6588, 2147483648
    %v6601 = vor.u32 1.1754944e-38, %v6600
    %v6602 = vsel %vm6599, %v6601, %v6597
    %v6603 = vmul.f32 1.0, %v6602
    %v6604 = vmul.f32 %v6583, %v6545
    %v6605 = vmul.f32 %v6564, %v6584
    %v6606 = vadd.f32 %v6604, %v6605
    %v6607 = vtanh.pop %v6606
    %v6608 = vmul.f32 %v6603, %v6607
    %v6609 = vld [vmem:[#allocation8] sm:$0xff]
    %v6610 = vxor.u32 %v6541, 2147483648
    %v6611 = vmul.f32 %v6610, 1.442695
    %v6612 = vpow.pop %v6611
    %v6613 = vadd.f32 %v6612, 1.0
    %v6614 = vrcp.pop %v6613
    %v6615 = vmul.f32 %v6613, %v6614
    %v6616 = vsub.f32 1.0, %v6615
    %v6617 = vmul.f32 %v6614, %v6616
    %v6618 = vadd.f32 %v6614, %v6617
    %vm6619 = vweird.f32 %v6613
    %vm6620 = vweird.f32 %v6614
    %vm6621 = vmor %vm6619, %vm6620
    %v6622 = vsel %vm6621, %v6614, %v6618
    %v6623 = vand.u32 2147483647, %v6613
    %vm6624 = vcmp.eq.f32.partialorder %v6623, 8.507059e+37
    %v6625 = vand.u32 %v6613, 2147483648
    %v6626 = vor.u32 1.1754944e-38, %v6625
    %v6627 = vsel %vm6624, %v6626, %v6622
    %v6628 = vmul.f32 1.0, %v6627
    %v6629 = vxor.u32 %v6542, 2147483648
    %v6630 = vmul.f32 %v6629, 1.442695
    %v6631 = vpow.pop %v6630
    %v6632 = vadd.f32 %v6631, 1.0
    %v6633 = vrcp.pop %v6632
    %v6634 = vmul.f32 %v6632, %v6633
    %v6635 = vsub.f32 1.0, %v6634
    %v6636 = vmul.f32 %v6633, %v6635
    %v6637 = vadd.f32 %v6633, %v6636
    %vm6638 = vweird.f32 %v6632
    %vm6639 = vweird.f32 %v6633
    %vm6640 = vmor %vm6638, %vm6639
    %v6641 = vsel %vm6640, %v6633, %v6637
    %v6642 = vand.u32 2147483647, %v6632
    %vm6643 = vcmp.eq.f32.partialorder %v6642, 8.507059e+37
    %v6644 = vand.u32 %v6632, 2147483648
    %v6645 = vor.u32 1.1754944e-38, %v6644
    %v6646 = vsel %vm6643, %v6645, %v6641
    %v6647 = vmul.f32 1.0, %v6646
    %v6648 = vtanh.pop %v6543
    %v6649 = vxor.u32 %v6544, 2147483648
    %v6650 = vmul.f32 %v6649, 1.442695
    %v6651 = vpow.pop %v6650
    %v6652 = vadd.f32 %v6651, 1.0
    %v6653 = vrcp.pop %v6652
    %v6654 = vmul.f32 %v6652, %v6653
    %v6655 = vsub.f32 1.0, %v6654
    %v6656 = vmul.f32 %v6653, %v6655
    %v6657 = vadd.f32 %v6653, %v6656
    %vm6658 = vweird.f32 %v6652
    %vm6659 = vweird.f32 %v6653
    %vm6660 = vmor %vm6658, %vm6659
    %v6661 = vsel %vm6660, %v6653, %v6657
    %v6662 = vand.u32 2147483647, %v6652
    %vm6663 = vcmp.eq.f32.partialorder %v6662, 8.507059e+37
    %v6664 = vand.u32 %v6652, 2147483648
    %v6665 = vor.u32 1.1754944e-38, %v6664
    %v6666 = vsel %vm6663, %v6665, %v6661
    %v6667 = vmul.f32 1.0, %v6666
    %v6668 = vmul.f32 %v6647, %v6609
    %v6669 = vmul.f32 %v6628, %v6648
    %v6670 = vadd.f32 %v6668, %v6669
    %v6671 = vtanh.pop %v6670
    %v6672 = vmul.f32 %v6667, %v6671
    %vm6673 = vcmp.gt.f32.partialorder %v6525, 0.0
    %v6674 = vld [vmem:[#allocation6] sm:$0xff]
    %v6675 = vsel %vm6673, 1, 0
    %6676 = vset.pattern.permute.xlu0 0
    %6677 = vperm.xlu0 %6676, %v6675
    %v6678 = vpop.permute.xlu0 %6677
    %vm6679 = vcmp.eq.s32.totalorder %v6678, 1
    %v6680 = vsel %vm6679, %v6608, %v6674
    %vm6681 = vcmp.gt.f32.partialorder %v6526, 0.0
    %v6682 = vsel %vm6681, 1, 0
    %6683 = vset.pattern.permute.xlu0 0
    %6684 = vperm.xlu0 %6683, %v6682
    %v6685 = vpop.permute.xlu0 %6684
    %vm6686 = vcmp.eq.s32.totalorder %v6685, 1
    %v6687 = vsel %vm6686, %v6672, %v5546
    %v6688 = vsel %vm6679, %v6606, %v6545
    %6689 = vst [vmem:[#allocation7] sm:$0xff] %v6688
    %v6690 = vld [vmem:[#allocation8] sm:$0xff]
    %v6691 = vsel %vm6686, %v6670, %v6690
    %6692 = vst [vmem:[#allocation8] sm:$0xff] %v6691
    %6693 = vst [vmem:[#allocation6] sm:$0xff] %v6680
    %6694 = vst [vmem:[#allocation6 + $0x8] sm:$0xff] %v6687
    %6696 = vset.pattern.permute.xlu0 0
    %6697 = vperm.xlu0 %6696, %v6525
    %v6698 = vpop.permute.xlu0 %6697
    %v6700 = vmul.f32 %v6680, %v6698
    %s6701 = scalar_lea.vmem [#allocation4], 32
    %6702 = vst [vmem:[%s6701] sm:$0xff] %v6700
    %6704 = vset.pattern.permute.xlu0 0
    %6705 = vperm.xlu0 %6704, %v6526
    %v6706 = vpop.permute.xlu0 %6705
    %v6708 = vmul.f32 %v6687, %v6706
    %s6709 = scalar_lea.vmem [#allocation5], 24
    %6710 = vst [vmem:[%s6709] sm:$0xff] %v6708
    %v6711 = vld [vmem:[#allocation6] sm:$0xff]
    %v6712 = vld [vmem:[#allocation6 + $0x8] sm:$0xff]
    %v6713 = vpack.c.bf16 %v6711, %v6711
    %v6714 = vpack.c.bf16 %v6712, %v6712
    %v6715 = vld [vmem:[#allocation14] sm:$0xff]
    %v6716 = vld [vmem:[#allocation14 + $0x8] sm:$0xff]
    %v6717 = vld [vmem:[#allocation14 + $0x10] sm:$0xff]
    %v6718 = vld [vmem:[#allocation14 + $0x18] sm:$0xff]
    %v6719 = vld [vmem:[#allocation14 + $0x20] sm:$0xff]
    %v6720 = vld [vmem:[#allocation14 + $0x28] sm:$0xff]
    %v6721 = vld [vmem:[#allocation14 + $0x30] sm:$0xff]
    %v6722 = vld [vmem:[#allocation14 + $0x38] sm:$0xff]
    %v6723 = vld [vmem:[#allocation14 + $0x40] sm:$0xff]
    %v6724 = vld [vmem:[#allocation14 + $0x48] sm:$0xff]
    %v6725 = vld [vmem:[#allocation14 + $0x50] sm:$0xff]
    %v6726 = vld [vmem:[#allocation14 + $0x58] sm:$0xff]
    %v6727 = vld [vmem:[#allocation14 + $0x60] sm:$0xff]
    %v6728 = vld [vmem:[#allocation14 + $0x68] sm:$0xff]
    %v6729 = vld [vmem:[#allocation14 + $0x70] sm:$0xff]
    %v6730 = vld [vmem:[#allocation14 + $0x78] sm:$0xff]
    %v6731 = vld [vmem:[#allocation14 + $0x80] sm:$0xff]
    %v6732 = vld [vmem:[#allocation14 + $0x88] sm:$0xff]
    %v6733 = vld [vmem:[#allocation14 + $0x90] sm:$0xff]
    %v6734 = vld [vmem:[#allocation14 + $0x98] sm:$0xff]
    %v6735 = vld [vmem:[#allocation14 + $0xa0] sm:$0xff]
    %v6736 = vld [vmem:[#allocation14 + $0xa8] sm:$0xff]
    %v6737 = vld [vmem:[#allocation14 + $0xb0] sm:$0xff]
    %v6738 = vld [vmem:[#allocation14 + $0xb8] sm:$0xff]
    %v6739 = vld [vmem:[#allocation14 + $0xc0] sm:$0xff]
    %v6740 = vld [vmem:[#allocation14 + $0xc8] sm:$0xff]
    %v6741 = vld [vmem:[#allocation14 + $0xd0] sm:$0xff]
    %v6742 = vld [vmem:[#allocation14 + $0xd8] sm:$0xff]
    %v6743 = vld [vmem:[#allocation14 + $0xe0] sm:$0xff]
    %v6744 = vld [vmem:[#allocation14 + $0xe8] sm:$0xff]
    %v6745 = vld [vmem:[#allocation14 + $0xf0] sm:$0xff]
    %v6746 = vld [vmem:[#allocation14 + $0xf8] sm:$0xff]
    %v6747 = vld [vmem:[#allocation14 + $0x100] sm:$0xff]
    %v6748 = vld [vmem:[#allocation14 + $0x108] sm:$0xff]
    %v6749 = vld [vmem:[#allocation14 + $0x110] sm:$0xff]
    %v6750 = vld [vmem:[#allocation14 + $0x118] sm:$0xff]
    %v6751 = vld [vmem:[#allocation14 + $0x120] sm:$0xff]
    %v6752 = vld [vmem:[#allocation14 + $0x128] sm:$0xff]
    %v6753 = vld [vmem:[#allocation14 + $0x130] sm:$0xff]
    %v6754 = vld [vmem:[#allocation14 + $0x138] sm:$0xff]
    %v6755 = vld [vmem:[#allocation14 + $0x140] sm:$0xff]
    %v6756 = vld [vmem:[#allocation14 + $0x148] sm:$0xff]
    %v6757 = vld [vmem:[#allocation14 + $0x150] sm:$0xff]
    %v6758 = vld [vmem:[#allocation14 + $0x158] sm:$0xff]
    %v6759 = vld [vmem:[#allocation14 + $0x160] sm:$0xff]
    %v6760 = vld [vmem:[#allocation14 + $0x168] sm:$0xff]
    %v6761 = vld [vmem:[#allocation14 + $0x170] sm:$0xff]
    %v6762 = vld [vmem:[#allocation14 + $0x178] sm:$0xff]
    %v6763 = vld [vmem:[#allocation14 + $0x180] sm:$0xff]
    %v6764 = vld [vmem:[#allocation14 + $0x188] sm:$0xff]
    %v6765 = vld [vmem:[#allocation14 + $0x190] sm:$0xff]
    %v6766 = vld [vmem:[#allocation14 + $0x198] sm:$0xff]
    %v6767 = vld [vmem:[#allocation14 + $0x1a0] sm:$0xff]
    %v6768 = vld [vmem:[#allocation14 + $0x1a8] sm:$0xff]
    %v6769 = vld [vmem:[#allocation14 + $0x1b0] sm:$0xff]
    %v6770 = vld [vmem:[#allocation14 + $0x1b8] sm:$0xff]
    %v6771 = vld [vmem:[#allocation14 + $0x1c0] sm:$0xff]
    %v6772 = vld [vmem:[#allocation14 + $0x1c8] sm:$0xff]
    %v6773 = vld [vmem:[#allocation14 + $0x1d0] sm:$0xff]
    %v6774 = vld [vmem:[#allocation14 + $0x1d8] sm:$0xff]
    %v6775 = vld [vmem:[#allocation14 + $0x1e0] sm:$0xff]
    %v6776 = vld [vmem:[#allocation14 + $0x1e8] sm:$0xff]
    %v6777 = vld [vmem:[#allocation14 + $0x1f0] sm:$0xff]
    %v6778 = vld [vmem:[#allocation14 + $0x1f8] sm:$0xff]
    %v6779 = vld [vmem:[#allocation14 + $0x200] sm:$0xff]
    %v6780 = vld [vmem:[#allocation14 + $0x208] sm:$0xff]
    %v6781 = vld [vmem:[#allocation14 + $0x210] sm:$0xff]
    %v6782 = vld [vmem:[#allocation14 + $0x218] sm:$0xff]
    %v6783 = vld [vmem:[#allocation14 + $0x220] sm:$0xff]
    %v6784 = vld [vmem:[#allocation14 + $0x228] sm:$0xff]
    %v6785 = vld [vmem:[#allocation14 + $0x230] sm:$0xff]
    %v6786 = vld [vmem:[#allocation14 + $0x238] sm:$0xff]
    %v6787 = vld [vmem:[#allocation14 + $0x240] sm:$0xff]
    %v6788 = vld [vmem:[#allocation14 + $0x248] sm:$0xff]
    %v6789 = vld [vmem:[#allocation14 + $0x250] sm:$0xff]
    %v6790 = vld [vmem:[#allocation14 + $0x258] sm:$0xff]
    %v6791 = vld [vmem:[#allocation14 + $0x260] sm:$0xff]
    %v6792 = vld [vmem:[#allocation14 + $0x268] sm:$0xff]
    %v6793 = vld [vmem:[#allocation14 + $0x270] sm:$0xff]
    %v6794 = vld [vmem:[#allocation14 + $0x278] sm:$0xff]
    %v6795 = vld [vmem:[#allocation14 + $0x280] sm:$0xff]
    %v6796 = vld [vmem:[#allocation14 + $0x288] sm:$0xff]
    %v6797 = vld [vmem:[#allocation14 + $0x290] sm:$0xff]
    %v6798 = vld [vmem:[#allocation14 + $0x298] sm:$0xff]
    %v6799 = vld [vmem:[#allocation14 + $0x2a0] sm:$0xff]
    %v6800 = vld [vmem:[#allocation14 + $0x2a8] sm:$0xff]
    %v6801 = vld [vmem:[#allocation14 + $0x2b0] sm:$0xff]
    %v6802 = vld [vmem:[#allocation14 + $0x2b8] sm:$0xff]
    %v6803 = vld [vmem:[#allocation14 + $0x2c0] sm:$0xff]
    %v6804 = vld [vmem:[#allocation14 + $0x2c8] sm:$0xff]
    %v6805 = vld [vmem:[#allocation14 + $0x2d0] sm:$0xff]
    %v6806 = vld [vmem:[#allocation14 + $0x2d8] sm:$0xff]
    %v6807 = vld [vmem:[#allocation14 + $0x2e0] sm:$0xff]
    %v6808 = vld [vmem:[#allocation14 + $0x2e8] sm:$0xff]
    %v6809 = vld [vmem:[#allocation14 + $0x2f0] sm:$0xff]
    %v6810 = vld [vmem:[#allocation14 + $0x2f8] sm:$0xff]
    %v6811 = vld [vmem:[#allocation14 + $0x300] sm:$0xff]
    %v6812 = vld [vmem:[#allocation14 + $0x308] sm:$0xff]
    %v6813 = vld [vmem:[#allocation14 + $0x310] sm:$0xff]
    %v6814 = vld [vmem:[#allocation14 + $0x318] sm:$0xff]
    %v6815 = vld [vmem:[#allocation14 + $0x320] sm:$0xff]
    %v6816 = vld [vmem:[#allocation14 + $0x328] sm:$0xff]
    %v6817 = vld [vmem:[#allocation14 + $0x330] sm:$0xff]
    %v6818 = vld [vmem:[#allocation14 + $0x338] sm:$0xff]
    %v6819 = vld [vmem:[#allocation14 + $0x340] sm:$0xff]
    %v6820 = vld [vmem:[#allocation14 + $0x348] sm:$0xff]
    %v6821 = vld [vmem:[#allocation14 + $0x350] sm:$0xff]
    %v6822 = vld [vmem:[#allocation14 + $0x358] sm:$0xff]
    %v6823 = vld [vmem:[#allocation14 + $0x360] sm:$0xff]
    %v6824 = vld [vmem:[#allocation14 + $0x368] sm:$0xff]
    %v6825 = vld [vmem:[#allocation14 + $0x370] sm:$0xff]
    %v6826 = vld [vmem:[#allocation14 + $0x378] sm:$0xff]
    %v6827 = vld [vmem:[#allocation14 + $0x380] sm:$0xff]
    %v6828 = vld [vmem:[#allocation14 + $0x388] sm:$0xff]
    %v6829 = vld [vmem:[#allocation14 + $0x390] sm:$0xff]
    %v6830 = vld [vmem:[#allocation14 + $0x398] sm:$0xff]
    %v6831 = vld [vmem:[#allocation14 + $0x3a0] sm:$0xff]
    %v6832 = vld [vmem:[#allocation14 + $0x3a8] sm:$0xff]
    %v6833 = vld [vmem:[#allocation14 + $0x3b0] sm:$0xff]
    %v6834 = vld [vmem:[#allocation14 + $0x3b8] sm:$0xff]
    %v6835 = vld [vmem:[#allocation14 + $0x3c0] sm:$0xff]
    %v6836 = vld [vmem:[#allocation14 + $0x3c8] sm:$0xff]
    %v6837 = vld [vmem:[#allocation14 + $0x3d0] sm:$0xff]
    %v6838 = vld [vmem:[#allocation14 + $0x3d8] sm:$0xff]
    %v6839 = vld [vmem:[#allocation14 + $0x3e0] sm:$0xff]
    %v6840 = vld [vmem:[#allocation14 + $0x3e8] sm:$0xff]
    %v6841 = vld [vmem:[#allocation14 + $0x3f0] sm:$0xff]
    %v6842 = vld [vmem:[#allocation14 + $0x3f8] sm:$0xff]
    %v6971 = vunpack.c.l.b16 %v6715
    %v6972 = vunpack.c.h.b16 %v6715
    %v6973 = vunpack.c.l.b16 %v6716
    %v6974 = vunpack.c.h.b16 %v6716
    %v6975 = vunpack.c.l.b16 %v6717
    %v6976 = vunpack.c.h.b16 %v6717
    %v6977 = vunpack.c.l.b16 %v6718
    %v6978 = vunpack.c.h.b16 %v6718
    %v6979 = vunpack.c.l.b16 %v6719
    %v6980 = vunpack.c.h.b16 %v6719
    %v6981 = vunpack.c.l.b16 %v6720
    %v6982 = vunpack.c.h.b16 %v6720
    %v6983 = vunpack.c.l.b16 %v6721
    %v6984 = vunpack.c.h.b16 %v6721
    %v6985 = vunpack.c.l.b16 %v6722
    %v6986 = vunpack.c.h.b16 %v6722
    %v6987 = vunpack.c.l.b16 %v6723
    %v6988 = vunpack.c.h.b16 %v6723
    %v6989 = vunpack.c.l.b16 %v6724
    %v6990 = vunpack.c.h.b16 %v6724
    %v6991 = vunpack.c.l.b16 %v6725
    %v6992 = vunpack.c.h.b16 %v6725
    %v6993 = vunpack.c.l.b16 %v6726
    %v6994 = vunpack.c.h.b16 %v6726
    %v6995 = vunpack.c.l.b16 %v6727
    %v6996 = vunpack.c.h.b16 %v6727
    %v6997 = vunpack.c.l.b16 %v6728
    %v6998 = vunpack.c.h.b16 %v6728
    %v6999 = vunpack.c.l.b16 %v6729
    %v7000 = vunpack.c.h.b16 %v6729
    %v7001 = vunpack.c.l.b16 %v6730
    %v7002 = vunpack.c.h.b16 %v6730
    %v7003 = vunpack.c.l.b16 %v6731
    %v7004 = vunpack.c.h.b16 %v6731
    %v7005 = vunpack.c.l.b16 %v6732
    %v7006 = vunpack.c.h.b16 %v6732
    %v7007 = vunpack.c.l.b16 %v6733
    %v7008 = vunpack.c.h.b16 %v6733
    %v7009 = vunpack.c.l.b16 %v6734
    %v7010 = vunpack.c.h.b16 %v6734
    %v7011 = vunpack.c.l.b16 %v6735
    %v7012 = vunpack.c.h.b16 %v6735
    %v7013 = vunpack.c.l.b16 %v6736
    %v7014 = vunpack.c.h.b16 %v6736
    %v7015 = vunpack.c.l.b16 %v6737
    %v7016 = vunpack.c.h.b16 %v6737
    %v7017 = vunpack.c.l.b16 %v6738
    %v7018 = vunpack.c.h.b16 %v6738
    %v7019 = vunpack.c.l.b16 %v6739
    %v7020 = vunpack.c.h.b16 %v6739
    %v7021 = vunpack.c.l.b16 %v6740
    %v7022 = vunpack.c.h.b16 %v6740
    %v7023 = vunpack.c.l.b16 %v6741
    %v7024 = vunpack.c.h.b16 %v6741
    %v7025 = vunpack.c.l.b16 %v6742
    %v7026 = vunpack.c.h.b16 %v6742
    %v7027 = vunpack.c.l.b16 %v6743
    %v7028 = vunpack.c.h.b16 %v6743
    %v7029 = vunpack.c.l.b16 %v6744
    %v7030 = vunpack.c.h.b16 %v6744
    %v7031 = vunpack.c.l.b16 %v6745
    %v7032 = vunpack.c.h.b16 %v6745
    %v7033 = vunpack.c.l.b16 %v6746
    %v7034 = vunpack.c.h.b16 %v6746
    %v7035 = vunpack.c.l.b16 %v6747
    %v7036 = vunpack.c.h.b16 %v6747
    %v7037 = vunpack.c.l.b16 %v6748
    %v7038 = vunpack.c.h.b16 %v6748
    %v7039 = vunpack.c.l.b16 %v6749
    %v7040 = vunpack.c.h.b16 %v6749
    %v7041 = vunpack.c.l.b16 %v6750
    %v7042 = vunpack.c.h.b16 %v6750
    %v7043 = vunpack.c.l.b16 %v6751
    %v7044 = vunpack.c.h.b16 %v6751
    %v7045 = vunpack.c.l.b16 %v6752
    %v7046 = vunpack.c.h.b16 %v6752
    %v7047 = vunpack.c.l.b16 %v6753
    %v7048 = vunpack.c.h.b16 %v6753
    %v7049 = vunpack.c.l.b16 %v6754
    %v7050 = vunpack.c.h.b16 %v6754
    %v7051 = vunpack.c.l.b16 %v6755
    %v7052 = vunpack.c.h.b16 %v6755
    %v7053 = vunpack.c.l.b16 %v6756
    %v7054 = vunpack.c.h.b16 %v6756
    %v7055 = vunpack.c.l.b16 %v6757
    %v7056 = vunpack.c.h.b16 %v6757
    %v7057 = vunpack.c.l.b16 %v6758
    %v7058 = vunpack.c.h.b16 %v6758
    %v7059 = vunpack.c.l.b16 %v6759
    %v7060 = vunpack.c.h.b16 %v6759
    %v7061 = vunpack.c.l.b16 %v6760
    %v7062 = vunpack.c.h.b16 %v6760
    %v7063 = vunpack.c.l.b16 %v6761
    %v7064 = vunpack.c.h.b16 %v6761
    %v7065 = vunpack.c.l.b16 %v6762
    %v7066 = vunpack.c.h.b16 %v6762
    %v7067 = vunpack.c.l.b16 %v6763
    %v7068 = vunpack.c.h.b16 %v6763
    %v7069 = vunpack.c.l.b16 %v6764
    %v7070 = vunpack.c.h.b16 %v6764
    %v7071 = vunpack.c.l.b16 %v6765
    %v7072 = vunpack.c.h.b16 %v6765
    %v7073 = vunpack.c.l.b16 %v6766
    %v7074 = vunpack.c.h.b16 %v6766
    %v7075 = vunpack.c.l.b16 %v6767
    %v7076 = vunpack.c.h.b16 %v6767
    %v7077 = vunpack.c.l.b16 %v6768
    %v7078 = vunpack.c.h.b16 %v6768
    %v7079 = vunpack.c.l.b16 %v6769
    %v7080 = vunpack.c.h.b16 %v6769
    %v7081 = vunpack.c.l.b16 %v6770
    %v7082 = vunpack.c.h.b16 %v6770
    %v7083 = vunpack.c.l.b16 %v6771
    %v7084 = vunpack.c.h.b16 %v6771
    %v7085 = vunpack.c.l.b16 %v6772
    %v7086 = vunpack.c.h.b16 %v6772
    %v7087 = vunpack.c.l.b16 %v6773
    %v7088 = vunpack.c.h.b16 %v6773
    %v7089 = vunpack.c.l.b16 %v6774
    %v7090 = vunpack.c.h.b16 %v6774
    %v7091 = vunpack.c.l.b16 %v6775
    %v7092 = vunpack.c.h.b16 %v6775
    %v7093 = vunpack.c.l.b16 %v6776
    %v7094 = vunpack.c.h.b16 %v6776
    %v7095 = vunpack.c.l.b16 %v6777
    %v7096 = vunpack.c.h.b16 %v6777
    %v7097 = vunpack.c.l.b16 %v6778
    %v7098 = vunpack.c.h.b16 %v6778
    %v7099 = vunpack.c.l.b16 %v6779
    %v7100 = vunpack.c.h.b16 %v6779
    %v7101 = vunpack.c.l.b16 %v6780
    %v7102 = vunpack.c.h.b16 %v6780
    %v7103 = vunpack.c.l.b16 %v6781
    %v7104 = vunpack.c.h.b16 %v6781
    %v7105 = vunpack.c.l.b16 %v6782
    %v7106 = vunpack.c.h.b16 %v6782
    %v7107 = vunpack.c.l.b16 %v6783
    %v7108 = vunpack.c.h.b16 %v6783
    %v7109 = vunpack.c.l.b16 %v6784
    %v7110 = vunpack.c.h.b16 %v6784
    %v7111 = vunpack.c.l.b16 %v6785
    %v7112 = vunpack.c.h.b16 %v6785
    %v7113 = vunpack.c.l.b16 %v6786
    %v7114 = vunpack.c.h.b16 %v6786
    %v7115 = vunpack.c.l.b16 %v6787
    %v7116 = vunpack.c.h.b16 %v6787
    %v7117 = vunpack.c.l.b16 %v6788
    %v7118 = vunpack.c.h.b16 %v6788
    %v7119 = vunpack.c.l.b16 %v6789
    %v7120 = vunpack.c.h.b16 %v6789
    %v7121 = vunpack.c.l.b16 %v6790
    %v7122 = vunpack.c.h.b16 %v6790
    %v7123 = vunpack.c.l.b16 %v6791
    %v7124 = vunpack.c.h.b16 %v6791
    %v7125 = vunpack.c.l.b16 %v6792
    %v7126 = vunpack.c.h.b16 %v6792
    %v7127 = vunpack.c.l.b16 %v6793
    %v7128 = vunpack.c.h.b16 %v6793
    %v7129 = vunpack.c.l.b16 %v6794
    %v7130 = vunpack.c.h.b16 %v6794
    %v7131 = vunpack.c.l.b16 %v6795
    %v7132 = vunpack.c.h.b16 %v6795
    %v7133 = vunpack.c.l.b16 %v6796
    %v7134 = vunpack.c.h.b16 %v6796
    %v7135 = vunpack.c.l.b16 %v6797
    %v7136 = vunpack.c.h.b16 %v6797
    %v7137 = vunpack.c.l.b16 %v6798
    %v7138 = vunpack.c.h.b16 %v6798
    %v7139 = vunpack.c.l.b16 %v6799
    %v7140 = vunpack.c.h.b16 %v6799
    %v7141 = vunpack.c.l.b16 %v6800
    %v7142 = vunpack.c.h.b16 %v6800
    %v7143 = vunpack.c.l.b16 %v6801
    %v7144 = vunpack.c.h.b16 %v6801
    %v7145 = vunpack.c.l.b16 %v6802
    %v7146 = vunpack.c.h.b16 %v6802
    %v7147 = vunpack.c.l.b16 %v6803
    %v7148 = vunpack.c.h.b16 %v6803
    %v7149 = vunpack.c.l.b16 %v6804
    %v7150 = vunpack.c.h.b16 %v6804
    %v7151 = vunpack.c.l.b16 %v6805
    %v7152 = vunpack.c.h.b16 %v6805
    %v7153 = vunpack.c.l.b16 %v6806
    %v7154 = vunpack.c.h.b16 %v6806
    %v7155 = vunpack.c.l.b16 %v6807
    %v7156 = vunpack.c.h.b16 %v6807
    %v7157 = vunpack.c.l.b16 %v6808
    %v7158 = vunpack.c.h.b16 %v6808
    %v7159 = vunpack.c.l.b16 %v6809
    %v7160 = vunpack.c.h.b16 %v6809
    %v7161 = vunpack.c.l.b16 %v6810
    %v7162 = vunpack.c.h.b16 %v6810
    %v7163 = vunpack.c.l.b16 %v6811
    %v7164 = vunpack.c.h.b16 %v6811
    %v7165 = vunpack.c.l.b16 %v6812
    %v7166 = vunpack.c.h.b16 %v6812
    %v7167 = vunpack.c.l.b16 %v6813
    %v7168 = vunpack.c.h.b16 %v6813
    %v7169 = vunpack.c.l.b16 %v6814
    %v7170 = vunpack.c.h.b16 %v6814
    %v7171 = vunpack.c.l.b16 %v6815
    %v7172 = vunpack.c.h.b16 %v6815
    %v7173 = vunpack.c.l.b16 %v6816
    %v7174 = vunpack.c.h.b16 %v6816
    %v7175 = vunpack.c.l.b16 %v6817
    %v7176 = vunpack.c.h.b16 %v6817
    %v7177 = vunpack.c.l.b16 %v6818
    %v7178 = vunpack.c.h.b16 %v6818
    %v7179 = vunpack.c.l.b16 %v6819
    %v7180 = vunpack.c.h.b16 %v6819
    %v7181 = vunpack.c.l.b16 %v6820
    %v7182 = vunpack.c.h.b16 %v6820
    %v7183 = vunpack.c.l.b16 %v6821
    %v7184 = vunpack.c.h.b16 %v6821
    %v7185 = vunpack.c.l.b16 %v6822
    %v7186 = vunpack.c.h.b16 %v6822
    %v7187 = vunpack.c.l.b16 %v6823
    %v7188 = vunpack.c.h.b16 %v6823
    %v7189 = vunpack.c.l.b16 %v6824
    %v7190 = vunpack.c.h.b16 %v6824
    %v7191 = vunpack.c.l.b16 %v6825
    %v7192 = vunpack.c.h.b16 %v6825
    %v7193 = vunpack.c.l.b16 %v6826
    %v7194 = vunpack.c.h.b16 %v6826
    %v7195 = vunpack.c.l.b16 %v6827
    %v7196 = vunpack.c.h.b16 %v6827
    %v7197 = vunpack.c.l.b16 %v6828
    %v7198 = vunpack.c.h.b16 %v6828
    %v7199 = vunpack.c.l.b16 %v6829
    %v7200 = vunpack.c.h.b16 %v6829
    %v7201 = vunpack.c.l.b16 %v6830
    %v7202 = vunpack.c.h.b16 %v6830
    %v7203 = vunpack.c.l.b16 %v6831
    %v7204 = vunpack.c.h.b16 %v6831
    %v7205 = vunpack.c.l.b16 %v6832
    %v7206 = vunpack.c.h.b16 %v6832
    %v7207 = vunpack.c.l.b16 %v6833
    %v7208 = vunpack.c.h.b16 %v6833
    %v7209 = vunpack.c.l.b16 %v6834
    %v7210 = vunpack.c.h.b16 %v6834
    %v7211 = vunpack.c.l.b16 %v6835
    %v7212 = vunpack.c.h.b16 %v6835
    %v7213 = vunpack.c.l.b16 %v6836
    %v7214 = vunpack.c.h.b16 %v6836
    %v7215 = vunpack.c.l.b16 %v6837
    %v7216 = vunpack.c.h.b16 %v6837
    %v7217 = vunpack.c.l.b16 %v6838
    %v7218 = vunpack.c.h.b16 %v6838
    %v7219 = vunpack.c.l.b16 %v6839
    %v7220 = vunpack.c.h.b16 %v6839
    %v7221 = vunpack.c.l.b16 %v6840
    %v7222 = vunpack.c.h.b16 %v6840
    %v7223 = vunpack.c.l.b16 %v6841
    %v7224 = vunpack.c.h.b16 %v6841
    %v7225 = vunpack.c.l.b16 %v6842
    %v7226 = vunpack.c.h.b16 %v6842
    %v7227 = vpack.c.b16 %v6979, %v6971
    %v7228 = vpack.c.b16 %v6980, %v6972
    %v7229 = vpack.c.b16 %v6981, %v6973
    %v7230 = vpack.c.b16 %v6982, %v6974
    %v7231 = vpack.c.b16 %v6983, %v6975
    %v7232 = vpack.c.b16 %v6984, %v6976
    %v7233 = vpack.c.b16 %v6985, %v6977
    %v7234 = vpack.c.b16 %v6986, %v6978
    %v7235 = vpack.c.b16 %v6995, %v6987
    %v7236 = vpack.c.b16 %v6996, %v6988
    %v7237 = vpack.c.b16 %v6997, %v6989
    %v7238 = vpack.c.b16 %v6998, %v6990
    %v7239 = vpack.c.b16 %v6999, %v6991
    %v7240 = vpack.c.b16 %v7000, %v6992
    %v7241 = vpack.c.b16 %v7001, %v6993
    %v7242 = vpack.c.b16 %v7002, %v6994
    %v7243 = vpack.c.b16 %v7011, %v7003
    %v7244 = vpack.c.b16 %v7012, %v7004
    %v7245 = vpack.c.b16 %v7013, %v7005
    %v7246 = vpack.c.b16 %v7014, %v7006
    %v7247 = vpack.c.b16 %v7015, %v7007
    %v7248 = vpack.c.b16 %v7016, %v7008
    %v7249 = vpack.c.b16 %v7017, %v7009
    %v7250 = vpack.c.b16 %v7018, %v7010
    %v7251 = vpack.c.b16 %v7027, %v7019
    %v7252 = vpack.c.b16 %v7028, %v7020
    %v7253 = vpack.c.b16 %v7029, %v7021
    %v7254 = vpack.c.b16 %v7030, %v7022
    %v7255 = vpack.c.b16 %v7031, %v7023
    %v7256 = vpack.c.b16 %v7032, %v7024
    %v7257 = vpack.c.b16 %v7033, %v7025
    %v7258 = vpack.c.b16 %v7034, %v7026
    %v7259 = vpack.c.b16 %v7043, %v7035
    %v7260 = vpack.c.b16 %v7044, %v7036
    %v7261 = vpack.c.b16 %v7045, %v7037
    %v7262 = vpack.c.b16 %v7046, %v7038
    %v7263 = vpack.c.b16 %v7047, %v7039
    %v7264 = vpack.c.b16 %v7048, %v7040
    %v7265 = vpack.c.b16 %v7049, %v7041
    %v7266 = vpack.c.b16 %v7050, %v7042
    %v7267 = vpack.c.b16 %v7059, %v7051
    %v7268 = vpack.c.b16 %v7060, %v7052
    %v7269 = vpack.c.b16 %v7061, %v7053
    %v7270 = vpack.c.b16 %v7062, %v7054
    %v7271 = vpack.c.b16 %v7063, %v7055
    %v7272 = vpack.c.b16 %v7064, %v7056
    %v7273 = vpack.c.b16 %v7065, %v7057
    %v7274 = vpack.c.b16 %v7066, %v7058
    %v7275 = vpack.c.b16 %v7075, %v7067
    %v7276 = vpack.c.b16 %v7076, %v7068
    %v7277 = vpack.c.b16 %v7077, %v7069
    %v7278 = vpack.c.b16 %v7078, %v7070
    %v7279 = vpack.c.b16 %v7079, %v7071
    %v7280 = vpack.c.b16 %v7080, %v7072
    %v7281 = vpack.c.b16 %v7081, %v7073
    %v7282 = vpack.c.b16 %v7082, %v7074
    %v7283 = vpack.c.b16 %v7091, %v7083
    %v7284 = vpack.c.b16 %v7092, %v7084
    %v7285 = vpack.c.b16 %v7093, %v7085
    %v7286 = vpack.c.b16 %v7094, %v7086
    %v7287 = vpack.c.b16 %v7095, %v7087
    %v7288 = vpack.c.b16 %v7096, %v7088
    %v7289 = vpack.c.b16 %v7097, %v7089
    %v7290 = vpack.c.b16 %v7098, %v7090
    %v7291 = vpack.c.b16 %v7107, %v7099
    %v7292 = vpack.c.b16 %v7108, %v7100
    %v7293 = vpack.c.b16 %v7109, %v7101
    %v7294 = vpack.c.b16 %v7110, %v7102
    %v7295 = vpack.c.b16 %v7111, %v7103
    %v7296 = vpack.c.b16 %v7112, %v7104
    %v7297 = vpack.c.b16 %v7113, %v7105
    %v7298 = vpack.c.b16 %v7114, %v7106
    %v7299 = vpack.c.b16 %v7123, %v7115
    %v7300 = vpack.c.b16 %v7124, %v7116
    %v7301 = vpack.c.b16 %v7125, %v7117
    %v7302 = vpack.c.b16 %v7126, %v7118
    %v7303 = vpack.c.b16 %v7127, %v7119
    %v7304 = vpack.c.b16 %v7128, %v7120
    %v7305 = vpack.c.b16 %v7129, %v7121
    %v7306 = vpack.c.b16 %v7130, %v7122
    %v7307 = vpack.c.b16 %v7139, %v7131
    %v7308 = vpack.c.b16 %v7140, %v7132
    %v7309 = vpack.c.b16 %v7141, %v7133
    %v7310 = vpack.c.b16 %v7142, %v7134
    %v7311 = vpack.c.b16 %v7143, %v7135
    %v7312 = vpack.c.b16 %v7144, %v7136
    %v7313 = vpack.c.b16 %v7145, %v7137
    %v7314 = vpack.c.b16 %v7146, %v7138
    %v7315 = vpack.c.b16 %v7155, %v7147
    %v7316 = vpack.c.b16 %v7156, %v7148
    %v7317 = vpack.c.b16 %v7157, %v7149
    %v7318 = vpack.c.b16 %v7158, %v7150
    %v7319 = vpack.c.b16 %v7159, %v7151
    %v7320 = vpack.c.b16 %v7160, %v7152
    %v7321 = vpack.c.b16 %v7161, %v7153
    %v7322 = vpack.c.b16 %v7162, %v7154
    %v7323 = vpack.c.b16 %v7171, %v7163
    %v7324 = vpack.c.b16 %v7172, %v7164
    %v7325 = vpack.c.b16 %v7173, %v7165
    %v7326 = vpack.c.b16 %v7174, %v7166
    %v7327 = vpack.c.b16 %v7175, %v7167
    %v7328 = vpack.c.b16 %v7176, %v7168
    %v7329 = vpack.c.b16 %v7177, %v7169
    %v7330 = vpack.c.b16 %v7178, %v7170
    %v7331 = vpack.c.b16 %v7187, %v7179
    %v7332 = vpack.c.b16 %v7188, %v7180
    %v7333 = vpack.c.b16 %v7189, %v7181
    %v7334 = vpack.c.b16 %v7190, %v7182
    %v7335 = vpack.c.b16 %v7191, %v7183
    %v7336 = vpack.c.b16 %v7192, %v7184
    %v7337 = vpack.c.b16 %v7193, %v7185
    %v7338 = vpack.c.b16 %v7194, %v7186
    %v7339 = vpack.c.b16 %v7203, %v7195
    %v7340 = vpack.c.b16 %v7204, %v7196
    %v7341 = vpack.c.b16 %v7205, %v7197
    %v7342 = vpack.c.b16 %v7206, %v7198
    %v7343 = vpack.c.b16 %v7207, %v7199
    %v7344 = vpack.c.b16 %v7208, %v7200
    %v7345 = vpack.c.b16 %v7209, %v7201
    %v7346 = vpack.c.b16 %v7210, %v7202
    %v7347 = vpack.c.b16 %v7219, %v7211
    %v7348 = vpack.c.b16 %v7220, %v7212
    %v7349 = vpack.c.b16 %v7221, %v7213
    %v7350 = vpack.c.b16 %v7222, %v7214
    %v7351 = vpack.c.b16 %v7223, %v7215
    %v7352 = vpack.c.b16 %v7224, %v7216
    %v7353 = vpack.c.b16 %v7225, %v7217
    %v7354 = vpack.c.b16 %v7226, %v7218
    %7483 = vmatpush.bf16.msra.mxu0 %v7283
    %7484 = vmatpush.bf16.msra.mxu0 %v7275
    %7485 = vmatpush.bf16.msra.mxu0 %v7267
    %7486 = vmatpush.bf16.msra.mxu0 %v7259
    %7487 = vmatpush.bf16.msra.mxu0 %v7251
    %7488 = vmatpush.bf16.msra.mxu0 %v7243
    %7489 = vmatpush.bf16.msra.mxu0 %v7235
    %7490 = vmatpush.bf16.msra.mxu0 %v7227
    %7491 = vmatmul.bf16.gmra.mxu0 %v6713
    %v7492 = vpop.f32.mrf.mxu0
    %v7493 = vadd.f32 0.0, %v7492
    %v7494 = vpop.f32.mrf.mxu0
    %7495 = vdwg.mxu0
    %7496 = vmatpush.bf16.msra.mxu0 %v7347
    %7497 = vmatpush.bf16.msra.mxu0 %v7339
    %7498 = vmatpush.bf16.msra.mxu0 %v7331
    %7499 = vmatpush.bf16.msra.mxu0 %v7323
    %7500 = vmatpush.bf16.msra.mxu0 %v7315
    %7501 = vmatpush.bf16.msra.mxu0 %v7307
    %7502 = vmatpush.bf16.msra.mxu0 %v7299
    %7503 = vmatpush.bf16.msra.mxu0 %v7291
    %7504 = vmatmul.bf16.gmra.mxu0 %v6714
    %v7505 = vpop.f32.mrf.mxu0
    %v7506 = vadd.f32 %v7493, %v7505
    %v7507 = vpop.f32.mrf.mxu0
    %7508 = vdwg.mxu0
    %7509 = vmatpush.bf16.msra.mxu0 %v7284
    %7510 = vmatpush.bf16.msra.mxu0 %v7276
    %7511 = vmatpush.bf16.msra.mxu0 %v7268
    %7512 = vmatpush.bf16.msra.mxu0 %v7260
    %7513 = vmatpush.bf16.msra.mxu0 %v7252
    %7514 = vmatpush.bf16.msra.mxu0 %v7244
    %7515 = vmatpush.bf16.msra.mxu0 %v7236
    %7516 = vmatpush.bf16.msra.mxu0 %v7228
    %7517 = vmatmul.bf16.gmra.mxu0 %v6713
    %v7518 = vpop.f32.mrf.mxu0
    %v7519 = vadd.f32 0.0, %v7518
    %v7520 = vpop.f32.mrf.mxu0
    %7521 = vdwg.mxu0
    %7522 = vmatpush.bf16.msra.mxu0 %v7348
    %7523 = vmatpush.bf16.msra.mxu0 %v7340
    %7524 = vmatpush.bf16.msra.mxu0 %v7332
    %7525 = vmatpush.bf16.msra.mxu0 %v7324
    %7526 = vmatpush.bf16.msra.mxu0 %v7316
    %7527 = vmatpush.bf16.msra.mxu0 %v7308
    %7528 = vmatpush.bf16.msra.mxu0 %v7300
    %7529 = vmatpush.bf16.msra.mxu0 %v7292
    %7530 = vmatmul.bf16.gmra.mxu0 %v6714
    %v7531 = vpop.f32.mrf.mxu0
    %v7532 = vadd.f32 %v7519, %v7531
    %v7533 = vpop.f32.mrf.mxu0
    %7534 = vdwg.mxu0
    %7535 = vmatpush.bf16.msra.mxu0 %v7285
    %7536 = vmatpush.bf16.msra.mxu0 %v7277
    %7537 = vmatpush.bf16.msra.mxu0 %v7269
    %7538 = vmatpush.bf16.msra.mxu0 %v7261
    %7539 = vmatpush.bf16.msra.mxu0 %v7253
    %7540 = vmatpush.bf16.msra.mxu0 %v7245
    %7541 = vmatpush.bf16.msra.mxu0 %v7237
    %7542 = vmatpush.bf16.msra.mxu0 %v7229
    %7543 = vmatmul.bf16.gmra.mxu0 %v6713
    %v7544 = vpop.f32.mrf.mxu0
    %v7545 = vadd.f32 0.0, %v7544
    %v7546 = vpop.f32.mrf.mxu0
    %7547 = vdwg.mxu0
    %7548 = vmatpush.bf16.msra.mxu0 %v7349
    %7549 = vmatpush.bf16.msra.mxu0 %v7341
    %7550 = vmatpush.bf16.msra.mxu0 %v7333
    %7551 = vmatpush.bf16.msra.mxu0 %v7325
    %7552 = vmatpush.bf16.msra.mxu0 %v7317
    %7553 = vmatpush.bf16.msra.mxu0 %v7309
    %7554 = vmatpush.bf16.msra.mxu0 %v7301
    %7555 = vmatpush.bf16.msra.mxu0 %v7293
    %7556 = vmatmul.bf16.gmra.mxu0 %v6714
    %v7557 = vpop.f32.mrf.mxu0
    %v7558 = vadd.f32 %v7545, %v7557
    %v7559 = vpop.f32.mrf.mxu0
    %7560 = vdwg.mxu0
    %7561 = vmatpush.bf16.msra.mxu0 %v7286
    %7562 = vmatpush.bf16.msra.mxu0 %v7278
    %7563 = vmatpush.bf16.msra.mxu0 %v7270
    %7564 = vmatpush.bf16.msra.mxu0 %v7262
    %7565 = vmatpush.bf16.msra.mxu0 %v7254
    %7566 = vmatpush.bf16.msra.mxu0 %v7246
    %7567 = vmatpush.bf16.msra.mxu0 %v7238
    %7568 = vmatpush.bf16.msra.mxu0 %v7230
    %7569 = vmatmul.bf16.gmra.mxu0 %v6713
    %v7570 = vpop.f32.mrf.mxu0
    %v7571 = vadd.f32 0.0, %v7570
    %v7572 = vpop.f32.mrf.mxu0
    %7573 = vdwg.mxu0
    %7574 = vmatpush.bf16.msra.mxu0 %v7350
    %7575 = vmatpush.bf16.msra.mxu0 %v7342
    %7576 = vmatpush.bf16.msra.mxu0 %v7334
    %7577 = vmatpush.bf16.msra.mxu0 %v7326
    %7578 = vmatpush.bf16.msra.mxu0 %v7318
    %7579 = vmatpush.bf16.msra.mxu0 %v7310
    %7580 = vmatpush.bf16.msra.mxu0 %v7302
    %7581 = vmatpush.bf16.msra.mxu0 %v7294
    %7582 = vmatmul.bf16.gmra.mxu0 %v6714
    %v7583 = vpop.f32.mrf.mxu0
    %v7584 = vadd.f32 %v7571, %v7583
    %v7585 = vpop.f32.mrf.mxu0
    %7586 = vdwg.mxu0
    %7587 = vmatpush.bf16.msra.mxu0 %v7287
    %7588 = vmatpush.bf16.msra.mxu0 %v7279
    %7589 = vmatpush.bf16.msra.mxu0 %v7271
    %7590 = vmatpush.bf16.msra.mxu0 %v7263
    %7591 = vmatpush.bf16.msra.mxu0 %v7255
    %7592 = vmatpush.bf16.msra.mxu0 %v7247
    %7593 = vmatpush.bf16.msra.mxu0 %v7239
    %7594 = vmatpush.bf16.msra.mxu0 %v7231
    %7595 = vmatmul.bf16.gmra.mxu0 %v6713
    %v7596 = vpop.f32.mrf.mxu0
    %v7597 = vadd.f32 0.0, %v7596
    %v7598 = vpop.f32.mrf.mxu0
    %7599 = vdwg.mxu0
    %7600 = vmatpush.bf16.msra.mxu0 %v7351
    %7601 = vmatpush.bf16.msra.mxu0 %v7343
    %7602 = vmatpush.bf16.msra.mxu0 %v7335
    %7603 = vmatpush.bf16.msra.mxu0 %v7327
    %7604 = vmatpush.bf16.msra.mxu0 %v7319
    %7605 = vmatpush.bf16.msra.mxu0 %v7311
    %7606 = vmatpush.bf16.msra.mxu0 %v7303
    %7607 = vmatpush.bf16.msra.mxu0 %v7295
    %7608 = vmatmul.bf16.gmra.mxu0 %v6714
    %v7609 = vpop.f32.mrf.mxu0
    %v7610 = vadd.f32 %v7597, %v7609
    %v7611 = vpop.f32.mrf.mxu0
    %7612 = vdwg.mxu0
    %7613 = vmatpush.bf16.msra.mxu0 %v7288
    %7614 = vmatpush.bf16.msra.mxu0 %v7280
    %7615 = vmatpush.bf16.msra.mxu0 %v7272
    %7616 = vmatpush.bf16.msra.mxu0 %v7264
    %7617 = vmatpush.bf16.msra.mxu0 %v7256
    %7618 = vmatpush.bf16.msra.mxu0 %v7248
    %7619 = vmatpush.bf16.msra.mxu0 %v7240
    %7620 = vmatpush.bf16.msra.mxu0 %v7232
    %7621 = vmatmul.bf16.gmra.mxu0 %v6713
    %v7622 = vpop.f32.mrf.mxu0
    %v7623 = vadd.f32 0.0, %v7622
    %v7624 = vpop.f32.mrf.mxu0
    %7625 = vdwg.mxu0
    %7626 = vmatpush.bf16.msra.mxu0 %v7352
    %7627 = vmatpush.bf16.msra.mxu0 %v7344
    %7628 = vmatpush.bf16.msra.mxu0 %v7336
    %7629 = vmatpush.bf16.msra.mxu0 %v7328
    %7630 = vmatpush.bf16.msra.mxu0 %v7320
    %7631 = vmatpush.bf16.msra.mxu0 %v7312
    %7632 = vmatpush.bf16.msra.mxu0 %v7304
    %7633 = vmatpush.bf16.msra.mxu0 %v7296
    %7634 = vmatmul.bf16.gmra.mxu0 %v6714
    %v7635 = vpop.f32.mrf.mxu0
    %v7636 = vadd.f32 %v7623, %v7635
    %v7637 = vpop.f32.mrf.mxu0
    %7638 = vdwg.mxu0
    %7639 = vmatpush.bf16.msra.mxu0 %v7289
    %7640 = vmatpush.bf16.msra.mxu0 %v7281
    %7641 = vmatpush.bf16.msra.mxu0 %v7273
    %7642 = vmatpush.bf16.msra.mxu0 %v7265
    %7643 = vmatpush.bf16.msra.mxu0 %v7257
    %7644 = vmatpush.bf16.msra.mxu0 %v7249
    %7645 = vmatpush.bf16.msra.mxu0 %v7241
    %7646 = vmatpush.bf16.msra.mxu0 %v7233
    %7647 = vmatmul.bf16.gmra.mxu0 %v6713
    %v7648 = vpop.f32.mrf.mxu0
    %v7649 = vadd.f32 0.0, %v7648
    %v7650 = vpop.f32.mrf.mxu0
    %7651 = vdwg.mxu0
    %7652 = vmatpush.bf16.msra.mxu0 %v7353
    %7653 = vmatpush.bf16.msra.mxu0 %v7345
    %7654 = vmatpush.bf16.msra.mxu0 %v7337
    %7655 = vmatpush.bf16.msra.mxu0 %v7329
    %7656 = vmatpush.bf16.msra.mxu0 %v7321
    %7657 = vmatpush.bf16.msra.mxu0 %v7313
    %7658 = vmatpush.bf16.msra.mxu0 %v7305
    %7659 = vmatpush.bf16.msra.mxu0 %v7297
    %7660 = vmatmul.bf16.gmra.mxu0 %v6714
    %v7661 = vpop.f32.mrf.mxu0
    %v7662 = vadd.f32 %v7649, %v7661
    %v7663 = vpop.f32.mrf.mxu0
    %7664 = vdwg.mxu0
    %7665 = vmatpush.bf16.msra.mxu0 %v7290
    %7666 = vmatpush.bf16.msra.mxu0 %v7282
    %7667 = vmatpush.bf16.msra.mxu0 %v7274
    %7668 = vmatpush.bf16.msra.mxu0 %v7266
    %7669 = vmatpush.bf16.msra.mxu0 %v7258
    %7670 = vmatpush.bf16.msra.mxu0 %v7250
    %7671 = vmatpush.bf16.msra.mxu0 %v7242
    %7672 = vmatpush.bf16.msra.mxu0 %v7234
    %7673 = vmatmul.bf16.gmra.mxu0 %v6713
    %v7674 = vpop.f32.mrf.mxu0
    %v7675 = vadd.f32 0.0, %v7674
    %v7676 = vpop.f32.mrf.mxu0
    %7677 = vdwg.mxu0
    %7678 = vmatpush.bf16.msra.mxu0 %v7354
    %7679 = vmatpush.bf16.msra.mxu0 %v7346
    %7680 = vmatpush.bf16.msra.mxu0 %v7338
    %7681 = vmatpush.bf16.msra.mxu0 %v7330
    %7682 = vmatpush.bf16.msra.mxu0 %v7322
    %7683 = vmatpush.bf16.msra.mxu0 %v7314
    %7684 = vmatpush.bf16.msra.mxu0 %v7306
    %7685 = vmatpush.bf16.msra.mxu0 %v7298
    %7686 = vmatmul.bf16.gmra.mxu0 %v6714
    %v7687 = vpop.f32.mrf.mxu0
    %v7688 = vadd.f32 %v7675, %v7687
    %v7689 = vpop.f32.mrf.mxu0
    %7690 = vdwg.mxu0
    %v7691 = vld [vmem:[%s4191] sm:$0xff]
    %v7692 = vld [vmem:[%s4189] sm:$0xff]
    %s7693 = scalar_lea.vmem [#allocation2], 160
    %v7694 = vld [vmem:[%s7693] sm:$0xff]
    %v7695 = vld [vmem:[%s7693 + $0x8] sm:$0xff]
    %v7696 = vld [vmem:[%s7693 + $0x10] sm:$0xff]
    %v7697 = vld [vmem:[%s7693 + $0x18] sm:$0xff]
    %v7698 = vadd.f32 %v7694, %v7506
    %v7699 = vadd.f32 %v7695, %v7532
    %v7700 = vadd.f32 %v7696, %v7558
    %v7701 = vadd.f32 %v7697, %v7584
    %s7702 = scalar_lea.vmem [#allocation3], 64
    %v7703 = vld [vmem:[%s7702] sm:$0xff]
    %v7704 = vld [vmem:[%s7702 + $0x8] sm:$0xff]
    %v7705 = vld [vmem:[%s7702 + $0x10] sm:$0xff]
    %v7706 = vld [vmem:[%s7702 + $0x18] sm:$0xff]
    %v7707 = vadd.f32 %v7703, %v7610
    %v7708 = vadd.f32 %v7704, %v7636
    %v7709 = vadd.f32 %v7705, %v7662
    %v7710 = vadd.f32 %v7706, %v7688
    %v7711 = vld [vmem:[#allocation7] sm:$0xff]
    %v7712 = vxor.u32 %v7698, 2147483648
    %v7713 = vmul.f32 %v7712, 1.442695
    %v7714 = vpow.pop %v7713
    %v7715 = vadd.f32 %v7714, 1.0
    %v7716 = vrcp.pop %v7715
    %v7717 = vmul.f32 %v7715, %v7716
    %v7718 = vsub.f32 1.0, %v7717
    %v7719 = vmul.f32 %v7716, %v7718
    %v7720 = vadd.f32 %v7716, %v7719
    %vm7721 = vweird.f32 %v7715
    %vm7722 = vweird.f32 %v7716
    %vm7723 = vmor %vm7721, %vm7722
    %v7724 = vsel %vm7723, %v7716, %v7720
    %v7725 = vand.u32 2147483647, %v7715
    %vm7726 = vcmp.eq.f32.partialorder %v7725, 8.507059e+37
    %v7727 = vand.u32 %v7715, 2147483648
    %v7728 = vor.u32 1.1754944e-38, %v7727
    %v7729 = vsel %vm7726, %v7728, %v7724
    %v7730 = vmul.f32 1.0, %v7729
    %v7731 = vxor.u32 %v7699, 2147483648
    %v7732 = vmul.f32 %v7731, 1.442695
    %v7733 = vpow.pop %v7732
    %v7734 = vadd.f32 %v7733, 1.0
    %v7735 = vrcp.pop %v7734
    %v7736 = vmul.f32 %v7734, %v7735
    %v7737 = vsub.f32 1.0, %v7736
    %v7738 = vmul.f32 %v7735, %v7737
    %v7739 = vadd.f32 %v7735, %v7738
    %vm7740 = vweird.f32 %v7734
    %vm7741 = vweird.f32 %v7735
    %vm7742 = vmor %vm7740, %vm7741
    %v7743 = vsel %vm7742, %v7735, %v7739
    %v7744 = vand.u32 2147483647, %v7734
    %vm7745 = vcmp.eq.f32.partialorder %v7744, 8.507059e+37
    %v7746 = vand.u32 %v7734, 2147483648
    %v7747 = vor.u32 1.1754944e-38, %v7746
    %v7748 = vsel %vm7745, %v7747, %v7743
    %v7749 = vmul.f32 1.0, %v7748
    %v7750 = vtanh.pop %v7700
    %v7751 = vxor.u32 %v7701, 2147483648
    %v7752 = vmul.f32 %v7751, 1.442695
    %v7753 = vpow.pop %v7752
    %v7754 = vadd.f32 %v7753, 1.0
    %v7755 = vrcp.pop %v7754
    %v7756 = vmul.f32 %v7754, %v7755
    %v7757 = vsub.f32 1.0, %v7756
    %v7758 = vmul.f32 %v7755, %v7757
    %v7759 = vadd.f32 %v7755, %v7758
    %vm7760 = vweird.f32 %v7754
    %vm7761 = vweird.f32 %v7755
    %vm7762 = vmor %vm7760, %vm7761
    %v7763 = vsel %vm7762, %v7755, %v7759
    %v7764 = vand.u32 2147483647, %v7754
    %vm7765 = vcmp.eq.f32.partialorder %v7764, 8.507059e+37
    %v7766 = vand.u32 %v7754, 2147483648
    %v7767 = vor.u32 1.1754944e-38, %v7766
    %v7768 = vsel %vm7765, %v7767, %v7763
    %v7769 = vmul.f32 1.0, %v7768
    %v7770 = vmul.f32 %v7749, %v7711
    %v7771 = vmul.f32 %v7730, %v7750
    %v7772 = vadd.f32 %v7770, %v7771
    %v7773 = vtanh.pop %v7772
    %v7774 = vmul.f32 %v7769, %v7773
    %v7775 = vld [vmem:[#allocation8] sm:$0xff]
    %v7776 = vxor.u32 %v7707, 2147483648
    %v7777 = vmul.f32 %v7776, 1.442695
    %v7778 = vpow.pop %v7777
    %v7779 = vadd.f32 %v7778, 1.0
    %v7780 = vrcp.pop %v7779
    %v7781 = vmul.f32 %v7779, %v7780
    %v7782 = vsub.f32 1.0, %v7781
    %v7783 = vmul.f32 %v7780, %v7782
    %v7784 = vadd.f32 %v7780, %v7783
    %vm7785 = vweird.f32 %v7779
    %vm7786 = vweird.f32 %v7780
    %vm7787 = vmor %vm7785, %vm7786
    %v7788 = vsel %vm7787, %v7780, %v7784
    %v7789 = vand.u32 2147483647, %v7779
    %vm7790 = vcmp.eq.f32.partialorder %v7789, 8.507059e+37
    %v7791 = vand.u32 %v7779, 2147483648
    %v7792 = vor.u32 1.1754944e-38, %v7791
    %v7793 = vsel %vm7790, %v7792, %v7788
    %v7794 = vmul.f32 1.0, %v7793
    %v7795 = vxor.u32 %v7708, 2147483648
    %v7796 = vmul.f32 %v7795, 1.442695
    %v7797 = vpow.pop %v7796
    %v7798 = vadd.f32 %v7797, 1.0
    %v7799 = vrcp.pop %v7798
    %v7800 = vmul.f32 %v7798, %v7799
    %v7801 = vsub.f32 1.0, %v7800
    %v7802 = vmul.f32 %v7799, %v7801
    %v7803 = vadd.f32 %v7799, %v7802
    %vm7804 = vweird.f32 %v7798
    %vm7805 = vweird.f32 %v7799
    %vm7806 = vmor %vm7804, %vm7805
    %v7807 = vsel %vm7806, %v7799, %v7803
    %v7808 = vand.u32 2147483647, %v7798
    %vm7809 = vcmp.eq.f32.partialorder %v7808, 8.507059e+37
    %v7810 = vand.u32 %v7798, 2147483648
    %v7811 = vor.u32 1.1754944e-38, %v7810
    %v7812 = vsel %vm7809, %v7811, %v7807
    %v7813 = vmul.f32 1.0, %v7812
    %v7814 = vtanh.pop %v7709
    %v7815 = vxor.u32 %v7710, 2147483648
    %v7816 = vmul.f32 %v7815, 1.442695
    %v7817 = vpow.pop %v7816
    %v7818 = vadd.f32 %v7817, 1.0
    %v7819 = vrcp.pop %v7818
    %v7820 = vmul.f32 %v7818, %v7819
    %v7821 = vsub.f32 1.0, %v7820
    %v7822 = vmul.f32 %v7819, %v7821
    %v7823 = vadd.f32 %v7819, %v7822
    %vm7824 = vweird.f32 %v7818
    %vm7825 = vweird.f32 %v7819
    %vm7826 = vmor %vm7824, %vm7825
    %v7827 = vsel %vm7826, %v7819, %v7823
    %v7828 = vand.u32 2147483647, %v7818
    %vm7829 = vcmp.eq.f32.partialorder %v7828, 8.507059e+37
    %v7830 = vand.u32 %v7818, 2147483648
    %v7831 = vor.u32 1.1754944e-38, %v7830
    %v7832 = vsel %vm7829, %v7831, %v7827
    %v7833 = vmul.f32 1.0, %v7832
    %v7834 = vmul.f32 %v7813, %v7775
    %v7835 = vmul.f32 %v7794, %v7814
    %v7836 = vadd.f32 %v7834, %v7835
    %v7837 = vtanh.pop %v7836
    %v7838 = vmul.f32 %v7833, %v7837
    %vm7839 = vcmp.gt.f32.partialorder %v7691, 0.0
    %v7840 = vld [vmem:[#allocation6] sm:$0xff]
    %v7841 = vsel %vm7839, 1, 0
    %7842 = vset.pattern.permute.xlu0 0
    %7843 = vperm.xlu0 %7842, %v7841
    %v7844 = vpop.permute.xlu0 %7843
    %vm7845 = vcmp.eq.s32.totalorder %v7844, 1
    %v7846 = vsel %vm7845, %v7774, %v7840
    %vm7847 = vcmp.gt.f32.partialorder %v7692, 0.0
    %v7848 = vsel %vm7847, 1, 0
    %7849 = vset.pattern.permute.xlu0 0
    %7850 = vperm.xlu0 %7849, %v7848
    %v7851 = vpop.permute.xlu0 %7850
    %vm7852 = vcmp.eq.s32.totalorder %v7851, 1
    %v7853 = vsel %vm7852, %v7838, %v6712
    %v7854 = vsel %vm7845, %v7772, %v7711
    %7855 = vst [vmem:[#allocation7] sm:$0xff] %v7854
    %v7856 = vld [vmem:[#allocation8] sm:$0xff]
    %v7857 = vsel %vm7852, %v7836, %v7856
    %7858 = vst [vmem:[#allocation8] sm:$0xff] %v7857
    %7859 = vst [vmem:[#allocation6] sm:$0xff] %v7846
    %7860 = vst [vmem:[#allocation6 + $0x8] sm:$0xff] %v7853
    %7862 = vset.pattern.permute.xlu0 0
    %7863 = vperm.xlu0 %7862, %v7691
    %v7864 = vpop.permute.xlu0 %7863
    %v7866 = vmul.f32 %v7846, %v7864
    %s7867 = scalar_lea.vmem [#allocation4], 40
    %7868 = vst [vmem:[%s7867] sm:$0xff] %v7866
    %7870 = vset.pattern.permute.xlu0 0
    %7871 = vperm.xlu0 %7870, %v7692
    %v7872 = vpop.permute.xlu0 %7871
    %v7874 = vmul.f32 %v7853, %v7872
    %s7875 = scalar_lea.vmem [#allocation5], 16
    %7876 = vst [vmem:[%s7875] sm:$0xff] %v7874
    %v7877 = vld [vmem:[#allocation6] sm:$0xff]
    %v7878 = vld [vmem:[#allocation6 + $0x8] sm:$0xff]
    %v7879 = vpack.c.bf16 %v7877, %v7877
    %v7880 = vpack.c.bf16 %v7878, %v7878
    %v7881 = vld [vmem:[#allocation14] sm:$0xff]
    %v7882 = vld [vmem:[#allocation14 + $0x8] sm:$0xff]
    %v7883 = vld [vmem:[#allocation14 + $0x10] sm:$0xff]
    %v7884 = vld [vmem:[#allocation14 + $0x18] sm:$0xff]
    %v7885 = vld [vmem:[#allocation14 + $0x20] sm:$0xff]
    %v7886 = vld [vmem:[#allocation14 + $0x28] sm:$0xff]
    %v7887 = vld [vmem:[#allocation14 + $0x30] sm:$0xff]
    %v7888 = vld [vmem:[#allocation14 + $0x38] sm:$0xff]
    %v7889 = vld [vmem:[#allocation14 + $0x40] sm:$0xff]
    %v7890 = vld [vmem:[#allocation14 + $0x48] sm:$0xff]
    %v7891 = vld [vmem:[#allocation14 + $0x50] sm:$0xff]
    %v7892 = vld [vmem:[#allocation14 + $0x58] sm:$0xff]
    %v7893 = vld [vmem:[#allocation14 + $0x60] sm:$0xff]
    %v7894 = vld [vmem:[#allocation14 + $0x68] sm:$0xff]
    %v7895 = vld [vmem:[#allocation14 + $0x70] sm:$0xff]
    %v7896 = vld [vmem:[#allocation14 + $0x78] sm:$0xff]
    %v7897 = vld [vmem:[#allocation14 + $0x80] sm:$0xff]
    %v7898 = vld [vmem:[#allocation14 + $0x88] sm:$0xff]
    %v7899 = vld [vmem:[#allocation14 + $0x90] sm:$0xff]
    %v7900 = vld [vmem:[#allocation14 + $0x98] sm:$0xff]
    %v7901 = vld [vmem:[#allocation14 + $0xa0] sm:$0xff]
    %v7902 = vld [vmem:[#allocation14 + $0xa8] sm:$0xff]
    %v7903 = vld [vmem:[#allocation14 + $0xb0] sm:$0xff]
    %v7904 = vld [vmem:[#allocation14 + $0xb8] sm:$0xff]
    %v7905 = vld [vmem:[#allocation14 + $0xc0] sm:$0xff]
    %v7906 = vld [vmem:[#allocation14 + $0xc8] sm:$0xff]
    %v7907 = vld [vmem:[#allocation14 + $0xd0] sm:$0xff]
    %v7908 = vld [vmem:[#allocation14 + $0xd8] sm:$0xff]
    %v7909 = vld [vmem:[#allocation14 + $0xe0] sm:$0xff]
    %v7910 = vld [vmem:[#allocation14 + $0xe8] sm:$0xff]
    %v7911 = vld [vmem:[#allocation14 + $0xf0] sm:$0xff]
    %v7912 = vld [vmem:[#allocation14 + $0xf8] sm:$0xff]
    %v7913 = vld [vmem:[#allocation14 + $0x100] sm:$0xff]
    %v7914 = vld [vmem:[#allocation14 + $0x108] sm:$0xff]
    %v7915 = vld [vmem:[#allocation14 + $0x110] sm:$0xff]
    %v7916 = vld [vmem:[#allocation14 + $0x118] sm:$0xff]
    %v7917 = vld [vmem:[#allocation14 + $0x120] sm:$0xff]
    %v7918 = vld [vmem:[#allocation14 + $0x128] sm:$0xff]
    %v7919 = vld [vmem:[#allocation14 + $0x130] sm:$0xff]
    %v7920 = vld [vmem:[#allocation14 + $0x138] sm:$0xff]
    %v7921 = vld [vmem:[#allocation14 + $0x140] sm:$0xff]
    %v7922 = vld [vmem:[#allocation14 + $0x148] sm:$0xff]
    %v7923 = vld [vmem:[#allocation14 + $0x150] sm:$0xff]
    %v7924 = vld [vmem:[#allocation14 + $0x158] sm:$0xff]
    %v7925 = vld [vmem:[#allocation14 + $0x160] sm:$0xff]
    %v7926 = vld [vmem:[#allocation14 + $0x168] sm:$0xff]
    %v7927 = vld [vmem:[#allocation14 + $0x170] sm:$0xff]
    %v7928 = vld [vmem:[#allocation14 + $0x178] sm:$0xff]
    %v7929 = vld [vmem:[#allocation14 + $0x180] sm:$0xff]
    %v7930 = vld [vmem:[#allocation14 + $0x188] sm:$0xff]
    %v7931 = vld [vmem:[#allocation14 + $0x190] sm:$0xff]
    %v7932 = vld [vmem:[#allocation14 + $0x198] sm:$0xff]
    %v7933 = vld [vmem:[#allocation14 + $0x1a0] sm:$0xff]
    %v7934 = vld [vmem:[#allocation14 + $0x1a8] sm:$0xff]
    %v7935 = vld [vmem:[#allocation14 + $0x1b0] sm:$0xff]
    %v7936 = vld [vmem:[#allocation14 + $0x1b8] sm:$0xff]
    %v7937 = vld [vmem:[#allocation14 + $0x1c0] sm:$0xff]
    %v7938 = vld [vmem:[#allocation14 + $0x1c8] sm:$0xff]
    %v7939 = vld [vmem:[#allocation14 + $0x1d0] sm:$0xff]
    %v7940 = vld [vmem:[#allocation14 + $0x1d8] sm:$0xff]
    %v7941 = vld [vmem:[#allocation14 + $0x1e0] sm:$0xff]
    %v7942 = vld [vmem:[#allocation14 + $0x1e8] sm:$0xff]
    %v7943 = vld [vmem:[#allocation14 + $0x1f0] sm:$0xff]
    %v7944 = vld [vmem:[#allocation14 + $0x1f8] sm:$0xff]
    %v7945 = vld [vmem:[#allocation14 + $0x200] sm:$0xff]
    %v7946 = vld [vmem:[#allocation14 + $0x208] sm:$0xff]
    %v7947 = vld [vmem:[#allocation14 + $0x210] sm:$0xff]
    %v7948 = vld [vmem:[#allocation14 + $0x218] sm:$0xff]
    %v7949 = vld [vmem:[#allocation14 + $0x220] sm:$0xff]
    %v7950 = vld [vmem:[#allocation14 + $0x228] sm:$0xff]
    %v7951 = vld [vmem:[#allocation14 + $0x230] sm:$0xff]
    %v7952 = vld [vmem:[#allocation14 + $0x238] sm:$0xff]
    %v7953 = vld [vmem:[#allocation14 + $0x240] sm:$0xff]
    %v7954 = vld [vmem:[#allocation14 + $0x248] sm:$0xff]
    %v7955 = vld [vmem:[#allocation14 + $0x250] sm:$0xff]
    %v7956 = vld [vmem:[#allocation14 + $0x258] sm:$0xff]
    %v7957 = vld [vmem:[#allocation14 + $0x260] sm:$0xff]
    %v7958 = vld [vmem:[#allocation14 + $0x268] sm:$0xff]
    %v7959 = vld [vmem:[#allocation14 + $0x270] sm:$0xff]
    %v7960 = vld [vmem:[#allocation14 + $0x278] sm:$0xff]
    %v7961 = vld [vmem:[#allocation14 + $0x280] sm:$0xff]
    %v7962 = vld [vmem:[#allocation14 + $0x288] sm:$0xff]
    %v7963 = vld [vmem:[#allocation14 + $0x290] sm:$0xff]
    %v7964 = vld [vmem:[#allocation14 + $0x298] sm:$0xff]
    %v7965 = vld [vmem:[#allocation14 + $0x2a0] sm:$0xff]
    %v7966 = vld [vmem:[#allocation14 + $0x2a8] sm:$0xff]
    %v7967 = vld [vmem:[#allocation14 + $0x2b0] sm:$0xff]
    %v7968 = vld [vmem:[#allocation14 + $0x2b8] sm:$0xff]
    %v7969 = vld [vmem:[#allocation14 + $0x2c0] sm:$0xff]
    %v7970 = vld [vmem:[#allocation14 + $0x2c8] sm:$0xff]
    %v7971 = vld [vmem:[#allocation14 + $0x2d0] sm:$0xff]
    %v7972 = vld [vmem:[#allocation14 + $0x2d8] sm:$0xff]
    %v7973 = vld [vmem:[#allocation14 + $0x2e0] sm:$0xff]
    %v7974 = vld [vmem:[#allocation14 + $0x2e8] sm:$0xff]
    %v7975 = vld [vmem:[#allocation14 + $0x2f0] sm:$0xff]
    %v7976 = vld [vmem:[#allocation14 + $0x2f8] sm:$0xff]
    %v7977 = vld [vmem:[#allocation14 + $0x300] sm:$0xff]
    %v7978 = vld [vmem:[#allocation14 + $0x308] sm:$0xff]
    %v7979 = vld [vmem:[#allocation14 + $0x310] sm:$0xff]
    %v7980 = vld [vmem:[#allocation14 + $0x318] sm:$0xff]
    %v7981 = vld [vmem:[#allocation14 + $0x320] sm:$0xff]
    %v7982 = vld [vmem:[#allocation14 + $0x328] sm:$0xff]
    %v7983 = vld [vmem:[#allocation14 + $0x330] sm:$0xff]
    %v7984 = vld [vmem:[#allocation14 + $0x338] sm:$0xff]
    %v7985 = vld [vmem:[#allocation14 + $0x340] sm:$0xff]
    %v7986 = vld [vmem:[#allocation14 + $0x348] sm:$0xff]
    %v7987 = vld [vmem:[#allocation14 + $0x350] sm:$0xff]
    %v7988 = vld [vmem:[#allocation14 + $0x358] sm:$0xff]
    %v7989 = vld [vmem:[#allocation14 + $0x360] sm:$0xff]
    %v7990 = vld [vmem:[#allocation14 + $0x368] sm:$0xff]
    %v7991 = vld [vmem:[#allocation14 + $0x370] sm:$0xff]
    %v7992 = vld [vmem:[#allocation14 + $0x378] sm:$0xff]
    %v7993 = vld [vmem:[#allocation14 + $0x380] sm:$0xff]
    %v7994 = vld [vmem:[#allocation14 + $0x388] sm:$0xff]
    %v7995 = vld [vmem:[#allocation14 + $0x390] sm:$0xff]
    %v7996 = vld [vmem:[#allocation14 + $0x398] sm:$0xff]
    %v7997 = vld [vmem:[#allocation14 + $0x3a0] sm:$0xff]
    %v7998 = vld [vmem:[#allocation14 + $0x3a8] sm:$0xff]
    %v7999 = vld [vmem:[#allocation14 + $0x3b0] sm:$0xff]
    %v8000 = vld [vmem:[#allocation14 + $0x3b8] sm:$0xff]
    %v8001 = vld [vmem:[#allocation14 + $0x3c0] sm:$0xff]
    %v8002 = vld [vmem:[#allocation14 + $0x3c8] sm:$0xff]
    %v8003 = vld [vmem:[#allocation14 + $0x3d0] sm:$0xff]
    %v8004 = vld [vmem:[#allocation14 + $0x3d8] sm:$0xff]
    %v8005 = vld [vmem:[#allocation14 + $0x3e0] sm:$0xff]
    %v8006 = vld [vmem:[#allocation14 + $0x3e8] sm:$0xff]
    %v8007 = vld [vmem:[#allocation14 + $0x3f0] sm:$0xff]
    %v8008 = vld [vmem:[#allocation14 + $0x3f8] sm:$0xff]
    %v8137 = vunpack.c.l.b16 %v7881
    %v8138 = vunpack.c.h.b16 %v7881
    %v8139 = vunpack.c.l.b16 %v7882
    %v8140 = vunpack.c.h.b16 %v7882
    %v8141 = vunpack.c.l.b16 %v7883
    %v8142 = vunpack.c.h.b16 %v7883
    %v8143 = vunpack.c.l.b16 %v7884
    %v8144 = vunpack.c.h.b16 %v7884
    %v8145 = vunpack.c.l.b16 %v7885
    %v8146 = vunpack.c.h.b16 %v7885
    %v8147 = vunpack.c.l.b16 %v7886
    %v8148 = vunpack.c.h.b16 %v7886
    %v8149 = vunpack.c.l.b16 %v7887
    %v8150 = vunpack.c.h.b16 %v7887
    %v8151 = vunpack.c.l.b16 %v7888
    %v8152 = vunpack.c.h.b16 %v7888
    %v8153 = vunpack.c.l.b16 %v7889
    %v8154 = vunpack.c.h.b16 %v7889
    %v8155 = vunpack.c.l.b16 %v7890
    %v8156 = vunpack.c.h.b16 %v7890
    %v8157 = vunpack.c.l.b16 %v7891
    %v8158 = vunpack.c.h.b16 %v7891
    %v8159 = vunpack.c.l.b16 %v7892
    %v8160 = vunpack.c.h.b16 %v7892
    %v8161 = vunpack.c.l.b16 %v7893
    %v8162 = vunpack.c.h.b16 %v7893
    %v8163 = vunpack.c.l.b16 %v7894
    %v8164 = vunpack.c.h.b16 %v7894
    %v8165 = vunpack.c.l.b16 %v7895
    %v8166 = vunpack.c.h.b16 %v7895
    %v8167 = vunpack.c.l.b16 %v7896
    %v8168 = vunpack.c.h.b16 %v7896
    %v8169 = vunpack.c.l.b16 %v7897
    %v8170 = vunpack.c.h.b16 %v7897
    %v8171 = vunpack.c.l.b16 %v7898
    %v8172 = vunpack.c.h.b16 %v7898
    %v8173 = vunpack.c.l.b16 %v7899
    %v8174 = vunpack.c.h.b16 %v7899
    %v8175 = vunpack.c.l.b16 %v7900
    %v8176 = vunpack.c.h.b16 %v7900
    %v8177 = vunpack.c.l.b16 %v7901
    %v8178 = vunpack.c.h.b16 %v7901
    %v8179 = vunpack.c.l.b16 %v7902
    %v8180 = vunpack.c.h.b16 %v7902
    %v8181 = vunpack.c.l.b16 %v7903
    %v8182 = vunpack.c.h.b16 %v7903
    %v8183 = vunpack.c.l.b16 %v7904
    %v8184 = vunpack.c.h.b16 %v7904
    %v8185 = vunpack.c.l.b16 %v7905
    %v8186 = vunpack.c.h.b16 %v7905
    %v8187 = vunpack.c.l.b16 %v7906
    %v8188 = vunpack.c.h.b16 %v7906
    %v8189 = vunpack.c.l.b16 %v7907
    %v8190 = vunpack.c.h.b16 %v7907
    %v8191 = vunpack.c.l.b16 %v7908
    %v8192 = vunpack.c.h.b16 %v7908
    %v8193 = vunpack.c.l.b16 %v7909
    %v8194 = vunpack.c.h.b16 %v7909
    %v8195 = vunpack.c.l.b16 %v7910
    %v8196 = vunpack.c.h.b16 %v7910
    %v8197 = vunpack.c.l.b16 %v7911
    %v8198 = vunpack.c.h.b16 %v7911
    %v8199 = vunpack.c.l.b16 %v7912
    %v8200 = vunpack.c.h.b16 %v7912
    %v8201 = vunpack.c.l.b16 %v7913
    %v8202 = vunpack.c.h.b16 %v7913
    %v8203 = vunpack.c.l.b16 %v7914
    %v8204 = vunpack.c.h.b16 %v7914
    %v8205 = vunpack.c.l.b16 %v7915
    %v8206 = vunpack.c.h.b16 %v7915
    %v8207 = vunpack.c.l.b16 %v7916
    %v8208 = vunpack.c.h.b16 %v7916
    %v8209 = vunpack.c.l.b16 %v7917
    %v8210 = vunpack.c.h.b16 %v7917
    %v8211 = vunpack.c.l.b16 %v7918
    %v8212 = vunpack.c.h.b16 %v7918
    %v8213 = vunpack.c.l.b16 %v7919
    %v8214 = vunpack.c.h.b16 %v7919
    %v8215 = vunpack.c.l.b16 %v7920
    %v8216 = vunpack.c.h.b16 %v7920
    %v8217 = vunpack.c.l.b16 %v7921
    %v8218 = vunpack.c.h.b16 %v7921
    %v8219 = vunpack.c.l.b16 %v7922
    %v8220 = vunpack.c.h.b16 %v7922
    %v8221 = vunpack.c.l.b16 %v7923
    %v8222 = vunpack.c.h.b16 %v7923
    %v8223 = vunpack.c.l.b16 %v7924
    %v8224 = vunpack.c.h.b16 %v7924
    %v8225 = vunpack.c.l.b16 %v7925
    %v8226 = vunpack.c.h.b16 %v7925
    %v8227 = vunpack.c.l.b16 %v7926
    %v8228 = vunpack.c.h.b16 %v7926
    %v8229 = vunpack.c.l.b16 %v7927
    %v8230 = vunpack.c.h.b16 %v7927
    %v8231 = vunpack.c.l.b16 %v7928
    %v8232 = vunpack.c.h.b16 %v7928
    %v8233 = vunpack.c.l.b16 %v7929
    %v8234 = vunpack.c.h.b16 %v7929
    %v8235 = vunpack.c.l.b16 %v7930
    %v8236 = vunpack.c.h.b16 %v7930
    %v8237 = vunpack.c.l.b16 %v7931
    %v8238 = vunpack.c.h.b16 %v7931
    %v8239 = vunpack.c.l.b16 %v7932
    %v8240 = vunpack.c.h.b16 %v7932
    %v8241 = vunpack.c.l.b16 %v7933
    %v8242 = vunpack.c.h.b16 %v7933
    %v8243 = vunpack.c.l.b16 %v7934
    %v8244 = vunpack.c.h.b16 %v7934
    %v8245 = vunpack.c.l.b16 %v7935
    %v8246 = vunpack.c.h.b16 %v7935
    %v8247 = vunpack.c.l.b16 %v7936
    %v8248 = vunpack.c.h.b16 %v7936
    %v8249 = vunpack.c.l.b16 %v7937
    %v8250 = vunpack.c.h.b16 %v7937
    %v8251 = vunpack.c.l.b16 %v7938
    %v8252 = vunpack.c.h.b16 %v7938
    %v8253 = vunpack.c.l.b16 %v7939
    %v8254 = vunpack.c.h.b16 %v7939
    %v8255 = vunpack.c.l.b16 %v7940
    %v8256 = vunpack.c.h.b16 %v7940
    %v8257 = vunpack.c.l.b16 %v7941
    %v8258 = vunpack.c.h.b16 %v7941
    %v8259 = vunpack.c.l.b16 %v7942
    %v8260 = vunpack.c.h.b16 %v7942
    %v8261 = vunpack.c.l.b16 %v7943
    %v8262 = vunpack.c.h.b16 %v7943
    %v8263 = vunpack.c.l.b16 %v7944
    %v8264 = vunpack.c.h.b16 %v7944
    %v8265 = vunpack.c.l.b16 %v7945
    %v8266 = vunpack.c.h.b16 %v7945
    %v8267 = vunpack.c.l.b16 %v7946
    %v8268 = vunpack.c.h.b16 %v7946
    %v8269 = vunpack.c.l.b16 %v7947
    %v8270 = vunpack.c.h.b16 %v7947
    %v8271 = vunpack.c.l.b16 %v7948
    %v8272 = vunpack.c.h.b16 %v7948
    %v8273 = vunpack.c.l.b16 %v7949
    %v8274 = vunpack.c.h.b16 %v7949
    %v8275 = vunpack.c.l.b16 %v7950
    %v8276 = vunpack.c.h.b16 %v7950
    %v8277 = vunpack.c.l.b16 %v7951
    %v8278 = vunpack.c.h.b16 %v7951
    %v8279 = vunpack.c.l.b16 %v7952
    %v8280 = vunpack.c.h.b16 %v7952
    %v8281 = vunpack.c.l.b16 %v7953
    %v8282 = vunpack.c.h.b16 %v7953
    %v8283 = vunpack.c.l.b16 %v7954
    %v8284 = vunpack.c.h.b16 %v7954
    %v8285 = vunpack.c.l.b16 %v7955
    %v8286 = vunpack.c.h.b16 %v7955
    %v8287 = vunpack.c.l.b16 %v7956
    %v8288 = vunpack.c.h.b16 %v7956
    %v8289 = vunpack.c.l.b16 %v7957
    %v8290 = vunpack.c.h.b16 %v7957
    %v8291 = vunpack.c.l.b16 %v7958
    %v8292 = vunpack.c.h.b16 %v7958
    %v8293 = vunpack.c.l.b16 %v7959
    %v8294 = vunpack.c.h.b16 %v7959
    %v8295 = vunpack.c.l.b16 %v7960
    %v8296 = vunpack.c.h.b16 %v7960
    %v8297 = vunpack.c.l.b16 %v7961
    %v8298 = vunpack.c.h.b16 %v7961
    %v8299 = vunpack.c.l.b16 %v7962
    %v8300 = vunpack.c.h.b16 %v7962
    %v8301 = vunpack.c.l.b16 %v7963
    %v8302 = vunpack.c.h.b16 %v7963
    %v8303 = vunpack.c.l.b16 %v7964
    %v8304 = vunpack.c.h.b16 %v7964
    %v8305 = vunpack.c.l.b16 %v7965
    %v8306 = vunpack.c.h.b16 %v7965
    %v8307 = vunpack.c.l.b16 %v7966
    %v8308 = vunpack.c.h.b16 %v7966
    %v8309 = vunpack.c.l.b16 %v7967
    %v8310 = vunpack.c.h.b16 %v7967
    %v8311 = vunpack.c.l.b16 %v7968
    %v8312 = vunpack.c.h.b16 %v7968
    %v8313 = vunpack.c.l.b16 %v7969
    %v8314 = vunpack.c.h.b16 %v7969
    %v8315 = vunpack.c.l.b16 %v7970
    %v8316 = vunpack.c.h.b16 %v7970
    %v8317 = vunpack.c.l.b16 %v7971
    %v8318 = vunpack.c.h.b16 %v7971
    %v8319 = vunpack.c.l.b16 %v7972
    %v8320 = vunpack.c.h.b16 %v7972
    %v8321 = vunpack.c.l.b16 %v7973
    %v8322 = vunpack.c.h.b16 %v7973
    %v8323 = vunpack.c.l.b16 %v7974
    %v8324 = vunpack.c.h.b16 %v7974
    %v8325 = vunpack.c.l.b16 %v7975
    %v8326 = vunpack.c.h.b16 %v7975
    %v8327 = vunpack.c.l.b16 %v7976
    %v8328 = vunpack.c.h.b16 %v7976
    %v8329 = vunpack.c.l.b16 %v7977
    %v8330 = vunpack.c.h.b16 %v7977
    %v8331 = vunpack.c.l.b16 %v7978
    %v8332 = vunpack.c.h.b16 %v7978
    %v8333 = vunpack.c.l.b16 %v7979
    %v8334 = vunpack.c.h.b16 %v7979
    %v8335 = vunpack.c.l.b16 %v7980
    %v8336 = vunpack.c.h.b16 %v7980
    %v8337 = vunpack.c.l.b16 %v7981
    %v8338 = vunpack.c.h.b16 %v7981
    %v8339 = vunpack.c.l.b16 %v7982
    %v8340 = vunpack.c.h.b16 %v7982
    %v8341 = vunpack.c.l.b16 %v7983
    %v8342 = vunpack.c.h.b16 %v7983
    %v8343 = vunpack.c.l.b16 %v7984
    %v8344 = vunpack.c.h.b16 %v7984
    %v8345 = vunpack.c.l.b16 %v7985
    %v8346 = vunpack.c.h.b16 %v7985
    %v8347 = vunpack.c.l.b16 %v7986
    %v8348 = vunpack.c.h.b16 %v7986
    %v8349 = vunpack.c.l.b16 %v7987
    %v8350 = vunpack.c.h.b16 %v7987
    %v8351 = vunpack.c.l.b16 %v7988
    %v8352 = vunpack.c.h.b16 %v7988
    %v8353 = vunpack.c.l.b16 %v7989
    %v8354 = vunpack.c.h.b16 %v7989
    %v8355 = vunpack.c.l.b16 %v7990
    %v8356 = vunpack.c.h.b16 %v7990
    %v8357 = vunpack.c.l.b16 %v7991
    %v8358 = vunpack.c.h.b16 %v7991
    %v8359 = vunpack.c.l.b16 %v7992
    %v8360 = vunpack.c.h.b16 %v7992
    %v8361 = vunpack.c.l.b16 %v7993
    %v8362 = vunpack.c.h.b16 %v7993
    %v8363 = vunpack.c.l.b16 %v7994
    %v8364 = vunpack.c.h.b16 %v7994
    %v8365 = vunpack.c.l.b16 %v7995
    %v8366 = vunpack.c.h.b16 %v7995
    %v8367 = vunpack.c.l.b16 %v7996
    %v8368 = vunpack.c.h.b16 %v7996
    %v8369 = vunpack.c.l.b16 %v7997
    %v8370 = vunpack.c.h.b16 %v7997
    %v8371 = vunpack.c.l.b16 %v7998
    %v8372 = vunpack.c.h.b16 %v7998
    %v8373 = vunpack.c.l.b16 %v7999
    %v8374 = vunpack.c.h.b16 %v7999
    %v8375 = vunpack.c.l.b16 %v8000
    %v8376 = vunpack.c.h.b16 %v8000
    %v8377 = vunpack.c.l.b16 %v8001
    %v8378 = vunpack.c.h.b16 %v8001
    %v8379 = vunpack.c.l.b16 %v8002
    %v8380 = vunpack.c.h.b16 %v8002
    %v8381 = vunpack.c.l.b16 %v8003
    %v8382 = vunpack.c.h.b16 %v8003
    %v8383 = vunpack.c.l.b16 %v8004
    %v8384 = vunpack.c.h.b16 %v8004
    %v8385 = vunpack.c.l.b16 %v8005
    %v8386 = vunpack.c.h.b16 %v8005
    %v8387 = vunpack.c.l.b16 %v8006
    %v8388 = vunpack.c.h.b16 %v8006
    %v8389 = vunpack.c.l.b16 %v8007
    %v8390 = vunpack.c.h.b16 %v8007
    %v8391 = vunpack.c.l.b16 %v8008
    %v8392 = vunpack.c.h.b16 %v8008
    %v8393 = vpack.c.b16 %v8145, %v8137
    %v8394 = vpack.c.b16 %v8146, %v8138
    %v8395 = vpack.c.b16 %v8147, %v8139
    %v8396 = vpack.c.b16 %v8148, %v8140
    %v8397 = vpack.c.b16 %v8149, %v8141
    %v8398 = vpack.c.b16 %v8150, %v8142
    %v8399 = vpack.c.b16 %v8151, %v8143
    %v8400 = vpack.c.b16 %v8152, %v8144
    %v8401 = vpack.c.b16 %v8161, %v8153
    %v8402 = vpack.c.b16 %v8162, %v8154
    %v8403 = vpack.c.b16 %v8163, %v8155
    %v8404 = vpack.c.b16 %v8164, %v8156
    %v8405 = vpack.c.b16 %v8165, %v8157
    %v8406 = vpack.c.b16 %v8166, %v8158
    %v8407 = vpack.c.b16 %v8167, %v8159
    %v8408 = vpack.c.b16 %v8168, %v8160
    %v8409 = vpack.c.b16 %v8177, %v8169
    %v8410 = vpack.c.b16 %v8178, %v8170
    %v8411 = vpack.c.b16 %v8179, %v8171
    %v8412 = vpack.c.b16 %v8180, %v8172
    %v8413 = vpack.c.b16 %v8181, %v8173
    %v8414 = vpack.c.b16 %v8182, %v8174
    %v8415 = vpack.c.b16 %v8183, %v8175
    %v8416 = vpack.c.b16 %v8184, %v8176
    %v8417 = vpack.c.b16 %v8193, %v8185
    %v8418 = vpack.c.b16 %v8194, %v8186
    %v8419 = vpack.c.b16 %v8195, %v8187
    %v8420 = vpack.c.b16 %v8196, %v8188
    %v8421 = vpack.c.b16 %v8197, %v8189
    %v8422 = vpack.c.b16 %v8198, %v8190
    %v8423 = vpack.c.b16 %v8199, %v8191
    %v8424 = vpack.c.b16 %v8200, %v8192
    %v8425 = vpack.c.b16 %v8209, %v8201
    %v8426 = vpack.c.b16 %v8210, %v8202
    %v8427 = vpack.c.b16 %v8211, %v8203
    %v8428 = vpack.c.b16 %v8212, %v8204
    %v8429 = vpack.c.b16 %v8213, %v8205
    %v8430 = vpack.c.b16 %v8214, %v8206
    %v8431 = vpack.c.b16 %v8215, %v8207
    %v8432 = vpack.c.b16 %v8216, %v8208
    %v8433 = vpack.c.b16 %v8225, %v8217
    %v8434 = vpack.c.b16 %v8226, %v8218
    %v8435 = vpack.c.b16 %v8227, %v8219
    %v8436 = vpack.c.b16 %v8228, %v8220
    %v8437 = vpack.c.b16 %v8229, %v8221
    %v8438 = vpack.c.b16 %v8230, %v8222
    %v8439 = vpack.c.b16 %v8231, %v8223
    %v8440 = vpack.c.b16 %v8232, %v8224
    %v8441 = vpack.c.b16 %v8241, %v8233
    %v8442 = vpack.c.b16 %v8242, %v8234
    %v8443 = vpack.c.b16 %v8243, %v8235
    %v8444 = vpack.c.b16 %v8244, %v8236
    %v8445 = vpack.c.b16 %v8245, %v8237
    %v8446 = vpack.c.b16 %v8246, %v8238
    %v8447 = vpack.c.b16 %v8247, %v8239
    %v8448 = vpack.c.b16 %v8248, %v8240
    %v8449 = vpack.c.b16 %v8257, %v8249
    %v8450 = vpack.c.b16 %v8258, %v8250
    %v8451 = vpack.c.b16 %v8259, %v8251
    %v8452 = vpack.c.b16 %v8260, %v8252
    %v8453 = vpack.c.b16 %v8261, %v8253
    %v8454 = vpack.c.b16 %v8262, %v8254
    %v8455 = vpack.c.b16 %v8263, %v8255
    %v8456 = vpack.c.b16 %v8264, %v8256
    %v8457 = vpack.c.b16 %v8273, %v8265
    %v8458 = vpack.c.b16 %v8274, %v8266
    %v8459 = vpack.c.b16 %v8275, %v8267
    %v8460 = vpack.c.b16 %v8276, %v8268
    %v8461 = vpack.c.b16 %v8277, %v8269
    %v8462 = vpack.c.b16 %v8278, %v8270
    %v8463 = vpack.c.b16 %v8279, %v8271
    %v8464 = vpack.c.b16 %v8280, %v8272
    %v8465 = vpack.c.b16 %v8289, %v8281
    %v8466 = vpack.c.b16 %v8290, %v8282
    %v8467 = vpack.c.b16 %v8291, %v8283
    %v8468 = vpack.c.b16 %v8292, %v8284
    %v8469 = vpack.c.b16 %v8293, %v8285
    %v8470 = vpack.c.b16 %v8294, %v8286
    %v8471 = vpack.c.b16 %v8295, %v8287
    %v8472 = vpack.c.b16 %v8296, %v8288
    %v8473 = vpack.c.b16 %v8305, %v8297
    %v8474 = vpack.c.b16 %v8306, %v8298
    %v8475 = vpack.c.b16 %v8307, %v8299
    %v8476 = vpack.c.b16 %v8308, %v8300
    %v8477 = vpack.c.b16 %v8309, %v8301
    %v8478 = vpack.c.b16 %v8310, %v8302
    %v8479 = vpack.c.b16 %v8311, %v8303
    %v8480 = vpack.c.b16 %v8312, %v8304
    %v8481 = vpack.c.b16 %v8321, %v8313
    %v8482 = vpack.c.b16 %v8322, %v8314
    %v8483 = vpack.c.b16 %v8323, %v8315
    %v8484 = vpack.c.b16 %v8324, %v8316
    %v8485 = vpack.c.b16 %v8325, %v8317
    %v8486 = vpack.c.b16 %v8326, %v8318
    %v8487 = vpack.c.b16 %v8327, %v8319
    %v8488 = vpack.c.b16 %v8328, %v8320
    %v8489 = vpack.c.b16 %v8337, %v8329
    %v8490 = vpack.c.b16 %v8338, %v8330
    %v8491 = vpack.c.b16 %v8339, %v8331
    %v8492 = vpack.c.b16 %v8340, %v8332
    %v8493 = vpack.c.b16 %v8341, %v8333
    %v8494 = vpack.c.b16 %v8342, %v8334
    %v8495 = vpack.c.b16 %v8343, %v8335
    %v8496 = vpack.c.b16 %v8344, %v8336
    %v8497 = vpack.c.b16 %v8353, %v8345
    %v8498 = vpack.c.b16 %v8354, %v8346
    %v8499 = vpack.c.b16 %v8355, %v8347
    %v8500 = vpack.c.b16 %v8356, %v8348
    %v8501 = vpack.c.b16 %v8357, %v8349
    %v8502 = vpack.c.b16 %v8358, %v8350
    %v8503 = vpack.c.b16 %v8359, %v8351
    %v8504 = vpack.c.b16 %v8360, %v8352
    %v8505 = vpack.c.b16 %v8369, %v8361
    %v8506 = vpack.c.b16 %v8370, %v8362
    %v8507 = vpack.c.b16 %v8371, %v8363
    %v8508 = vpack.c.b16 %v8372, %v8364
    %v8509 = vpack.c.b16 %v8373, %v8365
    %v8510 = vpack.c.b16 %v8374, %v8366
    %v8511 = vpack.c.b16 %v8375, %v8367
    %v8512 = vpack.c.b16 %v8376, %v8368
    %v8513 = vpack.c.b16 %v8385, %v8377
    %v8514 = vpack.c.b16 %v8386, %v8378
    %v8515 = vpack.c.b16 %v8387, %v8379
    %v8516 = vpack.c.b16 %v8388, %v8380
    %v8517 = vpack.c.b16 %v8389, %v8381
    %v8518 = vpack.c.b16 %v8390, %v8382
    %v8519 = vpack.c.b16 %v8391, %v8383
    %v8520 = vpack.c.b16 %v8392, %v8384
    %8649 = vmatpush.bf16.msra.mxu0 %v8449
    %8650 = vmatpush.bf16.msra.mxu0 %v8441
    %8651 = vmatpush.bf16.msra.mxu0 %v8433
    %8652 = vmatpush.bf16.msra.mxu0 %v8425
    %8653 = vmatpush.bf16.msra.mxu0 %v8417
    %8654 = vmatpush.bf16.msra.mxu0 %v8409
    %8655 = vmatpush.bf16.msra.mxu0 %v8401
    %8656 = vmatpush.bf16.msra.mxu0 %v8393
    %8657 = vmatmul.bf16.gmra.mxu0 %v7879
    %v8658 = vpop.f32.mrf.mxu0
    %v8659 = vadd.f32 0.0, %v8658
    %v8660 = vpop.f32.mrf.mxu0
    %8661 = vdwg.mxu0
    %8662 = vmatpush.bf16.msra.mxu0 %v8513
    %8663 = vmatpush.bf16.msra.mxu0 %v8505
    %8664 = vmatpush.bf16.msra.mxu0 %v8497
    %8665 = vmatpush.bf16.msra.mxu0 %v8489
    %8666 = vmatpush.bf16.msra.mxu0 %v8481
    %8667 = vmatpush.bf16.msra.mxu0 %v8473
    %8668 = vmatpush.bf16.msra.mxu0 %v8465
    %8669 = vmatpush.bf16.msra.mxu0 %v8457
    %8670 = vmatmul.bf16.gmra.mxu0 %v7880
    %v8671 = vpop.f32.mrf.mxu0
    %v8672 = vadd.f32 %v8659, %v8671
    %v8673 = vpop.f32.mrf.mxu0
    %8674 = vdwg.mxu0
    %8675 = vmatpush.bf16.msra.mxu0 %v8450
    %8676 = vmatpush.bf16.msra.mxu0 %v8442
    %8677 = vmatpush.bf16.msra.mxu0 %v8434
    %8678 = vmatpush.bf16.msra.mxu0 %v8426
    %8679 = vmatpush.bf16.msra.mxu0 %v8418
    %8680 = vmatpush.bf16.msra.mxu0 %v8410
    %8681 = vmatpush.bf16.msra.mxu0 %v8402
    %8682 = vmatpush.bf16.msra.mxu0 %v8394
    %8683 = vmatmul.bf16.gmra.mxu0 %v7879
    %v8684 = vpop.f32.mrf.mxu0
    %v8685 = vadd.f32 0.0, %v8684
    %v8686 = vpop.f32.mrf.mxu0
    %8687 = vdwg.mxu0
    %8688 = vmatpush.bf16.msra.mxu0 %v8514
    %8689 = vmatpush.bf16.msra.mxu0 %v8506
    %8690 = vmatpush.bf16.msra.mxu0 %v8498
    %8691 = vmatpush.bf16.msra.mxu0 %v8490
    %8692 = vmatpush.bf16.msra.mxu0 %v8482
    %8693 = vmatpush.bf16.msra.mxu0 %v8474
    %8694 = vmatpush.bf16.msra.mxu0 %v8466
    %8695 = vmatpush.bf16.msra.mxu0 %v8458
    %8696 = vmatmul.bf16.gmra.mxu0 %v7880
    %v8697 = vpop.f32.mrf.mxu0
    %v8698 = vadd.f32 %v8685, %v8697
    %v8699 = vpop.f32.mrf.mxu0
    %8700 = vdwg.mxu0
    %8701 = vmatpush.bf16.msra.mxu0 %v8451
    %8702 = vmatpush.bf16.msra.mxu0 %v8443
    %8703 = vmatpush.bf16.msra.mxu0 %v8435
    %8704 = vmatpush.bf16.msra.mxu0 %v8427
    %8705 = vmatpush.bf16.msra.mxu0 %v8419
    %8706 = vmatpush.bf16.msra.mxu0 %v8411
    %8707 = vmatpush.bf16.msra.mxu0 %v8403
    %8708 = vmatpush.bf16.msra.mxu0 %v8395
    %8709 = vmatmul.bf16.gmra.mxu0 %v7879
    %v8710 = vpop.f32.mrf.mxu0
    %v8711 = vadd.f32 0.0, %v8710
    %v8712 = vpop.f32.mrf.mxu0
    %8713 = vdwg.mxu0
    %8714 = vmatpush.bf16.msra.mxu0 %v8515
    %8715 = vmatpush.bf16.msra.mxu0 %v8507
    %8716 = vmatpush.bf16.msra.mxu0 %v8499
    %8717 = vmatpush.bf16.msra.mxu0 %v8491
    %8718 = vmatpush.bf16.msra.mxu0 %v8483
    %8719 = vmatpush.bf16.msra.mxu0 %v8475
    %8720 = vmatpush.bf16.msra.mxu0 %v8467
    %8721 = vmatpush.bf16.msra.mxu0 %v8459
    %8722 = vmatmul.bf16.gmra.mxu0 %v7880
    %v8723 = vpop.f32.mrf.mxu0
    %v8724 = vadd.f32 %v8711, %v8723
    %v8725 = vpop.f32.mrf.mxu0
    %8726 = vdwg.mxu0
    %8727 = vmatpush.bf16.msra.mxu0 %v8452
    %8728 = vmatpush.bf16.msra.mxu0 %v8444
    %8729 = vmatpush.bf16.msra.mxu0 %v8436
    %8730 = vmatpush.bf16.msra.mxu0 %v8428
    %8731 = vmatpush.bf16.msra.mxu0 %v8420
    %8732 = vmatpush.bf16.msra.mxu0 %v8412
    %8733 = vmatpush.bf16.msra.mxu0 %v8404
    %8734 = vmatpush.bf16.msra.mxu0 %v8396
    %8735 = vmatmul.bf16.gmra.mxu0 %v7879
    %v8736 = vpop.f32.mrf.mxu0
    %v8737 = vadd.f32 0.0, %v8736
    %v8738 = vpop.f32.mrf.mxu0
    %8739 = vdwg.mxu0
    %8740 = vmatpush.bf16.msra.mxu0 %v8516
    %8741 = vmatpush.bf16.msra.mxu0 %v8508
    %8742 = vmatpush.bf16.msra.mxu0 %v8500
    %8743 = vmatpush.bf16.msra.mxu0 %v8492
    %8744 = vmatpush.bf16.msra.mxu0 %v8484
    %8745 = vmatpush.bf16.msra.mxu0 %v8476
    %8746 = vmatpush.bf16.msra.mxu0 %v8468
    %8747 = vmatpush.bf16.msra.mxu0 %v8460
    %8748 = vmatmul.bf16.gmra.mxu0 %v7880
    %v8749 = vpop.f32.mrf.mxu0
    %v8750 = vadd.f32 %v8737, %v8749
    %v8751 = vpop.f32.mrf.mxu0
    %8752 = vdwg.mxu0
    %8753 = vmatpush.bf16.msra.mxu0 %v8453
    %8754 = vmatpush.bf16.msra.mxu0 %v8445
    %8755 = vmatpush.bf16.msra.mxu0 %v8437
    %8756 = vmatpush.bf16.msra.mxu0 %v8429
    %8757 = vmatpush.bf16.msra.mxu0 %v8421
    %8758 = vmatpush.bf16.msra.mxu0 %v8413
    %8759 = vmatpush.bf16.msra.mxu0 %v8405
    %8760 = vmatpush.bf16.msra.mxu0 %v8397
    %8761 = vmatmul.bf16.gmra.mxu0 %v7879
    %v8762 = vpop.f32.mrf.mxu0
    %v8763 = vadd.f32 0.0, %v8762
    %v8764 = vpop.f32.mrf.mxu0
    %8765 = vdwg.mxu0
    %8766 = vmatpush.bf16.msra.mxu0 %v8517
    %8767 = vmatpush.bf16.msra.mxu0 %v8509
    %8768 = vmatpush.bf16.msra.mxu0 %v8501
    %8769 = vmatpush.bf16.msra.mxu0 %v8493
    %8770 = vmatpush.bf16.msra.mxu0 %v8485
    %8771 = vmatpush.bf16.msra.mxu0 %v8477
    %8772 = vmatpush.bf16.msra.mxu0 %v8469
    %8773 = vmatpush.bf16.msra.mxu0 %v8461
    %8774 = vmatmul.bf16.gmra.mxu0 %v7880
    %v8775 = vpop.f32.mrf.mxu0
    %v8776 = vadd.f32 %v8763, %v8775
    %v8777 = vpop.f32.mrf.mxu0
    %8778 = vdwg.mxu0
    %8779 = vmatpush.bf16.msra.mxu0 %v8454
    %8780 = vmatpush.bf16.msra.mxu0 %v8446
    %8781 = vmatpush.bf16.msra.mxu0 %v8438
    %8782 = vmatpush.bf16.msra.mxu0 %v8430
    %8783 = vmatpush.bf16.msra.mxu0 %v8422
    %8784 = vmatpush.bf16.msra.mxu0 %v8414
    %8785 = vmatpush.bf16.msra.mxu0 %v8406
    %8786 = vmatpush.bf16.msra.mxu0 %v8398
    %8787 = vmatmul.bf16.gmra.mxu0 %v7879
    %v8788 = vpop.f32.mrf.mxu0
    %v8789 = vadd.f32 0.0, %v8788
    %v8790 = vpop.f32.mrf.mxu0
    %8791 = vdwg.mxu0
    %8792 = vmatpush.bf16.msra.mxu0 %v8518
    %8793 = vmatpush.bf16.msra.mxu0 %v8510
    %8794 = vmatpush.bf16.msra.mxu0 %v8502
    %8795 = vmatpush.bf16.msra.mxu0 %v8494
    %8796 = vmatpush.bf16.msra.mxu0 %v8486
    %8797 = vmatpush.bf16.msra.mxu0 %v8478
    %8798 = vmatpush.bf16.msra.mxu0 %v8470
    %8799 = vmatpush.bf16.msra.mxu0 %v8462
    %8800 = vmatmul.bf16.gmra.mxu0 %v7880
    %v8801 = vpop.f32.mrf.mxu0
    %v8802 = vadd.f32 %v8789, %v8801
    %v8803 = vpop.f32.mrf.mxu0
    %8804 = vdwg.mxu0
    %8805 = vmatpush.bf16.msra.mxu0 %v8455
    %8806 = vmatpush.bf16.msra.mxu0 %v8447
    %8807 = vmatpush.bf16.msra.mxu0 %v8439
    %8808 = vmatpush.bf16.msra.mxu0 %v8431
    %8809 = vmatpush.bf16.msra.mxu0 %v8423
    %8810 = vmatpush.bf16.msra.mxu0 %v8415
    %8811 = vmatpush.bf16.msra.mxu0 %v8407
    %8812 = vmatpush.bf16.msra.mxu0 %v8399
    %8813 = vmatmul.bf16.gmra.mxu0 %v7879
    %v8814 = vpop.f32.mrf.mxu0
    %v8815 = vadd.f32 0.0, %v8814
    %v8816 = vpop.f32.mrf.mxu0
    %8817 = vdwg.mxu0
    %8818 = vmatpush.bf16.msra.mxu0 %v8519
    %8819 = vmatpush.bf16.msra.mxu0 %v8511
    %8820 = vmatpush.bf16.msra.mxu0 %v8503
    %8821 = vmatpush.bf16.msra.mxu0 %v8495
    %8822 = vmatpush.bf16.msra.mxu0 %v8487
    %8823 = vmatpush.bf16.msra.mxu0 %v8479
    %8824 = vmatpush.bf16.msra.mxu0 %v8471
    %8825 = vmatpush.bf16.msra.mxu0 %v8463
    %8826 = vmatmul.bf16.gmra.mxu0 %v7880
    %v8827 = vpop.f32.mrf.mxu0
    %v8828 = vadd.f32 %v8815, %v8827
    %v8829 = vpop.f32.mrf.mxu0
    %8830 = vdwg.mxu0
    %8831 = vmatpush.bf16.msra.mxu0 %v8456
    %8832 = vmatpush.bf16.msra.mxu0 %v8448
    %8833 = vmatpush.bf16.msra.mxu0 %v8440
    %8834 = vmatpush.bf16.msra.mxu0 %v8432
    %8835 = vmatpush.bf16.msra.mxu0 %v8424
    %8836 = vmatpush.bf16.msra.mxu0 %v8416
    %8837 = vmatpush.bf16.msra.mxu0 %v8408
    %8838 = vmatpush.bf16.msra.mxu0 %v8400
    %8839 = vmatmul.bf16.gmra.mxu0 %v7879
    %v8840 = vpop.f32.mrf.mxu0
    %v8841 = vadd.f32 0.0, %v8840
    %v8842 = vpop.f32.mrf.mxu0
    %8843 = vdwg.mxu0
    %8844 = vmatpush.bf16.msra.mxu0 %v8520
    %8845 = vmatpush.bf16.msra.mxu0 %v8512
    %8846 = vmatpush.bf16.msra.mxu0 %v8504
    %8847 = vmatpush.bf16.msra.mxu0 %v8496
    %8848 = vmatpush.bf16.msra.mxu0 %v8488
    %8849 = vmatpush.bf16.msra.mxu0 %v8480
    %8850 = vmatpush.bf16.msra.mxu0 %v8472
    %8851 = vmatpush.bf16.msra.mxu0 %v8464
    %8852 = vmatmul.bf16.gmra.mxu0 %v7880
    %v8853 = vpop.f32.mrf.mxu0
    %v8854 = vadd.f32 %v8841, %v8853
    %v8855 = vpop.f32.mrf.mxu0
    %8856 = vdwg.mxu0
    %v8857 = vld [vmem:[%s3023] sm:$0xff]
    %v8858 = vld [vmem:[%s3021] sm:$0xff]
    %s8859 = scalar_lea.vmem [#allocation2], 192
    %v8860 = vld [vmem:[%s8859] sm:$0xff]
    %v8861 = vld [vmem:[%s8859 + $0x8] sm:$0xff]
    %v8862 = vld [vmem:[%s8859 + $0x10] sm:$0xff]
    %v8863 = vld [vmem:[%s8859 + $0x18] sm:$0xff]
    %v8864 = vadd.f32 %v8860, %v8672
    %v8865 = vadd.f32 %v8861, %v8698
    %v8866 = vadd.f32 %v8862, %v8724
    %v8867 = vadd.f32 %v8863, %v8750
    %s8868 = scalar_lea.vmem [#allocation3], 32
    %v8869 = vld [vmem:[%s8868] sm:$0xff]
    %v8870 = vld [vmem:[%s8868 + $0x8] sm:$0xff]
    %v8871 = vld [vmem:[%s8868 + $0x10] sm:$0xff]
    %v8872 = vld [vmem:[%s8868 + $0x18] sm:$0xff]
    %v8873 = vadd.f32 %v8869, %v8776
    %v8874 = vadd.f32 %v8870, %v8802
    %v8875 = vadd.f32 %v8871, %v8828
    %v8876 = vadd.f32 %v8872, %v8854
    %v8877 = vld [vmem:[#allocation7] sm:$0xff]
    %v8878 = vxor.u32 %v8864, 2147483648
    %v8879 = vmul.f32 %v8878, 1.442695
    %v8880 = vpow.pop %v8879
    %v8881 = vadd.f32 %v8880, 1.0
    %v8882 = vrcp.pop %v8881
    %v8883 = vmul.f32 %v8881, %v8882
    %v8884 = vsub.f32 1.0, %v8883
    %v8885 = vmul.f32 %v8882, %v8884
    %v8886 = vadd.f32 %v8882, %v8885
    %vm8887 = vweird.f32 %v8881
    %vm8888 = vweird.f32 %v8882
    %vm8889 = vmor %vm8887, %vm8888
    %v8890 = vsel %vm8889, %v8882, %v8886
    %v8891 = vand.u32 2147483647, %v8881
    %vm8892 = vcmp.eq.f32.partialorder %v8891, 8.507059e+37
    %v8893 = vand.u32 %v8881, 2147483648
    %v8894 = vor.u32 1.1754944e-38, %v8893
    %v8895 = vsel %vm8892, %v8894, %v8890
    %v8896 = vmul.f32 1.0, %v8895
    %v8897 = vxor.u32 %v8865, 2147483648
    %v8898 = vmul.f32 %v8897, 1.442695
    %v8899 = vpow.pop %v8898
    %v8900 = vadd.f32 %v8899, 1.0
    %v8901 = vrcp.pop %v8900
    %v8902 = vmul.f32 %v8900, %v8901
    %v8903 = vsub.f32 1.0, %v8902
    %v8904 = vmul.f32 %v8901, %v8903
    %v8905 = vadd.f32 %v8901, %v8904
    %vm8906 = vweird.f32 %v8900
    %vm8907 = vweird.f32 %v8901
    %vm8908 = vmor %vm8906, %vm8907
    %v8909 = vsel %vm8908, %v8901, %v8905
    %v8910 = vand.u32 2147483647, %v8900
    %vm8911 = vcmp.eq.f32.partialorder %v8910, 8.507059e+37
    %v8912 = vand.u32 %v8900, 2147483648
    %v8913 = vor.u32 1.1754944e-38, %v8912
    %v8914 = vsel %vm8911, %v8913, %v8909
    %v8915 = vmul.f32 1.0, %v8914
    %v8916 = vtanh.pop %v8866
    %v8917 = vxor.u32 %v8867, 2147483648
    %v8918 = vmul.f32 %v8917, 1.442695
    %v8919 = vpow.pop %v8918
    %v8920 = vadd.f32 %v8919, 1.0
    %v8921 = vrcp.pop %v8920
    %v8922 = vmul.f32 %v8920, %v8921
    %v8923 = vsub.f32 1.0, %v8922
    %v8924 = vmul.f32 %v8921, %v8923
    %v8925 = vadd.f32 %v8921, %v8924
    %vm8926 = vweird.f32 %v8920
    %vm8927 = vweird.f32 %v8921
    %vm8928 = vmor %vm8926, %vm8927
    %v8929 = vsel %vm8928, %v8921, %v8925
    %v8930 = vand.u32 2147483647, %v8920
    %vm8931 = vcmp.eq.f32.partialorder %v8930, 8.507059e+37
    %v8932 = vand.u32 %v8920, 2147483648
    %v8933 = vor.u32 1.1754944e-38, %v8932
    %v8934 = vsel %vm8931, %v8933, %v8929
    %v8935 = vmul.f32 1.0, %v8934
    %v8936 = vmul.f32 %v8915, %v8877
    %v8937 = vmul.f32 %v8896, %v8916
    %v8938 = vadd.f32 %v8936, %v8937
    %v8939 = vtanh.pop %v8938
    %v8940 = vmul.f32 %v8935, %v8939
    %v8941 = vld [vmem:[#allocation8] sm:$0xff]
    %v8942 = vxor.u32 %v8873, 2147483648
    %v8943 = vmul.f32 %v8942, 1.442695
    %v8944 = vpow.pop %v8943
    %v8945 = vadd.f32 %v8944, 1.0
    %v8946 = vrcp.pop %v8945
    %v8947 = vmul.f32 %v8945, %v8946
    %v8948 = vsub.f32 1.0, %v8947
    %v8949 = vmul.f32 %v8946, %v8948
    %v8950 = vadd.f32 %v8946, %v8949
    %vm8951 = vweird.f32 %v8945
    %vm8952 = vweird.f32 %v8946
    %vm8953 = vmor %vm8951, %vm8952
    %v8954 = vsel %vm8953, %v8946, %v8950
    %v8955 = vand.u32 2147483647, %v8945
    %vm8956 = vcmp.eq.f32.partialorder %v8955, 8.507059e+37
    %v8957 = vand.u32 %v8945, 2147483648
    %v8958 = vor.u32 1.1754944e-38, %v8957
    %v8959 = vsel %vm8956, %v8958, %v8954
    %v8960 = vmul.f32 1.0, %v8959
    %v8961 = vxor.u32 %v8874, 2147483648
    %v8962 = vmul.f32 %v8961, 1.442695
    %v8963 = vpow.pop %v8962
    %v8964 = vadd.f32 %v8963, 1.0
    %v8965 = vrcp.pop %v8964
    %v8966 = vmul.f32 %v8964, %v8965
    %v8967 = vsub.f32 1.0, %v8966
    %v8968 = vmul.f32 %v8965, %v8967
    %v8969 = vadd.f32 %v8965, %v8968
    %vm8970 = vweird.f32 %v8964
    %vm8971 = vweird.f32 %v8965
    %vm8972 = vmor %vm8970, %vm8971
    %v8973 = vsel %vm8972, %v8965, %v8969
    %v8974 = vand.u32 2147483647, %v8964
    %vm8975 = vcmp.eq.f32.partialorder %v8974, 8.507059e+37
    %v8976 = vand.u32 %v8964, 2147483648
    %v8977 = vor.u32 1.1754944e-38, %v8976
    %v8978 = vsel %vm8975, %v8977, %v8973
    %v8979 = vmul.f32 1.0, %v8978
    %v8980 = vtanh.pop %v8875
    %v8981 = vxor.u32 %v8876, 2147483648
    %v8982 = vmul.f32 %v8981, 1.442695
    %v8983 = vpow.pop %v8982
    %v8984 = vadd.f32 %v8983, 1.0
    %v8985 = vrcp.pop %v8984
    %v8986 = vmul.f32 %v8984, %v8985
    %v8987 = vsub.f32 1.0, %v8986
    %v8988 = vmul.f32 %v8985, %v8987
    %v8989 = vadd.f32 %v8985, %v8988
    %vm8990 = vweird.f32 %v8984
    %vm8991 = vweird.f32 %v8985
    %vm8992 = vmor %vm8990, %vm8991
    %v8993 = vsel %vm8992, %v8985, %v8989
    %v8994 = vand.u32 2147483647, %v8984
    %vm8995 = vcmp.eq.f32.partialorder %v8994, 8.507059e+37
    %v8996 = vand.u32 %v8984, 2147483648
    %v8997 = vor.u32 1.1754944e-38, %v8996
    %v8998 = vsel %vm8995, %v8997, %v8993
    %v8999 = vmul.f32 1.0, %v8998
    %v9000 = vmul.f32 %v8979, %v8941
    %v9001 = vmul.f32 %v8960, %v8980
    %v9002 = vadd.f32 %v9000, %v9001
    %v9003 = vtanh.pop %v9002
    %v9004 = vmul.f32 %v8999, %v9003
    %vm9005 = vcmp.gt.f32.partialorder %v8857, 0.0
    %v9006 = vld [vmem:[#allocation6] sm:$0xff]
    %v9007 = vsel %vm9005, 1, 0
    %9008 = vset.pattern.permute.xlu0 0
    %9009 = vperm.xlu0 %9008, %v9007
    %v9010 = vpop.permute.xlu0 %9009
    %vm9011 = vcmp.eq.s32.totalorder %v9010, 1
    %v9012 = vsel %vm9011, %v8940, %v9006
    %vm9013 = vcmp.gt.f32.partialorder %v8858, 0.0
    %v9014 = vsel %vm9013, 1, 0
    %9015 = vset.pattern.permute.xlu0 0
    %9016 = vperm.xlu0 %9015, %v9014
    %v9017 = vpop.permute.xlu0 %9016
    %vm9018 = vcmp.eq.s32.totalorder %v9017, 1
    %v9019 = vsel %vm9018, %v9004, %v7878
    %v9020 = vsel %vm9011, %v8938, %v8877
    %9021 = vst [vmem:[#allocation7] sm:$0xff] %v9020
    %v9022 = vld [vmem:[#allocation8] sm:$0xff]
    %v9023 = vsel %vm9018, %v9002, %v9022
    %9024 = vst [vmem:[#allocation8] sm:$0xff] %v9023
    %9025 = vst [vmem:[#allocation6] sm:$0xff] %v9012
    %9026 = vst [vmem:[#allocation6 + $0x8] sm:$0xff] %v9019
    %9028 = vset.pattern.permute.xlu0 0
    %9029 = vperm.xlu0 %9028, %v8857
    %v9030 = vpop.permute.xlu0 %9029
    %v9032 = vmul.f32 %v9012, %v9030
    %s9033 = scalar_lea.vmem [#allocation4], 48
    %9034 = vst [vmem:[%s9033] sm:$0xff] %v9032
    %9036 = vset.pattern.permute.xlu0 0
    %9037 = vperm.xlu0 %9036, %v8858
    %v9038 = vpop.permute.xlu0 %9037
    %v9040 = vmul.f32 %v9019, %v9038
    %s9041 = scalar_lea.vmem [#allocation5], 8
    %9042 = vst [vmem:[%s9041] sm:$0xff] %v9040
    %v9043 = vld [vmem:[#allocation6] sm:$0xff]
    %v9044 = vld [vmem:[#allocation6 + $0x8] sm:$0xff]
    %v9045 = vpack.c.bf16 %v9043, %v9043
    %v9046 = vpack.c.bf16 %v9044, %v9044
    %v9047 = vld [vmem:[#allocation14] sm:$0xff]
    %v9048 = vld [vmem:[#allocation14 + $0x8] sm:$0xff]
    %v9049 = vld [vmem:[#allocation14 + $0x10] sm:$0xff]
    %v9050 = vld [vmem:[#allocation14 + $0x18] sm:$0xff]
    %v9051 = vld [vmem:[#allocation14 + $0x20] sm:$0xff]
    %v9052 = vld [vmem:[#allocation14 + $0x28] sm:$0xff]
    %v9053 = vld [vmem:[#allocation14 + $0x30] sm:$0xff]
    %v9054 = vld [vmem:[#allocation14 + $0x38] sm:$0xff]
    %v9055 = vld [vmem:[#allocation14 + $0x40] sm:$0xff]
    %v9056 = vld [vmem:[#allocation14 + $0x48] sm:$0xff]
    %v9057 = vld [vmem:[#allocation14 + $0x50] sm:$0xff]
    %v9058 = vld [vmem:[#allocation14 + $0x58] sm:$0xff]
    %v9059 = vld [vmem:[#allocation14 + $0x60] sm:$0xff]
    %v9060 = vld [vmem:[#allocation14 + $0x68] sm:$0xff]
    %v9061 = vld [vmem:[#allocation14 + $0x70] sm:$0xff]
    %v9062 = vld [vmem:[#allocation14 + $0x78] sm:$0xff]
    %v9063 = vld [vmem:[#allocation14 + $0x80] sm:$0xff]
    %v9064 = vld [vmem:[#allocation14 + $0x88] sm:$0xff]
    %v9065 = vld [vmem:[#allocation14 + $0x90] sm:$0xff]
    %v9066 = vld [vmem:[#allocation14 + $0x98] sm:$0xff]
    %v9067 = vld [vmem:[#allocation14 + $0xa0] sm:$0xff]
    %v9068 = vld [vmem:[#allocation14 + $0xa8] sm:$0xff]
    %v9069 = vld [vmem:[#allocation14 + $0xb0] sm:$0xff]
    %v9070 = vld [vmem:[#allocation14 + $0xb8] sm:$0xff]
    %v9071 = vld [vmem:[#allocation14 + $0xc0] sm:$0xff]
    %v9072 = vld [vmem:[#allocation14 + $0xc8] sm:$0xff]
    %v9073 = vld [vmem:[#allocation14 + $0xd0] sm:$0xff]
    %v9074 = vld [vmem:[#allocation14 + $0xd8] sm:$0xff]
    %v9075 = vld [vmem:[#allocation14 + $0xe0] sm:$0xff]
    %v9076 = vld [vmem:[#allocation14 + $0xe8] sm:$0xff]
    %v9077 = vld [vmem:[#allocation14 + $0xf0] sm:$0xff]
    %v9078 = vld [vmem:[#allocation14 + $0xf8] sm:$0xff]
    %v9079 = vld [vmem:[#allocation14 + $0x100] sm:$0xff]
    %v9080 = vld [vmem:[#allocation14 + $0x108] sm:$0xff]
    %v9081 = vld [vmem:[#allocation14 + $0x110] sm:$0xff]
    %v9082 = vld [vmem:[#allocation14 + $0x118] sm:$0xff]
    %v9083 = vld [vmem:[#allocation14 + $0x120] sm:$0xff]
    %v9084 = vld [vmem:[#allocation14 + $0x128] sm:$0xff]
    %v9085 = vld [vmem:[#allocation14 + $0x130] sm:$0xff]
    %v9086 = vld [vmem:[#allocation14 + $0x138] sm:$0xff]
    %v9087 = vld [vmem:[#allocation14 + $0x140] sm:$0xff]
    %v9088 = vld [vmem:[#allocation14 + $0x148] sm:$0xff]
    %v9089 = vld [vmem:[#allocation14 + $0x150] sm:$0xff]
    %v9090 = vld [vmem:[#allocation14 + $0x158] sm:$0xff]
    %v9091 = vld [vmem:[#allocation14 + $0x160] sm:$0xff]
    %v9092 = vld [vmem:[#allocation14 + $0x168] sm:$0xff]
    %v9093 = vld [vmem:[#allocation14 + $0x170] sm:$0xff]
    %v9094 = vld [vmem:[#allocation14 + $0x178] sm:$0xff]
    %v9095 = vld [vmem:[#allocation14 + $0x180] sm:$0xff]
    %v9096 = vld [vmem:[#allocation14 + $0x188] sm:$0xff]
    %v9097 = vld [vmem:[#allocation14 + $0x190] sm:$0xff]
    %v9098 = vld [vmem:[#allocation14 + $0x198] sm:$0xff]
    %v9099 = vld [vmem:[#allocation14 + $0x1a0] sm:$0xff]
    %v9100 = vld [vmem:[#allocation14 + $0x1a8] sm:$0xff]
    %v9101 = vld [vmem:[#allocation14 + $0x1b0] sm:$0xff]
    %v9102 = vld [vmem:[#allocation14 + $0x1b8] sm:$0xff]
    %v9103 = vld [vmem:[#allocation14 + $0x1c0] sm:$0xff]
    %v9104 = vld [vmem:[#allocation14 + $0x1c8] sm:$0xff]
    %v9105 = vld [vmem:[#allocation14 + $0x1d0] sm:$0xff]
    %v9106 = vld [vmem:[#allocation14 + $0x1d8] sm:$0xff]
    %v9107 = vld [vmem:[#allocation14 + $0x1e0] sm:$0xff]
    %v9108 = vld [vmem:[#allocation14 + $0x1e8] sm:$0xff]
    %v9109 = vld [vmem:[#allocation14 + $0x1f0] sm:$0xff]
    %v9110 = vld [vmem:[#allocation14 + $0x1f8] sm:$0xff]
    %v9111 = vld [vmem:[#allocation14 + $0x200] sm:$0xff]
    %v9112 = vld [vmem:[#allocation14 + $0x208] sm:$0xff]
    %v9113 = vld [vmem:[#allocation14 + $0x210] sm:$0xff]
    %v9114 = vld [vmem:[#allocation14 + $0x218] sm:$0xff]
    %v9115 = vld [vmem:[#allocation14 + $0x220] sm:$0xff]
    %v9116 = vld [vmem:[#allocation14 + $0x228] sm:$0xff]
    %v9117 = vld [vmem:[#allocation14 + $0x230] sm:$0xff]
    %v9118 = vld [vmem:[#allocation14 + $0x238] sm:$0xff]
    %v9119 = vld [vmem:[#allocation14 + $0x240] sm:$0xff]
    %v9120 = vld [vmem:[#allocation14 + $0x248] sm:$0xff]
    %v9121 = vld [vmem:[#allocation14 + $0x250] sm:$0xff]
    %v9122 = vld [vmem:[#allocation14 + $0x258] sm:$0xff]
    %v9123 = vld [vmem:[#allocation14 + $0x260] sm:$0xff]
    %v9124 = vld [vmem:[#allocation14 + $0x268] sm:$0xff]
    %v9125 = vld [vmem:[#allocation14 + $0x270] sm:$0xff]
    %v9126 = vld [vmem:[#allocation14 + $0x278] sm:$0xff]
    %v9127 = vld [vmem:[#allocation14 + $0x280] sm:$0xff]
    %v9128 = vld [vmem:[#allocation14 + $0x288] sm:$0xff]
    %v9129 = vld [vmem:[#allocation14 + $0x290] sm:$0xff]
    %v9130 = vld [vmem:[#allocation14 + $0x298] sm:$0xff]
    %v9131 = vld [vmem:[#allocation14 + $0x2a0] sm:$0xff]
    %v9132 = vld [vmem:[#allocation14 + $0x2a8] sm:$0xff]
    %v9133 = vld [vmem:[#allocation14 + $0x2b0] sm:$0xff]
    %v9134 = vld [vmem:[#allocation14 + $0x2b8] sm:$0xff]
    %v9135 = vld [vmem:[#allocation14 + $0x2c0] sm:$0xff]
    %v9136 = vld [vmem:[#allocation14 + $0x2c8] sm:$0xff]
    %v9137 = vld [vmem:[#allocation14 + $0x2d0] sm:$0xff]
    %v9138 = vld [vmem:[#allocation14 + $0x2d8] sm:$0xff]
    %v9139 = vld [vmem:[#allocation14 + $0x2e0] sm:$0xff]
    %v9140 = vld [vmem:[#allocation14 + $0x2e8] sm:$0xff]
    %v9141 = vld [vmem:[#allocation14 + $0x2f0] sm:$0xff]
    %v9142 = vld [vmem:[#allocation14 + $0x2f8] sm:$0xff]
    %v9143 = vld [vmem:[#allocation14 + $0x300] sm:$0xff]
    %v9144 = vld [vmem:[#allocation14 + $0x308] sm:$0xff]
    %v9145 = vld [vmem:[#allocation14 + $0x310] sm:$0xff]
    %v9146 = vld [vmem:[#allocation14 + $0x318] sm:$0xff]
    %v9147 = vld [vmem:[#allocation14 + $0x320] sm:$0xff]
    %v9148 = vld [vmem:[#allocation14 + $0x328] sm:$0xff]
    %v9149 = vld [vmem:[#allocation14 + $0x330] sm:$0xff]
    %v9150 = vld [vmem:[#allocation14 + $0x338] sm:$0xff]
    %v9151 = vld [vmem:[#allocation14 + $0x340] sm:$0xff]
    %v9152 = vld [vmem:[#allocation14 + $0x348] sm:$0xff]
    %v9153 = vld [vmem:[#allocation14 + $0x350] sm:$0xff]
    %v9154 = vld [vmem:[#allocation14 + $0x358] sm:$0xff]
    %v9155 = vld [vmem:[#allocation14 + $0x360] sm:$0xff]
    %v9156 = vld [vmem:[#allocation14 + $0x368] sm:$0xff]
    %v9157 = vld [vmem:[#allocation14 + $0x370] sm:$0xff]
    %v9158 = vld [vmem:[#allocation14 + $0x378] sm:$0xff]
    %v9159 = vld [vmem:[#allocation14 + $0x380] sm:$0xff]
    %v9160 = vld [vmem:[#allocation14 + $0x388] sm:$0xff]
    %v9161 = vld [vmem:[#allocation14 + $0x390] sm:$0xff]
    %v9162 = vld [vmem:[#allocation14 + $0x398] sm:$0xff]
    %v9163 = vld [vmem:[#allocation14 + $0x3a0] sm:$0xff]
    %v9164 = vld [vmem:[#allocation14 + $0x3a8] sm:$0xff]
    %v9165 = vld [vmem:[#allocation14 + $0x3b0] sm:$0xff]
    %v9166 = vld [vmem:[#allocation14 + $0x3b8] sm:$0xff]
    %v9167 = vld [vmem:[#allocation14 + $0x3c0] sm:$0xff]
    %v9168 = vld [vmem:[#allocation14 + $0x3c8] sm:$0xff]
    %v9169 = vld [vmem:[#allocation14 + $0x3d0] sm:$0xff]
    %v9170 = vld [vmem:[#allocation14 + $0x3d8] sm:$0xff]
    %v9171 = vld [vmem:[#allocation14 + $0x3e0] sm:$0xff]
    %v9172 = vld [vmem:[#allocation14 + $0x3e8] sm:$0xff]
    %v9173 = vld [vmem:[#allocation14 + $0x3f0] sm:$0xff]
    %v9174 = vld [vmem:[#allocation14 + $0x3f8] sm:$0xff]
    %v9303 = vunpack.c.l.b16 %v9047
    %v9304 = vunpack.c.h.b16 %v9047
    %v9305 = vunpack.c.l.b16 %v9048
    %v9306 = vunpack.c.h.b16 %v9048
    %v9307 = vunpack.c.l.b16 %v9049
    %v9308 = vunpack.c.h.b16 %v9049
    %v9309 = vunpack.c.l.b16 %v9050
    %v9310 = vunpack.c.h.b16 %v9050
    %v9311 = vunpack.c.l.b16 %v9051
    %v9312 = vunpack.c.h.b16 %v9051
    %v9313 = vunpack.c.l.b16 %v9052
    %v9314 = vunpack.c.h.b16 %v9052
    %v9315 = vunpack.c.l.b16 %v9053
    %v9316 = vunpack.c.h.b16 %v9053
    %v9317 = vunpack.c.l.b16 %v9054
    %v9318 = vunpack.c.h.b16 %v9054
    %v9319 = vunpack.c.l.b16 %v9055
    %v9320 = vunpack.c.h.b16 %v9055
    %v9321 = vunpack.c.l.b16 %v9056
    %v9322 = vunpack.c.h.b16 %v9056
    %v9323 = vunpack.c.l.b16 %v9057
    %v9324 = vunpack.c.h.b16 %v9057
    %v9325 = vunpack.c.l.b16 %v9058
    %v9326 = vunpack.c.h.b16 %v9058
    %v9327 = vunpack.c.l.b16 %v9059
    %v9328 = vunpack.c.h.b16 %v9059
    %v9329 = vunpack.c.l.b16 %v9060
    %v9330 = vunpack.c.h.b16 %v9060
    %v9331 = vunpack.c.l.b16 %v9061
    %v9332 = vunpack.c.h.b16 %v9061
    %v9333 = vunpack.c.l.b16 %v9062
    %v9334 = vunpack.c.h.b16 %v9062
    %v9335 = vunpack.c.l.b16 %v9063
    %v9336 = vunpack.c.h.b16 %v9063
    %v9337 = vunpack.c.l.b16 %v9064
    %v9338 = vunpack.c.h.b16 %v9064
    %v9339 = vunpack.c.l.b16 %v9065
    %v9340 = vunpack.c.h.b16 %v9065
    %v9341 = vunpack.c.l.b16 %v9066
    %v9342 = vunpack.c.h.b16 %v9066
    %v9343 = vunpack.c.l.b16 %v9067
    %v9344 = vunpack.c.h.b16 %v9067
    %v9345 = vunpack.c.l.b16 %v9068
    %v9346 = vunpack.c.h.b16 %v9068
    %v9347 = vunpack.c.l.b16 %v9069
    %v9348 = vunpack.c.h.b16 %v9069
    %v9349 = vunpack.c.l.b16 %v9070
    %v9350 = vunpack.c.h.b16 %v9070
    %v9351 = vunpack.c.l.b16 %v9071
    %v9352 = vunpack.c.h.b16 %v9071
    %v9353 = vunpack.c.l.b16 %v9072
    %v9354 = vunpack.c.h.b16 %v9072
    %v9355 = vunpack.c.l.b16 %v9073
    %v9356 = vunpack.c.h.b16 %v9073
    %v9357 = vunpack.c.l.b16 %v9074
    %v9358 = vunpack.c.h.b16 %v9074
    %v9359 = vunpack.c.l.b16 %v9075
    %v9360 = vunpack.c.h.b16 %v9075
    %v9361 = vunpack.c.l.b16 %v9076
    %v9362 = vunpack.c.h.b16 %v9076
    %v9363 = vunpack.c.l.b16 %v9077
    %v9364 = vunpack.c.h.b16 %v9077
    %v9365 = vunpack.c.l.b16 %v9078
    %v9366 = vunpack.c.h.b16 %v9078
    %v9367 = vunpack.c.l.b16 %v9079
    %v9368 = vunpack.c.h.b16 %v9079
    %v9369 = vunpack.c.l.b16 %v9080
    %v9370 = vunpack.c.h.b16 %v9080
    %v9371 = vunpack.c.l.b16 %v9081
    %v9372 = vunpack.c.h.b16 %v9081
    %v9373 = vunpack.c.l.b16 %v9082
    %v9374 = vunpack.c.h.b16 %v9082
    %v9375 = vunpack.c.l.b16 %v9083
    %v9376 = vunpack.c.h.b16 %v9083
    %v9377 = vunpack.c.l.b16 %v9084
    %v9378 = vunpack.c.h.b16 %v9084
    %v9379 = vunpack.c.l.b16 %v9085
    %v9380 = vunpack.c.h.b16 %v9085
    %v9381 = vunpack.c.l.b16 %v9086
    %v9382 = vunpack.c.h.b16 %v9086
    %v9383 = vunpack.c.l.b16 %v9087
    %v9384 = vunpack.c.h.b16 %v9087
    %v9385 = vunpack.c.l.b16 %v9088
    %v9386 = vunpack.c.h.b16 %v9088
    %v9387 = vunpack.c.l.b16 %v9089
    %v9388 = vunpack.c.h.b16 %v9089
    %v9389 = vunpack.c.l.b16 %v9090
    %v9390 = vunpack.c.h.b16 %v9090
    %v9391 = vunpack.c.l.b16 %v9091
    %v9392 = vunpack.c.h.b16 %v9091
    %v9393 = vunpack.c.l.b16 %v9092
    %v9394 = vunpack.c.h.b16 %v9092
    %v9395 = vunpack.c.l.b16 %v9093
    %v9396 = vunpack.c.h.b16 %v9093
    %v9397 = vunpack.c.l.b16 %v9094
    %v9398 = vunpack.c.h.b16 %v9094
    %v9399 = vunpack.c.l.b16 %v9095
    %v9400 = vunpack.c.h.b16 %v9095
    %v9401 = vunpack.c.l.b16 %v9096
    %v9402 = vunpack.c.h.b16 %v9096
    %v9403 = vunpack.c.l.b16 %v9097
    %v9404 = vunpack.c.h.b16 %v9097
    %v9405 = vunpack.c.l.b16 %v9098
    %v9406 = vunpack.c.h.b16 %v9098
    %v9407 = vunpack.c.l.b16 %v9099
    %v9408 = vunpack.c.h.b16 %v9099
    %v9409 = vunpack.c.l.b16 %v9100
    %v9410 = vunpack.c.h.b16 %v9100
    %v9411 = vunpack.c.l.b16 %v9101
    %v9412 = vunpack.c.h.b16 %v9101
    %v9413 = vunpack.c.l.b16 %v9102
    %v9414 = vunpack.c.h.b16 %v9102
    %v9415 = vunpack.c.l.b16 %v9103
    %v9416 = vunpack.c.h.b16 %v9103
    %v9417 = vunpack.c.l.b16 %v9104
    %v9418 = vunpack.c.h.b16 %v9104
    %v9419 = vunpack.c.l.b16 %v9105
    %v9420 = vunpack.c.h.b16 %v9105
    %v9421 = vunpack.c.l.b16 %v9106
    %v9422 = vunpack.c.h.b16 %v9106
    %v9423 = vunpack.c.l.b16 %v9107
    %v9424 = vunpack.c.h.b16 %v9107
    %v9425 = vunpack.c.l.b16 %v9108
    %v9426 = vunpack.c.h.b16 %v9108
    %v9427 = vunpack.c.l.b16 %v9109
    %v9428 = vunpack.c.h.b16 %v9109
    %v9429 = vunpack.c.l.b16 %v9110
    %v9430 = vunpack.c.h.b16 %v9110
    %v9431 = vunpack.c.l.b16 %v9111
    %v9432 = vunpack.c.h.b16 %v9111
    %v9433 = vunpack.c.l.b16 %v9112
    %v9434 = vunpack.c.h.b16 %v9112
    %v9435 = vunpack.c.l.b16 %v9113
    %v9436 = vunpack.c.h.b16 %v9113
    %v9437 = vunpack.c.l.b16 %v9114
    %v9438 = vunpack.c.h.b16 %v9114
    %v9439 = vunpack.c.l.b16 %v9115
    %v9440 = vunpack.c.h.b16 %v9115
    %v9441 = vunpack.c.l.b16 %v9116
    %v9442 = vunpack.c.h.b16 %v9116
    %v9443 = vunpack.c.l.b16 %v9117
    %v9444 = vunpack.c.h.b16 %v9117
    %v9445 = vunpack.c.l.b16 %v9118
    %v9446 = vunpack.c.h.b16 %v9118
    %v9447 = vunpack.c.l.b16 %v9119
    %v9448 = vunpack.c.h.b16 %v9119
    %v9449 = vunpack.c.l.b16 %v9120
    %v9450 = vunpack.c.h.b16 %v9120
    %v9451 = vunpack.c.l.b16 %v9121
    %v9452 = vunpack.c.h.b16 %v9121
    %v9453 = vunpack.c.l.b16 %v9122
    %v9454 = vunpack.c.h.b16 %v9122
    %v9455 = vunpack.c.l.b16 %v9123
    %v9456 = vunpack.c.h.b16 %v9123
    %v9457 = vunpack.c.l.b16 %v9124
    %v9458 = vunpack.c.h.b16 %v9124
    %v9459 = vunpack.c.l.b16 %v9125
    %v9460 = vunpack.c.h.b16 %v9125
    %v9461 = vunpack.c.l.b16 %v9126
    %v9462 = vunpack.c.h.b16 %v9126
    %v9463 = vunpack.c.l.b16 %v9127
    %v9464 = vunpack.c.h.b16 %v9127
    %v9465 = vunpack.c.l.b16 %v9128
    %v9466 = vunpack.c.h.b16 %v9128
    %v9467 = vunpack.c.l.b16 %v9129
    %v9468 = vunpack.c.h.b16 %v9129
    %v9469 = vunpack.c.l.b16 %v9130
    %v9470 = vunpack.c.h.b16 %v9130
    %v9471 = vunpack.c.l.b16 %v9131
    %v9472 = vunpack.c.h.b16 %v9131
    %v9473 = vunpack.c.l.b16 %v9132
    %v9474 = vunpack.c.h.b16 %v9132
    %v9475 = vunpack.c.l.b16 %v9133
    %v9476 = vunpack.c.h.b16 %v9133
    %v9477 = vunpack.c.l.b16 %v9134
    %v9478 = vunpack.c.h.b16 %v9134
    %v9479 = vunpack.c.l.b16 %v9135
    %v9480 = vunpack.c.h.b16 %v9135
    %v9481 = vunpack.c.l.b16 %v9136
    %v9482 = vunpack.c.h.b16 %v9136
    %v9483 = vunpack.c.l.b16 %v9137
    %v9484 = vunpack.c.h.b16 %v9137
    %v9485 = vunpack.c.l.b16 %v9138
    %v9486 = vunpack.c.h.b16 %v9138
    %v9487 = vunpack.c.l.b16 %v9139
    %v9488 = vunpack.c.h.b16 %v9139
    %v9489 = vunpack.c.l.b16 %v9140
    %v9490 = vunpack.c.h.b16 %v9140
    %v9491 = vunpack.c.l.b16 %v9141
    %v9492 = vunpack.c.h.b16 %v9141
    %v9493 = vunpack.c.l.b16 %v9142
    %v9494 = vunpack.c.h.b16 %v9142
    %v9495 = vunpack.c.l.b16 %v9143
    %v9496 = vunpack.c.h.b16 %v9143
    %v9497 = vunpack.c.l.b16 %v9144
    %v9498 = vunpack.c.h.b16 %v9144
    %v9499 = vunpack.c.l.b16 %v9145
    %v9500 = vunpack.c.h.b16 %v9145
    %v9501 = vunpack.c.l.b16 %v9146
    %v9502 = vunpack.c.h.b16 %v9146
    %v9503 = vunpack.c.l.b16 %v9147
    %v9504 = vunpack.c.h.b16 %v9147
    %v9505 = vunpack.c.l.b16 %v9148
    %v9506 = vunpack.c.h.b16 %v9148
    %v9507 = vunpack.c.l.b16 %v9149
    %v9508 = vunpack.c.h.b16 %v9149
    %v9509 = vunpack.c.l.b16 %v9150
    %v9510 = vunpack.c.h.b16 %v9150
    %v9511 = vunpack.c.l.b16 %v9151
    %v9512 = vunpack.c.h.b16 %v9151
    %v9513 = vunpack.c.l.b16 %v9152
    %v9514 = vunpack.c.h.b16 %v9152
    %v9515 = vunpack.c.l.b16 %v9153
    %v9516 = vunpack.c.h.b16 %v9153
    %v9517 = vunpack.c.l.b16 %v9154
    %v9518 = vunpack.c.h.b16 %v9154
    %v9519 = vunpack.c.l.b16 %v9155
    %v9520 = vunpack.c.h.b16 %v9155
    %v9521 = vunpack.c.l.b16 %v9156
    %v9522 = vunpack.c.h.b16 %v9156
    %v9523 = vunpack.c.l.b16 %v9157
    %v9524 = vunpack.c.h.b16 %v9157
    %v9525 = vunpack.c.l.b16 %v9158
    %v9526 = vunpack.c.h.b16 %v9158
    %v9527 = vunpack.c.l.b16 %v9159
    %v9528 = vunpack.c.h.b16 %v9159
    %v9529 = vunpack.c.l.b16 %v9160
    %v9530 = vunpack.c.h.b16 %v9160
    %v9531 = vunpack.c.l.b16 %v9161
    %v9532 = vunpack.c.h.b16 %v9161
    %v9533 = vunpack.c.l.b16 %v9162
    %v9534 = vunpack.c.h.b16 %v9162
    %v9535 = vunpack.c.l.b16 %v9163
    %v9536 = vunpack.c.h.b16 %v9163
    %v9537 = vunpack.c.l.b16 %v9164
    %v9538 = vunpack.c.h.b16 %v9164
    %v9539 = vunpack.c.l.b16 %v9165
    %v9540 = vunpack.c.h.b16 %v9165
    %v9541 = vunpack.c.l.b16 %v9166
    %v9542 = vunpack.c.h.b16 %v9166
    %v9543 = vunpack.c.l.b16 %v9167
    %v9544 = vunpack.c.h.b16 %v9167
    %v9545 = vunpack.c.l.b16 %v9168
    %v9546 = vunpack.c.h.b16 %v9168
    %v9547 = vunpack.c.l.b16 %v9169
    %v9548 = vunpack.c.h.b16 %v9169
    %v9549 = vunpack.c.l.b16 %v9170
    %v9550 = vunpack.c.h.b16 %v9170
    %v9551 = vunpack.c.l.b16 %v9171
    %v9552 = vunpack.c.h.b16 %v9171
    %v9553 = vunpack.c.l.b16 %v9172
    %v9554 = vunpack.c.h.b16 %v9172
    %v9555 = vunpack.c.l.b16 %v9173
    %v9556 = vunpack.c.h.b16 %v9173
    %v9557 = vunpack.c.l.b16 %v9174
    %v9558 = vunpack.c.h.b16 %v9174
    %v9559 = vpack.c.b16 %v9311, %v9303
    %v9560 = vpack.c.b16 %v9312, %v9304
    %v9561 = vpack.c.b16 %v9313, %v9305
    %v9562 = vpack.c.b16 %v9314, %v9306
    %v9563 = vpack.c.b16 %v9315, %v9307
    %v9564 = vpack.c.b16 %v9316, %v9308
    %v9565 = vpack.c.b16 %v9317, %v9309
    %v9566 = vpack.c.b16 %v9318, %v9310
    %v9567 = vpack.c.b16 %v9327, %v9319
    %v9568 = vpack.c.b16 %v9328, %v9320
    %v9569 = vpack.c.b16 %v9329, %v9321
    %v9570 = vpack.c.b16 %v9330, %v9322
    %v9571 = vpack.c.b16 %v9331, %v9323
    %v9572 = vpack.c.b16 %v9332, %v9324
    %v9573 = vpack.c.b16 %v9333, %v9325
    %v9574 = vpack.c.b16 %v9334, %v9326
    %v9575 = vpack.c.b16 %v9343, %v9335
    %v9576 = vpack.c.b16 %v9344, %v9336
    %v9577 = vpack.c.b16 %v9345, %v9337
    %v9578 = vpack.c.b16 %v9346, %v9338
    %v9579 = vpack.c.b16 %v9347, %v9339
    %v9580 = vpack.c.b16 %v9348, %v9340
    %v9581 = vpack.c.b16 %v9349, %v9341
    %v9582 = vpack.c.b16 %v9350, %v9342
    %v9583 = vpack.c.b16 %v9359, %v9351
    %v9584 = vpack.c.b16 %v9360, %v9352
    %v9585 = vpack.c.b16 %v9361, %v9353
    %v9586 = vpack.c.b16 %v9362, %v9354
    %v9587 = vpack.c.b16 %v9363, %v9355
    %v9588 = vpack.c.b16 %v9364, %v9356
    %v9589 = vpack.c.b16 %v9365, %v9357
    %v9590 = vpack.c.b16 %v9366, %v9358
    %v9591 = vpack.c.b16 %v9375, %v9367
    %v9592 = vpack.c.b16 %v9376, %v9368
    %v9593 = vpack.c.b16 %v9377, %v9369
    %v9594 = vpack.c.b16 %v9378, %v9370
    %v9595 = vpack.c.b16 %v9379, %v9371
    %v9596 = vpack.c.b16 %v9380, %v9372
    %v9597 = vpack.c.b16 %v9381, %v9373
    %v9598 = vpack.c.b16 %v9382, %v9374
    %v9599 = vpack.c.b16 %v9391, %v9383
    %v9600 = vpack.c.b16 %v9392, %v9384
    %v9601 = vpack.c.b16 %v9393, %v9385
    %v9602 = vpack.c.b16 %v9394, %v9386
    %v9603 = vpack.c.b16 %v9395, %v9387
    %v9604 = vpack.c.b16 %v9396, %v9388
    %v9605 = vpack.c.b16 %v9397, %v9389
    %v9606 = vpack.c.b16 %v9398, %v9390
    %v9607 = vpack.c.b16 %v9407, %v9399
    %v9608 = vpack.c.b16 %v9408, %v9400
    %v9609 = vpack.c.b16 %v9409, %v9401
    %v9610 = vpack.c.b16 %v9410, %v9402
    %v9611 = vpack.c.b16 %v9411, %v9403
    %v9612 = vpack.c.b16 %v9412, %v9404
    %v9613 = vpack.c.b16 %v9413, %v9405
    %v9614 = vpack.c.b16 %v9414, %v9406
    %v9615 = vpack.c.b16 %v9423, %v9415
    %v9616 = vpack.c.b16 %v9424, %v9416
    %v9617 = vpack.c.b16 %v9425, %v9417
    %v9618 = vpack.c.b16 %v9426, %v9418
    %v9619 = vpack.c.b16 %v9427, %v9419
    %v9620 = vpack.c.b16 %v9428, %v9420
    %v9621 = vpack.c.b16 %v9429, %v9421
    %v9622 = vpack.c.b16 %v9430, %v9422
    %v9623 = vpack.c.b16 %v9439, %v9431
    %v9624 = vpack.c.b16 %v9440, %v9432
    %v9625 = vpack.c.b16 %v9441, %v9433
    %v9626 = vpack.c.b16 %v9442, %v9434
    %v9627 = vpack.c.b16 %v9443, %v9435
    %v9628 = vpack.c.b16 %v9444, %v9436
    %v9629 = vpack.c.b16 %v9445, %v9437
    %v9630 = vpack.c.b16 %v9446, %v9438
    %v9631 = vpack.c.b16 %v9455, %v9447
    %v9632 = vpack.c.b16 %v9456, %v9448
    %v9633 = vpack.c.b16 %v9457, %v9449
    %v9634 = vpack.c.b16 %v9458, %v9450
    %v9635 = vpack.c.b16 %v9459, %v9451
    %v9636 = vpack.c.b16 %v9460, %v9452
    %v9637 = vpack.c.b16 %v9461, %v9453
    %v9638 = vpack.c.b16 %v9462, %v9454
    %v9639 = vpack.c.b16 %v9471, %v9463
    %v9640 = vpack.c.b16 %v9472, %v9464
    %v9641 = vpack.c.b16 %v9473, %v9465
    %v9642 = vpack.c.b16 %v9474, %v9466
    %v9643 = vpack.c.b16 %v9475, %v9467
    %v9644 = vpack.c.b16 %v9476, %v9468
    %v9645 = vpack.c.b16 %v9477, %v9469
    %v9646 = vpack.c.b16 %v9478, %v9470
    %v9647 = vpack.c.b16 %v9487, %v9479
    %v9648 = vpack.c.b16 %v9488, %v9480
    %v9649 = vpack.c.b16 %v9489, %v9481
    %v9650 = vpack.c.b16 %v9490, %v9482
    %v9651 = vpack.c.b16 %v9491, %v9483
    %v9652 = vpack.c.b16 %v9492, %v9484
    %v9653 = vpack.c.b16 %v9493, %v9485
    %v9654 = vpack.c.b16 %v9494, %v9486
    %v9655 = vpack.c.b16 %v9503, %v9495
    %v9656 = vpack.c.b16 %v9504, %v9496
    %v9657 = vpack.c.b16 %v9505, %v9497
    %v9658 = vpack.c.b16 %v9506, %v9498
    %v9659 = vpack.c.b16 %v9507, %v9499
    %v9660 = vpack.c.b16 %v9508, %v9500
    %v9661 = vpack.c.b16 %v9509, %v9501
    %v9662 = vpack.c.b16 %v9510, %v9502
    %v9663 = vpack.c.b16 %v9519, %v9511
    %v9664 = vpack.c.b16 %v9520, %v9512
    %v9665 = vpack.c.b16 %v9521, %v9513
    %v9666 = vpack.c.b16 %v9522, %v9514
    %v9667 = vpack.c.b16 %v9523, %v9515
    %v9668 = vpack.c.b16 %v9524, %v9516
    %v9669 = vpack.c.b16 %v9525, %v9517
    %v9670 = vpack.c.b16 %v9526, %v9518
    %v9671 = vpack.c.b16 %v9535, %v9527
    %v9672 = vpack.c.b16 %v9536, %v9528
    %v9673 = vpack.c.b16 %v9537, %v9529
    %v9674 = vpack.c.b16 %v9538, %v9530
    %v9675 = vpack.c.b16 %v9539, %v9531
    %v9676 = vpack.c.b16 %v9540, %v9532
    %v9677 = vpack.c.b16 %v9541, %v9533
    %v9678 = vpack.c.b16 %v9542, %v9534
    %v9679 = vpack.c.b16 %v9551, %v9543
    %v9680 = vpack.c.b16 %v9552, %v9544
    %v9681 = vpack.c.b16 %v9553, %v9545
    %v9682 = vpack.c.b16 %v9554, %v9546
    %v9683 = vpack.c.b16 %v9555, %v9547
    %v9684 = vpack.c.b16 %v9556, %v9548
    %v9685 = vpack.c.b16 %v9557, %v9549
    %v9686 = vpack.c.b16 %v9558, %v9550
    %9815 = vmatpush.bf16.msra.mxu0 %v9615
    %9816 = vmatpush.bf16.msra.mxu0 %v9607
    %9817 = vmatpush.bf16.msra.mxu0 %v9599
    %9818 = vmatpush.bf16.msra.mxu0 %v9591
    %9819 = vmatpush.bf16.msra.mxu0 %v9583
    %9820 = vmatpush.bf16.msra.mxu0 %v9575
    %9821 = vmatpush.bf16.msra.mxu0 %v9567
    %9822 = vmatpush.bf16.msra.mxu0 %v9559
    %9823 = vmatmul.bf16.gmra.mxu0 %v9045
    %v9824 = vpop.f32.mrf.mxu0
    %v9825 = vadd.f32 0.0, %v9824
    %v9826 = vpop.f32.mrf.mxu0
    %9827 = vdwg.mxu0
    %9828 = vmatpush.bf16.msra.mxu0 %v9679
    %9829 = vmatpush.bf16.msra.mxu0 %v9671
    %9830 = vmatpush.bf16.msra.mxu0 %v9663
    %9831 = vmatpush.bf16.msra.mxu0 %v9655
    %9832 = vmatpush.bf16.msra.mxu0 %v9647
    %9833 = vmatpush.bf16.msra.mxu0 %v9639
    %9834 = vmatpush.bf16.msra.mxu0 %v9631
    %9835 = vmatpush.bf16.msra.mxu0 %v9623
    %9836 = vmatmul.bf16.gmra.mxu0 %v9046
    %v9837 = vpop.f32.mrf.mxu0
    %v9838 = vadd.f32 %v9825, %v9837
    %v9839 = vpop.f32.mrf.mxu0
    %9840 = vdwg.mxu0
    %9841 = vmatpush.bf16.msra.mxu0 %v9616
    %9842 = vmatpush.bf16.msra.mxu0 %v9608
    %9843 = vmatpush.bf16.msra.mxu0 %v9600
    %9844 = vmatpush.bf16.msra.mxu0 %v9592
    %9845 = vmatpush.bf16.msra.mxu0 %v9584
    %9846 = vmatpush.bf16.msra.mxu0 %v9576
    %9847 = vmatpush.bf16.msra.mxu0 %v9568
    %9848 = vmatpush.bf16.msra.mxu0 %v9560
    %9849 = vmatmul.bf16.gmra.mxu0 %v9045
    %v9850 = vpop.f32.mrf.mxu0
    %v9851 = vadd.f32 0.0, %v9850
    %v9852 = vpop.f32.mrf.mxu0
    %9853 = vdwg.mxu0
    %9854 = vmatpush.bf16.msra.mxu0 %v9680
    %9855 = vmatpush.bf16.msra.mxu0 %v9672
    %9856 = vmatpush.bf16.msra.mxu0 %v9664
    %9857 = vmatpush.bf16.msra.mxu0 %v9656
    %9858 = vmatpush.bf16.msra.mxu0 %v9648
    %9859 = vmatpush.bf16.msra.mxu0 %v9640
    %9860 = vmatpush.bf16.msra.mxu0 %v9632
    %9861 = vmatpush.bf16.msra.mxu0 %v9624
    %9862 = vmatmul.bf16.gmra.mxu0 %v9046
    %v9863 = vpop.f32.mrf.mxu0
    %v9864 = vadd.f32 %v9851, %v9863
    %v9865 = vpop.f32.mrf.mxu0
    %9866 = vdwg.mxu0
    %9867 = vmatpush.bf16.msra.mxu0 %v9617
    %9868 = vmatpush.bf16.msra.mxu0 %v9609
    %9869 = vmatpush.bf16.msra.mxu0 %v9601
    %9870 = vmatpush.bf16.msra.mxu0 %v9593
    %9871 = vmatpush.bf16.msra.mxu0 %v9585
    %9872 = vmatpush.bf16.msra.mxu0 %v9577
    %9873 = vmatpush.bf16.msra.mxu0 %v9569
    %9874 = vmatpush.bf16.msra.mxu0 %v9561
    %9875 = vmatmul.bf16.gmra.mxu0 %v9045
    %v9876 = vpop.f32.mrf.mxu0
    %v9877 = vadd.f32 0.0, %v9876
    %v9878 = vpop.f32.mrf.mxu0
    %9879 = vdwg.mxu0
    %9880 = vmatpush.bf16.msra.mxu0 %v9681
    %9881 = vmatpush.bf16.msra.mxu0 %v9673
    %9882 = vmatpush.bf16.msra.mxu0 %v9665
    %9883 = vmatpush.bf16.msra.mxu0 %v9657
    %9884 = vmatpush.bf16.msra.mxu0 %v9649
    %9885 = vmatpush.bf16.msra.mxu0 %v9641
    %9886 = vmatpush.bf16.msra.mxu0 %v9633
    %9887 = vmatpush.bf16.msra.mxu0 %v9625
    %9888 = vmatmul.bf16.gmra.mxu0 %v9046
    %v9889 = vpop.f32.mrf.mxu0
    %v9890 = vadd.f32 %v9877, %v9889
    %v9891 = vpop.f32.mrf.mxu0
    %9892 = vdwg.mxu0
    %9893 = vmatpush.bf16.msra.mxu0 %v9618
    %9894 = vmatpush.bf16.msra.mxu0 %v9610
    %9895 = vmatpush.bf16.msra.mxu0 %v9602
    %9896 = vmatpush.bf16.msra.mxu0 %v9594
    %9897 = vmatpush.bf16.msra.mxu0 %v9586
    %9898 = vmatpush.bf16.msra.mxu0 %v9578
    %9899 = vmatpush.bf16.msra.mxu0 %v9570
    %9900 = vmatpush.bf16.msra.mxu0 %v9562
    %9901 = vmatmul.bf16.gmra.mxu0 %v9045
    %v9902 = vpop.f32.mrf.mxu0
    %v9903 = vadd.f32 0.0, %v9902
    %v9904 = vpop.f32.mrf.mxu0
    %9905 = vdwg.mxu0
    %9906 = vmatpush.bf16.msra.mxu0 %v9682
    %9907 = vmatpush.bf16.msra.mxu0 %v9674
    %9908 = vmatpush.bf16.msra.mxu0 %v9666
    %9909 = vmatpush.bf16.msra.mxu0 %v9658
    %9910 = vmatpush.bf16.msra.mxu0 %v9650
    %9911 = vmatpush.bf16.msra.mxu0 %v9642
    %9912 = vmatpush.bf16.msra.mxu0 %v9634
    %9913 = vmatpush.bf16.msra.mxu0 %v9626
    %9914 = vmatmul.bf16.gmra.mxu0 %v9046
    %v9915 = vpop.f32.mrf.mxu0
    %v9916 = vadd.f32 %v9903, %v9915
    %v9917 = vpop.f32.mrf.mxu0
    %9918 = vdwg.mxu0
    %9919 = vmatpush.bf16.msra.mxu0 %v9619
    %9920 = vmatpush.bf16.msra.mxu0 %v9611
    %9921 = vmatpush.bf16.msra.mxu0 %v9603
    %9922 = vmatpush.bf16.msra.mxu0 %v9595
    %9923 = vmatpush.bf16.msra.mxu0 %v9587
    %9924 = vmatpush.bf16.msra.mxu0 %v9579
    %9925 = vmatpush.bf16.msra.mxu0 %v9571
    %9926 = vmatpush.bf16.msra.mxu0 %v9563
    %9927 = vmatmul.bf16.gmra.mxu0 %v9045
    %v9928 = vpop.f32.mrf.mxu0
    %v9929 = vadd.f32 0.0, %v9928
    %v9930 = vpop.f32.mrf.mxu0
    %9931 = vdwg.mxu0
    %9932 = vmatpush.bf16.msra.mxu0 %v9683
    %9933 = vmatpush.bf16.msra.mxu0 %v9675
    %9934 = vmatpush.bf16.msra.mxu0 %v9667
    %9935 = vmatpush.bf16.msra.mxu0 %v9659
    %9936 = vmatpush.bf16.msra.mxu0 %v9651
    %9937 = vmatpush.bf16.msra.mxu0 %v9643
    %9938 = vmatpush.bf16.msra.mxu0 %v9635
    %9939 = vmatpush.bf16.msra.mxu0 %v9627
    %9940 = vmatmul.bf16.gmra.mxu0 %v9046
    %v9941 = vpop.f32.mrf.mxu0
    %v9942 = vadd.f32 %v9929, %v9941
    %v9943 = vpop.f32.mrf.mxu0
    %9944 = vdwg.mxu0
    %9945 = vmatpush.bf16.msra.mxu0 %v9620
    %9946 = vmatpush.bf16.msra.mxu0 %v9612
    %9947 = vmatpush.bf16.msra.mxu0 %v9604
    %9948 = vmatpush.bf16.msra.mxu0 %v9596
    %9949 = vmatpush.bf16.msra.mxu0 %v9588
    %9950 = vmatpush.bf16.msra.mxu0 %v9580
    %9951 = vmatpush.bf16.msra.mxu0 %v9572
    %9952 = vmatpush.bf16.msra.mxu0 %v9564
    %9953 = vmatmul.bf16.gmra.mxu0 %v9045
    %v9954 = vpop.f32.mrf.mxu0
    %v9955 = vadd.f32 0.0, %v9954
    %v9956 = vpop.f32.mrf.mxu0
    %9957 = vdwg.mxu0
    %9958 = vmatpush.bf16.msra.mxu0 %v9684
    %9959 = vmatpush.bf16.msra.mxu0 %v9676
    %9960 = vmatpush.bf16.msra.mxu0 %v9668
    %9961 = vmatpush.bf16.msra.mxu0 %v9660
    %9962 = vmatpush.bf16.msra.mxu0 %v9652
    %9963 = vmatpush.bf16.msra.mxu0 %v9644
    %9964 = vmatpush.bf16.msra.mxu0 %v9636
    %9965 = vmatpush.bf16.msra.mxu0 %v9628
    %9966 = vmatmul.bf16.gmra.mxu0 %v9046
    %v9967 = vpop.f32.mrf.mxu0
    %v9968 = vadd.f32 %v9955, %v9967
    %v9969 = vpop.f32.mrf.mxu0
    %9970 = vdwg.mxu0
    %9971 = vmatpush.bf16.msra.mxu0 %v9621
    %9972 = vmatpush.bf16.msra.mxu0 %v9613
    %9973 = vmatpush.bf16.msra.mxu0 %v9605
    %9974 = vmatpush.bf16.msra.mxu0 %v9597
    %9975 = vmatpush.bf16.msra.mxu0 %v9589
    %9976 = vmatpush.bf16.msra.mxu0 %v9581
    %9977 = vmatpush.bf16.msra.mxu0 %v9573
    %9978 = vmatpush.bf16.msra.mxu0 %v9565
    %9979 = vmatmul.bf16.gmra.mxu0 %v9045
    %v9980 = vpop.f32.mrf.mxu0
    %v9981 = vadd.f32 0.0, %v9980
    %v9982 = vpop.f32.mrf.mxu0
    %9983 = vdwg.mxu0
    %9984 = vmatpush.bf16.msra.mxu0 %v9685
    %9985 = vmatpush.bf16.msra.mxu0 %v9677
    %9986 = vmatpush.bf16.msra.mxu0 %v9669
    %9987 = vmatpush.bf16.msra.mxu0 %v9661
    %9988 = vmatpush.bf16.msra.mxu0 %v9653
    %9989 = vmatpush.bf16.msra.mxu0 %v9645
    %9990 = vmatpush.bf16.msra.mxu0 %v9637
    %9991 = vmatpush.bf16.msra.mxu0 %v9629
    %9992 = vmatmul.bf16.gmra.mxu0 %v9046
    %v9993 = vpop.f32.mrf.mxu0
    %v9994 = vadd.f32 %v9981, %v9993
    %v9995 = vpop.f32.mrf.mxu0
    %9996 = vdwg.mxu0
    %9997 = vmatpush.bf16.msra.mxu0 %v9622
    %9998 = vmatpush.bf16.msra.mxu0 %v9614
    %9999 = vmatpush.bf16.msra.mxu0 %v9606
    %10000 = vmatpush.bf16.msra.mxu0 %v9598
    %10001 = vmatpush.bf16.msra.mxu0 %v9590
    %10002 = vmatpush.bf16.msra.mxu0 %v9582
    %10003 = vmatpush.bf16.msra.mxu0 %v9574
    %10004 = vmatpush.bf16.msra.mxu0 %v9566
    %10005 = vmatmul.bf16.gmra.mxu0 %v9045
    %v10006 = vpop.f32.mrf.mxu0
    %v10007 = vadd.f32 0.0, %v10006
    %v10008 = vpop.f32.mrf.mxu0
    %10009 = vdwg.mxu0
    %10010 = vmatpush.bf16.msra.mxu0 %v9686
    %10011 = vmatpush.bf16.msra.mxu0 %v9678
    %10012 = vmatpush.bf16.msra.mxu0 %v9670
    %10013 = vmatpush.bf16.msra.mxu0 %v9662
    %10014 = vmatpush.bf16.msra.mxu0 %v9654
    %10015 = vmatpush.bf16.msra.mxu0 %v9646
    %10016 = vmatpush.bf16.msra.mxu0 %v9638
    %10017 = vmatpush.bf16.msra.mxu0 %v9630
    %10018 = vmatmul.bf16.gmra.mxu0 %v9046
    %v10019 = vpop.f32.mrf.mxu0
    %v10020 = vadd.f32 %v10007, %v10019
    %v10021 = vpop.f32.mrf.mxu0
    %10022 = vdwg.mxu0
    %v10023 = vld [vmem:[%s1857] sm:$0xff]
    %v10024 = vld [vmem:[%s1] sm:$0xff]
    %s10025 = scalar_lea.vmem [#allocation2], 224
    %v10026 = vld [vmem:[%s10025] sm:$0xff]
    %v10027 = vld [vmem:[%s10025 + $0x8] sm:$0xff]
    %v10028 = vld [vmem:[%s10025 + $0x10] sm:$0xff]
    %v10029 = vld [vmem:[%s10025 + $0x18] sm:$0xff]
    %v10030 = vadd.f32 %v10026, %v9838
    %v10031 = vadd.f32 %v10027, %v9864
    %v10032 = vadd.f32 %v10028, %v9890
    %v10033 = vadd.f32 %v10029, %v9916
    %v10034 = vld [vmem:[#allocation3] sm:$0xff]
    %v10035 = vld [vmem:[#allocation3 + $0x8] sm:$0xff]
    %v10036 = vld [vmem:[#allocation3 + $0x10] sm:$0xff]
    %v10037 = vld [vmem:[#allocation3 + $0x18] sm:$0xff]
    %v10038 = vadd.f32 %v10034, %v9942
    %v10039 = vadd.f32 %v10035, %v9968
    %v10040 = vadd.f32 %v10036, %v9994
    %v10041 = vadd.f32 %v10037, %v10020
    %v10042 = vld [vmem:[#allocation7] sm:$0xff]
    %v10043 = vxor.u32 %v10030, 2147483648
    %v10044 = vmul.f32 %v10043, 1.442695
    %v10045 = vpow.pop %v10044
    %v10046 = vadd.f32 %v10045, 1.0
    %v10047 = vrcp.pop %v10046
    %v10048 = vmul.f32 %v10046, %v10047
    %v10049 = vsub.f32 1.0, %v10048
    %v10050 = vmul.f32 %v10047, %v10049
    %v10051 = vadd.f32 %v10047, %v10050
    %vm10052 = vweird.f32 %v10046
    %vm10053 = vweird.f32 %v10047
    %vm10054 = vmor %vm10052, %vm10053
    %v10055 = vsel %vm10054, %v10047, %v10051
    %v10056 = vand.u32 2147483647, %v10046
    %vm10057 = vcmp.eq.f32.partialorder %v10056, 8.507059e+37
    %v10058 = vand.u32 %v10046, 2147483648
    %v10059 = vor.u32 1.1754944e-38, %v10058
    %v10060 = vsel %vm10057, %v10059, %v10055
    %v10061 = vmul.f32 1.0, %v10060
    %v10062 = vxor.u32 %v10031, 2147483648
    %v10063 = vmul.f32 %v10062, 1.442695
    %v10064 = vpow.pop %v10063
    %v10065 = vadd.f32 %v10064, 1.0
    %v10066 = vrcp.pop %v10065
    %v10067 = vmul.f32 %v10065, %v10066
    %v10068 = vsub.f32 1.0, %v10067
    %v10069 = vmul.f32 %v10066, %v10068
    %v10070 = vadd.f32 %v10066, %v10069
    %vm10071 = vweird.f32 %v10065
    %vm10072 = vweird.f32 %v10066
    %vm10073 = vmor %vm10071, %vm10072
    %v10074 = vsel %vm10073, %v10066, %v10070
    %v10075 = vand.u32 2147483647, %v10065
    %vm10076 = vcmp.eq.f32.partialorder %v10075, 8.507059e+37
    %v10077 = vand.u32 %v10065, 2147483648
    %v10078 = vor.u32 1.1754944e-38, %v10077
    %v10079 = vsel %vm10076, %v10078, %v10074
    %v10080 = vmul.f32 1.0, %v10079
    %v10081 = vtanh.pop %v10032
    %v10082 = vxor.u32 %v10033, 2147483648
    %v10083 = vmul.f32 %v10082, 1.442695
    %v10084 = vpow.pop %v10083
    %v10085 = vadd.f32 %v10084, 1.0
    %v10086 = vrcp.pop %v10085
    %v10087 = vmul.f32 %v10085, %v10086
    %v10088 = vsub.f32 1.0, %v10087
    %v10089 = vmul.f32 %v10086, %v10088
    %v10090 = vadd.f32 %v10086, %v10089
    %vm10091 = vweird.f32 %v10085
    %vm10092 = vweird.f32 %v10086
    %vm10093 = vmor %vm10091, %vm10092
    %v10094 = vsel %vm10093, %v10086, %v10090
    %v10095 = vand.u32 2147483647, %v10085
    %vm10096 = vcmp.eq.f32.partialorder %v10095, 8.507059e+37
    %v10097 = vand.u32 %v10085, 2147483648
    %v10098 = vor.u32 1.1754944e-38, %v10097
    %v10099 = vsel %vm10096, %v10098, %v10094
    %v10100 = vmul.f32 1.0, %v10099
    %v10101 = vmul.f32 %v10080, %v10042
    %v10102 = vmul.f32 %v10061, %v10081
    %v10103 = vadd.f32 %v10101, %v10102
    %v10104 = vtanh.pop %v10103
    %v10105 = vmul.f32 %v10100, %v10104
    %v10106 = vld [vmem:[#allocation8] sm:$0xff]
    %v10107 = vxor.u32 %v10038, 2147483648
    %v10108 = vmul.f32 %v10107, 1.442695
    %v10109 = vpow.pop %v10108
    %v10110 = vadd.f32 %v10109, 1.0
    %v10111 = vrcp.pop %v10110
    %v10112 = vmul.f32 %v10110, %v10111
    %v10113 = vsub.f32 1.0, %v10112
    %v10114 = vmul.f32 %v10111, %v10113
    %v10115 = vadd.f32 %v10111, %v10114
    %vm10116 = vweird.f32 %v10110
    %vm10117 = vweird.f32 %v10111
    %vm10118 = vmor %vm10116, %vm10117
    %v10119 = vsel %vm10118, %v10111, %v10115
    %v10120 = vand.u32 2147483647, %v10110
    %vm10121 = vcmp.eq.f32.partialorder %v10120, 8.507059e+37
    %v10122 = vand.u32 %v10110, 2147483648
    %v10123 = vor.u32 1.1754944e-38, %v10122
    %v10124 = vsel %vm10121, %v10123, %v10119
    %v10125 = vmul.f32 1.0, %v10124
    %v10126 = vxor.u32 %v10039, 2147483648
    %v10127 = vmul.f32 %v10126, 1.442695
    %v10128 = vpow.pop %v10127
    %v10129 = vadd.f32 %v10128, 1.0
    %v10130 = vrcp.pop %v10129
    %v10131 = vmul.f32 %v10129, %v10130
    %v10132 = vsub.f32 1.0, %v10131
    %v10133 = vmul.f32 %v10130, %v10132
    %v10134 = vadd.f32 %v10130, %v10133
    %vm10135 = vweird.f32 %v10129
    %vm10136 = vweird.f32 %v10130
    %vm10137 = vmor %vm10135, %vm10136
    %v10138 = vsel %vm10137, %v10130, %v10134
    %v10139 = vand.u32 2147483647, %v10129
    %vm10140 = vcmp.eq.f32.partialorder %v10139, 8.507059e+37
    %v10141 = vand.u32 %v10129, 2147483648
    %v10142 = vor.u32 1.1754944e-38, %v10141
    %v10143 = vsel %vm10140, %v10142, %v10138
    %v10144 = vmul.f32 1.0, %v10143
    %v10145 = vtanh.pop %v10040
    %v10146 = vxor.u32 %v10041, 2147483648
    %v10147 = vmul.f32 %v10146, 1.442695
    %v10148 = vpow.pop %v10147
    %v10149 = vadd.f32 %v10148, 1.0
    %v10150 = vrcp.pop %v10149
    %v10151 = vmul.f32 %v10149, %v10150
    %v10152 = vsub.f32 1.0, %v10151
    %v10153 = vmul.f32 %v10150, %v10152
    %v10154 = vadd.f32 %v10150, %v10153
    %vm10155 = vweird.f32 %v10149
    %vm10156 = vweird.f32 %v10150
    %vm10157 = vmor %vm10155, %vm10156
    %v10158 = vsel %vm10157, %v10150, %v10154
    %v10159 = vand.u32 2147483647, %v10149
    %vm10160 = vcmp.eq.f32.partialorder %v10159, 8.507059e+37
    %v10161 = vand.u32 %v10149, 2147483648
    %v10162 = vor.u32 1.1754944e-38, %v10161
    %v10163 = vsel %vm10160, %v10162, %v10158
    %v10164 = vmul.f32 1.0, %v10163
    %v10165 = vmul.f32 %v10144, %v10106
    %v10166 = vmul.f32 %v10125, %v10145
    %v10167 = vadd.f32 %v10165, %v10166
    %v10168 = vtanh.pop %v10167
    %v10169 = vmul.f32 %v10164, %v10168
    %vm10170 = vcmp.gt.f32.partialorder %v10023, 0.0
    %v10171 = vld [vmem:[#allocation6] sm:$0xff]
    %v10172 = vsel %vm10170, 1, 0
    %10173 = vset.pattern.permute.xlu0 0
    %10174 = vperm.xlu0 %10173, %v10172
    %v10175 = vpop.permute.xlu0 %10174
    %vm10176 = vcmp.eq.s32.totalorder %v10175, 1
    %v10177 = vsel %vm10176, %v10105, %v10171
    %vm10178 = vcmp.gt.f32.partialorder %v10024, 0.0
    %v10179 = vsel %vm10178, 1, 0
    %10180 = vset.pattern.permute.xlu0 0
    %10181 = vperm.xlu0 %10180, %v10179
    %v10182 = vpop.permute.xlu0 %10181
    %vm10183 = vcmp.eq.s32.totalorder %v10182, 1
    %v10184 = vsel %vm10183, %v10169, %v9044
    %v10185 = vsel %vm10176, %v10103, %v10042
    %10186 = vst [vmem:[#allocation7] sm:$0xff] %v10185
    %v10187 = vld [vmem:[#allocation8] sm:$0xff]
    %v10188 = vsel %vm10183, %v10167, %v10187
    %10189 = vst [vmem:[#allocation8] sm:$0xff] %v10188
    %10190 = vst [vmem:[#allocation6] sm:$0xff] %v10177
    %10191 = vst [vmem:[#allocation6 + $0x8] sm:$0xff] %v10184
    %10193 = vset.pattern.permute.xlu0 0
    %10194 = vperm.xlu0 %10193, %v10023
    %v10195 = vpop.permute.xlu0 %10194
    %v10197 = vmul.f32 %v10177, %v10195
    %s10198 = scalar_lea.vmem [#allocation4], 56
    %10199 = vst [vmem:[%s10198] sm:$0xff] %v10197
    %10201 = vset.pattern.permute.xlu0 0
    %10202 = vperm.xlu0 %10201, %v10024
    %v10203 = vpop.permute.xlu0 %10202
    %v10205 = vmul.f32 %v10184, %v10203
    %10206 = vst [vmem:[#allocation5] sm:$0xff] %v10205
    %v10207 = vld [vmem:[#allocation7] sm:$0xff]
    %v10208 = vpack.c.bf16 %v10207, %v10207
    %v10209 = vld [vmem:[#allocation18] sm:$0xf]
    %v10210 = vld [vmem:[#allocation18 + $0x4] sm:$0xf]
    %v10211 = vld [vmem:[#allocation18 + $0x8] sm:$0xf]
    %v10212 = vld [vmem:[#allocation18 + $0xc] sm:$0xf]
    %v10213 = vld [vmem:[#allocation18 + $0x10] sm:$0xf]
    %v10214 = vld [vmem:[#allocation18 + $0x14] sm:$0xf]
    %v10215 = vld [vmem:[#allocation18 + $0x18] sm:$0xf]
    %v10216 = vld [vmem:[#allocation18 + $0x1c] sm:$0xf]
    %v10217 = vld [vmem:[#allocation18 + $0x20] sm:$0xf]
    %v10218 = vld [vmem:[#allocation18 + $0x24] sm:$0xf]
    %v10219 = vld [vmem:[#allocation18 + $0x28] sm:$0xf]
    %v10220 = vld [vmem:[#allocation18 + $0x2c] sm:$0xf]
    %v10221 = vld [vmem:[#allocation18 + $0x30] sm:$0xf]
    %v10222 = vld [vmem:[#allocation18 + $0x34] sm:$0xf]
    %v10223 = vld [vmem:[#allocation18 + $0x38] sm:$0xf]
    %v10224 = vld [vmem:[#allocation18 + $0x3c] sm:$0xf]
    %v10225 = vld [vmem:[#allocation8] sm:$0xff]
    %v10226 = vpack.c.bf16 %v10225, %v10225
    %v10227 = vld [vmem:[#allocation20] sm:$0xf]
    %v10228 = vld [vmem:[#allocation20 + $0x4] sm:$0xf]
    %v10229 = vld [vmem:[#allocation20 + $0x8] sm:$0xf]
    %v10230 = vld [vmem:[#allocation20 + $0xc] sm:$0xf]
    %v10231 = vld [vmem:[#allocation20 + $0x10] sm:$0xf]
    %v10232 = vld [vmem:[#allocation20 + $0x14] sm:$0xf]
    %v10233 = vld [vmem:[#allocation20 + $0x18] sm:$0xf]
    %v10234 = vld [vmem:[#allocation20 + $0x1c] sm:$0xf]
    %v10235 = vld [vmem:[#allocation20 + $0x20] sm:$0xf]
    %v10236 = vld [vmem:[#allocation20 + $0x24] sm:$0xf]
    %v10237 = vld [vmem:[#allocation20 + $0x28] sm:$0xf]
    %v10238 = vld [vmem:[#allocation20 + $0x2c] sm:$0xf]
    %v10239 = vld [vmem:[#allocation20 + $0x30] sm:$0xf]
    %v10240 = vld [vmem:[#allocation20 + $0x34] sm:$0xf]
    %v10241 = vld [vmem:[#allocation20 + $0x38] sm:$0xf]
    %v10242 = vld [vmem:[#allocation20 + $0x3c] sm:$0xf]
    %v10259 = vunpack.c.l.b16 %v10227
    %v10260 = vunpack.c.l.b16 %v10228
    %v10261 = vunpack.c.l.b16 %v10229
    %v10262 = vunpack.c.l.b16 %v10230
    %v10263 = vunpack.c.l.b16 %v10231
    %v10264 = vunpack.c.l.b16 %v10232
    %v10265 = vunpack.c.l.b16 %v10233
    %v10266 = vunpack.c.l.b16 %v10234
    %v10267 = vunpack.c.l.b16 %v10235
    %v10268 = vunpack.c.l.b16 %v10236
    %v10269 = vunpack.c.l.b16 %v10237
    %v10270 = vunpack.c.l.b16 %v10238
    %v10271 = vunpack.c.l.b16 %v10239
    %v10272 = vunpack.c.l.b16 %v10240
    %v10273 = vunpack.c.l.b16 %v10241
    %v10274 = vunpack.c.l.b16 %v10242
    %v10275 = vpack.c.b16 %v10260, %v10259
    %v10276 = vpack.c.b16 %v10262, %v10261
    %v10277 = vpack.c.b16 %v10264, %v10263
    %v10278 = vpack.c.b16 %v10266, %v10265
    %v10279 = vpack.c.b16 %v10268, %v10267
    %v10280 = vpack.c.b16 %v10270, %v10269
    %v10281 = vpack.c.b16 %v10272, %v10271
    %v10282 = vpack.c.b16 %v10274, %v10273
    %10291 = vmatpush.bf16.msra.mxu0 %v10282
    %10292 = vmatpush.bf16.msra.mxu0 %v10281
    %10293 = vmatpush.bf16.msra.mxu0 %v10280
    %10294 = vmatpush.bf16.msra.mxu0 %v10279
    %10295 = vmatpush.bf16.msra.mxu0 %v10278
    %10296 = vmatpush.bf16.msra.mxu0 %v10277
    %10297 = vmatpush.bf16.msra.mxu0 %v10276
    %10298 = vmatpush.bf16.msra.mxu0 %v10275
    %10299 = vmatmul.bf16.gmra.mxu0 %v10226
    %v10300 = vpop.f32.mrf.mxu0
    %v10301 = vadd.f32 0.0, %v10300
    %v10302 = vpop.f32.mrf.mxu0
    %10303 = vdwg.mxu0
    %v10320 = vunpack.c.l.b16 %v10209
    %v10321 = vunpack.c.l.b16 %v10210
    %v10322 = vunpack.c.l.b16 %v10211
    %v10323 = vunpack.c.l.b16 %v10212
    %v10324 = vunpack.c.l.b16 %v10213
    %v10325 = vunpack.c.l.b16 %v10214
    %v10326 = vunpack.c.l.b16 %v10215
    %v10327 = vunpack.c.l.b16 %v10216
    %v10328 = vunpack.c.l.b16 %v10217
    %v10329 = vunpack.c.l.b16 %v10218
    %v10330 = vunpack.c.l.b16 %v10219
    %v10331 = vunpack.c.l.b16 %v10220
    %v10332 = vunpack.c.l.b16 %v10221
    %v10333 = vunpack.c.l.b16 %v10222
    %v10334 = vunpack.c.l.b16 %v10223
    %v10335 = vunpack.c.l.b16 %v10224
    %v10336 = vpack.c.b16 %v10321, %v10320
    %v10337 = vpack.c.b16 %v10323, %v10322
    %v10338 = vpack.c.b16 %v10325, %v10324
    %v10339 = vpack.c.b16 %v10327, %v10326
    %v10340 = vpack.c.b16 %v10329, %v10328
    %v10341 = vpack.c.b16 %v10331, %v10330
    %v10342 = vpack.c.b16 %v10333, %v10332
    %v10343 = vpack.c.b16 %v10335, %v10334
    %10352 = vmatpush.bf16.msra.mxu0 %v10343
    %10353 = vmatpush.bf16.msra.mxu0 %v10342
    %10354 = vmatpush.bf16.msra.mxu0 %v10341
    %10355 = vmatpush.bf16.msra.mxu0 %v10340
    %10356 = vmatpush.bf16.msra.mxu0 %v10339
    %10357 = vmatpush.bf16.msra.mxu0 %v10338
    %10358 = vmatpush.bf16.msra.mxu0 %v10337
    %10359 = vmatpush.bf16.msra.mxu0 %v10336
    %10360 = vmatmul.bf16.gmra.mxu0 %v10208
    %v10361 = vpop.f32.mrf.mxu0
    %v10362 = vadd.f32 %v10301, %v10361
    %v10363 = vpop.f32.mrf.mxu0
    %10364 = vdwg.mxu0
    %v10365 = vld [vmem:[%s12] sm:$0x1]
    %v10367 = vperm.slane %v10365, 0
    %v10369 = vadd.f32 %v10362, %v10367
    %10370 = vst [vmem:[#allocation25] sm:$0xff] %v10369
    %v10371 = vtanh.pop %v10369
    %10372 = vst [vmem:[#allocation24] sm:$0xff] %v10371
    %v10373 = vld [vmem:[#allocation4] sm:$0xff]
    %v10374 = vld [vmem:[#allocation4 + $0x8] sm:$0xff]
    %v10375 = vld [vmem:[#allocation4 + $0x10] sm:$0xff]
    %v10376 = vld [vmem:[#allocation4 + $0x18] sm:$0xff]
    %v10377 = vld [vmem:[#allocation4 + $0x20] sm:$0xff]
    %v10378 = vld [vmem:[#allocation4 + $0x28] sm:$0xff]
    %v10379 = vld [vmem:[#allocation4 + $0x30] sm:$0xff]
    %v10380 = vld [vmem:[#allocation4 + $0x38] sm:$0xff]
    %v10381 = vpack.c.bf16 %v10374, %v10373
    %v10382 = vpack.c.bf16 %v10376, %v10375
    %v10383 = vpack.c.bf16 %v10378, %v10377
    %v10384 = vpack.c.bf16 %v10380, %v10379
    %v10385 = vld [vmem:[#allocation5] sm:$0xff]
    %v10386 = vld [vmem:[#allocation5 + $0x8] sm:$0xff]
    %v10387 = vld [vmem:[#allocation5 + $0x10] sm:$0xff]
    %v10388 = vld [vmem:[#allocation5 + $0x18] sm:$0xff]
    %v10389 = vld [vmem:[#allocation5 + $0x20] sm:$0xff]
    %v10390 = vld [vmem:[#allocation5 + $0x28] sm:$0xff]
    %v10391 = vld [vmem:[#allocation5 + $0x30] sm:$0xff]
    %v10392 = vld [vmem:[#allocation5 + $0x38] sm:$0xff]
    %v10393 = vpack.c.bf16 %v10386, %v10385
    %v10394 = vpack.c.bf16 %v10388, %v10387
    %v10395 = vpack.c.bf16 %v10390, %v10389
    %v10396 = vpack.c.bf16 %v10392, %v10391
    %v10397 = vld [vmem:[#allocation15] sm:$0xff]
    %v10398 = vld [vmem:[#allocation15 + $0x8] sm:$0xff]
    %v10399 = vld [vmem:[#allocation15 + $0x10] sm:$0xff]
    %v10400 = vld [vmem:[#allocation15 + $0x18] sm:$0xff]
    %v10401 = vld [vmem:[#allocation15 + $0x20] sm:$0xff]
    %v10402 = vld [vmem:[#allocation15 + $0x28] sm:$0xff]
    %v10403 = vld [vmem:[#allocation15 + $0x30] sm:$0xff]
    %v10404 = vld [vmem:[#allocation15 + $0x38] sm:$0xff]
    %v10405 = vld [vmem:[#allocation15 + $0x40] sm:$0xff]
    %v10406 = vld [vmem:[#allocation15 + $0x48] sm:$0xff]
    %v10407 = vld [vmem:[#allocation15 + $0x50] sm:$0xff]
    %v10408 = vld [vmem:[#allocation15 + $0x58] sm:$0xff]
    %v10409 = vld [vmem:[#allocation15 + $0x60] sm:$0xff]
    %v10410 = vld [vmem:[#allocation15 + $0x68] sm:$0xff]
    %v10411 = vld [vmem:[#allocation15 + $0x70] sm:$0xff]
    %v10412 = vld [vmem:[#allocation15 + $0x78] sm:$0xff]
    %v10413 = vld [vmem:[#allocation17] sm:$0xff]
    %v10414 = vld [vmem:[#allocation17 + $0x8] sm:$0xff]
    %v10415 = vld [vmem:[#allocation17 + $0x10] sm:$0xff]
    %v10416 = vld [vmem:[#allocation17 + $0x18] sm:$0xff]
    %v10417 = vld [vmem:[#allocation17 + $0x20] sm:$0xff]
    %v10418 = vld [vmem:[#allocation17 + $0x28] sm:$0xff]
    %v10419 = vld [vmem:[#allocation17 + $0x30] sm:$0xff]
    %v10420 = vld [vmem:[#allocation17 + $0x38] sm:$0xff]
    %v10421 = vld [vmem:[#allocation17 + $0x40] sm:$0xff]
    %v10422 = vld [vmem:[#allocation17 + $0x48] sm:$0xff]
    %v10423 = vld [vmem:[#allocation17 + $0x50] sm:$0xff]
    %v10424 = vld [vmem:[#allocation17 + $0x58] sm:$0xff]
    %v10425 = vld [vmem:[#allocation17 + $0x60] sm:$0xff]
    %v10426 = vld [vmem:[#allocation17 + $0x68] sm:$0xff]
    %v10427 = vld [vmem:[#allocation17 + $0x70] sm:$0xff]
    %v10428 = vld [vmem:[#allocation17 + $0x78] sm:$0xff]
    %v10445 = vunpack.c.l.b16 %v10413
    %v10446 = vunpack.c.h.b16 %v10413
    %v10447 = vunpack.c.l.b16 %v10414
    %v10448 = vunpack.c.h.b16 %v10414
    %v10449 = vunpack.c.l.b16 %v10415
    %v10450 = vunpack.c.h.b16 %v10415
    %v10451 = vunpack.c.l.b16 %v10416
    %v10452 = vunpack.c.h.b16 %v10416
    %v10453 = vunpack.c.l.b16 %v10417
    %v10454 = vunpack.c.h.b16 %v10417
    %v10455 = vunpack.c.l.b16 %v10418
    %v10456 = vunpack.c.h.b16 %v10418
    %v10457 = vunpack.c.l.b16 %v10419
    %v10458 = vunpack.c.h.b16 %v10419
    %v10459 = vunpack.c.l.b16 %v10420
    %v10460 = vunpack.c.h.b16 %v10420
    %v10461 = vunpack.c.l.b16 %v10421
    %v10462 = vunpack.c.h.b16 %v10421
    %v10463 = vunpack.c.l.b16 %v10422
    %v10464 = vunpack.c.h.b16 %v10422
    %v10465 = vunpack.c.l.b16 %v10423
    %v10466 = vunpack.c.h.b16 %v10423
    %v10467 = vunpack.c.l.b16 %v10424
    %v10468 = vunpack.c.h.b16 %v10424
    %v10469 = vunpack.c.l.b16 %v10425
    %v10470 = vunpack.c.h.b16 %v10425
    %v10471 = vunpack.c.l.b16 %v10426
    %v10472 = vunpack.c.h.b16 %v10426
    %v10473 = vunpack.c.l.b16 %v10427
    %v10474 = vunpack.c.h.b16 %v10427
    %v10475 = vunpack.c.l.b16 %v10428
    %v10476 = vunpack.c.h.b16 %v10428
    %v10477 = vpack.c.b16 %v10447, %v10445
    %v10478 = vpack.c.b16 %v10448, %v10446
    %v10479 = vpack.c.b16 %v10451, %v10449
    %v10480 = vpack.c.b16 %v10452, %v10450
    %v10481 = vpack.c.b16 %v10455, %v10453
    %v10482 = vpack.c.b16 %v10456, %v10454
    %v10483 = vpack.c.b16 %v10459, %v10457
    %v10484 = vpack.c.b16 %v10460, %v10458
    %v10485 = vpack.c.b16 %v10463, %v10461
    %v10486 = vpack.c.b16 %v10464, %v10462
    %v10487 = vpack.c.b16 %v10467, %v10465
    %v10488 = vpack.c.b16 %v10468, %v10466
    %v10489 = vpack.c.b16 %v10471, %v10469
    %v10490 = vpack.c.b16 %v10472, %v10470
    %v10491 = vpack.c.b16 %v10475, %v10473
    %v10492 = vpack.c.b16 %v10476, %v10474
    %10509 = vmatpush.bf16.msra.mxu0 %v10491
    %10510 = vmatpush.bf16.msra.mxu0 %v10489
    %10511 = vmatpush.bf16.msra.mxu0 %v10487
    %10512 = vmatpush.bf16.msra.mxu0 %v10485
    %10513 = vmatpush.bf16.msra.mxu0 %v10483
    %10514 = vmatpush.bf16.msra.mxu0 %v10481
    %10515 = vmatpush.bf16.msra.mxu0 %v10479
    %10516 = vmatpush.bf16.msra.mxu0 %v10477
    %10517 = vmatmul.bf16.gmra.mxu0 %v10393
    %v10518 = vpop.f32.mrf.mxu0
    %v10519 = vadd.f32 0.0, %v10518
    %v10520 = vpop.f32.mrf.mxu0
    %v10521 = vadd.f32 0.0, %v10520
    %10522 = vmatmul.bf16.gmra.mxu0 %v10394
    %v10523 = vpop.f32.mrf.mxu0
    %v10524 = vadd.f32 0.0, %v10523
    %v10525 = vpop.f32.mrf.mxu0
    %v10526 = vadd.f32 0.0, %v10525
    %10527 = vmatmul.bf16.gmra.mxu0 %v10395
    %v10528 = vpop.f32.mrf.mxu0
    %v10529 = vadd.f32 0.0, %v10528
    %v10530 = vpop.f32.mrf.mxu0
    %v10531 = vadd.f32 0.0, %v10530
    %10532 = vmatmul.bf16.gmra.mxu0 %v10396
    %v10533 = vpop.f32.mrf.mxu0
    %v10534 = vadd.f32 0.0, %v10533
    %v10535 = vpop.f32.mrf.mxu0
    %v10536 = vadd.f32 0.0, %v10535
    %10537 = vdwg.mxu0
    %10538 = vmatpush.bf16.msra.mxu0 %v10492
    %10539 = vmatpush.bf16.msra.mxu0 %v10490
    %10540 = vmatpush.bf16.msra.mxu0 %v10488
    %10541 = vmatpush.bf16.msra.mxu0 %v10486
    %10542 = vmatpush.bf16.msra.mxu0 %v10484
    %10543 = vmatpush.bf16.msra.mxu0 %v10482
    %10544 = vmatpush.bf16.msra.mxu0 %v10480
    %10545 = vmatpush.bf16.msra.mxu0 %v10478
    %10546 = vmatmul.bf16.gmra.mxu0 %v10393
    %v10547 = vpop.f32.mrf.mxu0
    %v10548 = vadd.f32 0.0, %v10547
    %v10549 = vpop.f32.mrf.mxu0
    %v10550 = vadd.f32 0.0, %v10549
    %10551 = vmatmul.bf16.gmra.mxu0 %v10394
    %v10552 = vpop.f32.mrf.mxu0
    %v10553 = vadd.f32 0.0, %v10552
    %v10554 = vpop.f32.mrf.mxu0
    %v10555 = vadd.f32 0.0, %v10554
    %10556 = vmatmul.bf16.gmra.mxu0 %v10395
    %v10557 = vpop.f32.mrf.mxu0
    %v10558 = vadd.f32 0.0, %v10557
    %v10559 = vpop.f32.mrf.mxu0
    %v10560 = vadd.f32 0.0, %v10559
    %10561 = vmatmul.bf16.gmra.mxu0 %v10396
    %v10562 = vpop.f32.mrf.mxu0
    %v10563 = vadd.f32 0.0, %v10562
    %v10564 = vpop.f32.mrf.mxu0
    %v10565 = vadd.f32 0.0, %v10564
    %10566 = vdwg.mxu0
    %v10583 = vunpack.c.l.b16 %v10397
    %v10584 = vunpack.c.h.b16 %v10397
    %v10585 = vunpack.c.l.b16 %v10398
    %v10586 = vunpack.c.h.b16 %v10398
    %v10587 = vunpack.c.l.b16 %v10399
    %v10588 = vunpack.c.h.b16 %v10399
    %v10589 = vunpack.c.l.b16 %v10400
    %v10590 = vunpack.c.h.b16 %v10400
    %v10591 = vunpack.c.l.b16 %v10401
    %v10592 = vunpack.c.h.b16 %v10401
    %v10593 = vunpack.c.l.b16 %v10402
    %v10594 = vunpack.c.h.b16 %v10402
    %v10595 = vunpack.c.l.b16 %v10403
    %v10596 = vunpack.c.h.b16 %v10403
    %v10597 = vunpack.c.l.b16 %v10404
    %v10598 = vunpack.c.h.b16 %v10404
    %v10599 = vunpack.c.l.b16 %v10405
    %v10600 = vunpack.c.h.b16 %v10405
    %v10601 = vunpack.c.l.b16 %v10406
    %v10602 = vunpack.c.h.b16 %v10406
    %v10603 = vunpack.c.l.b16 %v10407
    %v10604 = vunpack.c.h.b16 %v10407
    %v10605 = vunpack.c.l.b16 %v10408
    %v10606 = vunpack.c.h.b16 %v10408
    %v10607 = vunpack.c.l.b16 %v10409
    %v10608 = vunpack.c.h.b16 %v10409
    %v10609 = vunpack.c.l.b16 %v10410
    %v10610 = vunpack.c.h.b16 %v10410
    %v10611 = vunpack.c.l.b16 %v10411
    %v10612 = vunpack.c.h.b16 %v10411
    %v10613 = vunpack.c.l.b16 %v10412
    %v10614 = vunpack.c.h.b16 %v10412
    %v10615 = vpack.c.b16 %v10585, %v10583
    %v10616 = vpack.c.b16 %v10586, %v10584
    %v10617 = vpack.c.b16 %v10589, %v10587
    %v10618 = vpack.c.b16 %v10590, %v10588
    %v10619 = vpack.c.b16 %v10593, %v10591
    %v10620 = vpack.c.b16 %v10594, %v10592
    %v10621 = vpack.c.b16 %v10597, %v10595
    %v10622 = vpack.c.b16 %v10598, %v10596
    %v10623 = vpack.c.b16 %v10601, %v10599
    %v10624 = vpack.c.b16 %v10602, %v10600
    %v10625 = vpack.c.b16 %v10605, %v10603
    %v10626 = vpack.c.b16 %v10606, %v10604
    %v10627 = vpack.c.b16 %v10609, %v10607
    %v10628 = vpack.c.b16 %v10610, %v10608
    %v10629 = vpack.c.b16 %v10613, %v10611
    %v10630 = vpack.c.b16 %v10614, %v10612
    %10647 = vmatpush.bf16.msra.mxu0 %v10629
    %10648 = vmatpush.bf16.msra.mxu0 %v10627
    %10649 = vmatpush.bf16.msra.mxu0 %v10625
    %10650 = vmatpush.bf16.msra.mxu0 %v10623
    %10651 = vmatpush.bf16.msra.mxu0 %v10621
    %10652 = vmatpush.bf16.msra.mxu0 %v10619
    %10653 = vmatpush.bf16.msra.mxu0 %v10617
    %10654 = vmatpush.bf16.msra.mxu0 %v10615
    %10655 = vmatmul.bf16.gmra.mxu0 %v10381
    %v10656 = vpop.f32.mrf.mxu0
    %v10657 = vadd.f32 %v10519, %v10656
    %v10658 = vpop.f32.mrf.mxu0
    %v10659 = vadd.f32 %v10521, %v10658
    %10660 = vmatmul.bf16.gmra.mxu0 %v10382
    %v10661 = vpop.f32.mrf.mxu0
    %v10662 = vadd.f32 %v10524, %v10661
    %v10663 = vpop.f32.mrf.mxu0
    %v10664 = vadd.f32 %v10526, %v10663
    %10665 = vmatmul.bf16.gmra.mxu0 %v10383
    %v10666 = vpop.f32.mrf.mxu0
    %v10667 = vadd.f32 %v10529, %v10666
    %v10668 = vpop.f32.mrf.mxu0
    %v10669 = vadd.f32 %v10531, %v10668
    %10670 = vmatmul.bf16.gmra.mxu0 %v10384
    %v10671 = vpop.f32.mrf.mxu0
    %v10672 = vadd.f32 %v10534, %v10671
    %v10673 = vpop.f32.mrf.mxu0
    %v10674 = vadd.f32 %v10536, %v10673
    %10675 = vdwg.mxu0
    %10676 = vmatpush.bf16.msra.mxu0 %v10630
    %10677 = vmatpush.bf16.msra.mxu0 %v10628
    %10678 = vmatpush.bf16.msra.mxu0 %v10626
    %10679 = vmatpush.bf16.msra.mxu0 %v10624
    %10680 = vmatpush.bf16.msra.mxu0 %v10622
    %10681 = vmatpush.bf16.msra.mxu0 %v10620
    %10682 = vmatpush.bf16.msra.mxu0 %v10618
    %10683 = vmatpush.bf16.msra.mxu0 %v10616
    %10684 = vmatmul.bf16.gmra.mxu0 %v10381
    %v10685 = vpop.f32.mrf.mxu0
    %v10686 = vadd.f32 %v10548, %v10685
    %v10687 = vpop.f32.mrf.mxu0
    %v10688 = vadd.f32 %v10550, %v10687
    %10689 = vmatmul.bf16.gmra.mxu0 %v10382
    %v10690 = vpop.f32.mrf.mxu0
    %v10691 = vadd.f32 %v10553, %v10690
    %v10692 = vpop.f32.mrf.mxu0
    %v10693 = vadd.f32 %v10555, %v10692
    %10694 = vmatmul.bf16.gmra.mxu0 %v10383
    %v10695 = vpop.f32.mrf.mxu0
    %v10696 = vadd.f32 %v10558, %v10695
    %v10697 = vpop.f32.mrf.mxu0
    %v10698 = vadd.f32 %v10560, %v10697
    %10699 = vmatmul.bf16.gmra.mxu0 %v10384
    %v10700 = vpop.f32.mrf.mxu0
    %v10701 = vadd.f32 %v10563, %v10700
    %v10702 = vpop.f32.mrf.mxu0
    %v10703 = vadd.f32 %v10565, %v10702
    %10704 = vdwg.mxu0
    %v10705 = vld [vmem:[%s9] sm:$0x3]
    %v10707 = vperm.slane %v10705, 0
    %v10708 = vperm.slane %v10705, 1
    %v10711 = vadd.f32 %v10657, %v10707
    %v10712 = vadd.f32 %v10686, %v10708
    %v10713 = vadd.f32 %v10659, %v10707
    %v10714 = vadd.f32 %v10688, %v10708
    %v10715 = vadd.f32 %v10662, %v10707
    %v10716 = vadd.f32 %v10691, %v10708
    %v10717 = vadd.f32 %v10664, %v10707
    %v10718 = vadd.f32 %v10693, %v10708
    %v10719 = vadd.f32 %v10667, %v10707
    %v10720 = vadd.f32 %v10696, %v10708
    %v10721 = vadd.f32 %v10669, %v10707
    %v10722 = vadd.f32 %v10698, %v10708
    %v10723 = vadd.f32 %v10672, %v10707
    %v10724 = vadd.f32 %v10701, %v10708
    %v10725 = vadd.f32 %v10674, %v10707
    %v10726 = vadd.f32 %v10703, %v10708
    %10727 = vst [vmem:[#allocation21] sm:$0xff] %v10711
    %10728 = vst [vmem:[#allocation21 + $0x8] sm:$0xff] %v10713
    %10729 = vst [vmem:[#allocation21 + $0x10] sm:$0xff] %v10715
    %10730 = vst [vmem:[#allocation21 + $0x18] sm:$0xff] %v10717
    %10731 = vst [vmem:[#allocation21 + $0x20] sm:$0xff] %v10719
    %10732 = vst [vmem:[#allocation21 + $0x28] sm:$0xff] %v10721
    %10733 = vst [vmem:[#allocation21 + $0x30] sm:$0xff] %v10723
    %10734 = vst [vmem:[#allocation21 + $0x38] sm:$0xff] %v10725
    %10735 = vst [vmem:[#allocation22] sm:$0xff] %v10712
    %10736 = vst [vmem:[#allocation22 + $0x8] sm:$0xff] %v10714
    %10737 = vst [vmem:[#allocation22 + $0x10] sm:$0xff] %v10716
    %10738 = vst [vmem:[#allocation22 + $0x18] sm:$0xff] %v10718
    %10739 = vst [vmem:[#allocation22 + $0x20] sm:$0xff] %v10720
    %10740 = vst [vmem:[#allocation22 + $0x28] sm:$0xff] %v10722
    %10741 = vst [vmem:[#allocation22 + $0x30] sm:$0xff] %v10724
    %10742 = vst [vmem:[#allocation22 + $0x38] sm:$0xff] %v10726
    // Predicated region
    $region82: #{tpu_custom_call.1} parent=1 // pred_check
      _
    $region83: #{tpu_custom_call.1} parent=1 // pred_check_branch
      %10744 = sbr.rel (0) target = $region85
    $region84: #{tpu_custom_call.1} parent=1 // pred_region
      %10746 = vsyncadd [#allocation11], 0
      %s10747 = sshll.u32 [#allocation21], 4
      %s10748 = int_to_ptr.vmem [resolvable:$true] %s10747
      %s10749 = sshll.u32 %s13, 4
      %s10750 = int_to_ptr.hbm [resolvable:$true] %s10749
      %10755 = dma.vmem_to_hbm [thread:$0]  %s10748, 1024, %s10750, [#allocation11], 128, 128, 8
    $region85: #{tpu_custom_call.1} parent=1 // pred_fallthru
      _
    // Predicated region
    $region86: #{tpu_custom_call.1} parent=1 // pred_check
      _
    $region87: #{tpu_custom_call.1} parent=1 // pred_check_branch
      %10757 = sbr.rel (0) target = $region89
    $region88: #{tpu_custom_call.1} parent=1 // pred_region
      %10759 = vsyncadd [#allocation23], 0
      %s10760 = sshll.u32 [#allocation22], 4
      %s10761 = int_to_ptr.vmem [resolvable:$true] %s10760
      %s10762 = sshll.u32 %s14, 4
      %s10763 = int_to_ptr.hbm [resolvable:$true] %s10762
      %10768 = dma.vmem_to_hbm [thread:$0]  %s10761, 1024, %s10763, [#allocation23], 128, 128, 8
    $region89: #{tpu_custom_call.1} parent=1 // pred_fallthru
      _
    // Predicated region
    $region90: #{tpu_custom_call.1} parent=1 // pred_check
      _
    $region91: #{tpu_custom_call.1} parent=1 // pred_check_branch
      %10770 = sbr.rel (0) target = $region93
    $region92: #{tpu_custom_call.1} parent=1 // pred_region
      %10772 = vsyncadd [#allocation23], 0
      %s10774 = sshll.u32 [#allocation24], 4
      %s10775 = int_to_ptr.vmem [resolvable:$true] %s10774
      %s10776 = sshll.u32 %s15, 4
      %s10777 = int_to_ptr.hbm [resolvable:$true] %s10776
      %10779 = dma.vmem_to_hbm [thread:$0]  %s10775, 128, %s10777, [#allocation23]
    $region93: #{tpu_custom_call.1} parent=1 // pred_fallthru
      _
    // Predicated region
    $region94: #{tpu_custom_call.1} parent=1 // pred_check
      _
    $region95: #{tpu_custom_call.1} parent=1 // pred_check_branch
      %10781 = sbr.rel (0) target = $region97
    $region96: #{tpu_custom_call.1} parent=1 // pred_region
      %10783 = vsyncadd [#allocation26], 0
      %s10785 = sshll.u32 [#allocation25], 4
      %s10786 = int_to_ptr.vmem [resolvable:$true] %s10785
      %s10787 = sshll.u32 %s16, 4
      %s10788 = int_to_ptr.hbm [resolvable:$true] %s10787
      %10790 = dma.vmem_to_hbm [thread:$0]  %s10786, 128, %s10788, [#allocation26]
    $region97: #{tpu_custom_call.1} parent=1 // pred_fallthru
      _
    // Predicated region
    $region98: #{tpu_custom_call.1} parent=1 // pred_check
      _
    $region99: #{tpu_custom_call.1} parent=1 // pred_check_branch
      %10792 = sbr.rel (0) target = $region101
    $region100: #{tpu_custom_call.1} parent=1 // pred_region
      %10794 = dma.done [#allocation11], 1024
    $region101: #{tpu_custom_call.1} parent=1 // pred_fallthru
      _
    // Predicated region
    $region102: #{tpu_custom_call.1} parent=1 // pred_check
      _
    $region103: #{tpu_custom_call.1} parent=1 // pred_check_branch
      %10796 = sbr.rel (0) target = $region105
    $region104: #{tpu_custom_call.1} parent=1 // pred_region
      %10798 = dma.done [#allocation23], 1024
    $region105: #{tpu_custom_call.1} parent=1 // pred_fallthru
      _
    // Predicated region
    $region106: #{tpu_custom_call.1} parent=1 // pred_check
      _
    $region107: #{tpu_custom_call.1} parent=1 // pred_check_branch
      %10800 = sbr.rel (0) target = $region109
    $region108: #{tpu_custom_call.1} parent=1 // pred_region
      %10802 = dma.done [#allocation23], 128
    $region109: #{tpu_custom_call.1} parent=1 // pred_fallthru
      _
    // Predicated region
    $region110: #{tpu_custom_call.1} parent=1 // pred_check
      _
    $region111: #{tpu_custom_call.1} parent=1 // pred_check_branch
      %10804 = sbr.rel (0) target = $region113
    $region112: #{tpu_custom_call.1} parent=1 // pred_region
      %10806 = dma.done [#allocation26], 128
    $region113: #{tpu_custom_call.1} parent=1 // pred_fallthru
      _
    %10807 = vsyncpa [#allocation10], 1
    %10808 = vsyncpa [#allocation13], 1
    %10809 = vsyncpa [#allocation16], 1
    %10810 = vsyncpa [#allocation19], 1
    %10811 = vsyncpa [#allocation11], 1
    %10812 = vsyncpa [#allocation23], 1
    %10813 = vsyncpa [#allocation26], 1

</llo_original>
